<compile_context>
chip_gen: v5e
topology: v5e:2x2
jax: 0.10.0
libtpu: 0.0.40
codegen_flags: <defaults>
</compile_context>

<pallas_src>
import jax
import jax.numpy as jnp
import numpy as np
from jax.experimental import pallas as pl
from jax.experimental.pallas import tpu as pltpu


# ----------------------------------------------------------------------------
# helpers
# ----------------------------------------------------------------------------
def _silu(v):
    # exp -> EUP, approximate reciprocal -> EUP; keeps the VALU slots free.
    return v * pl.reciprocal(1.0 + jnp.exp(-v), approx=True)


def _round_up(v, m):
    return ((v + m - 1) // m) * m


def _fold_bn(p, eps=1e-5):
    """Fold eval-mode BatchNorm2d into the preceding (bias-free) conv."""
    scale = p["gamma"] / jnp.sqrt(p["var"] + eps)            # (Cout,)
    w = p["w"] * scale[:, None, None, None]                  # (Cout,Cin,kh,kw)
    b = p["beta"] - p["mean"] * scale                        # (Cout,)
    return w, b


# ----------------------------------------------------------------------------
# kernel 1: fused cv1 || cv2 (one 1x1 matmul producing both), spatial tiles
# ----------------------------------------------------------------------------
def _cv12_kernel(x_ref, w_ref, b_ref, y1_ref, y2_ref):
    c_ = y1_ref.shape[-1]
    x = x_ref[...]                                           # (tn, c1) bf16
    h = jnp.dot(x, w_ref[...], preferred_element_type=jnp.float32) + b_ref[...]
    h = _silu(h)                                             # (tn, 2c_) f32
    y1_ref[...] = h[:, :c_].astype(y1_ref.dtype)
    y2_ref[...] = h[:, c_:].astype(y2_ref.dtype)


def dual_pointwise_conv(x2d, w12, b12, c_, *, max_tile=1024):
    n, c1 = x2d.shape
    tn = min(max_tile, _round_up(n, 8))
    return pl.pallas_call(
        _cv12_kernel,
        out_shape=(jax.ShapeDtypeStruct((n, c_), jnp.bfloat16),
                   jax.ShapeDtypeStruct((n, c_), jnp.bfloat16)),
        grid=(pl.cdiv(n, tn),),
        in_specs=[
            pl.BlockSpec((tn, c1), lambda i: (i, 0)),
            pl.BlockSpec((c1, 2 * c_), lambda i: (0, 0)),
            pl.BlockSpec((1, 2 * c_), lambda i: (0, 0)),
        ],
        out_specs=(pl.BlockSpec((tn, c_), lambda i: (i, 0)),
                   pl.BlockSpec((tn, c_), lambda i: (i, 0))),
        compiler_params=pltpu.CompilerParams(dimension_semantics=("parallel",)),
    )(x2d, w12, b12)


# ----------------------------------------------------------------------------
# kernel 2: fused RepBottleneck (RepConv-as-one-3x3 + 3x3 Conv + shortcut)
#   - unpadded bf16 input; zero halo built in VMEM (border-only zero stores)
#   - three dx-pre-shifted, width-aligned slabs => every tap operand is a free
#     leading-axis view (no per-tap relayout, no per-tap casts)
# ----------------------------------------------------------------------------
def _rep_bottleneck_kernel(y_ref, wr_ref, br_ref, wb_ref, bb_ref, m_ref,
                           sl0, sl1, sl2):
    # y_ref  : (1, H, W, C)  bf16   un-padded y1 block (one image)
    # wr_ref : (9, C, C)     bf16   fused RepConv taps (1x1 folded into center, BN folded)
    # wb_ref : (9, C, C)     bf16   bottleneck cv2 3x3 taps (BN folded)
    # br/bb  : (1, C)        f32    folded biases (lane-dense)
    # m_ref  : (1, H, W, C)  bf16   y1 + SiLU(conv2(SiLU(conv1(y1))))
    # sl0/1/2: (H+2, Wp, C)  bf16   dx-shifted zero-halo slabs, Wp = roundup(W+2, 16)
    _, h, w, c = y_ref.shape
    hp = h + 2
    wp = sl0.shape[1]

    # zero only the halo rows/columns that are ever read (never the full slab)
    zrow = jnp.zeros((1, wp, c), jnp.bfloat16)
    zcol = jnp.zeros((hp, 1, c), jnp.bfloat16)
    for s in (sl0, sl1, sl2):
        s[0:1, :, :] = zrow
        s[hp - 1:hp, :, :] = zrow
    sl0[:, 0:1, :] = zcol                  # left halo for the dx=0 slab
    sl2[:, w - 1:w, :] = zcol              # right halo for the dx=2 slab

    def fill_slabs(v):                     # v: (H, W, C) bf16
        # slab_dx[y2, x'] == zero-padded-input[y2, x'+dx] for all x' < W
        sl0[1:h + 1, 1:w + 1, :] = v
        sl1[1:h + 1, 0:w, :] = v
        sl2[1:h + 1, 0:w - 1, :] = v[:, 1:, :]

    def conv3x3(taps_ref, bias_ref):
        slabs = (sl0[...], sl1[...], sl2[...])
        acc = None
        for dy in range(3):
            for dx in range(3):
                # leading-axis slice + aligned merge => no relayout, no cast
                op = slabs[dx][dy:dy + h, :, :].reshape(h * wp, c)
                p = jnp.dot(op, taps_ref[dy * 3 + dx],
                            preferred_element_type=jnp.float32)
                acc = p if acc is None else acc + p
        # rows y*Wp + x are valid for x < W; columns >= W are junk and discarded
        return acc + bias_ref[...]

    y1v = y_ref[0]                                            # (H, W, C) bf16

    # --- RepConv (3x3 with the 1x1 branch folded into its centre tap) ---
    fill_slabs(y1v)
    r = _silu(conv3x3(wr_ref, br_ref))                        # (H*Wp, C) f32
    rb = r.reshape(h, wp, c)[:, :w, :].astype(jnp.bfloat16)

    # --- bottleneck Conv 3x3 ---
    fill_slabs(rb)
    bout = _silu(conv3x3(wb_ref, bb_ref))
    bout = bout.reshape(h, wp, c)[:, :w, :]

    # --- residual shortcut ---
    m_ref[0] = (y1v.astype(jnp.float32) + bout).astype(m_ref.dtype)


def rep_bottleneck(y, w_rep, b_rep, w_bt, b_bt):
    b, h, w, c = y.shape
    wp = _round_up(w + 2, 16)              # bf16 sublane-tile aligned width
    return pl.pallas_call(
        _rep_bottleneck_kernel,
        out_shape=jax.ShapeDtypeStruct((b, h, w, c), jnp.bfloat16),
        grid=(b,),
        in_specs=[
            pl.BlockSpec((1, h, w, c), lambda i: (i, 0, 0, 0)),
            pl.BlockSpec((9, c, c), lambda i: (0, 0, 0)),
            pl.BlockSpec((1, c), lambda i: (0, 0)),
            pl.BlockSpec((9, c, c), lambda i: (0, 0, 0)),
            pl.BlockSpec((1, c), lambda i: (0, 0)),
        ],
        out_specs=pl.BlockSpec((1, h, w, c), lambda i: (i, 0, 0, 0)),
        scratch_shapes=[pltpu.VMEM((h + 2, wp, c), jnp.bfloat16)
                        for _ in range(3)],
        compiler_params=pltpu.CompilerParams(
            dimension_semantics=("parallel",),
            vmem_limit_bytes=64 * 1024 * 1024),
    )(y, w_rep, b_rep, w_bt, b_bt)


# ----------------------------------------------------------------------------
# kernel 3: cv3 on the never-materialized channel concat:
#           out = SiLU(m @ Wa + y2 @ Wb + b), spatial tiles
# ----------------------------------------------------------------------------
def _cv3_kernel(a_ref, b_ref, wa_ref, wb_ref, bias_ref, o_ref):
    acc = (jnp.dot(a_ref[...], wa_ref[...], preferred_element_type=jnp.float32)
           + jnp.dot(b_ref[...], wb_ref[...], preferred_element_type=jnp.float32)
           + bias_ref[...])
    o_ref[...] = _silu(acc)


def concat_pointwise_conv(a, b, wa, wb, bias, *, max_tile=1024):
    n, ca = a.shape
    cb = b.shape[1]
    cout = wa.shape[1]
    tn = min(max_tile, _round_up(n, 8))
    return pl.pallas_call(
        _cv3_kernel,
        out_shape=jax.ShapeDtypeStruct((n, cout), jnp.float32),
        grid=(pl.cdiv(n, tn),),
        in_specs=[
            pl.BlockSpec((tn, ca), lambda i: (i, 0)),
            pl.BlockSpec((tn, cb), lambda i: (i, 0)),
            pl.BlockSpec((ca, cout), lambda i: (0, 0)),
            pl.BlockSpec((cb, cout), lambda i: (0, 0)),
            pl.BlockSpec((1, cout), lambda i: (0, 0)),
        ],
        out_specs=pl.BlockSpec((tn, cout), lambda i: (i, 0)),
        compiler_params=pltpu.CompilerParams(dimension_semantics=("parallel",)),
    )(a, b, wa, wb, bias)


# ----------------------------------------------------------------------------
# RepCSP forward (wrapper: BN folding, weight packing, layout plumbing)
# ----------------------------------------------------------------------------
def repcsp_forward(x, params, eps=1e-5, max_tile=1024):
    B, c1, H, W = x.shape

    def pack_1x1(p):
        w, b = _fold_bn(p, eps)
        return jnp.transpose(w[:, :, 0, 0]), b               # (Cin, Cout), (Cout,)

    def pack_3x3(w, b):
        cout, cin = w.shape[0], w.shape[1]
        wk = jnp.transpose(w, (2, 3, 1, 0)).reshape(9, cin, cout)
        return wk.astype(jnp.bfloat16), b.reshape(1, -1).astype(jnp.float32)

    # fused cv1 || cv2 weights
    w1, b1 = pack_1x1(params["cv1"])
    w2, b2 = pack_1x1(params["cv2"])
    c_ = w1.shape[1]
    w12 = jnp.concatenate([w1, w2], axis=1).astype(jnp.bfloat16)     # (c1, 2c_)
    b12 = jnp.concatenate([b1, b2]).reshape(1, -1).astype(jnp.float32)

    # cv3 acts on concat([m, y2]); split its weight so the concat never exists.
    w3, b3 = pack_1x1(params["cv3"])                                  # (2c_, c2)
    w3a = w3[:c_].astype(jnp.bfloat16)
    w3b = w3[c_:].astype(jnp.bfloat16)
    b3 = b3.reshape(1, -1).astype(jnp.float32)

    # stage 1: fused cv1 + cv2 (single matmul, one pass over x), bf16 outputs
    x2d = (jnp.transpose(x, (0, 2, 3, 1))
           .reshape(B * H * W, c1).astype(jnp.bfloat16))
    y1_2d, y2_2d = dual_pointwise_conv(x2d, w12, b12, c_, max_tile=max_tile)

    # stage 2: n RepBottleneck blocks (RepConv 1x1 branch fused into the 3x3)
    y = y1_2d.reshape(B, H, W, c_)
    for blk in params["m"]:
        w3x3, b3x3 = _fold_bn(blk["rep_conv1"], eps)
        w1x1, b1x1 = _fold_bn(blk["rep_conv2"], eps)
        w_rep = w3x3.at[:, :, 1, 1].add(w1x1[:, :, 0, 0])
        b_rep = b3x3 + b1x1
        w_rep, b_rep = pack_3x3(w_rep, b_rep)
        w_bt, b_bt = pack_3x3(*_fold_bn(blk["cv2"], eps))
        y = rep_bottleneck(y, w_rep, b_rep, w_bt, b_bt)

    # stage 3: cv3 on the implicit concat
    out2d = concat_pointwise_conv(y.reshape(B * H * W, c_), y2_2d,
                                  w3a, w3b, b3, max_tile=max_tile)
    c2 = out2d.shape[1]
    return out2d.reshape(B, H, W, c2).transpose(0, 3, 1, 2)


# ----------------------------------------------------------------------------
# parameter init (PyTorch-like: bias-free convs + BatchNorm2d running stats)
# ----------------------------------------------------------------------------
def _init_conv_bn(key, cout, cin, k):
    kw, kg, kb, km, kv = jax.random.split(key, 5)
    fan_in = cin * k * k
    return dict(
        w=jax.random.normal(kw, (cout, cin, k, k), jnp.float32) / np.sqrt(fan_in),
        gamma=1.0 + 0.1 * jax.random.normal(kg, (cout,), jnp.float32),
        beta=0.1 * jax.random.normal(kb, (cout,), jnp.float32),
        mean=0.1 * jax.random.normal(km, (cout,), jnp.float32),
        var=1.0 + 0.1 * jax.random.uniform(kv, (cout,), jnp.float32),
    )


def init_repcsp_params(key, c1, c2, n=1, e=0.5):
    c_ = int(c2 * e)
    keys = jax.random.split(key, 3 + 3 * n)
    params = dict(
        cv1=_init_conv_bn(keys[0], c_, c1, 1),
        cv2=_init_conv_bn(keys[1], c_, c1, 1),
        cv3=_init_conv_bn(keys[2], c2, 2 * c_, 1),
        m=[],
    )
    for i in range(n):
        params["m"].append(dict(
            rep_conv1=_init_conv_bn(keys[3 + 3 * i], c_, c_, 3),
            rep_conv2=_init_conv_bn(keys[4 + 3 * i], c_, c_, 1),
            cv2=_init_conv_bn(keys[5 + 3 * i], c_, c_, 3),
        ))
    return params


# ----------------------------------------------------------------------------
# pure-JAX reference (unfused, unfolded, HIGHEST precision) matching PyTorch
# ----------------------------------------------------------------------------
def repcsp_reference(x, params, eps=1e-5):
    def conv(xv, w, pad):
        return jax.lax.conv_general_dilated(
            xv, w, (1, 1), [(pad, pad), (pad, pad)],
            dimension_numbers=("NCHW", "OIHW", "NCHW"),
            precision=jax.lax.Precision.HIGHEST)

    def bn(xv, p):
        scale = p["gamma"] / jnp.sqrt(p["var"] + eps)
        return ((xv - p["mean"][None, :, None, None]) * scale[None, :, None, None]
                + p["beta"][None, :, None, None])

    def silu(v):
        return v * (1.0 / (1.0 + jnp.exp(-v)))

    def conv_bn(xv, p, pad, act=True):
        y = bn(conv(xv, p["w"], pad), p)
        return silu(y) if act else y

    y1 = conv_bn(x, params["cv1"], 0)
    y2 = conv_bn(x, params["cv2"], 0)
    y = y1
    for blk in params["m"]:
        r = silu(conv_bn(y, blk["rep_conv1"], 1, act=False)
                 + conv_bn(y, blk["rep_conv2"], 0, act=False))
        y = y + conv_bn(r, blk["cv2"], 1)
    cat = jnp.concatenate([y, y2], axis=1)
    return conv_bn(cat, params["cv3"], 0)


if __name__ == "__main__":
    # Small shapes consistent with the module: c1=c2=32 -> c_=16, n=2.
    B, C1, C2, H, W, N_REP = 2, 32, 32, 16, 16, 2

    key = jax.random.PRNGKey(0)
    kx, kp = jax.random.split(key)
    x = jax.random.normal(kx, (B, C1, H, W), dtype=jnp.float32)
    params = init_repcsp_params(kp, C1, C2, n=N_REP, e=0.5)

    fwd = jax.jit(repcsp_forward)
    out = jax.block_until_ready(fwd(x, params))
    ref = jax.block_until_ready(repcsp_reference(x, params))

    assert out.shape == (B, C2, H, W), out.shape
    # Kernel matmuls run in bf16 on the MXU (f32 accumulate) and inter-stage
    # activations are stored in bf16; reference is f32 HIGHEST.
    np.testing.assert_allclose(np.asarray(out), np.asarray(ref),
                               rtol=3e-2, atol=3e-2)
    print("KERNEL_OK")
</pallas_src>

<mosaic_0001>
module attributes {stable_mosaic.version = 11 : i64} {
  func.func @_cv12_kernel(%arg0: i32, %arg1: memref<512x32xbf16, #tpu.memory_space<vmem>>, %arg2: memref<32x32xbf16, #tpu.memory_space<vmem>>, %arg3: memref<1x32xf32, #tpu.memory_space<vmem>>, %arg4: memref<512x16xbf16, #tpu.memory_space<vmem>>, %arg5: memref<512x16xbf16, #tpu.memory_space<vmem>>) attributes {dimension_semantics = [#tpu.dimension_semantics<parallel>], iteration_bounds = array<i64: 1>, scalar_prefetch = 0 : i64, scratch_operands = 0 : i64, tpu.core_type = #tpu.core_type<tc>, window_params = [{transform_indices = @transform_0, window_bounds = array<i64: 512, 32>}, {pipeline_mode = #tpu.pipeline_mode<synchronous>, transform_indices = @transform_1, window_bounds = array<i64: 32, 32>}, {pipeline_mode = #tpu.pipeline_mode<synchronous>, transform_indices = @transform_2, window_bounds = array<i64: 1, 32>}, {transform_indices = @transform_3, window_bounds = array<i64: 512, 16>}, {transform_indices = @transform_4, window_bounds = array<i64: 512, 16>}]} {
    %c0 = arith.constant 0 : index
    %c0_0 = arith.constant 0 : index
    %0 = vector.load %arg1[%c0, %c0_0] : memref<512x32xbf16, #tpu.memory_space<vmem>>, vector<512x32xbf16>
    %c0_1 = arith.constant 0 : index
    %c0_2 = arith.constant 0 : index
    %1 = vector.load %arg2[%c0_1, %c0_2] : memref<32x32xbf16, #tpu.memory_space<vmem>>, vector<32x32xbf16>
    %cst = arith.constant dense<0.000000e+00> : vector<512x32xf32>
    %2 = tpu.matmul %0, %1, %cst {dimension_numbers = #tpu.dot_dimension_numbers<[1], [0], [0], [1], [0, 0, 1, 1], [], []>} : vector<512x32xbf16>, vector<32x32xbf16>, vector<512x32xf32> -> vector<512x32xf32>
    %c0_3 = arith.constant 0 : index
    %c0_4 = arith.constant 0 : index
    %3 = vector.load %arg3[%c0_3, %c0_4] : memref<1x32xf32, #tpu.memory_space<vmem>>, vector<1x32xf32>
    %4 = vector.broadcast %3 : vector<1x32xf32> to vector<512x32xf32>
    %5 = arith.addf %2, %4 : vector<512x32xf32>
    %cst_5 = arith.constant 0.000000e+00 : f32
    %6 = vector.broadcast %cst_5 : f32 to vector<512x32xf32>
    %7 = arith.subf %6, %5 : vector<512x32xf32>
    %8 = math.exp %7 : vector<512x32xf32>
    %cst_6 = arith.constant 1.000000e+00 : f32
    %9 = vector.broadcast %cst_6 : f32 to vector<512x32xf32>
    %10 = arith.addf %9, %8 : vector<512x32xf32>
    %11 = tpu.reciprocal %10 {approx = true} : vector<512x32xf32> -> vector<512x32xf32>
    %12 = arith.mulf %5, %11 : vector<512x32xf32>
    %13 = vector.extract_strided_slice %12 {offsets = [0, 0], sizes = [512, 16], strides = [1, 1]} : vector<512x32xf32> to vector<512x16xf32>
    %14 = arith.truncf %13 : vector<512x16xf32> to vector<512x16xbf16>
    %c0_7 = arith.constant 0 : index
    %c0_8 = arith.constant 0 : index
    %15 = vector.load %arg4[%c0_7, %c0_8] : memref<512x16xbf16, #tpu.memory_space<vmem>>, vector<512x16xbf16>
    tpu.vector_store %arg4[%c0_7, %c0_8], %14 {strides = array<i32>} : memref<512x16xbf16, #tpu.memory_space<vmem>>, vector<512x16xbf16>,
    %16 = vector.extract_strided_slice %12 {offsets = [0, 16], sizes = [512, 16], strides = [1, 1]} : vector<512x32xf32> to vector<512x16xf32>
    %17 = arith.truncf %16 : vector<512x16xf32> to vector<512x16xbf16>
    %c0_9 = arith.constant 0 : index
    %c0_10 = arith.constant 0 : index
    %18 = vector.load %arg5[%c0_9, %c0_10] : memref<512x16xbf16, #tpu.memory_space<vmem>>, vector<512x16xbf16>
    tpu.vector_store %arg5[%c0_9, %c0_10], %17 {strides = array<i32>} : memref<512x16xbf16, #tpu.memory_space<vmem>>, vector<512x16xbf16>,
    return
  }
  func.func @transform_0(%arg0: i32) -> (i32, i32) {
    %c0_i32 = arith.constant 0 : i32
    %c0_i32_0 = arith.constant 0 : i32
    return %arg0, %c0_i32 : i32, i32
  }
  func.func @transform_1(%arg0: i32) -> (i32, i32) {
    %c0_i32 = arith.constant 0 : i32
    %c0_i32_0 = arith.constant 0 : i32
    %c0_i32_1 = arith.constant 0 : i32
    return %c0_i32, %c0_i32_0 : i32, i32
  }
  func.func @transform_2(%arg0: i32) -> (i32, i32) {
    %c0_i32 = arith.constant 0 : i32
    %c0_i32_0 = arith.constant 0 : i32
    %c0_i32_1 = arith.constant 0 : i32
    return %c0_i32, %c0_i32_0 : i32, i32
  }
  func.func @transform_3(%arg0: i32) -> (i32, i32) {
    %c0_i32 = arith.constant 0 : i32
    %c0_i32_0 = arith.constant 0 : i32
    return %arg0, %c0_i32 : i32, i32
  }
  func.func @transform_4(%arg0: i32) -> (i32, i32) {
    %c0_i32 = arith.constant 0 : i32
    %c0_i32_0 = arith.constant 0 : i32
    return %arg0, %c0_i32 : i32, i32
  }
}

module attributes {stable_mosaic.version = 11 : i64} {
  func.func @_cv3_kernel(%arg0: i32, %arg1: memref<512x16xbf16, #tpu.memory_space<vmem>>, %arg2: memref<512x16xbf16, #tpu.memory_space<vmem>>, %arg3: memref<16x32xbf16, #tpu.memory_space<vmem>>, %arg4: memref<16x32xbf16, #tpu.memory_space<vmem>>, %arg5: memref<1x32xf32, #tpu.memory_space<vmem>>, %arg6: memref<512x32xf32, #tpu.memory_space<vmem>>) attributes {dimension_semantics = [#tpu.dimension_semantics<parallel>], iteration_bounds = array<i64: 1>, scalar_prefetch = 0 : i64, scratch_operands = 0 : i64, tpu.core_type = #tpu.core_type<tc>, window_params = [{transform_indices = @transform_0, window_bounds = array<i64: 512, 16>}, {transform_indices = @transform_1, window_bounds = array<i64: 512, 16>}, {pipeline_mode = #tpu.pipeline_mode<synchronous>, transform_indices = @transform_2, window_bounds = array<i64: 16, 32>}, {pipeline_mode = #tpu.pipeline_mode<synchronous>, transform_indices = @transform_3, window_bounds = array<i64: 16, 32>}, {pipeline_mode = #tpu.pipeline_mode<synchronous>, transform_indices = @transform_4, window_bounds = array<i64: 1, 32>}, {transform_indices = @transform_5, window_bounds = array<i64: 512, 32>}]} {
    %c0 = arith.constant 0 : index
    %c0_0 = arith.constant 0 : index
    %0 = vector.load %arg1[%c0, %c0_0] : memref<512x16xbf16, #tpu.memory_space<vmem>>, vector<512x16xbf16>
    %c0_1 = arith.constant 0 : index
    %c0_2 = arith.constant 0 : index
    %1 = vector.load %arg3[%c0_1, %c0_2] : memref<16x32xbf16, #tpu.memory_space<vmem>>, vector<16x32xbf16>
    %cst = arith.constant dense<0.000000e+00> : vector<512x32xf32>
    %2 = tpu.matmul %0, %1, %cst {dimension_numbers = #tpu.dot_dimension_numbers<[1], [0], [0], [1], [0, 0, 1, 1], [], []>} : vector<512x16xbf16>, vector<16x32xbf16>, vector<512x32xf32> -> vector<512x32xf32>
    %c0_3 = arith.constant 0 : index
    %c0_4 = arith.constant 0 : index
    %3 = vector.load %arg2[%c0_3, %c0_4] : memref<512x16xbf16, #tpu.memory_space<vmem>>, vector<512x16xbf16>
    %c0_5 = arith.constant 0 : index
    %c0_6 = arith.constant 0 : index
    %4 = vector.load %arg4[%c0_5, %c0_6] : memref<16x32xbf16, #tpu.memory_space<vmem>>, vector<16x32xbf16>
    %cst_7 = arith.constant dense<0.000000e+00> : vector<512x32xf32>
    %5 = tpu.matmul %3, %4, %cst_7 {dimension_numbers = #tpu.dot_dimension_numbers<[1], [0], [0], [1], [0, 0, 1, 1], [], []>} : vector<512x16xbf16>, vector<16x32xbf16>, vector<512x32xf32> -> vector<512x32xf32>
    %6 = arith.addf %2, %5 : vector<512x32xf32>
    %c0_8 = arith.constant 0 : index
    %c0_9 = arith.constant 0 : index
    %7 = vector.load %arg5[%c0_8, %c0_9] : memref<1x32xf32, #tpu.memory_space<vmem>>, vector<1x32xf32>
    %8 = vector.broadcast %7 : vector<1x32xf32> to vector<512x32xf32>
    %9 = arith.addf %6, %8 : vector<512x32xf32>
    %cst_10 = arith.constant 0.000000e+00 : f32
    %10 = vector.broadcast %cst_10 : f32 to vector<512x32xf32>
    %11 = arith.subf %10, %9 : vector<512x32xf32>
    %12 = math.exp %11 : vector<512x32xf32>
    %cst_11 = arith.constant 1.000000e+00 : f32
    %13 = vector.broadcast %cst_11 : f32 to vector<512x32xf32>
    %14 = arith.addf %13, %12 : vector<512x32xf32>
    %15 = tpu.reciprocal %14 {approx = true} : vector<512x32xf32> -> vector<512x32xf32>
    %16 = arith.mulf %9, %15 : vector<512x32xf32>
    %c0_12 = arith.constant 0 : index
    %c0_13 = arith.constant 0 : index
    %17 = vector.load %arg6[%c0_12, %c0_13] : memref<512x32xf32, #tpu.memory_space<vmem>>, vector<512x32xf32>
    tpu.vector_store %arg6[%c0_12, %c0_13], %16 {strides = array<i32>} : memref<512x32xf32, #tpu.memory_space<vmem>>, vector<512x32xf32>,
    return
  }
  func.func @transform_0(%arg0: i32) -> (i32, i32) {
    %c0_i32 = arith.constant 0 : i32
    %c0_i32_0 = arith.constant 0 : i32
    return %arg0, %c0_i32 : i32, i32
  }
  func.func @transform_1(%arg0: i32) -> (i32, i32) {
    %c0_i32 = arith.constant 0 : i32
    %c0_i32_0 = arith.constant 0 : i32
    return %arg0, %c0_i32 : i32, i32
  }
  func.func @transform_2(%arg0: i32) -> (i32, i32) {
    %c0_i32 = arith.constant 0 : i32
    %c0_i32_0 = arith.constant 0 : i32
    %c0_i32_1 = arith.constant 0 : i32
    return %c0_i32, %c0_i32_0 : i32, i32
  }
  func.func @transform_3(%arg0: i32) -> (i32, i32) {
    %c0_i32 = arith.constant 0 : i32
    %c0_i32_0 = arith.constant 0 : i32
    %c0_i32_1 = arith.constant 0 : i32
    return %c0_i32, %c0_i32_0 : i32, i32
  }
  func.func @transform_4(%arg0: i32) -> (i32, i32) {
    %c0_i32 = arith.constant 0 : i32
    %c0_i32_0 = arith.constant 0 : i32
    %c0_i32_1 = arith.constant 0 : i32
    return %c0_i32, %c0_i32_0 : i32, i32
  }
  func.func @transform_5(%arg0: i32) -> (i32, i32) {
    %c0_i32 = arith.constant 0 : i32
    %c0_i32_0 = arith.constant 0 : i32
    return %arg0, %c0_i32 : i32, i32
  }
}

module attributes {stable_mosaic.version = 11 : i64} {
  func.func @_rep_bottleneck_kernel(%arg0: i32, %arg1: memref<1x16x16x16xbf16, #tpu.memory_space<vmem>>, %arg2: memref<9x16x16xbf16, #tpu.memory_space<vmem>>, %arg3: memref<1x16xf32, #tpu.memory_space<vmem>>, %arg4: memref<9x16x16xbf16, #tpu.memory_space<vmem>>, %arg5: memref<1x16xf32, #tpu.memory_space<vmem>>, %arg6: memref<1x16x16x16xbf16, #tpu.memory_space<vmem>>, %arg7: memref<18x32x16xbf16, #tpu.memory_space<vmem>>, %arg8: memref<18x32x16xbf16, #tpu.memory_space<vmem>>, %arg9: memref<18x32x16xbf16, #tpu.memory_space<vmem>>) attributes {dimension_semantics = [#tpu.dimension_semantics<parallel>], iteration_bounds = array<i64: 2>, scalar_prefetch = 0 : i64, scratch_operands = 3 : i64, tpu.core_type = #tpu.core_type<tc>, window_params = [{transform_indices = @transform_0, window_bounds = array<i64: 1, 16, 16, 16>}, {pipeline_mode = #tpu.pipeline_mode<synchronous>, transform_indices = @transform_1, window_bounds = array<i64: 9, 16, 16>}, {pipeline_mode = #tpu.pipeline_mode<synchronous>, transform_indices = @transform_2, window_bounds = array<i64: 1, 16>}, {pipeline_mode = #tpu.pipeline_mode<synchronous>, transform_indices = @transform_3, window_bounds = array<i64: 9, 16, 16>}, {pipeline_mode = #tpu.pipeline_mode<synchronous>, transform_indices = @transform_4, window_bounds = array<i64: 1, 16>}, {transform_indices = @transform_5, window_bounds = array<i64: 1, 16, 16, 16>}]} {
    %cst = arith.constant 0.000000e+00 : bf16
    %0 = vector.broadcast %cst : bf16 to vector<1x32x16xbf16>
    %cst_0 = arith.constant 0.000000e+00 : bf16
    %1 = vector.broadcast %cst_0 : bf16 to vector<18x1x16xbf16>
    %c0 = arith.constant 0 : index
    %c0_1 = arith.constant 0 : index
    %c0_2 = arith.constant 0 : index
    %2 = vector.load %arg7[%c0, %c0_1, %c0_2] : memref<18x32x16xbf16, #tpu.memory_space<vmem>>, vector<1x32x16xbf16>
    tpu.vector_store %arg7[%c0, %c0_1, %c0_2], %0 {strides = array<i32>} : memref<18x32x16xbf16, #tpu.memory_space<vmem>>, vector<1x32x16xbf16>,
    %c17 = arith.constant 17 : index
    %c0_3 = arith.constant 0 : index
    %c0_4 = arith.constant 0 : index
    %3 = vector.load %arg7[%c17, %c0_3, %c0_4] : memref<18x32x16xbf16, #tpu.memory_space<vmem>>, vector<1x32x16xbf16>
    tpu.vector_store %arg7[%c17, %c0_3, %c0_4], %0 {strides = array<i32>} : memref<18x32x16xbf16, #tpu.memory_space<vmem>>, vector<1x32x16xbf16>,
    %c0_5 = arith.constant 0 : index
    %c0_6 = arith.constant 0 : index
    %c0_7 = arith.constant 0 : index
    %4 = vector.load %arg8[%c0_5, %c0_6, %c0_7] : memref<18x32x16xbf16, #tpu.memory_space<vmem>>, vector<1x32x16xbf16>
    tpu.vector_store %arg8[%c0_5, %c0_6, %c0_7], %0 {strides = array<i32>} : memref<18x32x16xbf16, #tpu.memory_space<vmem>>, vector<1x32x16xbf16>,
    %c17_8 = arith.constant 17 : index
    %c0_9 = arith.constant 0 : index
    %c0_10 = arith.constant 0 : index
    %5 = vector.load %arg8[%c17_8, %c0_9, %c0_10] : memref<18x32x16xbf16, #tpu.memory_space<vmem>>, vector<1x32x16xbf16>
    tpu.vector_store %arg8[%c17_8, %c0_9, %c0_10], %0 {strides = array<i32>} : memref<18x32x16xbf16, #tpu.memory_space<vmem>>, vector<1x32x16xbf16>,
    %c0_11 = arith.constant 0 : index
    %c0_12 = arith.constant 0 : index
    %c0_13 = arith.constant 0 : index
    %6 = vector.load %arg9[%c0_11, %c0_12, %c0_13] : memref<18x32x16xbf16, #tpu.memory_space<vmem>>, vector<1x32x16xbf16>
    tpu.vector_store %arg9[%c0_11, %c0_12, %c0_13], %0 {strides = array<i32>} : memref<18x32x16xbf16, #tpu.memory_space<vmem>>, vector<1x32x16xbf16>,
    %c17_14 = arith.constant 17 : index
    %c0_15 = arith.constant 0 : index
    %c0_16 = arith.constant 0 : index
    %7 = vector.load %arg9[%c17_14, %c0_15, %c0_16] : memref<18x32x16xbf16, #tpu.memory_space<vmem>>, vector<1x32x16xbf16>
    tpu.vector_store %arg9[%c17_14, %c0_15, %c0_16], %0 {strides = array<i32>} : memref<18x32x16xbf16, #tpu.memory_space<vmem>>, vector<1x32x16xbf16>,
    %c0_17 = arith.constant 0 : index
    %c0_18 = arith.constant 0 : index
    %c0_19 = arith.constant 0 : index
    %8 = vector.load %arg7[%c0_17, %c0_18, %c0_19] : memref<18x32x16xbf16, #tpu.memory_space<vmem>>, vector<18x1x16xbf16>
    tpu.vector_store %arg7[%c0_17, %c0_18, %c0_19], %1 {strides = array<i32>} : memref<18x32x16xbf16, #tpu.memory_space<vmem>>, vector<18x1x16xbf16>,
    %c0_20 = arith.constant 0 : index
    %c15 = arith.constant 15 : index
    %c0_21 = arith.constant 0 : index
    %9 = vector.load %arg9[%c0_20, %c15, %c0_21] : memref<18x32x16xbf16, #tpu.memory_space<vmem>>, vector<18x1x16xbf16>
    tpu.vector_store %arg9[%c0_20, %c15, %c0_21], %1 {strides = array<i32>} : memref<18x32x16xbf16, #tpu.memory_space<vmem>>, vector<18x1x16xbf16>,
    %c0_22 = arith.constant 0 : index
    %c0_23 = arith.constant 0 : index
    %c0_24 = arith.constant 0 : index
    %c0_25 = arith.constant 0 : index
    %10 = vector.load %arg1[%c0_22, %c0_23, %c0_24, %c0_25] : memref<1x16x16x16xbf16, #tpu.memory_space<vmem>>, vector<1x16x16x16xbf16>
    %11 = vector.shape_cast %10 : vector<1x16x16x16xbf16> to vector<16x16x16xbf16>
    %c1 = arith.constant 1 : index
    %c1_26 = arith.constant 1 : index
    %c0_27 = arith.constant 0 : index
    %12 = vector.load %arg7[%c1, %c1_26, %c0_27] : memref<18x32x16xbf16, #tpu.memory_space<vmem>>, vector<16x16x16xbf16>
    tpu.vector_store %arg7[%c1, %c1_26, %c0_27], %11 {strides = array<i32>} : memref<18x32x16xbf16, #tpu.memory_space<vmem>>, vector<16x16x16xbf16>,
    %c1_28 = arith.constant 1 : index
    %c0_29 = arith.constant 0 : index
    %c0_30 = arith.constant 0 : index
    %13 = vector.load %arg8[%c1_28, %c0_29, %c0_30] : memref<18x32x16xbf16, #tpu.memory_space<vmem>>, vector<16x16x16xbf16>
    tpu.vector_store %arg8[%c1_28, %c0_29, %c0_30], %11 {strides = array<i32>} : memref<18x32x16xbf16, #tpu.memory_space<vmem>>, vector<16x16x16xbf16>,
    %14 = vector.extract_strided_slice %11 {offsets = [0, 1, 0], sizes = [16, 15, 16], strides = [1, 1, 1]} : vector<16x16x16xbf16> to vector<16x15x16xbf16>
    %c1_31 = arith.constant 1 : index
    %c0_32 = arith.constant 0 : index
    %c0_33 = arith.constant 0 : index
    %15 = vector.load %arg9[%c1_31, %c0_32, %c0_33] : memref<18x32x16xbf16, #tpu.memory_space<vmem>>, vector<16x15x16xbf16>
    tpu.vector_store %arg9[%c1_31, %c0_32, %c0_33], %14 {strides = array<i32>} : memref<18x32x16xbf16, #tpu.memory_space<vmem>>, vector<16x15x16xbf16>,
    %c0_34 = arith.constant 0 : index
    %c0_35 = arith.constant 0 : index
    %c0_36 = arith.constant 0 : index
    %16 = vector.load %arg7[%c0_34, %c0_35, %c0_36] : memref<18x32x16xbf16, #tpu.memory_space<vmem>>, vector<18x32x16xbf16>
    %c0_37 = arith.constant 0 : index
    %c0_38 = arith.constant 0 : index
    %c0_39 = arith.constant 0 : index
    %17 = vector.load %arg8[%c0_37, %c0_38, %c0_39] : memref<18x32x16xbf16, #tpu.memory_space<vmem>>, vector<18x32x16xbf16>
    %c0_40 = arith.constant 0 : index
    %c0_41 = arith.constant 0 : index
    %c0_42 = arith.constant 0 : index
    %18 = vector.load %arg9[%c0_40, %c0_41, %c0_42] : memref<18x32x16xbf16, #tpu.memory_space<vmem>>, vector<18x32x16xbf16>
    %19 = vector.extract_strided_slice %16 {offsets = [0, 0, 0], sizes = [16, 32, 16], strides = [1, 1, 1]} : vector<18x32x16xbf16> to vector<16x32x16xbf16>
    %20 = vector.shape_cast %19 : vector<16x32x16xbf16> to vector<512x16xbf16>
    %c0_43 = arith.constant 0 : index
    %c0_44 = arith.constant 0 : index
    %c0_45 = arith.constant 0 : index
    %21 = vector.load %arg2[%c0_43, %c0_44, %c0_45] : memref<9x16x16xbf16, #tpu.memory_space<vmem>>, vector<1x16x16xbf16>
    %22 = vector.shape_cast %21 : vector<1x16x16xbf16> to vector<16x16xbf16>
    %cst_46 = arith.constant dense<0.000000e+00> : vector<512x16xf32>
    %23 = tpu.matmul %20, %22, %cst_46 {dimension_numbers = #tpu.dot_dimension_numbers<[1], [0], [0], [1], [0, 0, 1, 1], [], []>} : vector<512x16xbf16>, vector<16x16xbf16>, vector<512x16xf32> -> vector<512x16xf32>
    %24 = vector.extract_strided_slice %17 {offsets = [0, 0, 0], sizes = [16, 32, 16], strides = [1, 1, 1]} : vector<18x32x16xbf16> to vector<16x32x16xbf16>
    %25 = vector.shape_cast %24 : vector<16x32x16xbf16> to vector<512x16xbf16>
    %c1_47 = arith.constant 1 : index
    %c0_48 = arith.constant 0 : index
    %c0_49 = arith.constant 0 : index
    %26 = vector.load %arg2[%c1_47, %c0_48, %c0_49] : memref<9x16x16xbf16, #tpu.memory_space<vmem>>, vector<1x16x16xbf16>
    %27 = vector.shape_cast %26 : vector<1x16x16xbf16> to vector<16x16xbf16>
    %cst_50 = arith.constant dense<0.000000e+00> : vector<512x16xf32>
    %28 = tpu.matmul %25, %27, %cst_50 {dimension_numbers = #tpu.dot_dimension_numbers<[1], [0], [0], [1], [0, 0, 1, 1], [], []>} : vector<512x16xbf16>, vector<16x16xbf16>, vector<512x16xf32> -> vector<512x16xf32>
    %29 = arith.addf %23, %28 : vector<512x16xf32>
    %30 = vector.extract_strided_slice %18 {offsets = [0, 0, 0], sizes = [16, 32, 16], strides = [1, 1, 1]} : vector<18x32x16xbf16> to vector<16x32x16xbf16>
    %31 = vector.shape_cast %30 : vector<16x32x16xbf16> to vector<512x16xbf16>
    %c2 = arith.constant 2 : index
    %c0_51 = arith.constant 0 : index
    %c0_52 = arith.constant 0 : index
    %32 = vector.load %arg2[%c2, %c0_51, %c0_52] : memref<9x16x16xbf16, #tpu.memory_space<vmem>>, vector<1x16x16xbf16>
    %33 = vector.shape_cast %32 : vector<1x16x16xbf16> to vector<16x16xbf16>
    %cst_53 = arith.constant dense<0.000000e+00> : vector<512x16xf32>
    %34 = tpu.matmul %31, %33, %cst_53 {dimension_numbers = #tpu.dot_dimension_numbers<[1], [0], [0], [1], [0, 0, 1, 1], [], []>} : vector<512x16xbf16>, vector<16x16xbf16>, vector<512x16xf32> -> vector<512x16xf32>
    %35 = arith.addf %29, %34 : vector<512x16xf32>
    %36 = vector.extract_strided_slice %16 {offsets = [1, 0, 0], sizes = [16, 32, 16], strides = [1, 1, 1]} : vector<18x32x16xbf16> to vector<16x32x16xbf16>
    %37 = vector.shape_cast %36 : vector<16x32x16xbf16> to vector<512x16xbf16>
    %c3 = arith.constant 3 : index
    %c0_54 = arith.constant 0 : index
    %c0_55 = arith.constant 0 : index
    %38 = vector.load %arg2[%c3, %c0_54, %c0_55] : memref<9x16x16xbf16, #tpu.memory_space<vmem>>, vector<1x16x16xbf16>
    %39 = vector.shape_cast %38 : vector<1x16x16xbf16> to vector<16x16xbf16>
    %cst_56 = arith.constant dense<0.000000e+00> : vector<512x16xf32>
    %40 = tpu.matmul %37, %39, %cst_56 {dimension_numbers = #tpu.dot_dimension_numbers<[1], [0], [0], [1], [0, 0, 1, 1], [], []>} : vector<512x16xbf16>, vector<16x16xbf16>, vector<512x16xf32> -> vector<512x16xf32>
    %41 = arith.addf %35, %40 : vector<512x16xf32>
    %42 = vector.extract_strided_slice %17 {offsets = [1, 0, 0], sizes = [16, 32, 16], strides = [1, 1, 1]} : vector<18x32x16xbf16> to vector<16x32x16xbf16>
    %43 = vector.shape_cast %42 : vector<16x32x16xbf16> to vector<512x16xbf16>
    %c4 = arith.constant 4 : index
    %c0_57 = arith.constant 0 : index
    %c0_58 = arith.constant 0 : index
    %44 = vector.load %arg2[%c4, %c0_57, %c0_58] : memref<9x16x16xbf16, #tpu.memory_space<vmem>>, vector<1x16x16xbf16>
    %45 = vector.shape_cast %44 : vector<1x16x16xbf16> to vector<16x16xbf16>
    %cst_59 = arith.constant dense<0.000000e+00> : vector<512x16xf32>
    %46 = tpu.matmul %43, %45, %cst_59 {dimension_numbers = #tpu.dot_dimension_numbers<[1], [0], [0], [1], [0, 0, 1, 1], [], []>} : vector<512x16xbf16>, vector<16x16xbf16>, vector<512x16xf32> -> vector<512x16xf32>
    %47 = arith.addf %41, %46 : vector<512x16xf32>
    %48 = vector.extract_strided_slice %18 {offsets = [1, 0, 0], sizes = [16, 32, 16], strides = [1, 1, 1]} : vector<18x32x16xbf16> to vector<16x32x16xbf16>
    %49 = vector.shape_cast %48 : vector<16x32x16xbf16> to vector<512x16xbf16>
    %c5 = arith.constant 5 : index
    %c0_60 = arith.constant 0 : index
    %c0_61 = arith.constant 0 : index
    %50 = vector.load %arg2[%c5, %c0_60, %c0_61] : memref<9x16x16xbf16, #tpu.memory_space<vmem>>, vector<1x16x16xbf16>
    %51 = vector.shape_cast %50 : vector<1x16x16xbf16> to vector<16x16xbf16>
    %cst_62 = arith.constant dense<0.000000e+00> : vector<512x16xf32>
    %52 = tpu.matmul %49, %51, %cst_62 {dimension_numbers = #tpu.dot_dimension_numbers<[1], [0], [0], [1], [0, 0, 1, 1], [], []>} : vector<512x16xbf16>, vector<16x16xbf16>, vector<512x16xf32> -> vector<512x16xf32>
    %53 = arith.addf %47, %52 : vector<512x16xf32>
    %54 = vector.extract_strided_slice %16 {offsets = [2, 0, 0], sizes = [16, 32, 16], strides = [1, 1, 1]} : vector<18x32x16xbf16> to vector<16x32x16xbf16>
    %55 = vector.shape_cast %54 : vector<16x32x16xbf16> to vector<512x16xbf16>
    %c6 = arith.constant 6 : index
    %c0_63 = arith.constant 0 : index
    %c0_64 = arith.constant 0 : index
    %56 = vector.load %arg2[%c6, %c0_63, %c0_64] : memref<9x16x16xbf16, #tpu.memory_space<vmem>>, vector<1x16x16xbf16>
    %57 = vector.shape_cast %56 : vector<1x16x16xbf16> to vector<16x16xbf16>
    %cst_65 = arith.constant dense<0.000000e+00> : vector<512x16xf32>
    %58 = tpu.matmul %55, %57, %cst_65 {dimension_numbers = #tpu.dot_dimension_numbers<[1], [0], [0], [1], [0, 0, 1, 1], [], []>} : vector<512x16xbf16>, vector<16x16xbf16>, vector<512x16xf32> -> vector<512x16xf32>
    %59 = arith.addf %53, %58 : vector<512x16xf32>
    %60 = vector.extract_strided_slice %17 {offsets = [2, 0, 0], sizes = [16, 32, 16], strides = [1, 1, 1]} : vector<18x32x16xbf16> to vector<16x32x16xbf16>
    %61 = vector.shape_cast %60 : vector<16x32x16xbf16> to vector<512x16xbf16>
    %c7 = arith.constant 7 : index
    %c0_66 = arith.constant 0 : index
    %c0_67 = arith.constant 0 : index
    %62 = vector.load %arg2[%c7, %c0_66, %c0_67] : memref<9x16x16xbf16, #tpu.memory_space<vmem>>, vector<1x16x16xbf16>
    %63 = vector.shape_cast %62 : vector<1x16x16xbf16> to vector<16x16xbf16>
    %cst_68 = arith.constant dense<0.000000e+00> : vector<512x16xf32>
    %64 = tpu.matmul %61, %63, %cst_68 {dimension_numbers = #tpu.dot_dimension_numbers<[1], [0], [0], [1], [0, 0, 1, 1], [], []>} : vector<512x16xbf16>, vector<16x16xbf16>, vector<512x16xf32> -> vector<512x16xf32>
    %65 = arith.addf %59, %64 : vector<512x16xf32>
    %66 = vector.extract_strided_slice %18 {offsets = [2, 0, 0], sizes = [16, 32, 16], strides = [1, 1, 1]} : vector<18x32x16xbf16> to vector<16x32x16xbf16>
    %67 = vector.shape_cast %66 : vector<16x32x16xbf16> to vector<512x16xbf16>
    %c8 = arith.constant 8 : index
    %c0_69 = arith.constant 0 : index
    %c0_70 = arith.constant 0 : index
    %68 = vector.load %arg2[%c8, %c0_69, %c0_70] : memref<9x16x16xbf16, #tpu.memory_space<vmem>>, vector<1x16x16xbf16>
    %69 = vector.shape_cast %68 : vector<1x16x16xbf16> to vector<16x16xbf16>
    %cst_71 = arith.constant dense<0.000000e+00> : vector<512x16xf32>
    %70 = tpu.matmul %67, %69, %cst_71 {dimension_numbers = #tpu.dot_dimension_numbers<[1], [0], [0], [1], [0, 0, 1, 1], [], []>} : vector<512x16xbf16>, vector<16x16xbf16>, vector<512x16xf32> -> vector<512x16xf32>
    %71 = arith.addf %65, %70 : vector<512x16xf32>
    %c0_72 = arith.constant 0 : index
    %c0_73 = arith.constant 0 : index
    %72 = vector.load %arg3[%c0_72, %c0_73] : memref<1x16xf32, #tpu.memory_space<vmem>>, vector<1x16xf32>
    %73 = vector.broadcast %72 : vector<1x16xf32> to vector<512x16xf32>
    %74 = arith.addf %71, %73 : vector<512x16xf32>
    %cst_74 = arith.constant 0.000000e+00 : f32
    %75 = vector.broadcast %cst_74 : f32 to vector<512x16xf32>
    %76 = arith.subf %75, %74 : vector<512x16xf32>
    %77 = math.exp %76 : vector<512x16xf32>
    %cst_75 = arith.constant 1.000000e+00 : f32
    %78 = vector.broadcast %cst_75 : f32 to vector<512x16xf32>
    %79 = arith.addf %78, %77 : vector<512x16xf32>
    %80 = tpu.reciprocal %79 {approx = true} : vector<512x16xf32> -> vector<512x16xf32>
    %81 = arith.mulf %74, %80 : vector<512x16xf32>
    %82 = vector.shape_cast %81 : vector<512x16xf32> to vector<16x32x16xf32>
    %83 = vector.extract_strided_slice %82 {offsets = [0, 0, 0], sizes = [16, 16, 16], strides = [1, 1, 1]} : vector<16x32x16xf32> to vector<16x16x16xf32>
    %84 = arith.truncf %83 : vector<16x16x16xf32> to vector<16x16x16xbf16>
    %c1_76 = arith.constant 1 : index
    %c1_77 = arith.constant 1 : index
    %c0_78 = arith.constant 0 : index
    %85 = vector.load %arg7[%c1_76, %c1_77, %c0_78] : memref<18x32x16xbf16, #tpu.memory_space<vmem>>, vector<16x16x16xbf16>
    tpu.vector_store %arg7[%c1_76, %c1_77, %c0_78], %84 {strides = array<i32>} : memref<18x32x16xbf16, #tpu.memory_space<vmem>>, vector<16x16x16xbf16>,
    %c1_79 = arith.constant 1 : index
    %c0_80 = arith.constant 0 : index
    %c0_81 = arith.constant 0 : index
    %86 = vector.load %arg8[%c1_79, %c0_80, %c0_81] : memref<18x32x16xbf16, #tpu.memory_space<vmem>>, vector<16x16x16xbf16>
    tpu.vector_store %arg8[%c1_79, %c0_80, %c0_81], %84 {strides = array<i32>} : memref<18x32x16xbf16, #tpu.memory_space<vmem>>, vector<16x16x16xbf16>,
    %87 = vector.extract_strided_slice %84 {offsets = [0, 1, 0], sizes = [16, 15, 16], strides = [1, 1, 1]} : vector<16x16x16xbf16> to vector<16x15x16xbf16>
    %c1_82 = arith.constant 1 : index
    %c0_83 = arith.constant 0 : index
    %c0_84 = arith.constant 0 : index
    %88 = vector.load %arg9[%c1_82, %c0_83, %c0_84] : memref<18x32x16xbf16, #tpu.memory_space<vmem>>, vector<16x15x16xbf16>
    tpu.vector_store %arg9[%c1_82, %c0_83, %c0_84], %87 {strides = array<i32>} : memref<18x32x16xbf16, #tpu.memory_space<vmem>>, vector<16x15x16xbf16>,
    %c0_85 = arith.constant 0 : index
    %c0_86 = arith.constant 0 : index
    %c0_87 = arith.constant 0 : index
    %89 = vector.load %arg7[%c0_85, %c0_86, %c0_87] : memref<18x32x16xbf16, #tpu.memory_space<vmem>>, vector<18x32x16xbf16>
    %c0_88 = arith.constant 0 : index
    %c0_89 = arith.constant 0 : index
    %c0_90 = arith.constant 0 : index
    %90 = vector.load %arg8[%c0_88, %c0_89, %c0_90] : memref<18x32x16xbf16, #tpu.memory_space<vmem>>, vector<18x32x16xbf16>
    %c0_91 = arith.constant 0 : index
    %c0_92 = arith.constant 0 : index
    %c0_93 = arith.constant 0 : index
    %91 = vector.load %arg9[%c0_91, %c0_92, %c0_93] : memref<18x32x16xbf16, #tpu.memory_space<vmem>>, vector<18x32x16xbf16>
    %92 = vector.extract_strided_slice %89 {offsets = [0, 0, 0], sizes = [16, 32, 16], strides = [1, 1, 1]} : vector<18x32x16xbf16> to vector<16x32x16xbf16>
    %93 = vector.shape_cast %92 : vector<16x32x16xbf16> to vector<512x16xbf16>
    %c0_94 = arith.constant 0 : index
    %c0_95 = arith.constant 0 : index
    %c0_96 = arith.constant 0 : index
    %94 = vector.load %arg4[%c0_94, %c0_95, %c0_96] : memref<9x16x16xbf16, #tpu.memory_space<vmem>>, vector<1x16x16xbf16>
    %95 = vector.shape_cast %94 : vector<1x16x16xbf16> to vector<16x16xbf16>
    %cst_97 = arith.constant dense<0.000000e+00> : vector<512x16xf32>
    %96 = tpu.matmul %93, %95, %cst_97 {dimension_numbers = #tpu.dot_dimension_numbers<[1], [0], [0], [1], [0, 0, 1, 1], [], []>} : vector<512x16xbf16>, vector<16x16xbf16>, vector<512x16xf32> -> vector<512x16xf32>
    %97 = vector.extract_strided_slice %90 {offsets = [0, 0, 0], sizes = [16, 32, 16], strides = [1, 1, 1]} : vector<18x32x16xbf16> to vector<16x32x16xbf16>
    %98 = vector.shape_cast %97 : vector<16x32x16xbf16> to vector<512x16xbf16>
    %c1_98 = arith.constant 1 : index
    %c0_99 = arith.constant 0 : index
    %c0_100 = arith.constant 0 : index
    %99 = vector.load %arg4[%c1_98, %c0_99, %c0_100] : memref<9x16x16xbf16, #tpu.memory_space<vmem>>, vector<1x16x16xbf16>
    %100 = vector.shape_cast %99 : vector<1x16x16xbf16> to vector<16x16xbf16>
    %cst_101 = arith.constant dense<0.000000e+00> : vector<512x16xf32>
    %101 = tpu.matmul %98, %100, %cst_101 {dimension_numbers = #tpu.dot_dimension_numbers<[1], [0], [0], [1], [0, 0, 1, 1], [], []>} : vector<512x16xbf16>, vector<16x16xbf16>, vector<512x16xf32> -> vector<512x16xf32>
    %102 = arith.addf %96, %101 : vector<512x16xf32>
    %103 = vector.extract_strided_slice %91 {offsets = [0, 0, 0], sizes = [16, 32, 16], strides = [1, 1, 1]} : vector<18x32x16xbf16> to vector<16x32x16xbf16>
    %104 = vector.shape_cast %103 : vector<16x32x16xbf16> to vector<512x16xbf16>
    %c2_102 = arith.constant 2 : index
    %c0_103 = arith.constant 0 : index
    %c0_104 = arith.constant 0 : index
    %105 = vector.load %arg4[%c2_102, %c0_103, %c0_104] : memref<9x16x16xbf16, #tpu.memory_space<vmem>>, vector<1x16x16xbf16>
    %106 = vector.shape_cast %105 : vector<1x16x16xbf16> to vector<16x16xbf16>
    %cst_105 = arith.constant dense<0.000000e+00> : vector<512x16xf32>
    %107 = tpu.matmul %104, %106, %cst_105 {dimension_numbers = #tpu.dot_dimension_numbers<[1], [0], [0], [1], [0, 0, 1, 1], [], []>} : vector<512x16xbf16>, vector<16x16xbf16>, vector<512x16xf32> -> vector<512x16xf32>
    %108 = arith.addf %102, %107 : vector<512x16xf32>
    %109 = vector.extract_strided_slice %89 {offsets = [1, 0, 0], sizes = [16, 32, 16], strides = [1, 1, 1]} : vector<18x32x16xbf16> to vector<16x32x16xbf16>
    %110 = vector.shape_cast %109 : vector<16x32x16xbf16> to vector<512x16xbf16>
    %c3_106 = arith.constant 3 : index
    %c0_107 = arith.constant 0 : index
    %c0_108 = arith.constant 0 : index
    %111 = vector.load %arg4[%c3_106, %c0_107, %c0_108] : memref<9x16x16xbf16, #tpu.memory_space<vmem>>, vector<1x16x16xbf16>
    %112 = vector.shape_cast %111 : vector<1x16x16xbf16> to vector<16x16xbf16>
    %cst_109 = arith.constant dense<0.000000e+00> : vector<512x16xf32>
    %113 = tpu.matmul %110, %112, %cst_109 {dimension_numbers = #tpu.dot_dimension_numbers<[1], [0], [0], [1], [0, 0, 1, 1], [], []>} : vector<512x16xbf16>, vector<16x16xbf16>, vector<512x16xf32> -> vector<512x16xf32>
    %114 = arith.addf %108, %113 : vector<512x16xf32>
    %115 = vector.extract_strided_slice %90 {offsets = [1, 0, 0], sizes = [16, 32, 16], strides = [1, 1, 1]} : vector<18x32x16xbf16> to vector<16x32x16xbf16>
    %116 = vector.shape_cast %115 : vector<16x32x16xbf16> to vector<512x16xbf16>
    %c4_110 = arith.constant 4 : index
    %c0_111 = arith.constant 0 : index
    %c0_112 = arith.constant 0 : index
    %117 = vector.load %arg4[%c4_110, %c0_111, %c0_112] : memref<9x16x16xbf16, #tpu.memory_space<vmem>>, vector<1x16x16xbf16>
    %118 = vector.shape_cast %117 : vector<1x16x16xbf16> to vector<16x16xbf16>
    %cst_113 = arith.constant dense<0.000000e+00> : vector<512x16xf32>
    %119 = tpu.matmul %116, %118, %cst_113 {dimension_numbers = #tpu.dot_dimension_numbers<[1], [0], [0], [1], [0, 0, 1, 1], [], []>} : vector<512x16xbf16>, vector<16x16xbf16>, vector<512x16xf32> -> vector<512x16xf32>
    %120 = arith.addf %114, %119 : vector<512x16xf32>
    %121 = vector.extract_strided_slice %91 {offsets = [1, 0, 0], sizes = [16, 32, 16], strides = [1, 1, 1]} : vector<18x32x16xbf16> to vector<16x32x16xbf16>
    %122 = vector.shape_cast %121 : vector<16x32x16xbf16> to vector<512x16xbf16>
    %c5_114 = arith.constant 5 : index
    %c0_115 = arith.constant 0 : index
    %c0_116 = arith.constant 0 : index
    %123 = vector.load %arg4[%c5_114, %c0_115, %c0_116] : memref<9x16x16xbf16, #tpu.memory_space<vmem>>, vector<1x16x16xbf16>
    %124 = vector.shape_cast %123 : vector<1x16x16xbf16> to vector<16x16xbf16>
    %cst_117 = arith.constant dense<0.000000e+00> : vector<512x16xf32>
    %125 = tpu.matmul %122, %124, %cst_117 {dimension_numbers = #tpu.dot_dimension_numbers<[1], [0], [0], [1], [0, 0, 1, 1], [], []>} : vector<512x16xbf16>, vector<16x16xbf16>, vector<512x16xf32> -> vector<512x16xf32>
    %126 = arith.addf %120, %125 : vector<512x16xf32>
    %127 = vector.extract_strided_slice %89 {offsets = [2, 0, 0], sizes = [16, 32, 16], strides = [1, 1, 1]} : vector<18x32x16xbf16> to vector<16x32x16xbf16>
    %128 = vector.shape_cast %127 : vector<16x32x16xbf16> to vector<512x16xbf16>
    %c6_118 = arith.constant 6 : index
    %c0_119 = arith.constant 0 : index
    %c0_120 = arith.constant 0 : index
    %129 = vector.load %arg4[%c6_118, %c0_119, %c0_120] : memref<9x16x16xbf16, #tpu.memory_space<vmem>>, vector<1x16x16xbf16>
    %130 = vector.shape_cast %129 : vector<1x16x16xbf16> to vector<16x16xbf16>
    %cst_121 = arith.constant dense<0.000000e+00> : vector<512x16xf32>
    %131 = tpu.matmul %128, %130, %cst_121 {dimension_numbers = #tpu.dot_dimension_numbers<[1], [0], [0], [1], [0, 0, 1, 1], [], []>} : vector<512x16xbf16>, vector<16x16xbf16>, vector<512x16xf32> -> vector<512x16xf32>
    %132 = arith.addf %126, %131 : vector<512x16xf32>
    %133 = vector.extract_strided_slice %90 {offsets = [2, 0, 0], sizes = [16, 32, 16], strides = [1, 1, 1]} : vector<18x32x16xbf16> to vector<16x32x16xbf16>
    %134 = vector.shape_cast %133 : vector<16x32x16xbf16> to vector<512x16xbf16>
    %c7_122 = arith.constant 7 : index
    %c0_123 = arith.constant 0 : index
    %c0_124 = arith.constant 0 : index
    %135 = vector.load %arg4[%c7_122, %c0_123, %c0_124] : memref<9x16x16xbf16, #tpu.memory_space<vmem>>, vector<1x16x16xbf16>
    %136 = vector.shape_cast %135 : vector<1x16x16xbf16> to vector<16x16xbf16>
    %cst_125 = arith.constant dense<0.000000e+00> : vector<512x16xf32>
    %137 = tpu.matmul %134, %136, %cst_125 {dimension_numbers = #tpu.dot_dimension_numbers<[1], [0], [0], [1], [0, 0, 1, 1], [], []>} : vector<512x16xbf16>, vector<16x16xbf16>, vector<512x16xf32> -> vector<512x16xf32>
    %138 = arith.addf %132, %137 : vector<512x16xf32>
    %139 = vector.extract_strided_slice %91 {offsets = [2, 0, 0], sizes = [16, 32, 16], strides = [1, 1, 1]} : vector<18x32x16xbf16> to vector<16x32x16xbf16>
    %140 = vector.shape_cast %139 : vector<16x32x16xbf16> to vector<512x16xbf16>
    %c8_126 = arith.constant 8 : index
    %c0_127 = arith.constant 0 : index
    %c0_128 = arith.constant 0 : index
    %141 = vector.load %arg4[%c8_126, %c0_127, %c0_128] : memref<9x16x16xbf16, #tpu.memory_space<vmem>>, vector<1x16x16xbf16>
    %142 = vector.shape_cast %141 : vector<1x16x16xbf16> to vector<16x16xbf16>
    %cst_129 = arith.constant dense<0.000000e+00> : vector<512x16xf32>
    %143 = tpu.matmul %140, %142, %cst_129 {dimension_numbers = #tpu.dot_dimension_numbers<[1], [0], [0], [1], [0, 0, 1, 1], [], []>} : vector<512x16xbf16>, vector<16x16xbf16>, vector<512x16xf32> -> vector<512x16xf32>
    %144 = arith.addf %138, %143 : vector<512x16xf32>
    %c0_130 = arith.constant 0 : index
    %c0_131 = arith.constant 0 : index
    %145 = vector.load %arg5[%c0_130, %c0_131] : memref<1x16xf32, #tpu.memory_space<vmem>>, vector<1x16xf32>
    %146 = vector.broadcast %145 : vector<1x16xf32> to vector<512x16xf32>
    %147 = arith.addf %144, %146 : vector<512x16xf32>
    %cst_132 = arith.constant 0.000000e+00 : f32
    %148 = vector.broadcast %cst_132 : f32 to vector<512x16xf32>
    %149 = arith.subf %148, %147 : vector<512x16xf32>
    %150 = math.exp %149 : vector<512x16xf32>
    %cst_133 = arith.constant 1.000000e+00 : f32
    %151 = vector.broadcast %cst_133 : f32 to vector<512x16xf32>
    %152 = arith.addf %151, %150 : vector<512x16xf32>
    %153 = tpu.reciprocal %152 {approx = true} : vector<512x16xf32> -> vector<512x16xf32>
    %154 = arith.mulf %147, %153 : vector<512x16xf32>
    %155 = vector.shape_cast %154 : vector<512x16xf32> to vector<16x32x16xf32>
    %156 = vector.extract_strided_slice %155 {offsets = [0, 0, 0], sizes = [16, 16, 16], strides = [1, 1, 1]} : vector<16x32x16xf32> to vector<16x16x16xf32>
    %157 = arith.extf %11 : vector<16x16x16xbf16> to vector<16x16x16xf32>
    %158 = arith.addf %157, %156 : vector<16x16x16xf32>
    %159 = arith.truncf %158 : vector<16x16x16xf32> to vector<16x16x16xbf16>
    %c0_134 = arith.constant 0 : index
    %c0_135 = arith.constant 0 : index
    %c0_136 = arith.constant 0 : index
    %c0_137 = arith.constant 0 : index
    %160 = vector.load %arg6[%c0_134, %c0_135, %c0_136, %c0_137] : memref<1x16x16x16xbf16, #tpu.memory_space<vmem>>, vector<1x16x16x16xbf16>
    %161 = vector.shape_cast %160 : vector<1x16x16x16xbf16> to vector<16x16x16xbf16>
    %162 = vector.shape_cast %159 : vector<16x16x16xbf16> to vector<1x16x16x16xbf16>
    tpu.vector_store %arg6[%c0_134, %c0_135, %c0_136, %c0_137], %162 {strides = array<i32>} : memref<1x16x16x16xbf16, #tpu.memory_space<vmem>>, vector<1x16x16x16xbf16>,
    return
  }
  func.func @transform_0(%arg0: i32) -> (i32, i32, i32, i32) {
    %c0_i32 = arith.constant 0 : i32
    %c0_i32_0 = arith.constant 0 : i32
    %c0_i32_1 = arith.constant 0 : i32
    %c0_i32_2 = arith.constant 0 : i32
    return %arg0, %c0_i32, %c0_i32_0, %c0_i32_1 : i32, i32, i32, i32
  }
  func.func @transform_1(%arg0: i32) -> (i32, i32, i32) {
    %c0_i32 = arith.constant 0 : i32
    %c0_i32_0 = arith.constant 0 : i32
    %c0_i32_1 = arith.constant 0 : i32
    %c0_i32_2 = arith.constant 0 : i32
    return %c0_i32, %c0_i32_0, %c0_i32_1 : i32, i32, i32
  }
  func.func @transform_2(%arg0: i32) -> (i32, i32) {
    %c0_i32 = arith.constant 0 : i32
    %c0_i32_0 = arith.constant 0 : i32
    %c0_i32_1 = arith.constant 0 : i32
    return %c0_i32, %c0_i32_0 : i32, i32
  }
  func.func @transform_3(%arg0: i32) -> (i32, i32, i32) {
    %c0_i32 = arith.constant 0 : i32
    %c0_i32_0 = arith.constant 0 : i32
    %c0_i32_1 = arith.constant 0 : i32
    %c0_i32_2 = arith.constant 0 : i32
    return %c0_i32, %c0_i32_0, %c0_i32_1 : i32, i32, i32
  }
  func.func @transform_4(%arg0: i32) -> (i32, i32) {
    %c0_i32 = arith.constant 0 : i32
    %c0_i32_0 = arith.constant 0 : i32
    %c0_i32_1 = arith.constant 0 : i32
    return %c0_i32, %c0_i32_0 : i32, i32
  }
  func.func @transform_5(%arg0: i32) -> (i32, i32, i32, i32) {
    %c0_i32 = arith.constant 0 : i32
    %c0_i32_0 = arith.constant 0 : i32
    %c0_i32_1 = arith.constant 0 : i32
    %c0_i32_2 = arith.constant 0 : i32
    return %arg0, %c0_i32, %c0_i32_0, %c0_i32_1 : i32, i32, i32, i32
  }
}

</mosaic_0001>

<llo_original>
// kernel: repcsp_forward.7
$region0: #{repcsp_forward.7}
  #allocation0 [shape = 'u32[]', space=smem, size = 0x4, offset = 0x4, fixed_abs, tag = 'smem constant byte address 0x4 - core index']
  #allocation1 [shape = 'u32[72,128]{1,0:T(1,128)}', space=vmem, size = 0x9000, scoped, tag = 'internal scratch']
  %s0 = inlined_call_operand.vmem [shape: bf16[512,16], index: 0, kind: input, shape index: {}]
  %s1 = inlined_call_operand.vmem [shape: bf16[512,16], index: 1, kind: input, shape index: {}]
  %s2 = inlined_call_operand.vmem [shape: bf16[16,32], index: 2, kind: input, shape index: {}]
  %s3 = inlined_call_operand.vmem [shape: bf16[16,32], index: 3, kind: input, shape index: {}]
  %s4 = inlined_call_operand.vmem [shape: f32[1,32], index: 4, kind: input, shape index: {}]
  %s5 = inlined_call_operand.hbm [shape: f32[512,32], index: 5, kind: output, shape index: {}]
  %s6 = sld [smem:[#allocation0]]
  $region30: #{repcsp_forward.7} parent=0
    _
  %s8 = ssub.s32 1, %s6
  %s9 = scalar_select 0, %s8, %s6
  $region1: #{repcsp_forward.7} parent=0
    #allocation2 [shape = 'u8[262144]{0}', space=vmem, size = 0x40000, scoped, tag = 'output window, operand 0, single buffered']
    #allocation3 [shape = 's32[1]{0}', space=sflag, size = 0x4, scoped, tag = 'scoped memory for repcsp_forward.7']
    %10 = vsyncpa [#allocation3], 0
    // Predicated region
    $region2: #{repcsp_forward.7} parent=1 // pred_check
      _
    $region3: #{repcsp_forward.7} parent=1 // pred_check_branch
      %12 = sbr.rel (0) target = $region5
    $region4: #{repcsp_forward.7} parent=1 // pred_region
      _
    $region5: #{repcsp_forward.7} parent=1 // pred_fallthru
      _
    // Predicated region
    $region6: #{repcsp_forward.7} parent=1 // pred_check
      _
    $region7: #{repcsp_forward.7} parent=1 // pred_check_branch
      %14 = sbr.rel (0) target = $region9
    $region8: #{repcsp_forward.7} parent=1 // pred_region
      _
    $region9: #{repcsp_forward.7} parent=1 // pred_fallthru
      _
    // Predicated region
    $region10: #{repcsp_forward.7} parent=1 // pred_check
      _
    $region11: #{repcsp_forward.7} parent=1 // pred_check_branch
      %16 = sbr.rel (0) target = $region13
    $region12: #{repcsp_forward.7} parent=1 // pred_region
      _
    $region13: #{repcsp_forward.7} parent=1 // pred_fallthru
      _
    // Predicated region
    $region14: #{repcsp_forward.7} parent=1 // pred_check
      _
    $region15: #{repcsp_forward.7} parent=1 // pred_check_branch
      %18 = sbr.rel (0) target = $region17
    $region16: #{repcsp_forward.7} parent=1 // pred_region
      _
    $region17: #{repcsp_forward.7} parent=1 // pred_fallthru
      _
    // Predicated region
    $region18: #{repcsp_forward.7} parent=1 // pred_check
      _
    $region19: #{repcsp_forward.7} parent=1 // pred_check_branch
      %20 = sbr.rel (0) target = $region21
    $region20: #{repcsp_forward.7} parent=1 // pred_region
      _
    $region21: #{repcsp_forward.7} parent=1 // pred_fallthru
      _
    %v22 = vld [vmem:[%s0] sm:$0xf]
    %v23 = vld [vmem:[%s0 + $0x4] sm:$0xf]
    %v24 = vld [vmem:[%s0 + $0x8] sm:$0xf]
    %v25 = vld [vmem:[%s0 + $0xc] sm:$0xf]
    %v26 = vld [vmem:[%s0 + $0x10] sm:$0xf]
    %v27 = vld [vmem:[%s0 + $0x14] sm:$0xf]
    %v28 = vld [vmem:[%s0 + $0x18] sm:$0xf]
    %v29 = vld [vmem:[%s0 + $0x1c] sm:$0xf]
    %v30 = vld [vmem:[%s0 + $0x20] sm:$0xf]
    %v31 = vld [vmem:[%s0 + $0x24] sm:$0xf]
    %v32 = vld [vmem:[%s0 + $0x28] sm:$0xf]
    %v33 = vld [vmem:[%s0 + $0x2c] sm:$0xf]
    %v34 = vld [vmem:[%s0 + $0x30] sm:$0xf]
    %v35 = vld [vmem:[%s0 + $0x34] sm:$0xf]
    %v36 = vld [vmem:[%s0 + $0x38] sm:$0xf]
    %v37 = vld [vmem:[%s0 + $0x3c] sm:$0xf]
    %v38 = vld [vmem:[%s0 + $0x40] sm:$0xf]
    %v39 = vld [vmem:[%s0 + $0x44] sm:$0xf]
    %v40 = vld [vmem:[%s0 + $0x48] sm:$0xf]
    %v41 = vld [vmem:[%s0 + $0x4c] sm:$0xf]
    %v42 = vld [vmem:[%s0 + $0x50] sm:$0xf]
    %v43 = vld [vmem:[%s0 + $0x54] sm:$0xf]
    %v44 = vld [vmem:[%s0 + $0x58] sm:$0xf]
    %v45 = vld [vmem:[%s0 + $0x5c] sm:$0xf]
    %v46 = vld [vmem:[%s0 + $0x60] sm:$0xf]
    %v47 = vld [vmem:[%s0 + $0x64] sm:$0xf]
    %v48 = vld [vmem:[%s0 + $0x68] sm:$0xf]
    %v49 = vld [vmem:[%s0 + $0x6c] sm:$0xf]
    %v50 = vld [vmem:[%s0 + $0x70] sm:$0xf]
    %v51 = vld [vmem:[%s0 + $0x74] sm:$0xf]
    %v52 = vld [vmem:[%s0 + $0x78] sm:$0xf]
    %v53 = vld [vmem:[%s0 + $0x7c] sm:$0xf]
    %v54 = vld [vmem:[%s0 + $0x80] sm:$0xf]
    %v55 = vld [vmem:[%s0 + $0x84] sm:$0xf]
    %v56 = vld [vmem:[%s0 + $0x88] sm:$0xf]
    %v57 = vld [vmem:[%s0 + $0x8c] sm:$0xf]
    %v58 = vld [vmem:[%s0 + $0x90] sm:$0xf]
    %v59 = vld [vmem:[%s0 + $0x94] sm:$0xf]
    %v60 = vld [vmem:[%s0 + $0x98] sm:$0xf]
    %v61 = vld [vmem:[%s0 + $0x9c] sm:$0xf]
    %v62 = vld [vmem:[%s0 + $0xa0] sm:$0xf]
    %v63 = vld [vmem:[%s0 + $0xa4] sm:$0xf]
    %v64 = vld [vmem:[%s0 + $0xa8] sm:$0xf]
    %v65 = vld [vmem:[%s0 + $0xac] sm:$0xf]
    %v66 = vld [vmem:[%s0 + $0xb0] sm:$0xf]
    %v67 = vld [vmem:[%s0 + $0xb4] sm:$0xf]
    %v68 = vld [vmem:[%s0 + $0xb8] sm:$0xf]
    %v69 = vld [vmem:[%s0 + $0xbc] sm:$0xf]
    %v70 = vld [vmem:[%s0 + $0xc0] sm:$0xf]
    %v71 = vld [vmem:[%s0 + $0xc4] sm:$0xf]
    %v72 = vld [vmem:[%s0 + $0xc8] sm:$0xf]
    %v73 = vld [vmem:[%s0 + $0xcc] sm:$0xf]
    %v74 = vld [vmem:[%s0 + $0xd0] sm:$0xf]
    %v75 = vld [vmem:[%s0 + $0xd4] sm:$0xf]
    %v76 = vld [vmem:[%s0 + $0xd8] sm:$0xf]
    %v77 = vld [vmem:[%s0 + $0xdc] sm:$0xf]
    %v78 = vld [vmem:[%s0 + $0xe0] sm:$0xf]
    %v79 = vld [vmem:[%s0 + $0xe4] sm:$0xf]
    %v80 = vld [vmem:[%s0 + $0xe8] sm:$0xf]
    %v81 = vld [vmem:[%s0 + $0xec] sm:$0xf]
    %v82 = vld [vmem:[%s0 + $0xf0] sm:$0xf]
    %v83 = vld [vmem:[%s0 + $0xf4] sm:$0xf]
    %v84 = vld [vmem:[%s0 + $0xf8] sm:$0xf]
    %v85 = vld [vmem:[%s0 + $0xfc] sm:$0xf]
    %v86 = vld [vmem:[%s2] sm:$0xf]
    %v87 = vld [vmem:[%s2 + $0x4] sm:$0xf]
    %v88 = vld [vmem:[%s1] sm:$0xf]
    %v89 = vld [vmem:[%s1 + $0x4] sm:$0xf]
    %v90 = vld [vmem:[%s1 + $0x8] sm:$0xf]
    %v91 = vld [vmem:[%s1 + $0xc] sm:$0xf]
    %v92 = vld [vmem:[%s1 + $0x10] sm:$0xf]
    %v93 = vld [vmem:[%s1 + $0x14] sm:$0xf]
    %v94 = vld [vmem:[%s1 + $0x18] sm:$0xf]
    %v95 = vld [vmem:[%s1 + $0x1c] sm:$0xf]
    %v96 = vld [vmem:[%s1 + $0x20] sm:$0xf]
    %v97 = vld [vmem:[%s1 + $0x24] sm:$0xf]
    %v98 = vld [vmem:[%s1 + $0x28] sm:$0xf]
    %v99 = vld [vmem:[%s1 + $0x2c] sm:$0xf]
    %v100 = vld [vmem:[%s1 + $0x30] sm:$0xf]
    %v101 = vld [vmem:[%s1 + $0x34] sm:$0xf]
    %v102 = vld [vmem:[%s1 + $0x38] sm:$0xf]
    %v103 = vld [vmem:[%s1 + $0x3c] sm:$0xf]
    %v104 = vld [vmem:[%s1 + $0x40] sm:$0xf]
    %v105 = vld [vmem:[%s1 + $0x44] sm:$0xf]
    %v106 = vld [vmem:[%s1 + $0x48] sm:$0xf]
    %v107 = vld [vmem:[%s1 + $0x4c] sm:$0xf]
    %v108 = vld [vmem:[%s1 + $0x50] sm:$0xf]
    %v109 = vld [vmem:[%s1 + $0x54] sm:$0xf]
    %v110 = vld [vmem:[%s1 + $0x58] sm:$0xf]
    %v111 = vld [vmem:[%s1 + $0x5c] sm:$0xf]
    %v112 = vld [vmem:[%s1 + $0x60] sm:$0xf]
    %v113 = vld [vmem:[%s1 + $0x64] sm:$0xf]
    %v114 = vld [vmem:[%s1 + $0x68] sm:$0xf]
    %v115 = vld [vmem:[%s1 + $0x6c] sm:$0xf]
    %v116 = vld [vmem:[%s1 + $0x70] sm:$0xf]
    %v117 = vld [vmem:[%s1 + $0x74] sm:$0xf]
    %v118 = vld [vmem:[%s1 + $0x78] sm:$0xf]
    %v119 = vld [vmem:[%s1 + $0x7c] sm:$0xf]
    %v120 = vld [vmem:[%s1 + $0x80] sm:$0xf]
    %v121 = vld [vmem:[%s1 + $0x84] sm:$0xf]
    %v122 = vld [vmem:[%s1 + $0x88] sm:$0xf]
    %v123 = vld [vmem:[%s1 + $0x8c] sm:$0xf]
    %v124 = vld [vmem:[%s1 + $0x90] sm:$0xf]
    %v125 = vld [vmem:[%s1 + $0x94] sm:$0xf]
    %v126 = vld [vmem:[%s1 + $0x98] sm:$0xf]
    %v127 = vld [vmem:[%s1 + $0x9c] sm:$0xf]
    %v128 = vld [vmem:[%s1 + $0xa0] sm:$0xf]
    %v129 = vld [vmem:[%s1 + $0xa4] sm:$0xf]
    %v130 = vld [vmem:[%s1 + $0xa8] sm:$0xf]
    %v131 = vld [vmem:[%s1 + $0xac] sm:$0xf]
    %v132 = vld [vmem:[%s1 + $0xb0] sm:$0xf]
    %v133 = vld [vmem:[%s1 + $0xb4] sm:$0xf]
    %v134 = vld [vmem:[%s1 + $0xb8] sm:$0xf]
    %v135 = vld [vmem:[%s1 + $0xbc] sm:$0xf]
    %v136 = vld [vmem:[%s1 + $0xc0] sm:$0xf]
    %v137 = vld [vmem:[%s1 + $0xc4] sm:$0xf]
    %v138 = vld [vmem:[%s1 + $0xc8] sm:$0xf]
    %v139 = vld [vmem:[%s1 + $0xcc] sm:$0xf]
    %v140 = vld [vmem:[%s1 + $0xd0] sm:$0xf]
    %v141 = vld [vmem:[%s1 + $0xd4] sm:$0xf]
    %v142 = vld [vmem:[%s1 + $0xd8] sm:$0xf]
    %v143 = vld [vmem:[%s1 + $0xdc] sm:$0xf]
    %v144 = vld [vmem:[%s1 + $0xe0] sm:$0xf]
    %v145 = vld [vmem:[%s1 + $0xe4] sm:$0xf]
    %v146 = vld [vmem:[%s1 + $0xe8] sm:$0xf]
    %v147 = vld [vmem:[%s1 + $0xec] sm:$0xf]
    %v148 = vld [vmem:[%s1 + $0xf0] sm:$0xf]
    %v149 = vld [vmem:[%s1 + $0xf4] sm:$0xf]
    %v150 = vld [vmem:[%s1 + $0xf8] sm:$0xf]
    %v151 = vld [vmem:[%s1 + $0xfc] sm:$0xf]
    %v152 = vld [vmem:[%s3] sm:$0xf]
    %v153 = vld [vmem:[%s3 + $0x4] sm:$0xf]
    %v218 = vunpack.c.l.b16 %v88
    %v219 = vunpack.c.l.b16 %v89
    %v220 = vunpack.c.l.b16 %v90
    %v221 = vunpack.c.l.b16 %v91
    %v222 = vunpack.c.l.b16 %v92
    %v223 = vunpack.c.l.b16 %v93
    %v224 = vunpack.c.l.b16 %v94
    %v225 = vunpack.c.l.b16 %v95
    %v226 = vunpack.c.l.b16 %v96
    %v227 = vunpack.c.l.b16 %v97
    %v228 = vunpack.c.l.b16 %v98
    %v229 = vunpack.c.l.b16 %v99
    %v230 = vunpack.c.l.b16 %v100
    %v231 = vunpack.c.l.b16 %v101
    %v232 = vunpack.c.l.b16 %v102
    %v233 = vunpack.c.l.b16 %v103
    %v234 = vunpack.c.l.b16 %v104
    %v235 = vunpack.c.l.b16 %v105
    %v236 = vunpack.c.l.b16 %v106
    %v237 = vunpack.c.l.b16 %v107
    %v238 = vunpack.c.l.b16 %v108
    %v239 = vunpack.c.l.b16 %v109
    %v240 = vunpack.c.l.b16 %v110
    %v241 = vunpack.c.l.b16 %v111
    %v242 = vunpack.c.l.b16 %v112
    %v243 = vunpack.c.l.b16 %v113
    %v244 = vunpack.c.l.b16 %v114
    %v245 = vunpack.c.l.b16 %v115
    %v246 = vunpack.c.l.b16 %v116
    %v247 = vunpack.c.l.b16 %v117
    %v248 = vunpack.c.l.b16 %v118
    %v249 = vunpack.c.l.b16 %v119
    %v250 = vunpack.c.l.b16 %v120
    %v251 = vunpack.c.l.b16 %v121
    %v252 = vunpack.c.l.b16 %v122
    %v253 = vunpack.c.l.b16 %v123
    %v254 = vunpack.c.l.b16 %v124
    %v255 = vunpack.c.l.b16 %v125
    %v256 = vunpack.c.l.b16 %v126
    %v257 = vunpack.c.l.b16 %v127
    %v258 = vunpack.c.l.b16 %v128
    %v259 = vunpack.c.l.b16 %v129
    %v260 = vunpack.c.l.b16 %v130
    %v261 = vunpack.c.l.b16 %v131
    %v262 = vunpack.c.l.b16 %v132
    %v263 = vunpack.c.l.b16 %v133
    %v264 = vunpack.c.l.b16 %v134
    %v265 = vunpack.c.l.b16 %v135
    %v266 = vunpack.c.l.b16 %v136
    %v267 = vunpack.c.l.b16 %v137
    %v268 = vunpack.c.l.b16 %v138
    %v269 = vunpack.c.l.b16 %v139
    %v270 = vunpack.c.l.b16 %v140
    %v271 = vunpack.c.l.b16 %v141
    %v272 = vunpack.c.l.b16 %v142
    %v273 = vunpack.c.l.b16 %v143
    %v274 = vunpack.c.l.b16 %v144
    %v275 = vunpack.c.l.b16 %v145
    %v276 = vunpack.c.l.b16 %v146
    %v277 = vunpack.c.l.b16 %v147
    %v278 = vunpack.c.l.b16 %v148
    %v279 = vunpack.c.l.b16 %v149
    %v280 = vunpack.c.l.b16 %v150
    %v281 = vunpack.c.l.b16 %v151
    %v282 = vpack.c.b16 %v219, %v218
    %v283 = vpack.c.b16 %v221, %v220
    %v284 = vpack.c.b16 %v223, %v222
    %v285 = vpack.c.b16 %v225, %v224
    %v286 = vpack.c.b16 %v227, %v226
    %v287 = vpack.c.b16 %v229, %v228
    %v288 = vpack.c.b16 %v231, %v230
    %v289 = vpack.c.b16 %v233, %v232
    %v290 = vpack.c.b16 %v235, %v234
    %v291 = vpack.c.b16 %v237, %v236
    %v292 = vpack.c.b16 %v239, %v238
    %v293 = vpack.c.b16 %v241, %v240
    %v294 = vpack.c.b16 %v243, %v242
    %v295 = vpack.c.b16 %v245, %v244
    %v296 = vpack.c.b16 %v247, %v246
    %v297 = vpack.c.b16 %v249, %v248
    %v298 = vpack.c.b16 %v251, %v250
    %v299 = vpack.c.b16 %v253, %v252
    %v300 = vpack.c.b16 %v255, %v254
    %v301 = vpack.c.b16 %v257, %v256
    %v302 = vpack.c.b16 %v259, %v258
    %v303 = vpack.c.b16 %v261, %v260
    %v304 = vpack.c.b16 %v263, %v262
    %v305 = vpack.c.b16 %v265, %v264
    %v306 = vpack.c.b16 %v267, %v266
    %v307 = vpack.c.b16 %v269, %v268
    %v308 = vpack.c.b16 %v271, %v270
    %v309 = vpack.c.b16 %v273, %v272
    %v310 = vpack.c.b16 %v275, %v274
    %v311 = vpack.c.b16 %v277, %v276
    %v312 = vpack.c.b16 %v279, %v278
    %v313 = vpack.c.b16 %v281, %v280
    %v316 = vunpack.c.l.b16 %v152
    %v317 = vunpack.c.l.b16 %v153
    %v318 = vpack.c.b16 %v317, %v316
    %vm320 = vcmask 130048
    %v322 = vsel %vm320, %v282, 0
    %v325 = vsel %vm320, %v283, 0
    %v328 = vsel %vm320, %v284, 0
    %v331 = vsel %vm320, %v285, 0
    %v334 = vsel %vm320, %v286, 0
    %v337 = vsel %vm320, %v287, 0
    %v340 = vsel %vm320, %v288, 0
    %v343 = vsel %vm320, %v289, 0
    %v346 = vsel %vm320, %v290, 0
    %v349 = vsel %vm320, %v291, 0
    %v352 = vsel %vm320, %v292, 0
    %v355 = vsel %vm320, %v293, 0
    %v358 = vsel %vm320, %v294, 0
    %v361 = vsel %vm320, %v295, 0
    %v364 = vsel %vm320, %v296, 0
    %v367 = vsel %vm320, %v297, 0
    %v370 = vsel %vm320, %v298, 0
    %v373 = vsel %vm320, %v299, 0
    %v376 = vsel %vm320, %v300, 0
    %v379 = vsel %vm320, %v301, 0
    %v382 = vsel %vm320, %v302, 0
    %v385 = vsel %vm320, %v303, 0
    %v388 = vsel %vm320, %v304, 0
    %v391 = vsel %vm320, %v305, 0
    %v394 = vsel %vm320, %v306, 0
    %v397 = vsel %vm320, %v307, 0
    %v400 = vsel %vm320, %v308, 0
    %v403 = vsel %vm320, %v309, 0
    %v406 = vsel %vm320, %v310, 0
    %v409 = vsel %vm320, %v311, 0
    %v412 = vsel %vm320, %v312, 0
    %v415 = vsel %vm320, %v313, 0
    %417 = vmatpush.bf16.msra.mxu0 0
    %418 = vmatpush.bf16.msra.mxu0 0
    %419 = vmatpush.bf16.msra.mxu0 0
    %420 = vmatpush.bf16.msra.mxu0 0
    %421 = vmatpush.bf16.msra.mxu0 0
    %422 = vmatpush.bf16.msra.mxu0 0
    %423 = vmatpush.bf16.msra.mxu0 0
    %424 = vmatpush.bf16.msra.mxu0 %v318
    %425 = vmatmul.bf16.gmra.mxu0 %v322
    %v426 = vpop.f32.mrf.mxu0
    %v427 = vadd.f32 0.0, %v426
    %v428 = vpop.f32.mrf.mxu0
    %v429 = vadd.f32 0.0, %v428
    %430 = vmatmul.bf16.gmra.mxu0 %v325
    %v431 = vpop.f32.mrf.mxu0
    %v432 = vadd.f32 0.0, %v431
    %v433 = vpop.f32.mrf.mxu0
    %v434 = vadd.f32 0.0, %v433
    %435 = vmatmul.bf16.gmra.mxu0 %v328
    %v436 = vpop.f32.mrf.mxu0
    %v437 = vadd.f32 0.0, %v436
    %v438 = vpop.f32.mrf.mxu0
    %v439 = vadd.f32 0.0, %v438
    %440 = vmatmul.bf16.gmra.mxu0 %v331
    %v441 = vpop.f32.mrf.mxu0
    %v442 = vadd.f32 0.0, %v441
    %v443 = vpop.f32.mrf.mxu0
    %v444 = vadd.f32 0.0, %v443
    %445 = vmatmul.bf16.gmra.mxu0 %v334
    %v446 = vpop.f32.mrf.mxu0
    %v447 = vadd.f32 0.0, %v446
    %v448 = vpop.f32.mrf.mxu0
    %v449 = vadd.f32 0.0, %v448
    %450 = vmatmul.bf16.gmra.mxu0 %v337
    %v451 = vpop.f32.mrf.mxu0
    %v452 = vadd.f32 0.0, %v451
    %v453 = vpop.f32.mrf.mxu0
    %v454 = vadd.f32 0.0, %v453
    %455 = vmatmul.bf16.gmra.mxu0 %v340
    %v456 = vpop.f32.mrf.mxu0
    %v457 = vadd.f32 0.0, %v456
    %v458 = vpop.f32.mrf.mxu0
    %v459 = vadd.f32 0.0, %v458
    %460 = vmatmul.bf16.gmra.mxu0 %v343
    %v461 = vpop.f32.mrf.mxu0
    %v462 = vadd.f32 0.0, %v461
    %v463 = vpop.f32.mrf.mxu0
    %v464 = vadd.f32 0.0, %v463
    %465 = vmatmul.bf16.gmra.mxu0 %v346
    %v466 = vpop.f32.mrf.mxu0
    %v467 = vadd.f32 0.0, %v466
    %v468 = vpop.f32.mrf.mxu0
    %v469 = vadd.f32 0.0, %v468
    %470 = vmatmul.bf16.gmra.mxu0 %v349
    %v471 = vpop.f32.mrf.mxu0
    %v472 = vadd.f32 0.0, %v471
    %v473 = vpop.f32.mrf.mxu0
    %v474 = vadd.f32 0.0, %v473
    %475 = vmatmul.bf16.gmra.mxu0 %v352
    %v476 = vpop.f32.mrf.mxu0
    %v477 = vadd.f32 0.0, %v476
    %v478 = vpop.f32.mrf.mxu0
    %v479 = vadd.f32 0.0, %v478
    %480 = vmatmul.bf16.gmra.mxu0 %v355
    %v481 = vpop.f32.mrf.mxu0
    %v482 = vadd.f32 0.0, %v481
    %v483 = vpop.f32.mrf.mxu0
    %v484 = vadd.f32 0.0, %v483
    %485 = vmatmul.bf16.gmra.mxu0 %v358
    %v486 = vpop.f32.mrf.mxu0
    %v487 = vadd.f32 0.0, %v486
    %v488 = vpop.f32.mrf.mxu0
    %v489 = vadd.f32 0.0, %v488
    %490 = vmatmul.bf16.gmra.mxu0 %v361
    %v491 = vpop.f32.mrf.mxu0
    %v492 = vadd.f32 0.0, %v491
    %v493 = vpop.f32.mrf.mxu0
    %v494 = vadd.f32 0.0, %v493
    %495 = vmatmul.bf16.gmra.mxu0 %v364
    %v496 = vpop.f32.mrf.mxu0
    %v497 = vadd.f32 0.0, %v496
    %v498 = vpop.f32.mrf.mxu0
    %v499 = vadd.f32 0.0, %v498
    %500 = vmatmul.bf16.gmra.mxu0 %v367
    %v501 = vpop.f32.mrf.mxu0
    %v502 = vadd.f32 0.0, %v501
    %v503 = vpop.f32.mrf.mxu0
    %v504 = vadd.f32 0.0, %v503
    %505 = vmatmul.bf16.gmra.mxu0 %v370
    %v506 = vpop.f32.mrf.mxu0
    %v507 = vadd.f32 0.0, %v506
    %v508 = vpop.f32.mrf.mxu0
    %v509 = vadd.f32 0.0, %v508
    %510 = vmatmul.bf16.gmra.mxu0 %v373
    %v511 = vpop.f32.mrf.mxu0
    %v512 = vadd.f32 0.0, %v511
    %v513 = vpop.f32.mrf.mxu0
    %v514 = vadd.f32 0.0, %v513
    %515 = vmatmul.bf16.gmra.mxu0 %v376
    %v516 = vpop.f32.mrf.mxu0
    %v517 = vadd.f32 0.0, %v516
    %v518 = vpop.f32.mrf.mxu0
    %v519 = vadd.f32 0.0, %v518
    %520 = vmatmul.bf16.gmra.mxu0 %v379
    %v521 = vpop.f32.mrf.mxu0
    %v522 = vadd.f32 0.0, %v521
    %v523 = vpop.f32.mrf.mxu0
    %v524 = vadd.f32 0.0, %v523
    %525 = vmatmul.bf16.gmra.mxu0 %v382
    %v526 = vpop.f32.mrf.mxu0
    %v527 = vadd.f32 0.0, %v526
    %v528 = vpop.f32.mrf.mxu0
    %v529 = vadd.f32 0.0, %v528
    %530 = vmatmul.bf16.gmra.mxu0 %v385
    %v531 = vpop.f32.mrf.mxu0
    %v532 = vadd.f32 0.0, %v531
    %v533 = vpop.f32.mrf.mxu0
    %v534 = vadd.f32 0.0, %v533
    %535 = vmatmul.bf16.gmra.mxu0 %v388
    %v536 = vpop.f32.mrf.mxu0
    %v537 = vadd.f32 0.0, %v536
    %v538 = vpop.f32.mrf.mxu0
    %v539 = vadd.f32 0.0, %v538
    %540 = vmatmul.bf16.gmra.mxu0 %v391
    %v541 = vpop.f32.mrf.mxu0
    %v542 = vadd.f32 0.0, %v541
    %v543 = vpop.f32.mrf.mxu0
    %v544 = vadd.f32 0.0, %v543
    %545 = vmatmul.bf16.gmra.mxu0 %v394
    %v546 = vpop.f32.mrf.mxu0
    %v547 = vadd.f32 0.0, %v546
    %v548 = vpop.f32.mrf.mxu0
    %v549 = vadd.f32 0.0, %v548
    %550 = vmatmul.bf16.gmra.mxu0 %v397
    %v551 = vpop.f32.mrf.mxu0
    %v552 = vadd.f32 0.0, %v551
    %v553 = vpop.f32.mrf.mxu0
    %v554 = vadd.f32 0.0, %v553
    %555 = vmatmul.bf16.gmra.mxu0 %v400
    %v556 = vpop.f32.mrf.mxu0
    %v557 = vadd.f32 0.0, %v556
    %v558 = vpop.f32.mrf.mxu0
    %v559 = vadd.f32 0.0, %v558
    %560 = vmatmul.bf16.gmra.mxu0 %v403
    %v561 = vpop.f32.mrf.mxu0
    %v562 = vadd.f32 0.0, %v561
    %v563 = vpop.f32.mrf.mxu0
    %v564 = vadd.f32 0.0, %v563
    %565 = vmatmul.bf16.gmra.mxu0 %v406
    %v566 = vpop.f32.mrf.mxu0
    %v567 = vadd.f32 0.0, %v566
    %v568 = vpop.f32.mrf.mxu0
    %v569 = vadd.f32 0.0, %v568
    %570 = vmatmul.bf16.gmra.mxu0 %v409
    %v571 = vpop.f32.mrf.mxu0
    %v572 = vadd.f32 0.0, %v571
    %v573 = vpop.f32.mrf.mxu0
    %v574 = vadd.f32 0.0, %v573
    %575 = vmatmul.bf16.gmra.mxu0 %v412
    %v576 = vpop.f32.mrf.mxu0
    %v577 = vadd.f32 0.0, %v576
    %v578 = vpop.f32.mrf.mxu0
    %v579 = vadd.f32 0.0, %v578
    %580 = vmatmul.bf16.gmra.mxu0 %v415
    %v581 = vpop.f32.mrf.mxu0
    %v582 = vadd.f32 0.0, %v581
    %v583 = vpop.f32.mrf.mxu0
    %v584 = vadd.f32 0.0, %v583
    %585 = vdwg.mxu0
    %v650 = vunpack.c.l.b16 %v22
    %v651 = vunpack.c.l.b16 %v23
    %v652 = vunpack.c.l.b16 %v24
    %v653 = vunpack.c.l.b16 %v25
    %v654 = vunpack.c.l.b16 %v26
    %v655 = vunpack.c.l.b16 %v27
    %v656 = vunpack.c.l.b16 %v28
    %v657 = vunpack.c.l.b16 %v29
    %v658 = vunpack.c.l.b16 %v30
    %v659 = vunpack.c.l.b16 %v31
    %v660 = vunpack.c.l.b16 %v32
    %v661 = vunpack.c.l.b16 %v33
    %v662 = vunpack.c.l.b16 %v34
    %v663 = vunpack.c.l.b16 %v35
    %v664 = vunpack.c.l.b16 %v36
    %v665 = vunpack.c.l.b16 %v37
    %v666 = vunpack.c.l.b16 %v38
    %v667 = vunpack.c.l.b16 %v39
    %v668 = vunpack.c.l.b16 %v40
    %v669 = vunpack.c.l.b16 %v41
    %v670 = vunpack.c.l.b16 %v42
    %v671 = vunpack.c.l.b16 %v43
    %v672 = vunpack.c.l.b16 %v44
    %v673 = vunpack.c.l.b16 %v45
    %v674 = vunpack.c.l.b16 %v46
    %v675 = vunpack.c.l.b16 %v47
    %v676 = vunpack.c.l.b16 %v48
    %v677 = vunpack.c.l.b16 %v49
    %v678 = vunpack.c.l.b16 %v50
    %v679 = vunpack.c.l.b16 %v51
    %v680 = vunpack.c.l.b16 %v52
    %v681 = vunpack.c.l.b16 %v53
    %v682 = vunpack.c.l.b16 %v54
    %v683 = vunpack.c.l.b16 %v55
    %v684 = vunpack.c.l.b16 %v56
    %v685 = vunpack.c.l.b16 %v57
    %v686 = vunpack.c.l.b16 %v58
    %v687 = vunpack.c.l.b16 %v59
    %v688 = vunpack.c.l.b16 %v60
    %v689 = vunpack.c.l.b16 %v61
    %v690 = vunpack.c.l.b16 %v62
    %v691 = vunpack.c.l.b16 %v63
    %v692 = vunpack.c.l.b16 %v64
    %v693 = vunpack.c.l.b16 %v65
    %v694 = vunpack.c.l.b16 %v66
    %v695 = vunpack.c.l.b16 %v67
    %v696 = vunpack.c.l.b16 %v68
    %v697 = vunpack.c.l.b16 %v69
    %v698 = vunpack.c.l.b16 %v70
    %v699 = vunpack.c.l.b16 %v71
    %v700 = vunpack.c.l.b16 %v72
    %v701 = vunpack.c.l.b16 %v73
    %v702 = vunpack.c.l.b16 %v74
    %v703 = vunpack.c.l.b16 %v75
    %v704 = vunpack.c.l.b16 %v76
    %v705 = vunpack.c.l.b16 %v77
    %v706 = vunpack.c.l.b16 %v78
    %v707 = vunpack.c.l.b16 %v79
    %v708 = vunpack.c.l.b16 %v80
    %v709 = vunpack.c.l.b16 %v81
    %v710 = vunpack.c.l.b16 %v82
    %v711 = vunpack.c.l.b16 %v83
    %v712 = vunpack.c.l.b16 %v84
    %v713 = vunpack.c.l.b16 %v85
    %v714 = vpack.c.b16 %v651, %v650
    %v715 = vpack.c.b16 %v653, %v652
    %v716 = vpack.c.b16 %v655, %v654
    %v717 = vpack.c.b16 %v657, %v656
    %v718 = vpack.c.b16 %v659, %v658
    %v719 = vpack.c.b16 %v661, %v660
    %v720 = vpack.c.b16 %v663, %v662
    %v721 = vpack.c.b16 %v665, %v664
    %v722 = vpack.c.b16 %v667, %v666
    %v723 = vpack.c.b16 %v669, %v668
    %v724 = vpack.c.b16 %v671, %v670
    %v725 = vpack.c.b16 %v673, %v672
    %v726 = vpack.c.b16 %v675, %v674
    %v727 = vpack.c.b16 %v677, %v676
    %v728 = vpack.c.b16 %v679, %v678
    %v729 = vpack.c.b16 %v681, %v680
    %v730 = vpack.c.b16 %v683, %v682
    %v731 = vpack.c.b16 %v685, %v684
    %v732 = vpack.c.b16 %v687, %v686
    %v733 = vpack.c.b16 %v689, %v688
    %v734 = vpack.c.b16 %v691, %v690
    %v735 = vpack.c.b16 %v693, %v692
    %v736 = vpack.c.b16 %v695, %v694
    %v737 = vpack.c.b16 %v697, %v696
    %v738 = vpack.c.b16 %v699, %v698
    %v739 = vpack.c.b16 %v701, %v700
    %v740 = vpack.c.b16 %v703, %v702
    %v741 = vpack.c.b16 %v705, %v704
    %v742 = vpack.c.b16 %v707, %v706
    %v743 = vpack.c.b16 %v709, %v708
    %v744 = vpack.c.b16 %v711, %v710
    %v745 = vpack.c.b16 %v713, %v712
    %v748 = vunpack.c.l.b16 %v86
    %v749 = vunpack.c.l.b16 %v87
    %v750 = vpack.c.b16 %v749, %v748
    %v753 = vsel %vm320, %v714, 0
    %v756 = vsel %vm320, %v715, 0
    %v759 = vsel %vm320, %v716, 0
    %v762 = vsel %vm320, %v717, 0
    %v765 = vsel %vm320, %v718, 0
    %v768 = vsel %vm320, %v719, 0
    %v771 = vsel %vm320, %v720, 0
    %v774 = vsel %vm320, %v721, 0
    %v777 = vsel %vm320, %v722, 0
    %v780 = vsel %vm320, %v723, 0
    %v783 = vsel %vm320, %v724, 0
    %v786 = vsel %vm320, %v725, 0
    %v789 = vsel %vm320, %v726, 0
    %v792 = vsel %vm320, %v727, 0
    %v795 = vsel %vm320, %v728, 0
    %v798 = vsel %vm320, %v729, 0
    %v801 = vsel %vm320, %v730, 0
    %v804 = vsel %vm320, %v731, 0
    %v807 = vsel %vm320, %v732, 0
    %v810 = vsel %vm320, %v733, 0
    %v813 = vsel %vm320, %v734, 0
    %v816 = vsel %vm320, %v735, 0
    %v819 = vsel %vm320, %v736, 0
    %v822 = vsel %vm320, %v737, 0
    %v825 = vsel %vm320, %v738, 0
    %v828 = vsel %vm320, %v739, 0
    %v831 = vsel %vm320, %v740, 0
    %v834 = vsel %vm320, %v741, 0
    %v837 = vsel %vm320, %v742, 0
    %v840 = vsel %vm320, %v743, 0
    %v843 = vsel %vm320, %v744, 0
    %v846 = vsel %vm320, %v745, 0
    %848 = vmatpush.bf16.msra.mxu0 0
    %849 = vmatpush.bf16.msra.mxu0 0
    %850 = vmatpush.bf16.msra.mxu0 0
    %851 = vmatpush.bf16.msra.mxu0 0
    %852 = vmatpush.bf16.msra.mxu0 0
    %853 = vmatpush.bf16.msra.mxu0 0
    %854 = vmatpush.bf16.msra.mxu0 0
    %855 = vmatpush.bf16.msra.mxu0 %v750
    %856 = vmatmul.bf16.gmra.mxu0 %v753
    %v857 = vpop.f32.mrf.mxu0
    %v858 = vadd.f32 %v427, %v857
    %v859 = vpop.f32.mrf.mxu0
    %v860 = vadd.f32 %v429, %v859
    %861 = vmatmul.bf16.gmra.mxu0 %v756
    %v862 = vpop.f32.mrf.mxu0
    %v863 = vadd.f32 %v432, %v862
    %v864 = vpop.f32.mrf.mxu0
    %v865 = vadd.f32 %v434, %v864
    %866 = vmatmul.bf16.gmra.mxu0 %v759
    %v867 = vpop.f32.mrf.mxu0
    %v868 = vadd.f32 %v437, %v867
    %v869 = vpop.f32.mrf.mxu0
    %v870 = vadd.f32 %v439, %v869
    %871 = vmatmul.bf16.gmra.mxu0 %v762
    %v872 = vpop.f32.mrf.mxu0
    %v873 = vadd.f32 %v442, %v872
    %v874 = vpop.f32.mrf.mxu0
    %v875 = vadd.f32 %v444, %v874
    %876 = vmatmul.bf16.gmra.mxu0 %v765
    %v877 = vpop.f32.mrf.mxu0
    %v878 = vadd.f32 %v447, %v877
    %v879 = vpop.f32.mrf.mxu0
    %v880 = vadd.f32 %v449, %v879
    %881 = vmatmul.bf16.gmra.mxu0 %v768
    %v882 = vpop.f32.mrf.mxu0
    %v883 = vadd.f32 %v452, %v882
    %v884 = vpop.f32.mrf.mxu0
    %v885 = vadd.f32 %v454, %v884
    %886 = vmatmul.bf16.gmra.mxu0 %v771
    %v887 = vpop.f32.mrf.mxu0
    %v888 = vadd.f32 %v457, %v887
    %v889 = vpop.f32.mrf.mxu0
    %v890 = vadd.f32 %v459, %v889
    %891 = vmatmul.bf16.gmra.mxu0 %v774
    %v892 = vpop.f32.mrf.mxu0
    %v893 = vadd.f32 %v462, %v892
    %v894 = vpop.f32.mrf.mxu0
    %v895 = vadd.f32 %v464, %v894
    %896 = vmatmul.bf16.gmra.mxu0 %v777
    %v897 = vpop.f32.mrf.mxu0
    %v898 = vadd.f32 %v467, %v897
    %v899 = vpop.f32.mrf.mxu0
    %v900 = vadd.f32 %v469, %v899
    %901 = vmatmul.bf16.gmra.mxu0 %v780
    %v902 = vpop.f32.mrf.mxu0
    %v903 = vadd.f32 %v472, %v902
    %v904 = vpop.f32.mrf.mxu0
    %v905 = vadd.f32 %v474, %v904
    %906 = vmatmul.bf16.gmra.mxu0 %v783
    %v907 = vpop.f32.mrf.mxu0
    %v908 = vadd.f32 %v477, %v907
    %v909 = vpop.f32.mrf.mxu0
    %v910 = vadd.f32 %v479, %v909
    %911 = vmatmul.bf16.gmra.mxu0 %v786
    %v912 = vpop.f32.mrf.mxu0
    %v913 = vadd.f32 %v482, %v912
    %v914 = vpop.f32.mrf.mxu0
    %v915 = vadd.f32 %v484, %v914
    %916 = vmatmul.bf16.gmra.mxu0 %v789
    %v917 = vpop.f32.mrf.mxu0
    %v918 = vadd.f32 %v487, %v917
    %v919 = vpop.f32.mrf.mxu0
    %v920 = vadd.f32 %v489, %v919
    %921 = vmatmul.bf16.gmra.mxu0 %v792
    %v922 = vpop.f32.mrf.mxu0
    %v923 = vadd.f32 %v492, %v922
    %v924 = vpop.f32.mrf.mxu0
    %v925 = vadd.f32 %v494, %v924
    %926 = vmatmul.bf16.gmra.mxu0 %v795
    %v927 = vpop.f32.mrf.mxu0
    %v928 = vadd.f32 %v497, %v927
    %v929 = vpop.f32.mrf.mxu0
    %v930 = vadd.f32 %v499, %v929
    %931 = vmatmul.bf16.gmra.mxu0 %v798
    %v932 = vpop.f32.mrf.mxu0
    %v933 = vadd.f32 %v502, %v932
    %v934 = vpop.f32.mrf.mxu0
    %v935 = vadd.f32 %v504, %v934
    %936 = vmatmul.bf16.gmra.mxu0 %v801
    %v937 = vpop.f32.mrf.mxu0
    %v938 = vadd.f32 %v507, %v937
    %v939 = vpop.f32.mrf.mxu0
    %v940 = vadd.f32 %v509, %v939
    %941 = vmatmul.bf16.gmra.mxu0 %v804
    %v942 = vpop.f32.mrf.mxu0
    %v943 = vadd.f32 %v512, %v942
    %v944 = vpop.f32.mrf.mxu0
    %v945 = vadd.f32 %v514, %v944
    %946 = vmatmul.bf16.gmra.mxu0 %v807
    %v947 = vpop.f32.mrf.mxu0
    %v948 = vadd.f32 %v517, %v947
    %v949 = vpop.f32.mrf.mxu0
    %v950 = vadd.f32 %v519, %v949
    %951 = vmatmul.bf16.gmra.mxu0 %v810
    %v952 = vpop.f32.mrf.mxu0
    %v953 = vadd.f32 %v522, %v952
    %v954 = vpop.f32.mrf.mxu0
    %v955 = vadd.f32 %v524, %v954
    %956 = vmatmul.bf16.gmra.mxu0 %v813
    %v957 = vpop.f32.mrf.mxu0
    %v958 = vadd.f32 %v527, %v957
    %v959 = vpop.f32.mrf.mxu0
    %v960 = vadd.f32 %v529, %v959
    %961 = vmatmul.bf16.gmra.mxu0 %v816
    %v962 = vpop.f32.mrf.mxu0
    %v963 = vadd.f32 %v532, %v962
    %v964 = vpop.f32.mrf.mxu0
    %v965 = vadd.f32 %v534, %v964
    %966 = vmatmul.bf16.gmra.mxu0 %v819
    %v967 = vpop.f32.mrf.mxu0
    %v968 = vadd.f32 %v537, %v967
    %v969 = vpop.f32.mrf.mxu0
    %v970 = vadd.f32 %v539, %v969
    %971 = vmatmul.bf16.gmra.mxu0 %v822
    %v972 = vpop.f32.mrf.mxu0
    %v973 = vadd.f32 %v542, %v972
    %v974 = vpop.f32.mrf.mxu0
    %v975 = vadd.f32 %v544, %v974
    %976 = vmatmul.bf16.gmra.mxu0 %v825
    %v977 = vpop.f32.mrf.mxu0
    %v978 = vadd.f32 %v547, %v977
    %v979 = vpop.f32.mrf.mxu0
    %v980 = vadd.f32 %v549, %v979
    %981 = vmatmul.bf16.gmra.mxu0 %v828
    %v982 = vpop.f32.mrf.mxu0
    %v983 = vadd.f32 %v552, %v982
    %v984 = vpop.f32.mrf.mxu0
    %v985 = vadd.f32 %v554, %v984
    %986 = vmatmul.bf16.gmra.mxu0 %v831
    %v987 = vpop.f32.mrf.mxu0
    %v988 = vadd.f32 %v557, %v987
    %v989 = vpop.f32.mrf.mxu0
    %v990 = vadd.f32 %v559, %v989
    %991 = vmatmul.bf16.gmra.mxu0 %v834
    %v992 = vpop.f32.mrf.mxu0
    %v993 = vadd.f32 %v562, %v992
    %v994 = vpop.f32.mrf.mxu0
    %v995 = vadd.f32 %v564, %v994
    %996 = vmatmul.bf16.gmra.mxu0 %v837
    %v997 = vpop.f32.mrf.mxu0
    %v998 = vadd.f32 %v567, %v997
    %v999 = vpop.f32.mrf.mxu0
    %v1000 = vadd.f32 %v569, %v999
    %1001 = vmatmul.bf16.gmra.mxu0 %v840
    %v1002 = vpop.f32.mrf.mxu0
    %v1003 = vadd.f32 %v572, %v1002
    %v1004 = vpop.f32.mrf.mxu0
    %v1005 = vadd.f32 %v574, %v1004
    %1006 = vmatmul.bf16.gmra.mxu0 %v843
    %v1007 = vpop.f32.mrf.mxu0
    %v1008 = vadd.f32 %v577, %v1007
    %v1009 = vpop.f32.mrf.mxu0
    %v1010 = vadd.f32 %v579, %v1009
    %1011 = vmatmul.bf16.gmra.mxu0 %v846
    %v1012 = vpop.f32.mrf.mxu0
    %v1013 = vadd.f32 %v582, %v1012
    %v1014 = vpop.f32.mrf.mxu0
    %v1015 = vadd.f32 %v584, %v1014
    %1016 = vdwg.mxu0
    %v1017 = vld [vmem:[%s4] sm:$0x1]
    %v1019 = vperm.slane %v1017, 0
    %v1021 = vadd.f32 %v858, %v1019
    %v1022 = vadd.f32 %v860, %v1019
    %v1023 = vadd.f32 %v863, %v1019
    %v1024 = vadd.f32 %v865, %v1019
    %v1025 = vadd.f32 %v868, %v1019
    %v1026 = vadd.f32 %v870, %v1019
    %v1027 = vadd.f32 %v873, %v1019
    %v1028 = vadd.f32 %v875, %v1019
    %v1029 = vadd.f32 %v878, %v1019
    %v1030 = vadd.f32 %v880, %v1019
    %v1031 = vadd.f32 %v883, %v1019
    %v1032 = vadd.f32 %v885, %v1019
    %v1033 = vadd.f32 %v888, %v1019
    %v1034 = vadd.f32 %v890, %v1019
    %v1035 = vadd.f32 %v893, %v1019
    %v1036 = vadd.f32 %v895, %v1019
    %v1037 = vadd.f32 %v898, %v1019
    %v1038 = vadd.f32 %v900, %v1019
    %v1039 = vadd.f32 %v903, %v1019
    %v1040 = vadd.f32 %v905, %v1019
    %v1041 = vadd.f32 %v908, %v1019
    %v1042 = vadd.f32 %v910, %v1019
    %v1043 = vadd.f32 %v913, %v1019
    %v1044 = vadd.f32 %v915, %v1019
    %v1045 = vadd.f32 %v918, %v1019
    %v1046 = vadd.f32 %v920, %v1019
    %v1047 = vadd.f32 %v923, %v1019
    %v1048 = vadd.f32 %v925, %v1019
    %v1049 = vadd.f32 %v928, %v1019
    %v1050 = vadd.f32 %v930, %v1019
    %v1051 = vadd.f32 %v933, %v1019
    %v1052 = vadd.f32 %v935, %v1019
    %v1053 = vadd.f32 %v938, %v1019
    %v1054 = vadd.f32 %v940, %v1019
    %v1055 = vadd.f32 %v943, %v1019
    %v1056 = vadd.f32 %v945, %v1019
    %v1057 = vadd.f32 %v948, %v1019
    %v1058 = vadd.f32 %v950, %v1019
    %v1059 = vadd.f32 %v953, %v1019
    %v1060 = vadd.f32 %v955, %v1019
    %v1061 = vadd.f32 %v958, %v1019
    %v1062 = vadd.f32 %v960, %v1019
    %v1063 = vadd.f32 %v963, %v1019
    %v1064 = vadd.f32 %v965, %v1019
    %v1065 = vadd.f32 %v968, %v1019
    %v1066 = vadd.f32 %v970, %v1019
    %v1067 = vadd.f32 %v973, %v1019
    %v1068 = vadd.f32 %v975, %v1019
    %v1069 = vadd.f32 %v978, %v1019
    %v1070 = vadd.f32 %v980, %v1019
    %v1071 = vadd.f32 %v983, %v1019
    %v1072 = vadd.f32 %v985, %v1019
    %v1073 = vadd.f32 %v988, %v1019
    %v1074 = vadd.f32 %v990, %v1019
    %v1075 = vadd.f32 %v993, %v1019
    %v1076 = vadd.f32 %v995, %v1019
    %v1077 = vadd.f32 %v998, %v1019
    %v1078 = vadd.f32 %v1000, %v1019
    %v1079 = vadd.f32 %v1003, %v1019
    %v1080 = vadd.f32 %v1005, %v1019
    %v1081 = vadd.f32 %v1008, %v1019
    %v1082 = vadd.f32 %v1010, %v1019
    %v1083 = vadd.f32 %v1013, %v1019
    %v1084 = vadd.f32 %v1015, %v1019
    %v1085 = vsub.f32 0.0, %v1021
    %v1086 = vsub.f32 0.0, %v1022
    %v1087 = vsub.f32 0.0, %v1023
    %v1088 = vsub.f32 0.0, %v1024
    %v1089 = vsub.f32 0.0, %v1025
    %v1090 = vsub.f32 0.0, %v1026
    %v1091 = vsub.f32 0.0, %v1027
    %v1092 = vsub.f32 0.0, %v1028
    %v1093 = vsub.f32 0.0, %v1029
    %v1094 = vsub.f32 0.0, %v1030
    %v1095 = vsub.f32 0.0, %v1031
    %v1096 = vsub.f32 0.0, %v1032
    %v1097 = vsub.f32 0.0, %v1033
    %v1098 = vsub.f32 0.0, %v1034
    %v1099 = vsub.f32 0.0, %v1035
    %v1100 = vsub.f32 0.0, %v1036
    %v1101 = vsub.f32 0.0, %v1037
    %v1102 = vsub.f32 0.0, %v1038
    %v1103 = vsub.f32 0.0, %v1039
    %v1104 = vsub.f32 0.0, %v1040
    %v1105 = vsub.f32 0.0, %v1041
    %v1106 = vsub.f32 0.0, %v1042
    %v1107 = vsub.f32 0.0, %v1043
    %v1108 = vsub.f32 0.0, %v1044
    %v1109 = vsub.f32 0.0, %v1045
    %v1110 = vsub.f32 0.0, %v1046
    %v1111 = vsub.f32 0.0, %v1047
    %v1112 = vsub.f32 0.0, %v1048
    %v1113 = vsub.f32 0.0, %v1049
    %v1114 = vsub.f32 0.0, %v1050
    %v1115 = vsub.f32 0.0, %v1051
    %v1116 = vsub.f32 0.0, %v1052
    %v1117 = vsub.f32 0.0, %v1053
    %v1118 = vsub.f32 0.0, %v1054
    %v1119 = vsub.f32 0.0, %v1055
    %v1120 = vsub.f32 0.0, %v1056
    %v1121 = vsub.f32 0.0, %v1057
    %v1122 = vsub.f32 0.0, %v1058
    %v1123 = vsub.f32 0.0, %v1059
    %v1124 = vsub.f32 0.0, %v1060
    %v1125 = vsub.f32 0.0, %v1061
    %v1126 = vsub.f32 0.0, %v1062
    %v1127 = vsub.f32 0.0, %v1063
    %v1128 = vsub.f32 0.0, %v1064
    %v1129 = vsub.f32 0.0, %v1065
    %v1130 = vsub.f32 0.0, %v1066
    %v1131 = vsub.f32 0.0, %v1067
    %v1132 = vsub.f32 0.0, %v1068
    %v1133 = vsub.f32 0.0, %v1069
    %v1134 = vsub.f32 0.0, %v1070
    %v1135 = vsub.f32 0.0, %v1071
    %v1136 = vsub.f32 0.0, %v1072
    %v1137 = vsub.f32 0.0, %v1073
    %v1138 = vsub.f32 0.0, %v1074
    %v1139 = vsub.f32 0.0, %v1075
    %v1140 = vsub.f32 0.0, %v1076
    %v1141 = vsub.f32 0.0, %v1077
    %v1142 = vsub.f32 0.0, %v1078
    %v1143 = vsub.f32 0.0, %v1079
    %v1144 = vsub.f32 0.0, %v1080
    %v1145 = vsub.f32 0.0, %v1081
    %v1146 = vsub.f32 0.0, %v1082
    %v1147 = vsub.f32 0.0, %v1083
    %v1148 = vsub.f32 0.0, %v1084
    %v1149 = vmul.f32 %v1085, 1.442695
    %v1150 = vpow.pop %v1149
    %v1151 = vmul.f32 %v1086, 1.442695
    %v1152 = vpow.pop %v1151
    %v1153 = vmul.f32 %v1087, 1.442695
    %v1154 = vpow.pop %v1153
    %v1155 = vmul.f32 %v1088, 1.442695
    %v1156 = vpow.pop %v1155
    %v1157 = vmul.f32 %v1089, 1.442695
    %v1158 = vpow.pop %v1157
    %v1159 = vmul.f32 %v1090, 1.442695
    %v1160 = vpow.pop %v1159
    %v1161 = vmul.f32 %v1091, 1.442695
    %v1162 = vpow.pop %v1161
    %v1163 = vmul.f32 %v1092, 1.442695
    %v1164 = vpow.pop %v1163
    %v1165 = vmul.f32 %v1093, 1.442695
    %v1166 = vpow.pop %v1165
    %v1167 = vmul.f32 %v1094, 1.442695
    %v1168 = vpow.pop %v1167
    %v1169 = vmul.f32 %v1095, 1.442695
    %v1170 = vpow.pop %v1169
    %v1171 = vmul.f32 %v1096, 1.442695
    %v1172 = vpow.pop %v1171
    %v1173 = vmul.f32 %v1097, 1.442695
    %v1174 = vpow.pop %v1173
    %v1175 = vmul.f32 %v1098, 1.442695
    %v1176 = vpow.pop %v1175
    %v1177 = vmul.f32 %v1099, 1.442695
    %v1178 = vpow.pop %v1177
    %v1179 = vmul.f32 %v1100, 1.442695
    %v1180 = vpow.pop %v1179
    %v1181 = vmul.f32 %v1101, 1.442695
    %v1182 = vpow.pop %v1181
    %v1183 = vmul.f32 %v1102, 1.442695
    %v1184 = vpow.pop %v1183
    %v1185 = vmul.f32 %v1103, 1.442695
    %v1186 = vpow.pop %v1185
    %v1187 = vmul.f32 %v1104, 1.442695
    %v1188 = vpow.pop %v1187
    %v1189 = vmul.f32 %v1105, 1.442695
    %v1190 = vpow.pop %v1189
    %v1191 = vmul.f32 %v1106, 1.442695
    %v1192 = vpow.pop %v1191
    %v1193 = vmul.f32 %v1107, 1.442695
    %v1194 = vpow.pop %v1193
    %v1195 = vmul.f32 %v1108, 1.442695
    %v1196 = vpow.pop %v1195
    %v1197 = vmul.f32 %v1109, 1.442695
    %v1198 = vpow.pop %v1197
    %v1199 = vmul.f32 %v1110, 1.442695
    %v1200 = vpow.pop %v1199
    %v1201 = vmul.f32 %v1111, 1.442695
    %v1202 = vpow.pop %v1201
    %v1203 = vmul.f32 %v1112, 1.442695
    %v1204 = vpow.pop %v1203
    %v1205 = vmul.f32 %v1113, 1.442695
    %v1206 = vpow.pop %v1205
    %v1207 = vmul.f32 %v1114, 1.442695
    %v1208 = vpow.pop %v1207
    %v1209 = vmul.f32 %v1115, 1.442695
    %v1210 = vpow.pop %v1209
    %v1211 = vmul.f32 %v1116, 1.442695
    %v1212 = vpow.pop %v1211
    %v1213 = vmul.f32 %v1117, 1.442695
    %v1214 = vpow.pop %v1213
    %v1215 = vmul.f32 %v1118, 1.442695
    %v1216 = vpow.pop %v1215
    %v1217 = vmul.f32 %v1119, 1.442695
    %v1218 = vpow.pop %v1217
    %v1219 = vmul.f32 %v1120, 1.442695
    %v1220 = vpow.pop %v1219
    %v1221 = vmul.f32 %v1121, 1.442695
    %v1222 = vpow.pop %v1221
    %v1223 = vmul.f32 %v1122, 1.442695
    %v1224 = vpow.pop %v1223
    %v1225 = vmul.f32 %v1123, 1.442695
    %v1226 = vpow.pop %v1225
    %v1227 = vmul.f32 %v1124, 1.442695
    %v1228 = vpow.pop %v1227
    %v1229 = vmul.f32 %v1125, 1.442695
    %v1230 = vpow.pop %v1229
    %v1231 = vmul.f32 %v1126, 1.442695
    %v1232 = vpow.pop %v1231
    %v1233 = vmul.f32 %v1127, 1.442695
    %v1234 = vpow.pop %v1233
    %v1235 = vmul.f32 %v1128, 1.442695
    %v1236 = vpow.pop %v1235
    %v1237 = vmul.f32 %v1129, 1.442695
    %v1238 = vpow.pop %v1237
    %v1239 = vmul.f32 %v1130, 1.442695
    %v1240 = vpow.pop %v1239
    %v1241 = vmul.f32 %v1131, 1.442695
    %v1242 = vpow.pop %v1241
    %v1243 = vmul.f32 %v1132, 1.442695
    %v1244 = vpow.pop %v1243
    %v1245 = vmul.f32 %v1133, 1.442695
    %v1246 = vpow.pop %v1245
    %v1247 = vmul.f32 %v1134, 1.442695
    %v1248 = vpow.pop %v1247
    %v1249 = vmul.f32 %v1135, 1.442695
    %v1250 = vpow.pop %v1249
    %v1251 = vmul.f32 %v1136, 1.442695
    %v1252 = vpow.pop %v1251
    %v1253 = vmul.f32 %v1137, 1.442695
    %v1254 = vpow.pop %v1253
    %v1255 = vmul.f32 %v1138, 1.442695
    %v1256 = vpow.pop %v1255
    %v1257 = vmul.f32 %v1139, 1.442695
    %v1258 = vpow.pop %v1257
    %v1259 = vmul.f32 %v1140, 1.442695
    %v1260 = vpow.pop %v1259
    %v1261 = vmul.f32 %v1141, 1.442695
    %v1262 = vpow.pop %v1261
    %v1263 = vmul.f32 %v1142, 1.442695
    %v1264 = vpow.pop %v1263
    %v1265 = vmul.f32 %v1143, 1.442695
    %v1266 = vpow.pop %v1265
    %v1267 = vmul.f32 %v1144, 1.442695
    %v1268 = vpow.pop %v1267
    %v1269 = vmul.f32 %v1145, 1.442695
    %v1270 = vpow.pop %v1269
    %v1271 = vmul.f32 %v1146, 1.442695
    %v1272 = vpow.pop %v1271
    %v1273 = vmul.f32 %v1147, 1.442695
    %v1274 = vpow.pop %v1273
    %v1275 = vmul.f32 %v1148, 1.442695
    %v1276 = vpow.pop %v1275
    %v1277 = vadd.f32 %v1150, 1.0
    %v1278 = vadd.f32 %v1152, 1.0
    %v1279 = vadd.f32 %v1154, 1.0
    %v1280 = vadd.f32 %v1156, 1.0
    %v1281 = vadd.f32 %v1158, 1.0
    %v1282 = vadd.f32 %v1160, 1.0
    %v1283 = vadd.f32 %v1162, 1.0
    %v1284 = vadd.f32 %v1164, 1.0
    %v1285 = vadd.f32 %v1166, 1.0
    %v1286 = vadd.f32 %v1168, 1.0
    %v1287 = vadd.f32 %v1170, 1.0
    %v1288 = vadd.f32 %v1172, 1.0
    %v1289 = vadd.f32 %v1174, 1.0
    %v1290 = vadd.f32 %v1176, 1.0
    %v1291 = vadd.f32 %v1178, 1.0
    %v1292 = vadd.f32 %v1180, 1.0
    %v1293 = vadd.f32 %v1182, 1.0
    %v1294 = vadd.f32 %v1184, 1.0
    %v1295 = vadd.f32 %v1186, 1.0
    %v1296 = vadd.f32 %v1188, 1.0
    %v1297 = vadd.f32 %v1190, 1.0
    %v1298 = vadd.f32 %v1192, 1.0
    %v1299 = vadd.f32 %v1194, 1.0
    %v1300 = vadd.f32 %v1196, 1.0
    %v1301 = vadd.f32 %v1198, 1.0
    %v1302 = vadd.f32 %v1200, 1.0
    %v1303 = vadd.f32 %v1202, 1.0
    %v1304 = vadd.f32 %v1204, 1.0
    %v1305 = vadd.f32 %v1206, 1.0
    %v1306 = vadd.f32 %v1208, 1.0
    %v1307 = vadd.f32 %v1210, 1.0
    %v1308 = vadd.f32 %v1212, 1.0
    %v1309 = vadd.f32 %v1214, 1.0
    %v1310 = vadd.f32 %v1216, 1.0
    %v1311 = vadd.f32 %v1218, 1.0
    %v1312 = vadd.f32 %v1220, 1.0
    %v1313 = vadd.f32 %v1222, 1.0
    %v1314 = vadd.f32 %v1224, 1.0
    %v1315 = vadd.f32 %v1226, 1.0
    %v1316 = vadd.f32 %v1228, 1.0
    %v1317 = vadd.f32 %v1230, 1.0
    %v1318 = vadd.f32 %v1232, 1.0
    %v1319 = vadd.f32 %v1234, 1.0
    %v1320 = vadd.f32 %v1236, 1.0
    %v1321 = vadd.f32 %v1238, 1.0
    %v1322 = vadd.f32 %v1240, 1.0
    %v1323 = vadd.f32 %v1242, 1.0
    %v1324 = vadd.f32 %v1244, 1.0
    %v1325 = vadd.f32 %v1246, 1.0
    %v1326 = vadd.f32 %v1248, 1.0
    %v1327 = vadd.f32 %v1250, 1.0
    %v1328 = vadd.f32 %v1252, 1.0
    %v1329 = vadd.f32 %v1254, 1.0
    %v1330 = vadd.f32 %v1256, 1.0
    %v1331 = vadd.f32 %v1258, 1.0
    %v1332 = vadd.f32 %v1260, 1.0
    %v1333 = vadd.f32 %v1262, 1.0
    %v1334 = vadd.f32 %v1264, 1.0
    %v1335 = vadd.f32 %v1266, 1.0
    %v1336 = vadd.f32 %v1268, 1.0
    %v1337 = vadd.f32 %v1270, 1.0
    %v1338 = vadd.f32 %v1272, 1.0
    %v1339 = vadd.f32 %v1274, 1.0
    %v1340 = vadd.f32 %v1276, 1.0
    %v1341 = vrcp.pop %v1277
    %v1342 = vrcp.pop %v1278
    %v1343 = vrcp.pop %v1279
    %v1344 = vrcp.pop %v1280
    %v1345 = vrcp.pop %v1281
    %v1346 = vrcp.pop %v1282
    %v1347 = vrcp.pop %v1283
    %v1348 = vrcp.pop %v1284
    %v1349 = vrcp.pop %v1285
    %v1350 = vrcp.pop %v1286
    %v1351 = vrcp.pop %v1287
    %v1352 = vrcp.pop %v1288
    %v1353 = vrcp.pop %v1289
    %v1354 = vrcp.pop %v1290
    %v1355 = vrcp.pop %v1291
    %v1356 = vrcp.pop %v1292
    %v1357 = vrcp.pop %v1293
    %v1358 = vrcp.pop %v1294
    %v1359 = vrcp.pop %v1295
    %v1360 = vrcp.pop %v1296
    %v1361 = vrcp.pop %v1297
    %v1362 = vrcp.pop %v1298
    %v1363 = vrcp.pop %v1299
    %v1364 = vrcp.pop %v1300
    %v1365 = vrcp.pop %v1301
    %v1366 = vrcp.pop %v1302
    %v1367 = vrcp.pop %v1303
    %v1368 = vrcp.pop %v1304
    %v1369 = vrcp.pop %v1305
    %v1370 = vrcp.pop %v1306
    %v1371 = vrcp.pop %v1307
    %v1372 = vrcp.pop %v1308
    %v1373 = vrcp.pop %v1309
    %v1374 = vrcp.pop %v1310
    %v1375 = vrcp.pop %v1311
    %v1376 = vrcp.pop %v1312
    %v1377 = vrcp.pop %v1313
    %v1378 = vrcp.pop %v1314
    %v1379 = vrcp.pop %v1315
    %v1380 = vrcp.pop %v1316
    %v1381 = vrcp.pop %v1317
    %v1382 = vrcp.pop %v1318
    %v1383 = vrcp.pop %v1319
    %v1384 = vrcp.pop %v1320
    %v1385 = vrcp.pop %v1321
    %v1386 = vrcp.pop %v1322
    %v1387 = vrcp.pop %v1323
    %v1388 = vrcp.pop %v1324
    %v1389 = vrcp.pop %v1325
    %v1390 = vrcp.pop %v1326
    %v1391 = vrcp.pop %v1327
    %v1392 = vrcp.pop %v1328
    %v1393 = vrcp.pop %v1329
    %v1394 = vrcp.pop %v1330
    %v1395 = vrcp.pop %v1331
    %v1396 = vrcp.pop %v1332
    %v1397 = vrcp.pop %v1333
    %v1398 = vrcp.pop %v1334
    %v1399 = vrcp.pop %v1335
    %v1400 = vrcp.pop %v1336
    %v1401 = vrcp.pop %v1337
    %v1402 = vrcp.pop %v1338
    %v1403 = vrcp.pop %v1339
    %v1404 = vrcp.pop %v1340
    %v1405 = vmul.f32 %v1021, %v1341
    %v1406 = vmul.f32 %v1022, %v1342
    %v1407 = vmul.f32 %v1023, %v1343
    %v1408 = vmul.f32 %v1024, %v1344
    %v1409 = vmul.f32 %v1025, %v1345
    %v1410 = vmul.f32 %v1026, %v1346
    %v1411 = vmul.f32 %v1027, %v1347
    %v1412 = vmul.f32 %v1028, %v1348
    %v1413 = vmul.f32 %v1029, %v1349
    %v1414 = vmul.f32 %v1030, %v1350
    %v1415 = vmul.f32 %v1031, %v1351
    %v1416 = vmul.f32 %v1032, %v1352
    %v1417 = vmul.f32 %v1033, %v1353
    %v1418 = vmul.f32 %v1034, %v1354
    %v1419 = vmul.f32 %v1035, %v1355
    %v1420 = vmul.f32 %v1036, %v1356
    %v1421 = vmul.f32 %v1037, %v1357
    %v1422 = vmul.f32 %v1038, %v1358
    %v1423 = vmul.f32 %v1039, %v1359
    %v1424 = vmul.f32 %v1040, %v1360
    %v1425 = vmul.f32 %v1041, %v1361
    %v1426 = vmul.f32 %v1042, %v1362
    %v1427 = vmul.f32 %v1043, %v1363
    %v1428 = vmul.f32 %v1044, %v1364
    %v1429 = vmul.f32 %v1045, %v1365
    %v1430 = vmul.f32 %v1046, %v1366
    %v1431 = vmul.f32 %v1047, %v1367
    %v1432 = vmul.f32 %v1048, %v1368
    %v1433 = vmul.f32 %v1049, %v1369
    %v1434 = vmul.f32 %v1050, %v1370
    %v1435 = vmul.f32 %v1051, %v1371
    %v1436 = vmul.f32 %v1052, %v1372
    %v1437 = vmul.f32 %v1053, %v1373
    %v1438 = vmul.f32 %v1054, %v1374
    %v1439 = vmul.f32 %v1055, %v1375
    %v1440 = vmul.f32 %v1056, %v1376
    %v1441 = vmul.f32 %v1057, %v1377
    %v1442 = vmul.f32 %v1058, %v1378
    %v1443 = vmul.f32 %v1059, %v1379
    %v1444 = vmul.f32 %v1060, %v1380
    %v1445 = vmul.f32 %v1061, %v1381
    %v1446 = vmul.f32 %v1062, %v1382
    %v1447 = vmul.f32 %v1063, %v1383
    %v1448 = vmul.f32 %v1064, %v1384
    %v1449 = vmul.f32 %v1065, %v1385
    %v1450 = vmul.f32 %v1066, %v1386
    %v1451 = vmul.f32 %v1067, %v1387
    %v1452 = vmul.f32 %v1068, %v1388
    %v1453 = vmul.f32 %v1069, %v1389
    %v1454 = vmul.f32 %v1070, %v1390
    %v1455 = vmul.f32 %v1071, %v1391
    %v1456 = vmul.f32 %v1072, %v1392
    %v1457 = vmul.f32 %v1073, %v1393
    %v1458 = vmul.f32 %v1074, %v1394
    %v1459 = vmul.f32 %v1075, %v1395
    %v1460 = vmul.f32 %v1076, %v1396
    %v1461 = vmul.f32 %v1077, %v1397
    %v1462 = vmul.f32 %v1078, %v1398
    %v1463 = vmul.f32 %v1079, %v1399
    %v1464 = vmul.f32 %v1080, %v1400
    %v1465 = vmul.f32 %v1081, %v1401
    %v1466 = vmul.f32 %v1082, %v1402
    %v1467 = vmul.f32 %v1083, %v1403
    %v1468 = vmul.f32 %v1084, %v1404
    %vm1469 = vcmask 261120
    %1470 = vst.msk [vmem:[#allocation2] sm:$0xff] %vm1469, %v1405
    %1471 = vst.msk [vmem:[#allocation2 + $0x8] sm:$0xff] %vm1469, %v1406
    %1472 = vst.msk [vmem:[#allocation2 + $0x10] sm:$0xff] %vm1469, %v1407
    %1473 = vst.msk [vmem:[#allocation2 + $0x18] sm:$0xff] %vm1469, %v1408
    %1474 = vst.msk [vmem:[#allocation2 + $0x20] sm:$0xff] %vm1469, %v1409
    %1475 = vst.msk [vmem:[#allocation2 + $0x28] sm:$0xff] %vm1469, %v1410
    %1476 = vst.msk [vmem:[#allocation2 + $0x30] sm:$0xff] %vm1469, %v1411
    %1477 = vst.msk [vmem:[#allocation2 + $0x38] sm:$0xff] %vm1469, %v1412
    %1478 = vst.msk [vmem:[#allocation2 + $0x40] sm:$0xff] %vm1469, %v1413
    %1479 = vst.msk [vmem:[#allocation2 + $0x48] sm:$0xff] %vm1469, %v1414
    %1480 = vst.msk [vmem:[#allocation2 + $0x50] sm:$0xff] %vm1469, %v1415
    %1481 = vst.msk [vmem:[#allocation2 + $0x58] sm:$0xff] %vm1469, %v1416
    %1482 = vst.msk [vmem:[#allocation2 + $0x60] sm:$0xff] %vm1469, %v1417
    %1483 = vst.msk [vmem:[#allocation2 + $0x68] sm:$0xff] %vm1469, %v1418
    %1484 = vst.msk [vmem:[#allocation2 + $0x70] sm:$0xff] %vm1469, %v1419
    %1485 = vst.msk [vmem:[#allocation2 + $0x78] sm:$0xff] %vm1469, %v1420
    %1486 = vst.msk [vmem:[#allocation2 + $0x80] sm:$0xff] %vm1469, %v1421
    %1487 = vst.msk [vmem:[#allocation2 + $0x88] sm:$0xff] %vm1469, %v1422
    %1488 = vst.msk [vmem:[#allocation2 + $0x90] sm:$0xff] %vm1469, %v1423
    %1489 = vst.msk [vmem:[#allocation2 + $0x98] sm:$0xff] %vm1469, %v1424
    %1490 = vst.msk [vmem:[#allocation2 + $0xa0] sm:$0xff] %vm1469, %v1425
    %1491 = vst.msk [vmem:[#allocation2 + $0xa8] sm:$0xff] %vm1469, %v1426
    %1492 = vst.msk [vmem:[#allocation2 + $0xb0] sm:$0xff] %vm1469, %v1427
    %1493 = vst.msk [vmem:[#allocation2 + $0xb8] sm:$0xff] %vm1469, %v1428
    %1494 = vst.msk [vmem:[#allocation2 + $0xc0] sm:$0xff] %vm1469, %v1429
    %1495 = vst.msk [vmem:[#allocation2 + $0xc8] sm:$0xff] %vm1469, %v1430
    %1496 = vst.msk [vmem:[#allocation2 + $0xd0] sm:$0xff] %vm1469, %v1431
    %1497 = vst.msk [vmem:[#allocation2 + $0xd8] sm:$0xff] %vm1469, %v1432
    %1498 = vst.msk [vmem:[#allocation2 + $0xe0] sm:$0xff] %vm1469, %v1433
    %1499 = vst.msk [vmem:[#allocation2 + $0xe8] sm:$0xff] %vm1469, %v1434
    %1500 = vst.msk [vmem:[#allocation2 + $0xf0] sm:$0xff] %vm1469, %v1435
    %1501 = vst.msk [vmem:[#allocation2 + $0xf8] sm:$0xff] %vm1469, %v1436
    %1502 = vst.msk [vmem:[#allocation2 + $0x100] sm:$0xff] %vm1469, %v1437
    %1503 = vst.msk [vmem:[#allocation2 + $0x108] sm:$0xff] %vm1469, %v1438
    %1504 = vst.msk [vmem:[#allocation2 + $0x110] sm:$0xff] %vm1469, %v1439
    %1505 = vst.msk [vmem:[#allocation2 + $0x118] sm:$0xff] %vm1469, %v1440
    %1506 = vst.msk [vmem:[#allocation2 + $0x120] sm:$0xff] %vm1469, %v1441
    %1507 = vst.msk [vmem:[#allocation2 + $0x128] sm:$0xff] %vm1469, %v1442
    %1508 = vst.msk [vmem:[#allocation2 + $0x130] sm:$0xff] %vm1469, %v1443
    %1509 = vst.msk [vmem:[#allocation2 + $0x138] sm:$0xff] %vm1469, %v1444
    %1510 = vst.msk [vmem:[#allocation2 + $0x140] sm:$0xff] %vm1469, %v1445
    %1511 = vst.msk [vmem:[#allocation2 + $0x148] sm:$0xff] %vm1469, %v1446
    %1512 = vst.msk [vmem:[#allocation2 + $0x150] sm:$0xff] %vm1469, %v1447
    %1513 = vst.msk [vmem:[#allocation2 + $0x158] sm:$0xff] %vm1469, %v1448
    %1514 = vst.msk [vmem:[#allocation2 + $0x160] sm:$0xff] %vm1469, %v1449
    %1515 = vst.msk [vmem:[#allocation2 + $0x168] sm:$0xff] %vm1469, %v1450
    %1516 = vst.msk [vmem:[#allocation2 + $0x170] sm:$0xff] %vm1469, %v1451
    %1517 = vst.msk [vmem:[#allocation2 + $0x178] sm:$0xff] %vm1469, %v1452
    %1518 = vst.msk [vmem:[#allocation2 + $0x180] sm:$0xff] %vm1469, %v1453
    %1519 = vst.msk [vmem:[#allocation2 + $0x188] sm:$0xff] %vm1469, %v1454
    %1520 = vst.msk [vmem:[#allocation2 + $0x190] sm:$0xff] %vm1469, %v1455
    %1521 = vst.msk [vmem:[#allocation2 + $0x198] sm:$0xff] %vm1469, %v1456
    %1522 = vst.msk [vmem:[#allocation2 + $0x1a0] sm:$0xff] %vm1469, %v1457
    %1523 = vst.msk [vmem:[#allocation2 + $0x1a8] sm:$0xff] %vm1469, %v1458
    %1524 = vst.msk [vmem:[#allocation2 + $0x1b0] sm:$0xff] %vm1469, %v1459
    %1525 = vst.msk [vmem:[#allocation2 + $0x1b8] sm:$0xff] %vm1469, %v1460
    %1526 = vst.msk [vmem:[#allocation2 + $0x1c0] sm:$0xff] %vm1469, %v1461
    %1527 = vst.msk [vmem:[#allocation2 + $0x1c8] sm:$0xff] %vm1469, %v1462
    %1528 = vst.msk [vmem:[#allocation2 + $0x1d0] sm:$0xff] %vm1469, %v1463
    %1529 = vst.msk [vmem:[#allocation2 + $0x1d8] sm:$0xff] %vm1469, %v1464
    %1530 = vst.msk [vmem:[#allocation2 + $0x1e0] sm:$0xff] %vm1469, %v1465
    %1531 = vst.msk [vmem:[#allocation2 + $0x1e8] sm:$0xff] %vm1469, %v1466
    %1532 = vst.msk [vmem:[#allocation2 + $0x1f0] sm:$0xff] %vm1469, %v1467
    %1533 = vst.msk [vmem:[#allocation2 + $0x1f8] sm:$0xff] %vm1469, %v1468
    // Predicated region
    $region22: #{repcsp_forward.7} parent=1 // pred_check
      _
    $region23: #{repcsp_forward.7} parent=1 // pred_check_branch
      %1535 = sbr.rel (0) target = $region25
    $region24: #{repcsp_forward.7} parent=1 // pred_region
      %1537 = vsyncadd [#allocation3], 0
      %s1538 = sshll.u32 [#allocation2], 4
      %s1539 = int_to_ptr.vmem [resolvable:$true] %s1538
      %s1540 = sshll.u32 %s5, 4
      %s1541 = int_to_ptr.hbm [resolvable:$true] %s1540
      %1546 = dma.vmem_to_hbm [thread:$0]  %s1539, 8192, %s1541, [#allocation3], 128, 128, 8
    $region25: #{repcsp_forward.7} parent=1 // pred_fallthru
      _
    // Predicated region
    $region26: #{repcsp_forward.7} parent=1 // pred_check
      _
    $region27: #{repcsp_forward.7} parent=1 // pred_check_branch
      %1548 = sbr.rel (0) target = $region29
    $region28: #{repcsp_forward.7} parent=1 // pred_region
      %1550 = dma.done [#allocation3], 8192
    $region29: #{repcsp_forward.7} parent=1 // pred_fallthru
      _
    %1551 = vsyncpa [#allocation3], 1

// kernel: repcsp_forward.4
$region0: #{repcsp_forward.4}
  #allocation0 [shape = 'u32[]', space=smem, size = 0x4, offset = 0x4, fixed_abs, tag = 'smem constant byte address 0x4 - core index']
  #allocation1 [shape = 'u32[72,128]{1,0:T(1,128)}', space=vmem, size = 0x9000, scoped, tag = 'internal scratch']
  %s0 = inlined_call_operand.vmem [shape: bf16[512,32], index: 0, kind: input, shape index: {}]
  %s1 = inlined_call_operand.vmem [shape: bf16[32,32], index: 1, kind: input, shape index: {}]
  %s2 = inlined_call_operand.vmem [shape: f32[1,32], index: 2, kind: input, shape index: {}]
  %s3 = inlined_call_operand.vmem [shape: bf16[512,16], index: 3, kind: output, shape index: {0}]
  %s4 = inlined_call_operand.vmem [shape: bf16[512,16], index: 4, kind: output, shape index: {1}]
  %5 = xla_tuple %s3, %s4
  %s6 = sld [smem:[#allocation0]]
  $region30: #{repcsp_forward.4} parent=0
    _
  %s8 = ssub.s32 1, %s6
  %s9 = scalar_select 0, %s8, %s6
  // Predicated region
  $region2: #{repcsp_forward.4} parent=0 // pred_check
    _
  $region3: #{repcsp_forward.4} parent=0 // pred_check_branch
    %11 = sbr.rel (0) target = $region5
  $region4: #{repcsp_forward.4} parent=0 // pred_region
    _
  $region5: #{repcsp_forward.4} parent=0 // pred_fallthru
    _
  // Predicated region
  $region6: #{repcsp_forward.4} parent=0 // pred_check
    _
  $region7: #{repcsp_forward.4} parent=0 // pred_check_branch
    %13 = sbr.rel (0) target = $region9
  $region8: #{repcsp_forward.4} parent=0 // pred_region
    _
  $region9: #{repcsp_forward.4} parent=0 // pred_fallthru
    _
  // Predicated region
  $region10: #{repcsp_forward.4} parent=0 // pred_check
    _
  $region11: #{repcsp_forward.4} parent=0 // pred_check_branch
    %15 = sbr.rel (0) target = $region13
  $region12: #{repcsp_forward.4} parent=0 // pred_region
    _
  $region13: #{repcsp_forward.4} parent=0 // pred_fallthru
    _
  %v17 = vld [vmem:[%s0] sm:$0xf]
  %v18 = vld [vmem:[%s0 + $0x4] sm:$0xf]
  %v19 = vld [vmem:[%s0 + $0x8] sm:$0xf]
  %v20 = vld [vmem:[%s0 + $0xc] sm:$0xf]
  %v21 = vld [vmem:[%s0 + $0x10] sm:$0xf]
  %v22 = vld [vmem:[%s0 + $0x14] sm:$0xf]
  %v23 = vld [vmem:[%s0 + $0x18] sm:$0xf]
  %v24 = vld [vmem:[%s0 + $0x1c] sm:$0xf]
  %v25 = vld [vmem:[%s0 + $0x20] sm:$0xf]
  %v26 = vld [vmem:[%s0 + $0x24] sm:$0xf]
  %v27 = vld [vmem:[%s0 + $0x28] sm:$0xf]
  %v28 = vld [vmem:[%s0 + $0x2c] sm:$0xf]
  %v29 = vld [vmem:[%s0 + $0x30] sm:$0xf]
  %v30 = vld [vmem:[%s0 + $0x34] sm:$0xf]
  %v31 = vld [vmem:[%s0 + $0x38] sm:$0xf]
  %v32 = vld [vmem:[%s0 + $0x3c] sm:$0xf]
  %v33 = vld [vmem:[%s0 + $0x40] sm:$0xf]
  %v34 = vld [vmem:[%s0 + $0x44] sm:$0xf]
  %v35 = vld [vmem:[%s0 + $0x48] sm:$0xf]
  %v36 = vld [vmem:[%s0 + $0x4c] sm:$0xf]
  %v37 = vld [vmem:[%s0 + $0x50] sm:$0xf]
  %v38 = vld [vmem:[%s0 + $0x54] sm:$0xf]
  %v39 = vld [vmem:[%s0 + $0x58] sm:$0xf]
  %v40 = vld [vmem:[%s0 + $0x5c] sm:$0xf]
  %v41 = vld [vmem:[%s0 + $0x60] sm:$0xf]
  %v42 = vld [vmem:[%s0 + $0x64] sm:$0xf]
  %v43 = vld [vmem:[%s0 + $0x68] sm:$0xf]
  %v44 = vld [vmem:[%s0 + $0x6c] sm:$0xf]
  %v45 = vld [vmem:[%s0 + $0x70] sm:$0xf]
  %v46 = vld [vmem:[%s0 + $0x74] sm:$0xf]
  %v47 = vld [vmem:[%s0 + $0x78] sm:$0xf]
  %v48 = vld [vmem:[%s0 + $0x7c] sm:$0xf]
  %v49 = vld [vmem:[%s0 + $0x80] sm:$0xf]
  %v50 = vld [vmem:[%s0 + $0x84] sm:$0xf]
  %v51 = vld [vmem:[%s0 + $0x88] sm:$0xf]
  %v52 = vld [vmem:[%s0 + $0x8c] sm:$0xf]
  %v53 = vld [vmem:[%s0 + $0x90] sm:$0xf]
  %v54 = vld [vmem:[%s0 + $0x94] sm:$0xf]
  %v55 = vld [vmem:[%s0 + $0x98] sm:$0xf]
  %v56 = vld [vmem:[%s0 + $0x9c] sm:$0xf]
  %v57 = vld [vmem:[%s0 + $0xa0] sm:$0xf]
  %v58 = vld [vmem:[%s0 + $0xa4] sm:$0xf]
  %v59 = vld [vmem:[%s0 + $0xa8] sm:$0xf]
  %v60 = vld [vmem:[%s0 + $0xac] sm:$0xf]
  %v61 = vld [vmem:[%s0 + $0xb0] sm:$0xf]
  %v62 = vld [vmem:[%s0 + $0xb4] sm:$0xf]
  %v63 = vld [vmem:[%s0 + $0xb8] sm:$0xf]
  %v64 = vld [vmem:[%s0 + $0xbc] sm:$0xf]
  %v65 = vld [vmem:[%s0 + $0xc0] sm:$0xf]
  %v66 = vld [vmem:[%s0 + $0xc4] sm:$0xf]
  %v67 = vld [vmem:[%s0 + $0xc8] sm:$0xf]
  %v68 = vld [vmem:[%s0 + $0xcc] sm:$0xf]
  %v69 = vld [vmem:[%s0 + $0xd0] sm:$0xf]
  %v70 = vld [vmem:[%s0 + $0xd4] sm:$0xf]
  %v71 = vld [vmem:[%s0 + $0xd8] sm:$0xf]
  %v72 = vld [vmem:[%s0 + $0xdc] sm:$0xf]
  %v73 = vld [vmem:[%s0 + $0xe0] sm:$0xf]
  %v74 = vld [vmem:[%s0 + $0xe4] sm:$0xf]
  %v75 = vld [vmem:[%s0 + $0xe8] sm:$0xf]
  %v76 = vld [vmem:[%s0 + $0xec] sm:$0xf]
  %v77 = vld [vmem:[%s0 + $0xf0] sm:$0xf]
  %v78 = vld [vmem:[%s0 + $0xf4] sm:$0xf]
  %v79 = vld [vmem:[%s0 + $0xf8] sm:$0xf]
  %v80 = vld [vmem:[%s0 + $0xfc] sm:$0xf]
  %v81 = vld [vmem:[%s1] sm:$0xf]
  %v82 = vld [vmem:[%s1 + $0x4] sm:$0xf]
  %v83 = vld [vmem:[%s1 + $0x8] sm:$0xf]
  %v84 = vld [vmem:[%s1 + $0xc] sm:$0xf]
  %v85 = vld [vmem:[%s2] sm:$0x1]
  %v87 = vperm.slane %v85, 0
  %v153 = vunpack.c.l.b16 %v17
  %v154 = vunpack.c.l.b16 %v18
  %v155 = vunpack.c.l.b16 %v19
  %v156 = vunpack.c.l.b16 %v20
  %v157 = vunpack.c.l.b16 %v21
  %v158 = vunpack.c.l.b16 %v22
  %v159 = vunpack.c.l.b16 %v23
  %v160 = vunpack.c.l.b16 %v24
  %v161 = vunpack.c.l.b16 %v25
  %v162 = vunpack.c.l.b16 %v26
  %v163 = vunpack.c.l.b16 %v27
  %v164 = vunpack.c.l.b16 %v28
  %v165 = vunpack.c.l.b16 %v29
  %v166 = vunpack.c.l.b16 %v30
  %v167 = vunpack.c.l.b16 %v31
  %v168 = vunpack.c.l.b16 %v32
  %v169 = vunpack.c.l.b16 %v33
  %v170 = vunpack.c.l.b16 %v34
  %v171 = vunpack.c.l.b16 %v35
  %v172 = vunpack.c.l.b16 %v36
  %v173 = vunpack.c.l.b16 %v37
  %v174 = vunpack.c.l.b16 %v38
  %v175 = vunpack.c.l.b16 %v39
  %v176 = vunpack.c.l.b16 %v40
  %v177 = vunpack.c.l.b16 %v41
  %v178 = vunpack.c.l.b16 %v42
  %v179 = vunpack.c.l.b16 %v43
  %v180 = vunpack.c.l.b16 %v44
  %v181 = vunpack.c.l.b16 %v45
  %v182 = vunpack.c.l.b16 %v46
  %v183 = vunpack.c.l.b16 %v47
  %v184 = vunpack.c.l.b16 %v48
  %v185 = vunpack.c.l.b16 %v49
  %v186 = vunpack.c.l.b16 %v50
  %v187 = vunpack.c.l.b16 %v51
  %v188 = vunpack.c.l.b16 %v52
  %v189 = vunpack.c.l.b16 %v53
  %v190 = vunpack.c.l.b16 %v54
  %v191 = vunpack.c.l.b16 %v55
  %v192 = vunpack.c.l.b16 %v56
  %v193 = vunpack.c.l.b16 %v57
  %v194 = vunpack.c.l.b16 %v58
  %v195 = vunpack.c.l.b16 %v59
  %v196 = vunpack.c.l.b16 %v60
  %v197 = vunpack.c.l.b16 %v61
  %v198 = vunpack.c.l.b16 %v62
  %v199 = vunpack.c.l.b16 %v63
  %v200 = vunpack.c.l.b16 %v64
  %v201 = vunpack.c.l.b16 %v65
  %v202 = vunpack.c.l.b16 %v66
  %v203 = vunpack.c.l.b16 %v67
  %v204 = vunpack.c.l.b16 %v68
  %v205 = vunpack.c.l.b16 %v69
  %v206 = vunpack.c.l.b16 %v70
  %v207 = vunpack.c.l.b16 %v71
  %v208 = vunpack.c.l.b16 %v72
  %v209 = vunpack.c.l.b16 %v73
  %v210 = vunpack.c.l.b16 %v74
  %v211 = vunpack.c.l.b16 %v75
  %v212 = vunpack.c.l.b16 %v76
  %v213 = vunpack.c.l.b16 %v77
  %v214 = vunpack.c.l.b16 %v78
  %v215 = vunpack.c.l.b16 %v79
  %v216 = vunpack.c.l.b16 %v80
  %v217 = vpack.c.b16 %v154, %v153
  %v218 = vpack.c.b16 %v156, %v155
  %v219 = vpack.c.b16 %v158, %v157
  %v220 = vpack.c.b16 %v160, %v159
  %v221 = vpack.c.b16 %v162, %v161
  %v222 = vpack.c.b16 %v164, %v163
  %v223 = vpack.c.b16 %v166, %v165
  %v224 = vpack.c.b16 %v168, %v167
  %v225 = vpack.c.b16 %v170, %v169
  %v226 = vpack.c.b16 %v172, %v171
  %v227 = vpack.c.b16 %v174, %v173
  %v228 = vpack.c.b16 %v176, %v175
  %v229 = vpack.c.b16 %v178, %v177
  %v230 = vpack.c.b16 %v180, %v179
  %v231 = vpack.c.b16 %v182, %v181
  %v232 = vpack.c.b16 %v184, %v183
  %v233 = vpack.c.b16 %v186, %v185
  %v234 = vpack.c.b16 %v188, %v187
  %v235 = vpack.c.b16 %v190, %v189
  %v236 = vpack.c.b16 %v192, %v191
  %v237 = vpack.c.b16 %v194, %v193
  %v238 = vpack.c.b16 %v196, %v195
  %v239 = vpack.c.b16 %v198, %v197
  %v240 = vpack.c.b16 %v200, %v199
  %v241 = vpack.c.b16 %v202, %v201
  %v242 = vpack.c.b16 %v204, %v203
  %v243 = vpack.c.b16 %v206, %v205
  %v244 = vpack.c.b16 %v208, %v207
  %v245 = vpack.c.b16 %v210, %v209
  %v246 = vpack.c.b16 %v212, %v211
  %v247 = vpack.c.b16 %v214, %v213
  %v248 = vpack.c.b16 %v216, %v215
  %v253 = vunpack.c.l.b16 %v81
  %v254 = vunpack.c.l.b16 %v82
  %v255 = vunpack.c.l.b16 %v83
  %v256 = vunpack.c.l.b16 %v84
  %v257 = vpack.c.b16 %v254, %v253
  %v258 = vpack.c.b16 %v256, %v255
  %vm261 = vcmask 261120
  %v263 = vsel %vm261, %v217, 0
  %v266 = vsel %vm261, %v218, 0
  %v269 = vsel %vm261, %v219, 0
  %v272 = vsel %vm261, %v220, 0
  %v275 = vsel %vm261, %v221, 0
  %v278 = vsel %vm261, %v222, 0
  %v281 = vsel %vm261, %v223, 0
  %v284 = vsel %vm261, %v224, 0
  %v287 = vsel %vm261, %v225, 0
  %v290 = vsel %vm261, %v226, 0
  %v293 = vsel %vm261, %v227, 0
  %v296 = vsel %vm261, %v228, 0
  %v299 = vsel %vm261, %v229, 0
  %v302 = vsel %vm261, %v230, 0
  %v305 = vsel %vm261, %v231, 0
  %v308 = vsel %vm261, %v232, 0
  %v311 = vsel %vm261, %v233, 0
  %v314 = vsel %vm261, %v234, 0
  %v317 = vsel %vm261, %v235, 0
  %v320 = vsel %vm261, %v236, 0
  %v323 = vsel %vm261, %v237, 0
  %v326 = vsel %vm261, %v238, 0
  %v329 = vsel %vm261, %v239, 0
  %v332 = vsel %vm261, %v240, 0
  %v335 = vsel %vm261, %v241, 0
  %v338 = vsel %vm261, %v242, 0
  %v341 = vsel %vm261, %v243, 0
  %v344 = vsel %vm261, %v244, 0
  %v347 = vsel %vm261, %v245, 0
  %v350 = vsel %vm261, %v246, 0
  %v353 = vsel %vm261, %v247, 0
  %v356 = vsel %vm261, %v248, 0
  %358 = vmatpush.bf16.msra.mxu0 0
  %359 = vmatpush.bf16.msra.mxu0 0
  %360 = vmatpush.bf16.msra.mxu0 0
  %361 = vmatpush.bf16.msra.mxu0 0
  %362 = vmatpush.bf16.msra.mxu0 0
  %363 = vmatpush.bf16.msra.mxu0 0
  %364 = vmatpush.bf16.msra.mxu0 %v258
  %365 = vmatpush.bf16.msra.mxu0 %v257
  %366 = vmatmul.bf16.gmra.mxu0 %v263
  %v367 = vpop.f32.mrf.mxu0
  %v368 = vadd.f32 %v87, %v367
  %v369 = vpop.f32.mrf.mxu0
  %v370 = vadd.f32 %v87, %v369
  %371 = vmatmul.bf16.gmra.mxu0 %v266
  %v372 = vpop.f32.mrf.mxu0
  %v373 = vadd.f32 %v87, %v372
  %v374 = vpop.f32.mrf.mxu0
  %v375 = vadd.f32 %v87, %v374
  %376 = vmatmul.bf16.gmra.mxu0 %v269
  %v377 = vpop.f32.mrf.mxu0
  %v378 = vadd.f32 %v87, %v377
  %v379 = vpop.f32.mrf.mxu0
  %v380 = vadd.f32 %v87, %v379
  %381 = vmatmul.bf16.gmra.mxu0 %v272
  %v382 = vpop.f32.mrf.mxu0
  %v383 = vadd.f32 %v87, %v382
  %v384 = vpop.f32.mrf.mxu0
  %v385 = vadd.f32 %v87, %v384
  %386 = vmatmul.bf16.gmra.mxu0 %v275
  %v387 = vpop.f32.mrf.mxu0
  %v388 = vadd.f32 %v87, %v387
  %v389 = vpop.f32.mrf.mxu0
  %v390 = vadd.f32 %v87, %v389
  %391 = vmatmul.bf16.gmra.mxu0 %v278
  %v392 = vpop.f32.mrf.mxu0
  %v393 = vadd.f32 %v87, %v392
  %v394 = vpop.f32.mrf.mxu0
  %v395 = vadd.f32 %v87, %v394
  %396 = vmatmul.bf16.gmra.mxu0 %v281
  %v397 = vpop.f32.mrf.mxu0
  %v398 = vadd.f32 %v87, %v397
  %v399 = vpop.f32.mrf.mxu0
  %v400 = vadd.f32 %v87, %v399
  %401 = vmatmul.bf16.gmra.mxu0 %v284
  %v402 = vpop.f32.mrf.mxu0
  %v403 = vadd.f32 %v87, %v402
  %v404 = vpop.f32.mrf.mxu0
  %v405 = vadd.f32 %v87, %v404
  %406 = vmatmul.bf16.gmra.mxu0 %v287
  %v407 = vpop.f32.mrf.mxu0
  %v408 = vadd.f32 %v87, %v407
  %v409 = vpop.f32.mrf.mxu0
  %v410 = vadd.f32 %v87, %v409
  %411 = vmatmul.bf16.gmra.mxu0 %v290
  %v412 = vpop.f32.mrf.mxu0
  %v413 = vadd.f32 %v87, %v412
  %v414 = vpop.f32.mrf.mxu0
  %v415 = vadd.f32 %v87, %v414
  %416 = vmatmul.bf16.gmra.mxu0 %v293
  %v417 = vpop.f32.mrf.mxu0
  %v418 = vadd.f32 %v87, %v417
  %v419 = vpop.f32.mrf.mxu0
  %v420 = vadd.f32 %v87, %v419
  %421 = vmatmul.bf16.gmra.mxu0 %v296
  %v422 = vpop.f32.mrf.mxu0
  %v423 = vadd.f32 %v87, %v422
  %v424 = vpop.f32.mrf.mxu0
  %v425 = vadd.f32 %v87, %v424
  %426 = vmatmul.bf16.gmra.mxu0 %v299
  %v427 = vpop.f32.mrf.mxu0
  %v428 = vadd.f32 %v87, %v427
  %v429 = vpop.f32.mrf.mxu0
  %v430 = vadd.f32 %v87, %v429
  %431 = vmatmul.bf16.gmra.mxu0 %v302
  %v432 = vpop.f32.mrf.mxu0
  %v433 = vadd.f32 %v87, %v432
  %v434 = vpop.f32.mrf.mxu0
  %v435 = vadd.f32 %v87, %v434
  %436 = vmatmul.bf16.gmra.mxu0 %v305
  %v437 = vpop.f32.mrf.mxu0
  %v438 = vadd.f32 %v87, %v437
  %v439 = vpop.f32.mrf.mxu0
  %v440 = vadd.f32 %v87, %v439
  %441 = vmatmul.bf16.gmra.mxu0 %v308
  %v442 = vpop.f32.mrf.mxu0
  %v443 = vadd.f32 %v87, %v442
  %v444 = vpop.f32.mrf.mxu0
  %v445 = vadd.f32 %v87, %v444
  %446 = vmatmul.bf16.gmra.mxu0 %v311
  %v447 = vpop.f32.mrf.mxu0
  %v448 = vadd.f32 %v87, %v447
  %v449 = vpop.f32.mrf.mxu0
  %v450 = vadd.f32 %v87, %v449
  %451 = vmatmul.bf16.gmra.mxu0 %v314
  %v452 = vpop.f32.mrf.mxu0
  %v453 = vadd.f32 %v87, %v452
  %v454 = vpop.f32.mrf.mxu0
  %v455 = vadd.f32 %v87, %v454
  %456 = vmatmul.bf16.gmra.mxu0 %v317
  %v457 = vpop.f32.mrf.mxu0
  %v458 = vadd.f32 %v87, %v457
  %v459 = vpop.f32.mrf.mxu0
  %v460 = vadd.f32 %v87, %v459
  %461 = vmatmul.bf16.gmra.mxu0 %v320
  %v462 = vpop.f32.mrf.mxu0
  %v463 = vadd.f32 %v87, %v462
  %v464 = vpop.f32.mrf.mxu0
  %v465 = vadd.f32 %v87, %v464
  %466 = vmatmul.bf16.gmra.mxu0 %v323
  %v467 = vpop.f32.mrf.mxu0
  %v468 = vadd.f32 %v87, %v467
  %v469 = vpop.f32.mrf.mxu0
  %v470 = vadd.f32 %v87, %v469
  %471 = vmatmul.bf16.gmra.mxu0 %v326
  %v472 = vpop.f32.mrf.mxu0
  %v473 = vadd.f32 %v87, %v472
  %v474 = vpop.f32.mrf.mxu0
  %v475 = vadd.f32 %v87, %v474
  %476 = vmatmul.bf16.gmra.mxu0 %v329
  %v477 = vpop.f32.mrf.mxu0
  %v478 = vadd.f32 %v87, %v477
  %v479 = vpop.f32.mrf.mxu0
  %v480 = vadd.f32 %v87, %v479
  %481 = vmatmul.bf16.gmra.mxu0 %v332
  %v482 = vpop.f32.mrf.mxu0
  %v483 = vadd.f32 %v87, %v482
  %v484 = vpop.f32.mrf.mxu0
  %v485 = vadd.f32 %v87, %v484
  %486 = vmatmul.bf16.gmra.mxu0 %v335
  %v487 = vpop.f32.mrf.mxu0
  %v488 = vadd.f32 %v87, %v487
  %v489 = vpop.f32.mrf.mxu0
  %v490 = vadd.f32 %v87, %v489
  %491 = vmatmul.bf16.gmra.mxu0 %v338
  %v492 = vpop.f32.mrf.mxu0
  %v493 = vadd.f32 %v87, %v492
  %v494 = vpop.f32.mrf.mxu0
  %v495 = vadd.f32 %v87, %v494
  %496 = vmatmul.bf16.gmra.mxu0 %v341
  %v497 = vpop.f32.mrf.mxu0
  %v498 = vadd.f32 %v87, %v497
  %v499 = vpop.f32.mrf.mxu0
  %v500 = vadd.f32 %v87, %v499
  %501 = vmatmul.bf16.gmra.mxu0 %v344
  %v502 = vpop.f32.mrf.mxu0
  %v503 = vadd.f32 %v87, %v502
  %v504 = vpop.f32.mrf.mxu0
  %v505 = vadd.f32 %v87, %v504
  %506 = vmatmul.bf16.gmra.mxu0 %v347
  %v507 = vpop.f32.mrf.mxu0
  %v508 = vadd.f32 %v87, %v507
  %v509 = vpop.f32.mrf.mxu0
  %v510 = vadd.f32 %v87, %v509
  %511 = vmatmul.bf16.gmra.mxu0 %v350
  %v512 = vpop.f32.mrf.mxu0
  %v513 = vadd.f32 %v87, %v512
  %v514 = vpop.f32.mrf.mxu0
  %v515 = vadd.f32 %v87, %v514
  %516 = vmatmul.bf16.gmra.mxu0 %v353
  %v517 = vpop.f32.mrf.mxu0
  %v518 = vadd.f32 %v87, %v517
  %v519 = vpop.f32.mrf.mxu0
  %v520 = vadd.f32 %v87, %v519
  %521 = vmatmul.bf16.gmra.mxu0 %v356
  %v522 = vpop.f32.mrf.mxu0
  %v523 = vadd.f32 %v87, %v522
  %v524 = vpop.f32.mrf.mxu0
  %v525 = vadd.f32 %v87, %v524
  %526 = vdwg.mxu0
  %v527 = vsub.f32 0.0, %v368
  %v528 = vsub.f32 0.0, %v370
  %v529 = vsub.f32 0.0, %v373
  %v530 = vsub.f32 0.0, %v375
  %v531 = vsub.f32 0.0, %v378
  %v532 = vsub.f32 0.0, %v380
  %v533 = vsub.f32 0.0, %v383
  %v534 = vsub.f32 0.0, %v385
  %v535 = vsub.f32 0.0, %v388
  %v536 = vsub.f32 0.0, %v390
  %v537 = vsub.f32 0.0, %v393
  %v538 = vsub.f32 0.0, %v395
  %v539 = vsub.f32 0.0, %v398
  %v540 = vsub.f32 0.0, %v400
  %v541 = vsub.f32 0.0, %v403
  %v542 = vsub.f32 0.0, %v405
  %v543 = vsub.f32 0.0, %v408
  %v544 = vsub.f32 0.0, %v410
  %v545 = vsub.f32 0.0, %v413
  %v546 = vsub.f32 0.0, %v415
  %v547 = vsub.f32 0.0, %v418
  %v548 = vsub.f32 0.0, %v420
  %v549 = vsub.f32 0.0, %v423
  %v550 = vsub.f32 0.0, %v425
  %v551 = vsub.f32 0.0, %v428
  %v552 = vsub.f32 0.0, %v430
  %v553 = vsub.f32 0.0, %v433
  %v554 = vsub.f32 0.0, %v435
  %v555 = vsub.f32 0.0, %v438
  %v556 = vsub.f32 0.0, %v440
  %v557 = vsub.f32 0.0, %v443
  %v558 = vsub.f32 0.0, %v445
  %v559 = vsub.f32 0.0, %v448
  %v560 = vsub.f32 0.0, %v450
  %v561 = vsub.f32 0.0, %v453
  %v562 = vsub.f32 0.0, %v455
  %v563 = vsub.f32 0.0, %v458
  %v564 = vsub.f32 0.0, %v460
  %v565 = vsub.f32 0.0, %v463
  %v566 = vsub.f32 0.0, %v465
  %v567 = vsub.f32 0.0, %v468
  %v568 = vsub.f32 0.0, %v470
  %v569 = vsub.f32 0.0, %v473
  %v570 = vsub.f32 0.0, %v475
  %v571 = vsub.f32 0.0, %v478
  %v572 = vsub.f32 0.0, %v480
  %v573 = vsub.f32 0.0, %v483
  %v574 = vsub.f32 0.0, %v485
  %v575 = vsub.f32 0.0, %v488
  %v576 = vsub.f32 0.0, %v490
  %v577 = vsub.f32 0.0, %v493
  %v578 = vsub.f32 0.0, %v495
  %v579 = vsub.f32 0.0, %v498
  %v580 = vsub.f32 0.0, %v500
  %v581 = vsub.f32 0.0, %v503
  %v582 = vsub.f32 0.0, %v505
  %v583 = vsub.f32 0.0, %v508
  %v584 = vsub.f32 0.0, %v510
  %v585 = vsub.f32 0.0, %v513
  %v586 = vsub.f32 0.0, %v515
  %v587 = vsub.f32 0.0, %v518
  %v588 = vsub.f32 0.0, %v520
  %v589 = vsub.f32 0.0, %v523
  %v590 = vsub.f32 0.0, %v525
  %v591 = vmul.f32 %v527, 1.442695
  %v592 = vpow.pop %v591
  %v593 = vmul.f32 %v528, 1.442695
  %v594 = vpow.pop %v593
  %v595 = vmul.f32 %v529, 1.442695
  %v596 = vpow.pop %v595
  %v597 = vmul.f32 %v530, 1.442695
  %v598 = vpow.pop %v597
  %v599 = vmul.f32 %v531, 1.442695
  %v600 = vpow.pop %v599
  %v601 = vmul.f32 %v532, 1.442695
  %v602 = vpow.pop %v601
  %v603 = vmul.f32 %v533, 1.442695
  %v604 = vpow.pop %v603
  %v605 = vmul.f32 %v534, 1.442695
  %v606 = vpow.pop %v605
  %v607 = vmul.f32 %v535, 1.442695
  %v608 = vpow.pop %v607
  %v609 = vmul.f32 %v536, 1.442695
  %v610 = vpow.pop %v609
  %v611 = vmul.f32 %v537, 1.442695
  %v612 = vpow.pop %v611
  %v613 = vmul.f32 %v538, 1.442695
  %v614 = vpow.pop %v613
  %v615 = vmul.f32 %v539, 1.442695
  %v616 = vpow.pop %v615
  %v617 = vmul.f32 %v540, 1.442695
  %v618 = vpow.pop %v617
  %v619 = vmul.f32 %v541, 1.442695
  %v620 = vpow.pop %v619
  %v621 = vmul.f32 %v542, 1.442695
  %v622 = vpow.pop %v621
  %v623 = vmul.f32 %v543, 1.442695
  %v624 = vpow.pop %v623
  %v625 = vmul.f32 %v544, 1.442695
  %v626 = vpow.pop %v625
  %v627 = vmul.f32 %v545, 1.442695
  %v628 = vpow.pop %v627
  %v629 = vmul.f32 %v546, 1.442695
  %v630 = vpow.pop %v629
  %v631 = vmul.f32 %v547, 1.442695
  %v632 = vpow.pop %v631
  %v633 = vmul.f32 %v548, 1.442695
  %v634 = vpow.pop %v633
  %v635 = vmul.f32 %v549, 1.442695
  %v636 = vpow.pop %v635
  %v637 = vmul.f32 %v550, 1.442695
  %v638 = vpow.pop %v637
  %v639 = vmul.f32 %v551, 1.442695
  %v640 = vpow.pop %v639
  %v641 = vmul.f32 %v552, 1.442695
  %v642 = vpow.pop %v641
  %v643 = vmul.f32 %v553, 1.442695
  %v644 = vpow.pop %v643
  %v645 = vmul.f32 %v554, 1.442695
  %v646 = vpow.pop %v645
  %v647 = vmul.f32 %v555, 1.442695
  %v648 = vpow.pop %v647
  %v649 = vmul.f32 %v556, 1.442695
  %v650 = vpow.pop %v649
  %v651 = vmul.f32 %v557, 1.442695
  %v652 = vpow.pop %v651
  %v653 = vmul.f32 %v558, 1.442695
  %v654 = vpow.pop %v653
  %v655 = vmul.f32 %v559, 1.442695
  %v656 = vpow.pop %v655
  %v657 = vmul.f32 %v560, 1.442695
  %v658 = vpow.pop %v657
  %v659 = vmul.f32 %v561, 1.442695
  %v660 = vpow.pop %v659
  %v661 = vmul.f32 %v562, 1.442695
  %v662 = vpow.pop %v661
  %v663 = vmul.f32 %v563, 1.442695
  %v664 = vpow.pop %v663
  %v665 = vmul.f32 %v564, 1.442695
  %v666 = vpow.pop %v665
  %v667 = vmul.f32 %v565, 1.442695
  %v668 = vpow.pop %v667
  %v669 = vmul.f32 %v566, 1.442695
  %v670 = vpow.pop %v669
  %v671 = vmul.f32 %v567, 1.442695
  %v672 = vpow.pop %v671
  %v673 = vmul.f32 %v568, 1.442695
  %v674 = vpow.pop %v673
  %v675 = vmul.f32 %v569, 1.442695
  %v676 = vpow.pop %v675
  %v677 = vmul.f32 %v570, 1.442695
  %v678 = vpow.pop %v677
  %v679 = vmul.f32 %v571, 1.442695
  %v680 = vpow.pop %v679
  %v681 = vmul.f32 %v572, 1.442695
  %v682 = vpow.pop %v681
  %v683 = vmul.f32 %v573, 1.442695
  %v684 = vpow.pop %v683
  %v685 = vmul.f32 %v574, 1.442695
  %v686 = vpow.pop %v685
  %v687 = vmul.f32 %v575, 1.442695
  %v688 = vpow.pop %v687
  %v689 = vmul.f32 %v576, 1.442695
  %v690 = vpow.pop %v689
  %v691 = vmul.f32 %v577, 1.442695
  %v692 = vpow.pop %v691
  %v693 = vmul.f32 %v578, 1.442695
  %v694 = vpow.pop %v693
  %v695 = vmul.f32 %v579, 1.442695
  %v696 = vpow.pop %v695
  %v697 = vmul.f32 %v580, 1.442695
  %v698 = vpow.pop %v697
  %v699 = vmul.f32 %v581, 1.442695
  %v700 = vpow.pop %v699
  %v701 = vmul.f32 %v582, 1.442695
  %v702 = vpow.pop %v701
  %v703 = vmul.f32 %v583, 1.442695
  %v704 = vpow.pop %v703
  %v705 = vmul.f32 %v584, 1.442695
  %v706 = vpow.pop %v705
  %v707 = vmul.f32 %v585, 1.442695
  %v708 = vpow.pop %v707
  %v709 = vmul.f32 %v586, 1.442695
  %v710 = vpow.pop %v709
  %v711 = vmul.f32 %v587, 1.442695
  %v712 = vpow.pop %v711
  %v713 = vmul.f32 %v588, 1.442695
  %v714 = vpow.pop %v713
  %v715 = vmul.f32 %v589, 1.442695
  %v716 = vpow.pop %v715
  %v717 = vmul.f32 %v590, 1.442695
  %v718 = vpow.pop %v717
  %v719 = vadd.f32 %v592, 1.0
  %v720 = vadd.f32 %v594, 1.0
  %v721 = vadd.f32 %v596, 1.0
  %v722 = vadd.f32 %v598, 1.0
  %v723 = vadd.f32 %v600, 1.0
  %v724 = vadd.f32 %v602, 1.0
  %v725 = vadd.f32 %v604, 1.0
  %v726 = vadd.f32 %v606, 1.0
  %v727 = vadd.f32 %v608, 1.0
  %v728 = vadd.f32 %v610, 1.0
  %v729 = vadd.f32 %v612, 1.0
  %v730 = vadd.f32 %v614, 1.0
  %v731 = vadd.f32 %v616, 1.0
  %v732 = vadd.f32 %v618, 1.0
  %v733 = vadd.f32 %v620, 1.0
  %v734 = vadd.f32 %v622, 1.0
  %v735 = vadd.f32 %v624, 1.0
  %v736 = vadd.f32 %v626, 1.0
  %v737 = vadd.f32 %v628, 1.0
  %v738 = vadd.f32 %v630, 1.0
  %v739 = vadd.f32 %v632, 1.0
  %v740 = vadd.f32 %v634, 1.0
  %v741 = vadd.f32 %v636, 1.0
  %v742 = vadd.f32 %v638, 1.0
  %v743 = vadd.f32 %v640, 1.0
  %v744 = vadd.f32 %v642, 1.0
  %v745 = vadd.f32 %v644, 1.0
  %v746 = vadd.f32 %v646, 1.0
  %v747 = vadd.f32 %v648, 1.0
  %v748 = vadd.f32 %v650, 1.0
  %v749 = vadd.f32 %v652, 1.0
  %v750 = vadd.f32 %v654, 1.0
  %v751 = vadd.f32 %v656, 1.0
  %v752 = vadd.f32 %v658, 1.0
  %v753 = vadd.f32 %v660, 1.0
  %v754 = vadd.f32 %v662, 1.0
  %v755 = vadd.f32 %v664, 1.0
  %v756 = vadd.f32 %v666, 1.0
  %v757 = vadd.f32 %v668, 1.0
  %v758 = vadd.f32 %v670, 1.0
  %v759 = vadd.f32 %v672, 1.0
  %v760 = vadd.f32 %v674, 1.0
  %v761 = vadd.f32 %v676, 1.0
  %v762 = vadd.f32 %v678, 1.0
  %v763 = vadd.f32 %v680, 1.0
  %v764 = vadd.f32 %v682, 1.0
  %v765 = vadd.f32 %v684, 1.0
  %v766 = vadd.f32 %v686, 1.0
  %v767 = vadd.f32 %v688, 1.0
  %v768 = vadd.f32 %v690, 1.0
  %v769 = vadd.f32 %v692, 1.0
  %v770 = vadd.f32 %v694, 1.0
  %v771 = vadd.f32 %v696, 1.0
  %v772 = vadd.f32 %v698, 1.0
  %v773 = vadd.f32 %v700, 1.0
  %v774 = vadd.f32 %v702, 1.0
  %v775 = vadd.f32 %v704, 1.0
  %v776 = vadd.f32 %v706, 1.0
  %v777 = vadd.f32 %v708, 1.0
  %v778 = vadd.f32 %v710, 1.0
  %v779 = vadd.f32 %v712, 1.0
  %v780 = vadd.f32 %v714, 1.0
  %v781 = vadd.f32 %v716, 1.0
  %v782 = vadd.f32 %v718, 1.0
  %v783 = vrcp.pop %v719
  %v784 = vrcp.pop %v720
  %v785 = vrcp.pop %v721
  %v786 = vrcp.pop %v722
  %v787 = vrcp.pop %v723
  %v788 = vrcp.pop %v724
  %v789 = vrcp.pop %v725
  %v790 = vrcp.pop %v726
  %v791 = vrcp.pop %v727
  %v792 = vrcp.pop %v728
  %v793 = vrcp.pop %v729
  %v794 = vrcp.pop %v730
  %v795 = vrcp.pop %v731
  %v796 = vrcp.pop %v732
  %v797 = vrcp.pop %v733
  %v798 = vrcp.pop %v734
  %v799 = vrcp.pop %v735
  %v800 = vrcp.pop %v736
  %v801 = vrcp.pop %v737
  %v802 = vrcp.pop %v738
  %v803 = vrcp.pop %v739
  %v804 = vrcp.pop %v740
  %v805 = vrcp.pop %v741
  %v806 = vrcp.pop %v742
  %v807 = vrcp.pop %v743
  %v808 = vrcp.pop %v744
  %v809 = vrcp.pop %v745
  %v810 = vrcp.pop %v746
  %v811 = vrcp.pop %v747
  %v812 = vrcp.pop %v748
  %v813 = vrcp.pop %v749
  %v814 = vrcp.pop %v750
  %v815 = vrcp.pop %v751
  %v816 = vrcp.pop %v752
  %v817 = vrcp.pop %v753
  %v818 = vrcp.pop %v754
  %v819 = vrcp.pop %v755
  %v820 = vrcp.pop %v756
  %v821 = vrcp.pop %v757
  %v822 = vrcp.pop %v758
  %v823 = vrcp.pop %v759
  %v824 = vrcp.pop %v760
  %v825 = vrcp.pop %v761
  %v826 = vrcp.pop %v762
  %v827 = vrcp.pop %v763
  %v828 = vrcp.pop %v764
  %v829 = vrcp.pop %v765
  %v830 = vrcp.pop %v766
  %v831 = vrcp.pop %v767
  %v832 = vrcp.pop %v768
  %v833 = vrcp.pop %v769
  %v834 = vrcp.pop %v770
  %v835 = vrcp.pop %v771
  %v836 = vrcp.pop %v772
  %v837 = vrcp.pop %v773
  %v838 = vrcp.pop %v774
  %v839 = vrcp.pop %v775
  %v840 = vrcp.pop %v776
  %v841 = vrcp.pop %v777
  %v842 = vrcp.pop %v778
  %v843 = vrcp.pop %v779
  %v844 = vrcp.pop %v780
  %v845 = vrcp.pop %v781
  %v846 = vrcp.pop %v782
  %v847 = vmul.f32 %v368, %v783
  %v848 = vmul.f32 %v370, %v784
  %v849 = vmul.f32 %v373, %v785
  %v850 = vmul.f32 %v375, %v786
  %v851 = vmul.f32 %v378, %v787
  %v852 = vmul.f32 %v380, %v788
  %v853 = vmul.f32 %v383, %v789
  %v854 = vmul.f32 %v385, %v790
  %v855 = vmul.f32 %v388, %v791
  %v856 = vmul.f32 %v390, %v792
  %v857 = vmul.f32 %v393, %v793
  %v858 = vmul.f32 %v395, %v794
  %v859 = vmul.f32 %v398, %v795
  %v860 = vmul.f32 %v400, %v796
  %v861 = vmul.f32 %v403, %v797
  %v862 = vmul.f32 %v405, %v798
  %v863 = vmul.f32 %v408, %v799
  %v864 = vmul.f32 %v410, %v800
  %v865 = vmul.f32 %v413, %v801
  %v866 = vmul.f32 %v415, %v802
  %v867 = vmul.f32 %v418, %v803
  %v868 = vmul.f32 %v420, %v804
  %v869 = vmul.f32 %v423, %v805
  %v870 = vmul.f32 %v425, %v806
  %v871 = vmul.f32 %v428, %v807
  %v872 = vmul.f32 %v430, %v808
  %v873 = vmul.f32 %v433, %v809
  %v874 = vmul.f32 %v435, %v810
  %v875 = vmul.f32 %v438, %v811
  %v876 = vmul.f32 %v440, %v812
  %v877 = vmul.f32 %v443, %v813
  %v878 = vmul.f32 %v445, %v814
  %v879 = vmul.f32 %v448, %v815
  %v880 = vmul.f32 %v450, %v816
  %v881 = vmul.f32 %v453, %v817
  %v882 = vmul.f32 %v455, %v818
  %v883 = vmul.f32 %v458, %v819
  %v884 = vmul.f32 %v460, %v820
  %v885 = vmul.f32 %v463, %v821
  %v886 = vmul.f32 %v465, %v822
  %v887 = vmul.f32 %v468, %v823
  %v888 = vmul.f32 %v470, %v824
  %v889 = vmul.f32 %v473, %v825
  %v890 = vmul.f32 %v475, %v826
  %v891 = vmul.f32 %v478, %v827
  %v892 = vmul.f32 %v480, %v828
  %v893 = vmul.f32 %v483, %v829
  %v894 = vmul.f32 %v485, %v830
  %v895 = vmul.f32 %v488, %v831
  %v896 = vmul.f32 %v490, %v832
  %v897 = vmul.f32 %v493, %v833
  %v898 = vmul.f32 %v495, %v834
  %v899 = vmul.f32 %v498, %v835
  %v900 = vmul.f32 %v500, %v836
  %v901 = vmul.f32 %v503, %v837
  %v902 = vmul.f32 %v505, %v838
  %v903 = vmul.f32 %v508, %v839
  %v904 = vmul.f32 %v510, %v840
  %v905 = vmul.f32 %v513, %v841
  %v906 = vmul.f32 %v515, %v842
  %v907 = vmul.f32 %v518, %v843
  %v908 = vmul.f32 %v520, %v844
  %v909 = vmul.f32 %v523, %v845
  %v910 = vmul.f32 %v525, %v846
  %v911 = vpack.c.bf16 %v847, %v847
  %v912 = vpack.c.bf16 %v848, %v848
  %v913 = vpack.c.bf16 %v849, %v849
  %v914 = vpack.c.bf16 %v850, %v850
  %v915 = vpack.c.bf16 %v851, %v851
  %v916 = vpack.c.bf16 %v852, %v852
  %v917 = vpack.c.bf16 %v853, %v853
  %v918 = vpack.c.bf16 %v854, %v854
  %v919 = vpack.c.bf16 %v855, %v855
  %v920 = vpack.c.bf16 %v856, %v856
  %v921 = vpack.c.bf16 %v857, %v857
  %v922 = vpack.c.bf16 %v858, %v858
  %v923 = vpack.c.bf16 %v859, %v859
  %v924 = vpack.c.bf16 %v860, %v860
  %v925 = vpack.c.bf16 %v861, %v861
  %v926 = vpack.c.bf16 %v862, %v862
  %v927 = vpack.c.bf16 %v863, %v863
  %v928 = vpack.c.bf16 %v864, %v864
  %v929 = vpack.c.bf16 %v865, %v865
  %v930 = vpack.c.bf16 %v866, %v866
  %v931 = vpack.c.bf16 %v867, %v867
  %v932 = vpack.c.bf16 %v868, %v868
  %v933 = vpack.c.bf16 %v869, %v869
  %v934 = vpack.c.bf16 %v870, %v870
  %v935 = vpack.c.bf16 %v871, %v871
  %v936 = vpack.c.bf16 %v872, %v872
  %v937 = vpack.c.bf16 %v873, %v873
  %v938 = vpack.c.bf16 %v874, %v874
  %v939 = vpack.c.bf16 %v875, %v875
  %v940 = vpack.c.bf16 %v876, %v876
  %v941 = vpack.c.bf16 %v877, %v877
  %v942 = vpack.c.bf16 %v878, %v878
  %v943 = vpack.c.bf16 %v879, %v879
  %v944 = vpack.c.bf16 %v880, %v880
  %v945 = vpack.c.bf16 %v881, %v881
  %v946 = vpack.c.bf16 %v882, %v882
  %v947 = vpack.c.bf16 %v883, %v883
  %v948 = vpack.c.bf16 %v884, %v884
  %v949 = vpack.c.bf16 %v885, %v885
  %v950 = vpack.c.bf16 %v886, %v886
  %v951 = vpack.c.bf16 %v887, %v887
  %v952 = vpack.c.bf16 %v888, %v888
  %v953 = vpack.c.bf16 %v889, %v889
  %v954 = vpack.c.bf16 %v890, %v890
  %v955 = vpack.c.bf16 %v891, %v891
  %v956 = vpack.c.bf16 %v892, %v892
  %v957 = vpack.c.bf16 %v893, %v893
  %v958 = vpack.c.bf16 %v894, %v894
  %v959 = vpack.c.bf16 %v895, %v895
  %v960 = vpack.c.bf16 %v896, %v896
  %v961 = vpack.c.bf16 %v897, %v897
  %v962 = vpack.c.bf16 %v898, %v898
  %v963 = vpack.c.bf16 %v899, %v899
  %v964 = vpack.c.bf16 %v900, %v900
  %v965 = vpack.c.bf16 %v901, %v901
  %v966 = vpack.c.bf16 %v902, %v902
  %v967 = vpack.c.bf16 %v903, %v903
  %v968 = vpack.c.bf16 %v904, %v904
  %v969 = vpack.c.bf16 %v905, %v905
  %v970 = vpack.c.bf16 %v906, %v906
  %v971 = vpack.c.bf16 %v907, %v907
  %v972 = vpack.c.bf16 %v908, %v908
  %v973 = vpack.c.bf16 %v909, %v909
  %v974 = vpack.c.bf16 %v910, %v910
  %vm975 = vcmask 125952
  %976 = vst.msk [vmem:[%s3] sm:$0xf] %vm975, %v911
  %977 = vst.msk [vmem:[%s3 + $0x4] sm:$0xf] %vm975, %v912
  %978 = vst.msk [vmem:[%s3 + $0x8] sm:$0xf] %vm975, %v913
  %979 = vst.msk [vmem:[%s3 + $0xc] sm:$0xf] %vm975, %v914
  %980 = vst.msk [vmem:[%s3 + $0x10] sm:$0xf] %vm975, %v915
  %981 = vst.msk [vmem:[%s3 + $0x14] sm:$0xf] %vm975, %v916
  %982 = vst.msk [vmem:[%s3 + $0x18] sm:$0xf] %vm975, %v917
  %983 = vst.msk [vmem:[%s3 + $0x1c] sm:$0xf] %vm975, %v918
  %984 = vst.msk [vmem:[%s3 + $0x20] sm:$0xf] %vm975, %v919
  %985 = vst.msk [vmem:[%s3 + $0x24] sm:$0xf] %vm975, %v920
  %986 = vst.msk [vmem:[%s3 + $0x28] sm:$0xf] %vm975, %v921
  %987 = vst.msk [vmem:[%s3 + $0x2c] sm:$0xf] %vm975, %v922
  %988 = vst.msk [vmem:[%s3 + $0x30] sm:$0xf] %vm975, %v923
  %989 = vst.msk [vmem:[%s3 + $0x34] sm:$0xf] %vm975, %v924
  %990 = vst.msk [vmem:[%s3 + $0x38] sm:$0xf] %vm975, %v925
  %991 = vst.msk [vmem:[%s3 + $0x3c] sm:$0xf] %vm975, %v926
  %992 = vst.msk [vmem:[%s3 + $0x40] sm:$0xf] %vm975, %v927
  %993 = vst.msk [vmem:[%s3 + $0x44] sm:$0xf] %vm975, %v928
  %994 = vst.msk [vmem:[%s3 + $0x48] sm:$0xf] %vm975, %v929
  %995 = vst.msk [vmem:[%s3 + $0x4c] sm:$0xf] %vm975, %v930
  %996 = vst.msk [vmem:[%s3 + $0x50] sm:$0xf] %vm975, %v931
  %997 = vst.msk [vmem:[%s3 + $0x54] sm:$0xf] %vm975, %v932
  %998 = vst.msk [vmem:[%s3 + $0x58] sm:$0xf] %vm975, %v933
  %999 = vst.msk [vmem:[%s3 + $0x5c] sm:$0xf] %vm975, %v934
  %1000 = vst.msk [vmem:[%s3 + $0x60] sm:$0xf] %vm975, %v935
  %1001 = vst.msk [vmem:[%s3 + $0x64] sm:$0xf] %vm975, %v936
  %1002 = vst.msk [vmem:[%s3 + $0x68] sm:$0xf] %vm975, %v937
  %1003 = vst.msk [vmem:[%s3 + $0x6c] sm:$0xf] %vm975, %v938
  %1004 = vst.msk [vmem:[%s3 + $0x70] sm:$0xf] %vm975, %v939
  %1005 = vst.msk [vmem:[%s3 + $0x74] sm:$0xf] %vm975, %v940
  %1006 = vst.msk [vmem:[%s3 + $0x78] sm:$0xf] %vm975, %v941
  %1007 = vst.msk [vmem:[%s3 + $0x7c] sm:$0xf] %vm975, %v942
  %1008 = vst.msk [vmem:[%s3 + $0x80] sm:$0xf] %vm975, %v943
  %1009 = vst.msk [vmem:[%s3 + $0x84] sm:$0xf] %vm975, %v944
  %1010 = vst.msk [vmem:[%s3 + $0x88] sm:$0xf] %vm975, %v945
  %1011 = vst.msk [vmem:[%s3 + $0x8c] sm:$0xf] %vm975, %v946
  %1012 = vst.msk [vmem:[%s3 + $0x90] sm:$0xf] %vm975, %v947
  %1013 = vst.msk [vmem:[%s3 + $0x94] sm:$0xf] %vm975, %v948
  %1014 = vst.msk [vmem:[%s3 + $0x98] sm:$0xf] %vm975, %v949
  %1015 = vst.msk [vmem:[%s3 + $0x9c] sm:$0xf] %vm975, %v950
  %1016 = vst.msk [vmem:[%s3 + $0xa0] sm:$0xf] %vm975, %v951
  %1017 = vst.msk [vmem:[%s3 + $0xa4] sm:$0xf] %vm975, %v952
  %1018 = vst.msk [vmem:[%s3 + $0xa8] sm:$0xf] %vm975, %v953
  %1019 = vst.msk [vmem:[%s3 + $0xac] sm:$0xf] %vm975, %v954
  %1020 = vst.msk [vmem:[%s3 + $0xb0] sm:$0xf] %vm975, %v955
  %1021 = vst.msk [vmem:[%s3 + $0xb4] sm:$0xf] %vm975, %v956
  %1022 = vst.msk [vmem:[%s3 + $0xb8] sm:$0xf] %vm975, %v957
  %1023 = vst.msk [vmem:[%s3 + $0xbc] sm:$0xf] %vm975, %v958
  %1024 = vst.msk [vmem:[%s3 + $0xc0] sm:$0xf] %vm975, %v959
  %1025 = vst.msk [vmem:[%s3 + $0xc4] sm:$0xf] %vm975, %v960
  %1026 = vst.msk [vmem:[%s3 + $0xc8] sm:$0xf] %vm975, %v961
  %1027 = vst.msk [vmem:[%s3 + $0xcc] sm:$0xf] %vm975, %v962
  %1028 = vst.msk [vmem:[%s3 + $0xd0] sm:$0xf] %vm975, %v963
  %1029 = vst.msk [vmem:[%s3 + $0xd4] sm:$0xf] %vm975, %v964
  %1030 = vst.msk [vmem:[%s3 + $0xd8] sm:$0xf] %vm975, %v965
  %1031 = vst.msk [vmem:[%s3 + $0xdc] sm:$0xf] %vm975, %v966
  %1032 = vst.msk [vmem:[%s3 + $0xe0] sm:$0xf] %vm975, %v967
  %1033 = vst.msk [vmem:[%s3 + $0xe4] sm:$0xf] %vm975, %v968
  %1034 = vst.msk [vmem:[%s3 + $0xe8] sm:$0xf] %vm975, %v969
  %1035 = vst.msk [vmem:[%s3 + $0xec] sm:$0xf] %vm975, %v970
  %1036 = vst.msk [vmem:[%s3 + $0xf0] sm:$0xf] %vm975, %v971
  %1037 = vst.msk [vmem:[%s3 + $0xf4] sm:$0xf] %vm975, %v972
  %1038 = vst.msk [vmem:[%s3 + $0xf8] sm:$0xf] %vm975, %v973
  %1039 = vst.msk [vmem:[%s3 + $0xfc] sm:$0xf] %vm975, %v974
  %1104 = vrot.lane.b32.xlu0 %v911, 112
  %v1105 = vpop.permute.xlu0 %1104
  %1106 = vrot.lane.b32.xlu0 %v912, 112
  %v1107 = vpop.permute.xlu0 %1106
  %1108 = vrot.lane.b32.xlu0 %v913, 112
  %v1109 = vpop.permute.xlu0 %1108
  %1110 = vrot.lane.b32.xlu0 %v914, 112
  %v1111 = vpop.permute.xlu0 %1110
  %1112 = vrot.lane.b32.xlu0 %v915, 112
  %v1113 = vpop.permute.xlu0 %1112
  %1114 = vrot.lane.b32.xlu0 %v916, 112
  %v1115 = vpop.permute.xlu0 %1114
  %1116 = vrot.lane.b32.xlu0 %v917, 112
  %v1117 = vpop.permute.xlu0 %1116
  %1118 = vrot.lane.b32.xlu0 %v918, 112
  %v1119 = vpop.permute.xlu0 %1118
  %1120 = vrot.lane.b32.xlu0 %v919, 112
  %v1121 = vpop.permute.xlu0 %1120
  %1122 = vrot.lane.b32.xlu0 %v920, 112
  %v1123 = vpop.permute.xlu0 %1122
  %1124 = vrot.lane.b32.xlu0 %v921, 112
  %v1125 = vpop.permute.xlu0 %1124
  %1126 = vrot.lane.b32.xlu0 %v922, 112
  %v1127 = vpop.permute.xlu0 %1126
  %1128 = vrot.lane.b32.xlu0 %v923, 112
  %v1129 = vpop.permute.xlu0 %1128
  %1130 = vrot.lane.b32.xlu0 %v924, 112
  %v1131 = vpop.permute.xlu0 %1130
  %1132 = vrot.lane.b32.xlu0 %v925, 112
  %v1133 = vpop.permute.xlu0 %1132
  %1134 = vrot.lane.b32.xlu0 %v926, 112
  %v1135 = vpop.permute.xlu0 %1134
  %1136 = vrot.lane.b32.xlu0 %v927, 112
  %v1137 = vpop.permute.xlu0 %1136
  %1138 = vrot.lane.b32.xlu0 %v928, 112
  %v1139 = vpop.permute.xlu0 %1138
  %1140 = vrot.lane.b32.xlu0 %v929, 112
  %v1141 = vpop.permute.xlu0 %1140
  %1142 = vrot.lane.b32.xlu0 %v930, 112
  %v1143 = vpop.permute.xlu0 %1142
  %1144 = vrot.lane.b32.xlu0 %v931, 112
  %v1145 = vpop.permute.xlu0 %1144
  %1146 = vrot.lane.b32.xlu0 %v932, 112
  %v1147 = vpop.permute.xlu0 %1146
  %1148 = vrot.lane.b32.xlu0 %v933, 112
  %v1149 = vpop.permute.xlu0 %1148
  %1150 = vrot.lane.b32.xlu0 %v934, 112
  %v1151 = vpop.permute.xlu0 %1150
  %1152 = vrot.lane.b32.xlu0 %v935, 112
  %v1153 = vpop.permute.xlu0 %1152
  %1154 = vrot.lane.b32.xlu0 %v936, 112
  %v1155 = vpop.permute.xlu0 %1154
  %1156 = vrot.lane.b32.xlu0 %v937, 112
  %v1157 = vpop.permute.xlu0 %1156
  %1158 = vrot.lane.b32.xlu0 %v938, 112
  %v1159 = vpop.permute.xlu0 %1158
  %1160 = vrot.lane.b32.xlu0 %v939, 112
  %v1161 = vpop.permute.xlu0 %1160
  %1162 = vrot.lane.b32.xlu0 %v940, 112
  %v1163 = vpop.permute.xlu0 %1162
  %1164 = vrot.lane.b32.xlu0 %v941, 112
  %v1165 = vpop.permute.xlu0 %1164
  %1166 = vrot.lane.b32.xlu0 %v942, 112
  %v1167 = vpop.permute.xlu0 %1166
  %1168 = vrot.lane.b32.xlu0 %v943, 112
  %v1169 = vpop.permute.xlu0 %1168
  %1170 = vrot.lane.b32.xlu0 %v944, 112
  %v1171 = vpop.permute.xlu0 %1170
  %1172 = vrot.lane.b32.xlu0 %v945, 112
  %v1173 = vpop.permute.xlu0 %1172
  %1174 = vrot.lane.b32.xlu0 %v946, 112
  %v1175 = vpop.permute.xlu0 %1174
  %1176 = vrot.lane.b32.xlu0 %v947, 112
  %v1177 = vpop.permute.xlu0 %1176
  %1178 = vrot.lane.b32.xlu0 %v948, 112
  %v1179 = vpop.permute.xlu0 %1178
  %1180 = vrot.lane.b32.xlu0 %v949, 112
  %v1181 = vpop.permute.xlu0 %1180
  %1182 = vrot.lane.b32.xlu0 %v950, 112
  %v1183 = vpop.permute.xlu0 %1182
  %1184 = vrot.lane.b32.xlu0 %v951, 112
  %v1185 = vpop.permute.xlu0 %1184
  %1186 = vrot.lane.b32.xlu0 %v952, 112
  %v1187 = vpop.permute.xlu0 %1186
  %1188 = vrot.lane.b32.xlu0 %v953, 112
  %v1189 = vpop.permute.xlu0 %1188
  %1190 = vrot.lane.b32.xlu0 %v954, 112
  %v1191 = vpop.permute.xlu0 %1190
  %1192 = vrot.lane.b32.xlu0 %v955, 112
  %v1193 = vpop.permute.xlu0 %1192
  %1194 = vrot.lane.b32.xlu0 %v956, 112
  %v1195 = vpop.permute.xlu0 %1194
  %1196 = vrot.lane.b32.xlu0 %v957, 112
  %v1197 = vpop.permute.xlu0 %1196
  %1198 = vrot.lane.b32.xlu0 %v958, 112
  %v1199 = vpop.permute.xlu0 %1198
  %1200 = vrot.lane.b32.xlu0 %v959, 112
  %v1201 = vpop.permute.xlu0 %1200
  %1202 = vrot.lane.b32.xlu0 %v960, 112
  %v1203 = vpop.permute.xlu0 %1202
  %1204 = vrot.lane.b32.xlu0 %v961, 112
  %v1205 = vpop.permute.xlu0 %1204
  %1206 = vrot.lane.b32.xlu0 %v962, 112
  %v1207 = vpop.permute.xlu0 %1206
  %1208 = vrot.lane.b32.xlu0 %v963, 112
  %v1209 = vpop.permute.xlu0 %1208
  %1210 = vrot.lane.b32.xlu0 %v964, 112
  %v1211 = vpop.permute.xlu0 %1210
  %1212 = vrot.lane.b32.xlu0 %v965, 112
  %v1213 = vpop.permute.xlu0 %1212
  %1214 = vrot.lane.b32.xlu0 %v966, 112
  %v1215 = vpop.permute.xlu0 %1214
  %1216 = vrot.lane.b32.xlu0 %v967, 112
  %v1217 = vpop.permute.xlu0 %1216
  %1218 = vrot.lane.b32.xlu0 %v968, 112
  %v1219 = vpop.permute.xlu0 %1218
  %1220 = vrot.lane.b32.xlu0 %v969, 112
  %v1221 = vpop.permute.xlu0 %1220
  %1222 = vrot.lane.b32.xlu0 %v970, 112
  %v1223 = vpop.permute.xlu0 %1222
  %1224 = vrot.lane.b32.xlu0 %v971, 112
  %v1225 = vpop.permute.xlu0 %1224
  %1226 = vrot.lane.b32.xlu0 %v972, 112
  %v1227 = vpop.permute.xlu0 %1226
  %1228 = vrot.lane.b32.xlu0 %v973, 112
  %v1229 = vpop.permute.xlu0 %1228
  %1230 = vrot.lane.b32.xlu0 %v974, 112
  %v1231 = vpop.permute.xlu0 %1230
  %1296 = vst.msk [vmem:[%s4] sm:$0xf] %vm975, %v1105
  %1297 = vst.msk [vmem:[%s4 + $0x4] sm:$0xf] %vm975, %v1107
  %1298 = vst.msk [vmem:[%s4 + $0x8] sm:$0xf] %vm975, %v1109
  %1299 = vst.msk [vmem:[%s4 + $0xc] sm:$0xf] %vm975, %v1111
  %1300 = vst.msk [vmem:[%s4 + $0x10] sm:$0xf] %vm975, %v1113
  %1301 = vst.msk [vmem:[%s4 + $0x14] sm:$0xf] %vm975, %v1115
  %1302 = vst.msk [vmem:[%s4 + $0x18] sm:$0xf] %vm975, %v1117
  %1303 = vst.msk [vmem:[%s4 + $0x1c] sm:$0xf] %vm975, %v1119
  %1304 = vst.msk [vmem:[%s4 + $0x20] sm:$0xf] %vm975, %v1121
  %1305 = vst.msk [vmem:[%s4 + $0x24] sm:$0xf] %vm975, %v1123
  %1306 = vst.msk [vmem:[%s4 + $0x28] sm:$0xf] %vm975, %v1125
  %1307 = vst.msk [vmem:[%s4 + $0x2c] sm:$0xf] %vm975, %v1127
  %1308 = vst.msk [vmem:[%s4 + $0x30] sm:$0xf] %vm975, %v1129
  %1309 = vst.msk [vmem:[%s4 + $0x34] sm:$0xf] %vm975, %v1131
  %1310 = vst.msk [vmem:[%s4 + $0x38] sm:$0xf] %vm975, %v1133
  %1311 = vst.msk [vmem:[%s4 + $0x3c] sm:$0xf] %vm975, %v1135
  %1312 = vst.msk [vmem:[%s4 + $0x40] sm:$0xf] %vm975, %v1137
  %1313 = vst.msk [vmem:[%s4 + $0x44] sm:$0xf] %vm975, %v1139
  %1314 = vst.msk [vmem:[%s4 + $0x48] sm:$0xf] %vm975, %v1141
  %1315 = vst.msk [vmem:[%s4 + $0x4c] sm:$0xf] %vm975, %v1143
  %1316 = vst.msk [vmem:[%s4 + $0x50] sm:$0xf] %vm975, %v1145
  %1317 = vst.msk [vmem:[%s4 + $0x54] sm:$0xf] %vm975, %v1147
  %1318 = vst.msk [vmem:[%s4 + $0x58] sm:$0xf] %vm975, %v1149
  %1319 = vst.msk [vmem:[%s4 + $0x5c] sm:$0xf] %vm975, %v1151
  %1320 = vst.msk [vmem:[%s4 + $0x60] sm:$0xf] %vm975, %v1153
  %1321 = vst.msk [vmem:[%s4 + $0x64] sm:$0xf] %vm975, %v1155
  %1322 = vst.msk [vmem:[%s4 + $0x68] sm:$0xf] %vm975, %v1157
  %1323 = vst.msk [vmem:[%s4 + $0x6c] sm:$0xf] %vm975, %v1159
  %1324 = vst.msk [vmem:[%s4 + $0x70] sm:$0xf] %vm975, %v1161
  %1325 = vst.msk [vmem:[%s4 + $0x74] sm:$0xf] %vm975, %v1163
  %1326 = vst.msk [vmem:[%s4 + $0x78] sm:$0xf] %vm975, %v1165
  %1327 = vst.msk [vmem:[%s4 + $0x7c] sm:$0xf] %vm975, %v1167
  %1328 = vst.msk [vmem:[%s4 + $0x80] sm:$0xf] %vm975, %v1169
  %1329 = vst.msk [vmem:[%s4 + $0x84] sm:$0xf] %vm975, %v1171
  %1330 = vst.msk [vmem:[%s4 + $0x88] sm:$0xf] %vm975, %v1173
  %1331 = vst.msk [vmem:[%s4 + $0x8c] sm:$0xf] %vm975, %v1175
  %1332 = vst.msk [vmem:[%s4 + $0x90] sm:$0xf] %vm975, %v1177
  %1333 = vst.msk [vmem:[%s4 + $0x94] sm:$0xf] %vm975, %v1179
  %1334 = vst.msk [vmem:[%s4 + $0x98] sm:$0xf] %vm975, %v1181
  %1335 = vst.msk [vmem:[%s4 + $0x9c] sm:$0xf] %vm975, %v1183
  %1336 = vst.msk [vmem:[%s4 + $0xa0] sm:$0xf] %vm975, %v1185
  %1337 = vst.msk [vmem:[%s4 + $0xa4] sm:$0xf] %vm975, %v1187
  %1338 = vst.msk [vmem:[%s4 + $0xa8] sm:$0xf] %vm975, %v1189
  %1339 = vst.msk [vmem:[%s4 + $0xac] sm:$0xf] %vm975, %v1191
  %1340 = vst.msk [vmem:[%s4 + $0xb0] sm:$0xf] %vm975, %v1193
  %1341 = vst.msk [vmem:[%s4 + $0xb4] sm:$0xf] %vm975, %v1195
  %1342 = vst.msk [vmem:[%s4 + $0xb8] sm:$0xf] %vm975, %v1197
  %1343 = vst.msk [vmem:[%s4 + $0xbc] sm:$0xf] %vm975, %v1199
  %1344 = vst.msk [vmem:[%s4 + $0xc0] sm:$0xf] %vm975, %v1201
  %1345 = vst.msk [vmem:[%s4 + $0xc4] sm:$0xf] %vm975, %v1203
  %1346 = vst.msk [vmem:[%s4 + $0xc8] sm:$0xf] %vm975, %v1205
  %1347 = vst.msk [vmem:[%s4 + $0xcc] sm:$0xf] %vm975, %v1207
  %1348 = vst.msk [vmem:[%s4 + $0xd0] sm:$0xf] %vm975, %v1209
  %1349 = vst.msk [vmem:[%s4 + $0xd4] sm:$0xf] %vm975, %v1211
  %1350 = vst.msk [vmem:[%s4 + $0xd8] sm:$0xf] %vm975, %v1213
  %1351 = vst.msk [vmem:[%s4 + $0xdc] sm:$0xf] %vm975, %v1215
  %1352 = vst.msk [vmem:[%s4 + $0xe0] sm:$0xf] %vm975, %v1217
  %1353 = vst.msk [vmem:[%s4 + $0xe4] sm:$0xf] %vm975, %v1219
  %1354 = vst.msk [vmem:[%s4 + $0xe8] sm:$0xf] %vm975, %v1221
  %1355 = vst.msk [vmem:[%s4 + $0xec] sm:$0xf] %vm975, %v1223
  %1356 = vst.msk [vmem:[%s4 + $0xf0] sm:$0xf] %vm975, %v1225
  %1357 = vst.msk [vmem:[%s4 + $0xf4] sm:$0xf] %vm975, %v1227
  %1358 = vst.msk [vmem:[%s4 + $0xf8] sm:$0xf] %vm975, %v1229
  %1359 = vst.msk [vmem:[%s4 + $0xfc] sm:$0xf] %vm975, %v1231
  // Predicated region
  $region14: #{repcsp_forward.4} parent=0 // pred_check
    _
  $region15: #{repcsp_forward.4} parent=0 // pred_check_branch
    %1361 = sbr.rel (0) target = $region17
  $region16: #{repcsp_forward.4} parent=0 // pred_region
    _
  $region17: #{repcsp_forward.4} parent=0 // pred_fallthru
    _
  // Predicated region
  $region18: #{repcsp_forward.4} parent=0 // pred_check
    _
  $region19: #{repcsp_forward.4} parent=0 // pred_check_branch
    %1363 = sbr.rel (0) target = $region21
  $region20: #{repcsp_forward.4} parent=0 // pred_region
    _
  $region21: #{repcsp_forward.4} parent=0 // pred_fallthru
    _
  // Predicated region
  $region22: #{repcsp_forward.4} parent=0 // pred_check
    _
  $region23: #{repcsp_forward.4} parent=0 // pred_check_branch
    %1365 = sbr.rel (0) target = $region25
  $region24: #{repcsp_forward.4} parent=0 // pred_region
    _
  $region25: #{repcsp_forward.4} parent=0 // pred_fallthru
    _
  // Predicated region
  $region26: #{repcsp_forward.4} parent=0 // pred_check
    _
  $region27: #{repcsp_forward.4} parent=0 // pred_check_branch
    %1367 = sbr.rel (0) target = $region29
  $region28: #{repcsp_forward.4} parent=0 // pred_region
    _
  $region29: #{repcsp_forward.4} parent=0 // pred_fallthru
    _

// kernel: repcsp_forward.5
$region0: #{repcsp_forward.5}
  #allocation0 [shape = 'u32[]', space=smem, size = 0x4, offset = 0x4, fixed_abs, tag = 'smem constant byte address 0x4 - core index']
  #allocation1 [shape = 'u32[72,128]{1,0:T(1,128)}', space=vmem, size = 0x9000, scoped, tag = 'internal scratch']
  #allocation2 [shape = 'bf16[18,32,16]{2,1,0:T(8,128)(2,1)}', space=vmem, size = 0x24000, scoped, tag = 'scratch operand']
  #allocation3 [shape = 'bf16[18,32,16]{2,1,0:T(8,128)(2,1)}', space=vmem, size = 0x24000, scoped, tag = 'scratch operand']
  #allocation4 [shape = 'bf16[18,32,16]{2,1,0:T(8,128)(2,1)}', space=vmem, size = 0x24000, scoped, tag = 'scratch operand']
  %s0 = inlined_call_operand.vmem [shape: bf16[2,16,16,16], index: 0, kind: input, shape index: {}]
  %s1 = inlined_call_operand.vmem [shape: bf16[9,16,16], index: 1, kind: input, shape index: {}]
  %s2 = inlined_call_operand.vmem [shape: f32[1,16], index: 2, kind: input, shape index: {}]
  %s3 = inlined_call_operand.vmem [shape: bf16[9,16,16], index: 3, kind: input, shape index: {}]
  %s4 = inlined_call_operand.vmem [shape: f32[1,16], index: 4, kind: input, shape index: {}]
  %s5 = inlined_call_operand.vmem [shape: bf16[2,16,16,16], index: 5, kind: output, shape index: {}]
  %s6 = sld [smem:[#allocation0]]
  $region53: #{repcsp_forward.5} parent=0
    _
  %s8 = ssub.s32 1, %s6
  %s9 = scalar_select 0, %s8, %s6
  loop: start=0, step=1, limit=4
  $region2: #{repcsp_forward.5} parent=0 // loop_pre_header
    _
  $region3: #{repcsp_forward.5} parent=0 // loop_header
    %s11 = sphi 0, %s15
    %p12 = scmp.ge.s32.totalorder %s11, 4
    %s21 = sphi 0, %s23
    %s24 = sphi 0, %s21
    %s25 = sphi 0, %s24
    %s41 = sphi 0, %s25
    %s45 = sphi 0, %s45
    %s47 = sphi 0, %s45
    %s48 = sphi 0, %s47
    %s62 = sphi 0, %s48
    %s66 = sphi 0, %s66
    %s68 = sphi 0, %s66
    %s69 = sphi 0, %s68
    %s83 = sphi 0, %s69
    %s87 = sphi 0, %s87
    %s89 = sphi 0, %s87
    %s90 = sphi 0, %s89
    %s104 = sphi 0, %s90
    %s108 = sphi 0, %s108
    %s110 = sphi 0, %s108
    %s111 = sphi 0, %s110
    %s125 = sphi 0, %s111
    %s131 = sphi 0, %s133
    %s134 = sphi 0, %s131
    %s135 = sphi 0, %s134
    %s151 = sphi 0, %s135
  $region4: #{repcsp_forward.5} parent=0 // loop_header_branch
    %14 = sbr.rel (%p12) target = $region8
  $region5: #{repcsp_forward.5} parent=0 // loop_body
    %s16 = ssub.s32 %s11, 1
    %s17 = ssub.s32 %s11, 2
    %s18 = sadd.s32 %s11, 1
    %s19 = ssub.s32 %s11, %s18
    %p20 = scmp.eq.s32.totalorder %s19, 0
    %s22 = sadd.s32 %s21, 1
    %s23 = scalar_select %p20, %s21, %s22
    %p26 = pneg %p20
    %p27 = scmp.eq.s32.totalorder %s11, 1
    %p28 = por %p26, %p27
    %p29 = scmp.ne.s32.totalorder %s21, %s24
    %p30 = scmp.eq.s32.totalorder %s11, 0
    %p31 = por %p29, %p30
    %p32 = scmp.ne.s32.totalorder %s21, %s24
    %p33 = scmp.eq.s32.totalorder %s16, 1
    %p34 = por %p32, %p33
    %p35 = scmp.ne.s32.totalorder %s24, %s25
    %p36 = scmp.eq.s32.totalorder %s16, 0
    %p37 = por %p35, %p36
    %p38 = scmp.ne.s32.totalorder %s24, %s25
    %p39 = scmp.eq.s32.totalorder %s17, 1
    %p40 = por %p38, %p39
    %p42 = scmp.ne.s32.totalorder %s25, %s41
    %p43 = scmp.eq.s32.totalorder %s17, 0
    %p44 = por %p42, %p43
    %s46 = sadd.s32 %s45, 1
    %p49 = scmp.eq.s32.totalorder %s11, 1
    %p50 = scmp.ne.s32.totalorder %s45, %s47
    %p51 = scmp.eq.s32.totalorder %s11, 0
    %p52 = por %p50, %p51
    %p53 = scmp.ne.s32.totalorder %s45, %s47
    %p54 = scmp.eq.s32.totalorder %s16, 1
    %p55 = por %p53, %p54
    %p56 = scmp.ne.s32.totalorder %s47, %s48
    %p57 = scmp.eq.s32.totalorder %s16, 0
    %p58 = por %p56, %p57
    %p59 = scmp.ne.s32.totalorder %s47, %s48
    %p60 = scmp.eq.s32.totalorder %s17, 1
    %p61 = por %p59, %p60
    %p63 = scmp.ne.s32.totalorder %s48, %s62
    %p64 = scmp.eq.s32.totalorder %s17, 0
    %p65 = por %p63, %p64
    %s67 = sadd.s32 %s66, 1
    %p70 = scmp.eq.s32.totalorder %s11, 1
    %p71 = scmp.ne.s32.totalorder %s66, %s68
    %p72 = scmp.eq.s32.totalorder %s11, 0
    %p73 = por %p71, %p72
    %p74 = scmp.ne.s32.totalorder %s66, %s68
    %p75 = scmp.eq.s32.totalorder %s16, 1
    %p76 = por %p74, %p75
    %p77 = scmp.ne.s32.totalorder %s68, %s69
    %p78 = scmp.eq.s32.totalorder %s16, 0
    %p79 = por %p77, %p78
    %p80 = scmp.ne.s32.totalorder %s68, %s69
    %p81 = scmp.eq.s32.totalorder %s17, 1
    %p82 = por %p80, %p81
    %p84 = scmp.ne.s32.totalorder %s69, %s83
    %p85 = scmp.eq.s32.totalorder %s17, 0
    %p86 = por %p84, %p85
    %s88 = sadd.s32 %s87, 1
    %p91 = scmp.eq.s32.totalorder %s11, 1
    %p92 = scmp.ne.s32.totalorder %s87, %s89
    %p93 = scmp.eq.s32.totalorder %s11, 0
    %p94 = por %p92, %p93
    %p95 = scmp.ne.s32.totalorder %s87, %s89
    %p96 = scmp.eq.s32.totalorder %s16, 1
    %p97 = por %p95, %p96
    %p98 = scmp.ne.s32.totalorder %s89, %s90
    %p99 = scmp.eq.s32.totalorder %s16, 0
    %p100 = por %p98, %p99
    %p101 = scmp.ne.s32.totalorder %s89, %s90
    %p102 = scmp.eq.s32.totalorder %s17, 1
    %p103 = por %p101, %p102
    %p105 = scmp.ne.s32.totalorder %s90, %s104
    %p106 = scmp.eq.s32.totalorder %s17, 0
    %p107 = por %p105, %p106
    %s109 = sadd.s32 %s108, 1
    %p112 = scmp.eq.s32.totalorder %s11, 1
    %p113 = scmp.ne.s32.totalorder %s108, %s110
    %p114 = scmp.eq.s32.totalorder %s11, 0
    %p115 = por %p113, %p114
    %p116 = scmp.ne.s32.totalorder %s108, %s110
    %p117 = scmp.eq.s32.totalorder %s16, 1
    %p118 = por %p116, %p117
    %p119 = scmp.ne.s32.totalorder %s110, %s111
    %p120 = scmp.eq.s32.totalorder %s16, 0
    %p121 = por %p119, %p120
    %p122 = scmp.ne.s32.totalorder %s110, %s111
    %p123 = scmp.eq.s32.totalorder %s17, 1
    %p124 = por %p122, %p123
    %p126 = scmp.ne.s32.totalorder %s111, %s125
    %p127 = scmp.eq.s32.totalorder %s17, 0
    %p128 = por %p126, %p127
    %s129 = ssub.s32 %s11, %s18
    %p130 = scmp.eq.s32.totalorder %s129, 0
    %s132 = sadd.s32 %s131, 1
    %s133 = scalar_select %p130, %s131, %s132
    %p136 = pneg %p130
    %p137 = scmp.eq.s32.totalorder %s11, 1
    %p138 = por %p136, %p137
    %p139 = scmp.ne.s32.totalorder %s131, %s134
    %p140 = scmp.eq.s32.totalorder %s11, 0
    %p141 = por %p139, %p140
    %p142 = scmp.ne.s32.totalorder %s131, %s134
    %p143 = scmp.eq.s32.totalorder %s16, 1
    %p144 = por %p142, %p143
    %p145 = scmp.ne.s32.totalorder %s134, %s135
    %p146 = scmp.eq.s32.totalorder %s16, 0
    %p147 = por %p145, %p146
    %p148 = scmp.ne.s32.totalorder %s134, %s135
    %p149 = scmp.eq.s32.totalorder %s17, 1
    %p150 = por %p148, %p149
    %p152 = scmp.ne.s32.totalorder %s135, %s151
    %p153 = scmp.eq.s32.totalorder %s17, 0
    %p154 = por %p152, %p153
    %p155 = scmp.le.s32.totalorder 1, %s11
    %p156 = scmp.lt.s32.totalorder %s11, 3
    %p157 = pnand %p155, %p156
    %p158 = pneg %p157
    // Predicated region
    $region9: #{repcsp_forward.5} parent=5 // pred_check
      _
    $region10: #{repcsp_forward.5} parent=5 // pred_check_branch
      %160 = sbr.rel (%p157) target = $region12
    $region11: #{repcsp_forward.5} parent=5 // pred_region
      %s161 = ssub.s32 %s11, 1
      // Predicated region
      $region13: #{repcsp_forward.5} parent=11 // pred_check
        %p162 = pneg %p58
      $region14: #{repcsp_forward.5} parent=11 // pred_check_branch
        %164 = sbr.rel (%p162) target = $region16
      $region15: #{repcsp_forward.5} parent=11 // pred_region
        _
      $region16: #{repcsp_forward.5} parent=11 // pred_fallthru
        _
      // Predicated region
      $region17: #{repcsp_forward.5} parent=11 // pred_check
        %p165 = pneg %p79
      $region18: #{repcsp_forward.5} parent=11 // pred_check_branch
        %167 = sbr.rel (%p165) target = $region20
      $region19: #{repcsp_forward.5} parent=11 // pred_region
        _
      $region20: #{repcsp_forward.5} parent=11 // pred_fallthru
        _
      // Predicated region
      $region21: #{repcsp_forward.5} parent=11 // pred_check
        %p168 = pneg %p100
      $region22: #{repcsp_forward.5} parent=11 // pred_check_branch
        %170 = sbr.rel (%p168) target = $region24
      $region23: #{repcsp_forward.5} parent=11 // pred_region
        _
      $region24: #{repcsp_forward.5} parent=11 // pred_fallthru
        _
      // Predicated region
      $region25: #{repcsp_forward.5} parent=11 // pred_check
        %p171 = pneg %p121
      $region26: #{repcsp_forward.5} parent=11 // pred_check_branch
        %173 = sbr.rel (%p171) target = $region28
      $region27: #{repcsp_forward.5} parent=11 // pred_region
        _
      $region28: #{repcsp_forward.5} parent=11 // pred_fallthru
        _
    $region12: #{repcsp_forward.5} parent=5 // pred_fallthru
      _
    %p174 = scmp.lt.s32.totalorder %s11, 2
    // Predicated region
    $region29: #{repcsp_forward.5} parent=5 // pred_check
      %p175 = pneg %p174
    $region30: #{repcsp_forward.5} parent=5 // pred_check_branch
      %177 = sbr.rel (%p175) target = $region32
    $region31: #{repcsp_forward.5} parent=5 // pred_region
      // Predicated region
      $region33: #{repcsp_forward.5} parent=31 // pred_check
        %p178 = pneg %p31
      $region34: #{repcsp_forward.5} parent=31 // pred_check_branch
        %180 = sbr.rel (%p178) target = $region36
      $region35: #{repcsp_forward.5} parent=31 // pred_region
        %p181 = scmp.lt.s32.totalorder %s11, 1
        %s182 = scalar_select %p181, %s11, 1
        %s183 = smul.addr %s182, 32
        %s184 = smul.addr %s183, 4
        %s185 = scalar_lea.vmem %s0, %s184
      $region36: #{repcsp_forward.5} parent=31 // pred_fallthru
        _
    $region32: #{repcsp_forward.5} parent=5 // pred_fallthru
      _
    %p186 = scmp.le.s32.totalorder 1, %s11
    %p187 = scmp.lt.s32.totalorder %s11, 3
    %p188 = pnand %p186, %p187
    %p189 = pneg %p188
    // Predicated region
    $region37: #{repcsp_forward.5} parent=5 // pred_check
      _
    $region38: #{repcsp_forward.5} parent=5 // pred_check_branch
      %191 = sbr.rel (%p188) target = $region40
    $region39: #{repcsp_forward.5} parent=5 // pred_region
      %s192 = ssub.s32 %s11, 1
      %p193 = scmp.lt.s32.totalorder %s16, 1
      %s194 = scalar_select %p193, %s16, 1
      %s195 = smul.addr %s194, 32
      %s196 = smul.addr %s195, 4
      %s197 = scalar_lea.vmem %s0, %s196
      %p198 = pneg %p37
      %p199 = pneg %p34
      %p200 = pneg %p58
      %p201 = pneg %p55
      %p202 = pneg %p79
      %p203 = pneg %p76
      %p204 = pneg %p100
      %p205 = pneg %p97
      %p206 = pneg %p121
      %p207 = pneg %p118
      %p208 = pneg %p147
      %p209 = pneg %p144
      %p210 = scmp.lt.s32.totalorder %s16, 1
      %s211 = scalar_select %p210, %s16, 1
      %s212 = smul.addr %s211, 32
      %s213 = smul.addr %s212, 4
      %s214 = scalar_lea.vmem %s5, %s213
      %p215 = scmp.lt.s32.totalorder %s16, 1
      %s216 = scalar_select %p215, %s16, 1
      %s217 = smul.addr %s216, 32
      %s218 = smul.addr %s217, 4
      %s219 = scalar_lea.vmem %s0, %s218
      %p220 = scmp.lt.s32.totalorder %s16, 1
      %s221 = scalar_select %p220, %s16, 1
      %s222 = smul.addr %s221, 32
      %s223 = smul.addr %s222, 4
      %s224 = scalar_lea.vmem %s5, %s223
      %vm226 = vcmask 125952
      %227 = vst.msk [vmem:[#allocation2] sm:$0xf] %vm226, 0
      %228 = vst.msk [vmem:[#allocation2 + $0x4] sm:$0xf] %vm226, 0
      %229 = vst.msk [vmem:[#allocation2 + $0x8] sm:$0xf] %vm226, 0
      %230 = vst.msk [vmem:[#allocation2 + $0xc] sm:$0xf] %vm226, 0
      %s231 = scalar_lea.vmem [#allocation2], 272
      %232 = vst.msk [vmem:[%s231] sm:$0xf] %vm226, 0
      %233 = vst.msk [vmem:[%s231 + $0x4] sm:$0xf] %vm226, 0
      %234 = vst.msk [vmem:[%s231 + $0x8] sm:$0xf] %vm226, 0
      %235 = vst.msk [vmem:[%s231 + $0xc] sm:$0xf] %vm226, 0
      %236 = vst.msk [vmem:[#allocation3] sm:$0xf] %vm226, 0
      %237 = vst.msk [vmem:[#allocation3 + $0x4] sm:$0xf] %vm226, 0
      %238 = vst.msk [vmem:[#allocation3 + $0x8] sm:$0xf] %vm226, 0
      %239 = vst.msk [vmem:[#allocation3 + $0xc] sm:$0xf] %vm226, 0
      %s240 = scalar_lea.vmem [#allocation3], 272
      %241 = vst.msk [vmem:[%s240] sm:$0xf] %vm226, 0
      %242 = vst.msk [vmem:[%s240 + $0x4] sm:$0xf] %vm226, 0
      %243 = vst.msk [vmem:[%s240 + $0x8] sm:$0xf] %vm226, 0
      %244 = vst.msk [vmem:[%s240 + $0xc] sm:$0xf] %vm226, 0
      %245 = vst.msk [vmem:[#allocation4] sm:$0xf] %vm226, 0
      %246 = vst.msk [vmem:[#allocation4 + $0x4] sm:$0xf] %vm226, 0
      %247 = vst.msk [vmem:[#allocation4 + $0x8] sm:$0xf] %vm226, 0
      %248 = vst.msk [vmem:[#allocation4 + $0xc] sm:$0xf] %vm226, 0
      %s249 = scalar_lea.vmem [#allocation4], 272
      %250 = vst.msk [vmem:[%s249] sm:$0xf] %vm226, 0
      %251 = vst.msk [vmem:[%s249 + $0x4] sm:$0xf] %vm226, 0
      %252 = vst.msk [vmem:[%s249 + $0x8] sm:$0xf] %vm226, 0
      %253 = vst.msk [vmem:[%s249 + $0xc] sm:$0xf] %vm226, 0
      %vm254 = vcmask 122880
      %vm255 = vsmask.f32 256
      %vm256 = vmand %vm254, %vm255
      %v257 = vld [vmem:[#allocation2] sm:$0x1]
      %v258 = vsel %vm256, 0, %v257
      %259 = vst [vmem:[#allocation2] sm:$0x1] %v258
      %v260 = vld [vmem:[#allocation2 + $0x10] sm:$0x1]
      %v261 = vsel %vm256, 0, %v260
      %262 = vst [vmem:[#allocation2 + $0x10] sm:$0x1] %v261
      %v263 = vld [vmem:[#allocation2 + $0x20] sm:$0x1]
      %v264 = vsel %vm256, 0, %v263
      %265 = vst [vmem:[#allocation2 + $0x20] sm:$0x1] %v264
      %v266 = vld [vmem:[#allocation2 + $0x30] sm:$0x1]
      %v267 = vsel %vm256, 0, %v266
      %268 = vst [vmem:[#allocation2 + $0x30] sm:$0x1] %v267
      %v269 = vld [vmem:[#allocation2 + $0x40] sm:$0x1]
      %v270 = vsel %vm256, 0, %v269
      %271 = vst [vmem:[#allocation2 + $0x40] sm:$0x1] %v270
      %v272 = vld [vmem:[#allocation2 + $0x50] sm:$0x1]
      %v273 = vsel %vm256, 0, %v272
      %274 = vst [vmem:[#allocation2 + $0x50] sm:$0x1] %v273
      %v275 = vld [vmem:[#allocation2 + $0x60] sm:$0x1]
      %v276 = vsel %vm256, 0, %v275
      %277 = vst [vmem:[#allocation2 + $0x60] sm:$0x1] %v276
      %v278 = vld [vmem:[#allocation2 + $0x70] sm:$0x1]
      %v279 = vsel %vm256, 0, %v278
      %280 = vst [vmem:[#allocation2 + $0x70] sm:$0x1] %v279
      %v281 = vld [vmem:[#allocation2 + $0x80] sm:$0x1]
      %v282 = vsel %vm256, 0, %v281
      %283 = vst [vmem:[#allocation2 + $0x80] sm:$0x1] %v282
      %v284 = vld [vmem:[#allocation2 + $0x90] sm:$0x1]
      %v285 = vsel %vm256, 0, %v284
      %286 = vst [vmem:[#allocation2 + $0x90] sm:$0x1] %v285
      %v287 = vld [vmem:[#allocation2 + $0xa0] sm:$0x1]
      %v288 = vsel %vm256, 0, %v287
      %289 = vst [vmem:[#allocation2 + $0xa0] sm:$0x1] %v288
      %v290 = vld [vmem:[#allocation2 + $0xb0] sm:$0x1]
      %v291 = vsel %vm256, 0, %v290
      %292 = vst [vmem:[#allocation2 + $0xb0] sm:$0x1] %v291
      %v293 = vld [vmem:[#allocation2 + $0xc0] sm:$0x1]
      %v294 = vsel %vm256, 0, %v293
      %295 = vst [vmem:[#allocation2 + $0xc0] sm:$0x1] %v294
      %v296 = vld [vmem:[#allocation2 + $0xd0] sm:$0x1]
      %v297 = vsel %vm256, 0, %v296
      %298 = vst [vmem:[#allocation2 + $0xd0] sm:$0x1] %v297
      %v299 = vld [vmem:[#allocation2 + $0xe0] sm:$0x1]
      %v300 = vsel %vm256, 0, %v299
      %301 = vst [vmem:[#allocation2 + $0xe0] sm:$0x1] %v300
      %v302 = vld [vmem:[#allocation2 + $0xf0] sm:$0x1]
      %v303 = vsel %vm256, 0, %v302
      %304 = vst [vmem:[#allocation2 + $0xf0] sm:$0x1] %v303
      %v305 = vld [vmem:[#allocation2 + $0x100] sm:$0x1]
      %v306 = vsel %vm256, 0, %v305
      %307 = vst [vmem:[#allocation2 + $0x100] sm:$0x1] %v306
      %v308 = vld [vmem:[#allocation2 + $0x110] sm:$0x1]
      %v309 = vsel %vm256, 0, %v308
      %310 = vst [vmem:[#allocation2 + $0x110] sm:$0x1] %v309
      %vm311 = vcmask 125955
      %vm312 = vsmask.f32 7950
      %vm313 = vmand %vm311, %vm312
      %v314 = vld [vmem:[#allocation4 + $0x4] sm:$0x8]
      %v315 = vsel %vm313, 0, %v314
      %316 = vst [vmem:[#allocation4 + $0x4] sm:$0x8] %v315
      %v317 = vld [vmem:[#allocation4 + $0x14] sm:$0x8]
      %v318 = vsel %vm313, 0, %v317
      %319 = vst [vmem:[#allocation4 + $0x14] sm:$0x8] %v318
      %v320 = vld [vmem:[#allocation4 + $0x24] sm:$0x8]
      %v321 = vsel %vm313, 0, %v320
      %322 = vst [vmem:[#allocation4 + $0x24] sm:$0x8] %v321
      %v323 = vld [vmem:[#allocation4 + $0x34] sm:$0x8]
      %v324 = vsel %vm313, 0, %v323
      %325 = vst [vmem:[#allocation4 + $0x34] sm:$0x8] %v324
      %v326 = vld [vmem:[#allocation4 + $0x44] sm:$0x8]
      %v327 = vsel %vm313, 0, %v326
      %328 = vst [vmem:[#allocation4 + $0x44] sm:$0x8] %v327
      %v329 = vld [vmem:[#allocation4 + $0x54] sm:$0x8]
      %v330 = vsel %vm313, 0, %v329
      %331 = vst [vmem:[#allocation4 + $0x54] sm:$0x8] %v330
      %v332 = vld [vmem:[#allocation4 + $0x64] sm:$0x8]
      %v333 = vsel %vm313, 0, %v332
      %334 = vst [vmem:[#allocation4 + $0x64] sm:$0x8] %v333
      %v335 = vld [vmem:[#allocation4 + $0x74] sm:$0x8]
      %v336 = vsel %vm313, 0, %v335
      %337 = vst [vmem:[#allocation4 + $0x74] sm:$0x8] %v336
      %v338 = vld [vmem:[#allocation4 + $0x84] sm:$0x8]
      %v339 = vsel %vm313, 0, %v338
      %340 = vst [vmem:[#allocation4 + $0x84] sm:$0x8] %v339
      %v341 = vld [vmem:[#allocation4 + $0x94] sm:$0x8]
      %v342 = vsel %vm313, 0, %v341
      %343 = vst [vmem:[#allocation4 + $0x94] sm:$0x8] %v342
      %v344 = vld [vmem:[#allocation4 + $0xa4] sm:$0x8]
      %v345 = vsel %vm313, 0, %v344
      %346 = vst [vmem:[#allocation4 + $0xa4] sm:$0x8] %v345
      %v347 = vld [vmem:[#allocation4 + $0xb4] sm:$0x8]
      %v348 = vsel %vm313, 0, %v347
      %349 = vst [vmem:[#allocation4 + $0xb4] sm:$0x8] %v348
      %v350 = vld [vmem:[#allocation4 + $0xc4] sm:$0x8]
      %v351 = vsel %vm313, 0, %v350
      %352 = vst [vmem:[#allocation4 + $0xc4] sm:$0x8] %v351
      %v353 = vld [vmem:[#allocation4 + $0xd4] sm:$0x8]
      %v354 = vsel %vm313, 0, %v353
      %355 = vst [vmem:[#allocation4 + $0xd4] sm:$0x8] %v354
      %v356 = vld [vmem:[#allocation4 + $0xe4] sm:$0x8]
      %v357 = vsel %vm313, 0, %v356
      %358 = vst [vmem:[#allocation4 + $0xe4] sm:$0x8] %v357
      %v359 = vld [vmem:[#allocation4 + $0xf4] sm:$0x8]
      %v360 = vsel %vm313, 0, %v359
      %361 = vst [vmem:[#allocation4 + $0xf4] sm:$0x8] %v360
      %v362 = vld [vmem:[#allocation4 + $0x104] sm:$0x8]
      %v363 = vsel %vm313, 0, %v362
      %364 = vst [vmem:[#allocation4 + $0x104] sm:$0x8] %v363
      %v365 = vld [vmem:[#allocation4 + $0x114] sm:$0x8]
      %v366 = vsel %vm313, 0, %v365
      %367 = vst [vmem:[#allocation4 + $0x114] sm:$0x8] %v366
      %v368 = vld [vmem:[%s219] sm:$0xf]
      %v369 = vld [vmem:[%s219 + $0x4] sm:$0xf]
      %v370 = vld [vmem:[%s219 + $0x8] sm:$0xf]
      %v371 = vld [vmem:[%s219 + $0xc] sm:$0xf]
      %v372 = vld [vmem:[%s219 + $0x10] sm:$0xf]
      %v373 = vld [vmem:[%s219 + $0x14] sm:$0xf]
      %v374 = vld [vmem:[%s219 + $0x18] sm:$0xf]
      %v375 = vld [vmem:[%s219 + $0x1c] sm:$0xf]
      %v376 = vld [vmem:[%s219 + $0x20] sm:$0xf]
      %v377 = vld [vmem:[%s219 + $0x24] sm:$0xf]
      %v378 = vld [vmem:[%s219 + $0x28] sm:$0xf]
      %v379 = vld [vmem:[%s219 + $0x2c] sm:$0xf]
      %v380 = vld [vmem:[%s219 + $0x30] sm:$0xf]
      %v381 = vld [vmem:[%s219 + $0x34] sm:$0xf]
      %v382 = vld [vmem:[%s219 + $0x38] sm:$0xf]
      %v383 = vld [vmem:[%s219 + $0x3c] sm:$0xf]
      %v384 = vld [vmem:[%s219 + $0x40] sm:$0xf]
      %v385 = vld [vmem:[%s219 + $0x44] sm:$0xf]
      %v386 = vld [vmem:[%s219 + $0x48] sm:$0xf]
      %v387 = vld [vmem:[%s219 + $0x4c] sm:$0xf]
      %v388 = vld [vmem:[%s219 + $0x50] sm:$0xf]
      %v389 = vld [vmem:[%s219 + $0x54] sm:$0xf]
      %v390 = vld [vmem:[%s219 + $0x58] sm:$0xf]
      %v391 = vld [vmem:[%s219 + $0x5c] sm:$0xf]
      %v392 = vld [vmem:[%s219 + $0x60] sm:$0xf]
      %v393 = vld [vmem:[%s219 + $0x64] sm:$0xf]
      %v394 = vld [vmem:[%s219 + $0x68] sm:$0xf]
      %v395 = vld [vmem:[%s219 + $0x6c] sm:$0xf]
      %v396 = vld [vmem:[%s219 + $0x70] sm:$0xf]
      %v397 = vld [vmem:[%s219 + $0x74] sm:$0xf]
      %v398 = vld [vmem:[%s219 + $0x78] sm:$0xf]
      %v399 = vld [vmem:[%s219 + $0x7c] sm:$0xf]
      %vm400 = vsmask.f32 4368
      %vm401 = vmor %vm255, %vm400
      %v403 = vshrl.u32 %v368, 16
      %v405 = vrot.slane %v403, 7
      %v406 = vshll.u32 %v368, 16
      %v408 = vor.u32 %v405, %v406
      %v409 = vrot.slane %v405, 4
      %v411 = vshrl.u32 %v369, 16
      %v413 = vrot.slane %v411, 7
      %v414 = vshll.u32 %v369, 16
      %v416 = vor.u32 %v413, %v414
      %v417 = vsel %vm401, %v409, %v416
      %v418 = vrot.slane %v413, 4
      %v420 = vshrl.u32 %v370, 16
      %v422 = vrot.slane %v420, 7
      %v423 = vshll.u32 %v370, 16
      %v425 = vor.u32 %v422, %v423
      %v426 = vrot.slane %v422, 4
      %v428 = vshrl.u32 %v371, 16
      %v430 = vrot.slane %v428, 7
      %v431 = vshll.u32 %v371, 16
      %v433 = vor.u32 %v430, %v431
      %v434 = vsel %vm401, %v426, %v433
      %v435 = vrot.slane %v430, 4
      %v437 = vshrl.u32 %v372, 16
      %v439 = vrot.slane %v437, 7
      %v440 = vshll.u32 %v372, 16
      %v442 = vor.u32 %v439, %v440
      %v443 = vrot.slane %v439, 4
      %v445 = vshrl.u32 %v373, 16
      %v447 = vrot.slane %v445, 7
      %v448 = vshll.u32 %v373, 16
      %v450 = vor.u32 %v447, %v448
      %v451 = vsel %vm401, %v443, %v450
      %v452 = vrot.slane %v447, 4
      %v454 = vshrl.u32 %v374, 16
      %v456 = vrot.slane %v454, 7
      %v457 = vshll.u32 %v374, 16
      %v459 = vor.u32 %v456, %v457
      %v460 = vrot.slane %v456, 4
      %v462 = vshrl.u32 %v375, 16
      %v464 = vrot.slane %v462, 7
      %v465 = vshll.u32 %v375, 16
      %v467 = vor.u32 %v464, %v465
      %v468 = vsel %vm401, %v460, %v467
      %v469 = vrot.slane %v464, 4
      %v471 = vshrl.u32 %v376, 16
      %v473 = vrot.slane %v471, 7
      %v474 = vshll.u32 %v376, 16
      %v476 = vor.u32 %v473, %v474
      %v477 = vrot.slane %v473, 4
      %v479 = vshrl.u32 %v377, 16
      %v481 = vrot.slane %v479, 7
      %v482 = vshll.u32 %v377, 16
      %v484 = vor.u32 %v481, %v482
      %v485 = vsel %vm401, %v477, %v484
      %v486 = vrot.slane %v481, 4
      %v488 = vshrl.u32 %v378, 16
      %v490 = vrot.slane %v488, 7
      %v491 = vshll.u32 %v378, 16
      %v493 = vor.u32 %v490, %v491
      %v494 = vrot.slane %v490, 4
      %v496 = vshrl.u32 %v379, 16
      %v498 = vrot.slane %v496, 7
      %v499 = vshll.u32 %v379, 16
      %v501 = vor.u32 %v498, %v499
      %v502 = vsel %vm401, %v494, %v501
      %v503 = vrot.slane %v498, 4
      %v505 = vshrl.u32 %v380, 16
      %v507 = vrot.slane %v505, 7
      %v508 = vshll.u32 %v380, 16
      %v510 = vor.u32 %v507, %v508
      %v511 = vrot.slane %v507, 4
      %v513 = vshrl.u32 %v381, 16
      %v515 = vrot.slane %v513, 7
      %v516 = vshll.u32 %v381, 16
      %v518 = vor.u32 %v515, %v516
      %v519 = vsel %vm401, %v511, %v518
      %v520 = vrot.slane %v515, 4
      %v522 = vshrl.u32 %v382, 16
      %v524 = vrot.slane %v522, 7
      %v525 = vshll.u32 %v382, 16
      %v527 = vor.u32 %v524, %v525
      %v528 = vrot.slane %v524, 4
      %v530 = vshrl.u32 %v383, 16
      %v532 = vrot.slane %v530, 7
      %v533 = vshll.u32 %v383, 16
      %v535 = vor.u32 %v532, %v533
      %v536 = vsel %vm401, %v528, %v535
      %v537 = vrot.slane %v532, 4
      %v539 = vshrl.u32 %v384, 16
      %v541 = vrot.slane %v539, 7
      %v542 = vshll.u32 %v384, 16
      %v544 = vor.u32 %v541, %v542
      %v545 = vrot.slane %v541, 4
      %v547 = vshrl.u32 %v385, 16
      %v549 = vrot.slane %v547, 7
      %v550 = vshll.u32 %v385, 16
      %v552 = vor.u32 %v549, %v550
      %v553 = vsel %vm401, %v545, %v552
      %v554 = vrot.slane %v549, 4
      %v556 = vshrl.u32 %v386, 16
      %v558 = vrot.slane %v556, 7
      %v559 = vshll.u32 %v386, 16
      %v561 = vor.u32 %v558, %v559
      %v562 = vrot.slane %v558, 4
      %v564 = vshrl.u32 %v387, 16
      %v566 = vrot.slane %v564, 7
      %v567 = vshll.u32 %v387, 16
      %v569 = vor.u32 %v566, %v567
      %v570 = vsel %vm401, %v562, %v569
      %v571 = vrot.slane %v566, 4
      %v573 = vshrl.u32 %v388, 16
      %v575 = vrot.slane %v573, 7
      %v576 = vshll.u32 %v388, 16
      %v578 = vor.u32 %v575, %v576
      %v579 = vrot.slane %v575, 4
      %v581 = vshrl.u32 %v389, 16
      %v583 = vrot.slane %v581, 7
      %v584 = vshll.u32 %v389, 16
      %v586 = vor.u32 %v583, %v584
      %v587 = vsel %vm401, %v579, %v586
      %v588 = vrot.slane %v583, 4
      %v590 = vshrl.u32 %v390, 16
      %v592 = vrot.slane %v590, 7
      %v593 = vshll.u32 %v390, 16
      %v595 = vor.u32 %v592, %v593
      %v596 = vrot.slane %v592, 4
      %v598 = vshrl.u32 %v391, 16
      %v600 = vrot.slane %v598, 7
      %v601 = vshll.u32 %v391, 16
      %v603 = vor.u32 %v600, %v601
      %v604 = vsel %vm401, %v596, %v603
      %v605 = vrot.slane %v600, 4
      %v607 = vshrl.u32 %v392, 16
      %v609 = vrot.slane %v607, 7
      %v610 = vshll.u32 %v392, 16
      %v612 = vor.u32 %v609, %v610
      %v613 = vrot.slane %v609, 4
      %v615 = vshrl.u32 %v393, 16
      %v617 = vrot.slane %v615, 7
      %v618 = vshll.u32 %v393, 16
      %v620 = vor.u32 %v617, %v618
      %v621 = vsel %vm401, %v613, %v620
      %v622 = vrot.slane %v617, 4
      %v624 = vshrl.u32 %v394, 16
      %v626 = vrot.slane %v624, 7
      %v627 = vshll.u32 %v394, 16
      %v629 = vor.u32 %v626, %v627
      %v630 = vrot.slane %v626, 4
      %v632 = vshrl.u32 %v395, 16
      %v634 = vrot.slane %v632, 7
      %v635 = vshll.u32 %v395, 16
      %v637 = vor.u32 %v634, %v635
      %v638 = vsel %vm401, %v630, %v637
      %v639 = vrot.slane %v634, 4
      %v641 = vshrl.u32 %v396, 16
      %v643 = vrot.slane %v641, 7
      %v644 = vshll.u32 %v396, 16
      %v646 = vor.u32 %v643, %v644
      %v647 = vrot.slane %v643, 4
      %v649 = vshrl.u32 %v397, 16
      %v651 = vrot.slane %v649, 7
      %v652 = vshll.u32 %v397, 16
      %v654 = vor.u32 %v651, %v652
      %v655 = vsel %vm401, %v647, %v654
      %v656 = vrot.slane %v651, 4
      %v658 = vshrl.u32 %v398, 16
      %v660 = vrot.slane %v658, 7
      %v661 = vshll.u32 %v398, 16
      %v663 = vor.u32 %v660, %v661
      %v664 = vrot.slane %v660, 4
      %v666 = vshrl.u32 %v399, 16
      %v668 = vrot.slane %v666, 7
      %v669 = vshll.u32 %v399, 16
      %v671 = vor.u32 %v668, %v669
      %v672 = vsel %vm401, %v664, %v671
      %v673 = vrot.slane %v668, 4
      %s722 = scalar_lea.vmem [#allocation2], 16
      %vm723 = vcmask 125952
      %vm724 = vsmask.f32 7938
      %vm725 = vmand %vm723, %vm724
      %v726 = vld [vmem:[%s722] sm:$0xf]
      %v727 = vsel %vm725, %v408, %v726
      %728 = vst [vmem:[%s722] sm:$0xf] %v727
      %729 = vst.msk [vmem:[%s722 + $0x4] sm:$0xf] %vm226, %v417
      %v730 = vld [vmem:[%s722 + $0x8] sm:$0x1]
      %v731 = vsel %vm256, %v418, %v730
      %732 = vst [vmem:[%s722 + $0x8] sm:$0x1] %v731
      %v733 = vld [vmem:[%s722 + $0x10] sm:$0xf]
      %v734 = vsel %vm725, %v425, %v733
      %735 = vst [vmem:[%s722 + $0x10] sm:$0xf] %v734
      %736 = vst.msk [vmem:[%s722 + $0x14] sm:$0xf] %vm226, %v434
      %v737 = vld [vmem:[%s722 + $0x18] sm:$0x1]
      %v738 = vsel %vm256, %v435, %v737
      %739 = vst [vmem:[%s722 + $0x18] sm:$0x1] %v738
      %v740 = vld [vmem:[%s722 + $0x20] sm:$0xf]
      %v741 = vsel %vm725, %v442, %v740
      %742 = vst [vmem:[%s722 + $0x20] sm:$0xf] %v741
      %743 = vst.msk [vmem:[%s722 + $0x24] sm:$0xf] %vm226, %v451
      %v744 = vld [vmem:[%s722 + $0x28] sm:$0x1]
      %v745 = vsel %vm256, %v452, %v744
      %746 = vst [vmem:[%s722 + $0x28] sm:$0x1] %v745
      %v747 = vld [vmem:[%s722 + $0x30] sm:$0xf]
      %v748 = vsel %vm725, %v459, %v747
      %749 = vst [vmem:[%s722 + $0x30] sm:$0xf] %v748
      %750 = vst.msk [vmem:[%s722 + $0x34] sm:$0xf] %vm226, %v468
      %v751 = vld [vmem:[%s722 + $0x38] sm:$0x1]
      %v752 = vsel %vm256, %v469, %v751
      %753 = vst [vmem:[%s722 + $0x38] sm:$0x1] %v752
      %v754 = vld [vmem:[%s722 + $0x40] sm:$0xf]
      %v755 = vsel %vm725, %v476, %v754
      %756 = vst [vmem:[%s722 + $0x40] sm:$0xf] %v755
      %757 = vst.msk [vmem:[%s722 + $0x44] sm:$0xf] %vm226, %v485
      %v758 = vld [vmem:[%s722 + $0x48] sm:$0x1]
      %v759 = vsel %vm256, %v486, %v758
      %760 = vst [vmem:[%s722 + $0x48] sm:$0x1] %v759
      %v761 = vld [vmem:[%s722 + $0x50] sm:$0xf]
      %v762 = vsel %vm725, %v493, %v761
      %763 = vst [vmem:[%s722 + $0x50] sm:$0xf] %v762
      %764 = vst.msk [vmem:[%s722 + $0x54] sm:$0xf] %vm226, %v502
      %v765 = vld [vmem:[%s722 + $0x58] sm:$0x1]
      %v766 = vsel %vm256, %v503, %v765
      %767 = vst [vmem:[%s722 + $0x58] sm:$0x1] %v766
      %v768 = vld [vmem:[%s722 + $0x60] sm:$0xf]
      %v769 = vsel %vm725, %v510, %v768
      %770 = vst [vmem:[%s722 + $0x60] sm:$0xf] %v769
      %771 = vst.msk [vmem:[%s722 + $0x64] sm:$0xf] %vm226, %v519
      %v772 = vld [vmem:[%s722 + $0x68] sm:$0x1]
      %v773 = vsel %vm256, %v520, %v772
      %774 = vst [vmem:[%s722 + $0x68] sm:$0x1] %v773
      %v775 = vld [vmem:[%s722 + $0x70] sm:$0xf]
      %v776 = vsel %vm725, %v527, %v775
      %777 = vst [vmem:[%s722 + $0x70] sm:$0xf] %v776
      %778 = vst.msk [vmem:[%s722 + $0x74] sm:$0xf] %vm226, %v536
      %v779 = vld [vmem:[%s722 + $0x78] sm:$0x1]
      %v780 = vsel %vm256, %v537, %v779
      %781 = vst [vmem:[%s722 + $0x78] sm:$0x1] %v780
      %v782 = vld [vmem:[%s722 + $0x80] sm:$0xf]
      %v783 = vsel %vm725, %v544, %v782
      %784 = vst [vmem:[%s722 + $0x80] sm:$0xf] %v783
      %785 = vst.msk [vmem:[%s722 + $0x84] sm:$0xf] %vm226, %v553
      %v786 = vld [vmem:[%s722 + $0x88] sm:$0x1]
      %v787 = vsel %vm256, %v554, %v786
      %788 = vst [vmem:[%s722 + $0x88] sm:$0x1] %v787
      %v789 = vld [vmem:[%s722 + $0x90] sm:$0xf]
      %v790 = vsel %vm725, %v561, %v789
      %791 = vst [vmem:[%s722 + $0x90] sm:$0xf] %v790
      %792 = vst.msk [vmem:[%s722 + $0x94] sm:$0xf] %vm226, %v570
      %v793 = vld [vmem:[%s722 + $0x98] sm:$0x1]
      %v794 = vsel %vm256, %v571, %v793
      %795 = vst [vmem:[%s722 + $0x98] sm:$0x1] %v794
      %v796 = vld [vmem:[%s722 + $0xa0] sm:$0xf]
      %v797 = vsel %vm725, %v578, %v796
      %798 = vst [vmem:[%s722 + $0xa0] sm:$0xf] %v797
      %799 = vst.msk [vmem:[%s722 + $0xa4] sm:$0xf] %vm226, %v587
      %v800 = vld [vmem:[%s722 + $0xa8] sm:$0x1]
      %v801 = vsel %vm256, %v588, %v800
      %802 = vst [vmem:[%s722 + $0xa8] sm:$0x1] %v801
      %v803 = vld [vmem:[%s722 + $0xb0] sm:$0xf]
      %v804 = vsel %vm725, %v595, %v803
      %805 = vst [vmem:[%s722 + $0xb0] sm:$0xf] %v804
      %806 = vst.msk [vmem:[%s722 + $0xb4] sm:$0xf] %vm226, %v604
      %v807 = vld [vmem:[%s722 + $0xb8] sm:$0x1]
      %v808 = vsel %vm256, %v605, %v807
      %809 = vst [vmem:[%s722 + $0xb8] sm:$0x1] %v808
      %v810 = vld [vmem:[%s722 + $0xc0] sm:$0xf]
      %v811 = vsel %vm725, %v612, %v810
      %812 = vst [vmem:[%s722 + $0xc0] sm:$0xf] %v811
      %813 = vst.msk [vmem:[%s722 + $0xc4] sm:$0xf] %vm226, %v621
      %v814 = vld [vmem:[%s722 + $0xc8] sm:$0x1]
      %v815 = vsel %vm256, %v622, %v814
      %816 = vst [vmem:[%s722 + $0xc8] sm:$0x1] %v815
      %v817 = vld [vmem:[%s722 + $0xd0] sm:$0xf]
      %v818 = vsel %vm725, %v629, %v817
      %819 = vst [vmem:[%s722 + $0xd0] sm:$0xf] %v818
      %820 = vst.msk [vmem:[%s722 + $0xd4] sm:$0xf] %vm226, %v638
      %v821 = vld [vmem:[%s722 + $0xd8] sm:$0x1]
      %v822 = vsel %vm256, %v639, %v821
      %823 = vst [vmem:[%s722 + $0xd8] sm:$0x1] %v822
      %v824 = vld [vmem:[%s722 + $0xe0] sm:$0xf]
      %v825 = vsel %vm725, %v646, %v824
      %826 = vst [vmem:[%s722 + $0xe0] sm:$0xf] %v825
      %827 = vst.msk [vmem:[%s722 + $0xe4] sm:$0xf] %vm226, %v655
      %v828 = vld [vmem:[%s722 + $0xe8] sm:$0x1]
      %v829 = vsel %vm256, %v656, %v828
      %830 = vst [vmem:[%s722 + $0xe8] sm:$0x1] %v829
      %v831 = vld [vmem:[%s722 + $0xf0] sm:$0xf]
      %v832 = vsel %vm725, %v663, %v831
      %833 = vst [vmem:[%s722 + $0xf0] sm:$0xf] %v832
      %834 = vst.msk [vmem:[%s722 + $0xf4] sm:$0xf] %vm226, %v672
      %v835 = vld [vmem:[%s722 + $0xf8] sm:$0x1]
      %v836 = vsel %vm256, %v673, %v835
      %837 = vst [vmem:[%s722 + $0xf8] sm:$0x1] %v836
      %s838 = scalar_lea.vmem [#allocation3], 16
      %839 = vst.msk [vmem:[%s838] sm:$0xf] %vm226, %v368
      %840 = vst.msk [vmem:[%s838 + $0x4] sm:$0xf] %vm226, %v369
      %841 = vst.msk [vmem:[%s838 + $0x10] sm:$0xf] %vm226, %v370
      %842 = vst.msk [vmem:[%s838 + $0x14] sm:$0xf] %vm226, %v371
      %843 = vst.msk [vmem:[%s838 + $0x20] sm:$0xf] %vm226, %v372
      %844 = vst.msk [vmem:[%s838 + $0x24] sm:$0xf] %vm226, %v373
      %845 = vst.msk [vmem:[%s838 + $0x30] sm:$0xf] %vm226, %v374
      %846 = vst.msk [vmem:[%s838 + $0x34] sm:$0xf] %vm226, %v375
      %847 = vst.msk [vmem:[%s838 + $0x40] sm:$0xf] %vm226, %v376
      %848 = vst.msk [vmem:[%s838 + $0x44] sm:$0xf] %vm226, %v377
      %849 = vst.msk [vmem:[%s838 + $0x50] sm:$0xf] %vm226, %v378
      %850 = vst.msk [vmem:[%s838 + $0x54] sm:$0xf] %vm226, %v379
      %851 = vst.msk [vmem:[%s838 + $0x60] sm:$0xf] %vm226, %v380
      %852 = vst.msk [vmem:[%s838 + $0x64] sm:$0xf] %vm226, %v381
      %853 = vst.msk [vmem:[%s838 + $0x70] sm:$0xf] %vm226, %v382
      %854 = vst.msk [vmem:[%s838 + $0x74] sm:$0xf] %vm226, %v383
      %855 = vst.msk [vmem:[%s838 + $0x80] sm:$0xf] %vm226, %v384
      %856 = vst.msk [vmem:[%s838 + $0x84] sm:$0xf] %vm226, %v385
      %857 = vst.msk [vmem:[%s838 + $0x90] sm:$0xf] %vm226, %v386
      %858 = vst.msk [vmem:[%s838 + $0x94] sm:$0xf] %vm226, %v387
      %859 = vst.msk [vmem:[%s838 + $0xa0] sm:$0xf] %vm226, %v388
      %860 = vst.msk [vmem:[%s838 + $0xa4] sm:$0xf] %vm226, %v389
      %861 = vst.msk [vmem:[%s838 + $0xb0] sm:$0xf] %vm226, %v390
      %862 = vst.msk [vmem:[%s838 + $0xb4] sm:$0xf] %vm226, %v391
      %863 = vst.msk [vmem:[%s838 + $0xc0] sm:$0xf] %vm226, %v392
      %864 = vst.msk [vmem:[%s838 + $0xc4] sm:$0xf] %vm226, %v393
      %865 = vst.msk [vmem:[%s838 + $0xd0] sm:$0xf] %vm226, %v394
      %866 = vst.msk [vmem:[%s838 + $0xd4] sm:$0xf] %vm226, %v395
      %867 = vst.msk [vmem:[%s838 + $0xe0] sm:$0xf] %vm226, %v396
      %868 = vst.msk [vmem:[%s838 + $0xe4] sm:$0xf] %vm226, %v397
      %869 = vst.msk [vmem:[%s838 + $0xf0] sm:$0xf] %vm226, %v398
      %870 = vst.msk [vmem:[%s838 + $0xf4] sm:$0xf] %vm226, %v399
      %vm871 = vsmask.f32 3328
      %vm872 = vsmask.f32 7440
      %vm873 = vmor %vm871, %vm872
      %v874 = vrot.slane %v403, 4
      %v875 = vrot.slane %v406, 5
      %v876 = vor.u32 %v874, %v875
      %v877 = vrot.slane %v876, 4
      %v878 = vrot.slane %v414, 5
      %v879 = vsel %vm873, %v877, %v878
      %v880 = vrot.slane %v411, 4
      %v881 = vor.u32 %v880, %v878
      %v882 = vrot.slane %v881, 4
      %v883 = vrot.slane %v420, 4
      %v884 = vrot.slane %v423, 5
      %v885 = vor.u32 %v883, %v884
      %v886 = vrot.slane %v885, 4
      %v887 = vrot.slane %v431, 5
      %v888 = vsel %vm873, %v886, %v887
      %v889 = vrot.slane %v428, 4
      %v890 = vor.u32 %v889, %v887
      %v891 = vrot.slane %v890, 4
      %v892 = vrot.slane %v437, 4
      %v893 = vrot.slane %v440, 5
      %v894 = vor.u32 %v892, %v893
      %v895 = vrot.slane %v894, 4
      %v896 = vrot.slane %v448, 5
      %v897 = vsel %vm873, %v895, %v896
      %v898 = vrot.slane %v445, 4
      %v899 = vor.u32 %v898, %v896
      %v900 = vrot.slane %v899, 4
      %v901 = vrot.slane %v454, 4
      %v902 = vrot.slane %v457, 5
      %v903 = vor.u32 %v901, %v902
      %v904 = vrot.slane %v903, 4
      %v905 = vrot.slane %v465, 5
      %v906 = vsel %vm873, %v904, %v905
      %v907 = vrot.slane %v462, 4
      %v908 = vor.u32 %v907, %v905
      %v909 = vrot.slane %v908, 4
      %v910 = vrot.slane %v471, 4
      %v911 = vrot.slane %v474, 5
      %v912 = vor.u32 %v910, %v911
      %v913 = vrot.slane %v912, 4
      %v914 = vrot.slane %v482, 5
      %v915 = vsel %vm873, %v913, %v914
      %v916 = vrot.slane %v479, 4
      %v917 = vor.u32 %v916, %v914
      %v918 = vrot.slane %v917, 4
      %v919 = vrot.slane %v488, 4
      %v920 = vrot.slane %v491, 5
      %v921 = vor.u32 %v919, %v920
      %v922 = vrot.slane %v921, 4
      %v923 = vrot.slane %v499, 5
      %v924 = vsel %vm873, %v922, %v923
      %v925 = vrot.slane %v496, 4
      %v926 = vor.u32 %v925, %v923
      %v927 = vrot.slane %v926, 4
      %v928 = vrot.slane %v505, 4
      %v929 = vrot.slane %v508, 5
      %v930 = vor.u32 %v928, %v929
      %v931 = vrot.slane %v930, 4
      %v932 = vrot.slane %v516, 5
      %v933 = vsel %vm873, %v931, %v932
      %v934 = vrot.slane %v513, 4
      %v935 = vor.u32 %v934, %v932
      %v936 = vrot.slane %v935, 4
      %v937 = vrot.slane %v522, 4
      %v938 = vrot.slane %v525, 5
      %v939 = vor.u32 %v937, %v938
      %v940 = vrot.slane %v939, 4
      %v941 = vrot.slane %v533, 5
      %v942 = vsel %vm873, %v940, %v941
      %v943 = vrot.slane %v530, 4
      %v944 = vor.u32 %v943, %v941
      %v945 = vrot.slane %v944, 4
      %v946 = vrot.slane %v539, 4
      %v947 = vrot.slane %v542, 5
      %v948 = vor.u32 %v946, %v947
      %v949 = vrot.slane %v948, 4
      %v950 = vrot.slane %v550, 5
      %v951 = vsel %vm873, %v949, %v950
      %v952 = vrot.slane %v547, 4
      %v953 = vor.u32 %v952, %v950
      %v954 = vrot.slane %v953, 4
      %v955 = vrot.slane %v556, 4
      %v956 = vrot.slane %v559, 5
      %v957 = vor.u32 %v955, %v956
      %v958 = vrot.slane %v957, 4
      %v959 = vrot.slane %v567, 5
      %v960 = vsel %vm873, %v958, %v959
      %v961 = vrot.slane %v564, 4
      %v962 = vor.u32 %v961, %v959
      %v963 = vrot.slane %v962, 4
      %v964 = vrot.slane %v573, 4
      %v965 = vrot.slane %v576, 5
      %v966 = vor.u32 %v964, %v965
      %v967 = vrot.slane %v966, 4
      %v968 = vrot.slane %v584, 5
      %v969 = vsel %vm873, %v967, %v968
      %v970 = vrot.slane %v581, 4
      %v971 = vor.u32 %v970, %v968
      %v972 = vrot.slane %v971, 4
      %v973 = vrot.slane %v590, 4
      %v974 = vrot.slane %v593, 5
      %v975 = vor.u32 %v973, %v974
      %v976 = vrot.slane %v975, 4
      %v977 = vrot.slane %v601, 5
      %v978 = vsel %vm873, %v976, %v977
      %v979 = vrot.slane %v598, 4
      %v980 = vor.u32 %v979, %v977
      %v981 = vrot.slane %v980, 4
      %v982 = vrot.slane %v607, 4
      %v983 = vrot.slane %v610, 5
      %v984 = vor.u32 %v982, %v983
      %v985 = vrot.slane %v984, 4
      %v986 = vrot.slane %v618, 5
      %v987 = vsel %vm873, %v985, %v986
      %v988 = vrot.slane %v615, 4
      %v989 = vor.u32 %v988, %v986
      %v990 = vrot.slane %v989, 4
      %v991 = vrot.slane %v624, 4
      %v992 = vrot.slane %v627, 5
      %v993 = vor.u32 %v991, %v992
      %v994 = vrot.slane %v993, 4
      %v995 = vrot.slane %v635, 5
      %v996 = vsel %vm873, %v994, %v995
      %v997 = vrot.slane %v632, 4
      %v998 = vor.u32 %v997, %v995
      %v999 = vrot.slane %v998, 4
      %v1000 = vrot.slane %v641, 4
      %v1001 = vrot.slane %v644, 5
      %v1002 = vor.u32 %v1000, %v1001
      %v1003 = vrot.slane %v1002, 4
      %v1004 = vrot.slane %v652, 5
      %v1005 = vsel %vm873, %v1003, %v1004
      %v1006 = vrot.slane %v649, 4
      %v1007 = vor.u32 %v1006, %v1004
      %v1008 = vrot.slane %v1007, 4
      %v1009 = vrot.slane %v658, 4
      %v1010 = vrot.slane %v661, 5
      %v1011 = vor.u32 %v1009, %v1010
      %v1012 = vrot.slane %v1011, 4
      %v1013 = vrot.slane %v669, 5
      %v1014 = vsel %vm873, %v1012, %v1013
      %v1015 = vrot.slane %v666, 4
      %v1016 = vor.u32 %v1015, %v1013
      %v1017 = vrot.slane %v1016, 4
      %s1050 = scalar_lea.vmem [#allocation4], 16
      %1051 = vst.msk [vmem:[%s1050] sm:$0xf] %vm226, %v879
      %vm1052 = vmand %vm723, %vm871
      %v1053 = vld [vmem:[%s1050 + $0x4] sm:$0xf]
      %v1054 = vsel %vm1052, %v882, %v1053
      %1055 = vst [vmem:[%s1050 + $0x4] sm:$0xf] %v1054
      %1056 = vst.msk [vmem:[%s1050 + $0x10] sm:$0xf] %vm226, %v888
      %v1057 = vld [vmem:[%s1050 + $0x14] sm:$0xf]
      %v1058 = vsel %vm1052, %v891, %v1057
      %1059 = vst [vmem:[%s1050 + $0x14] sm:$0xf] %v1058
      %1060 = vst.msk [vmem:[%s1050 + $0x20] sm:$0xf] %vm226, %v897
      %v1061 = vld [vmem:[%s1050 + $0x24] sm:$0xf]
      %v1062 = vsel %vm1052, %v900, %v1061
      %1063 = vst [vmem:[%s1050 + $0x24] sm:$0xf] %v1062
      %1064 = vst.msk [vmem:[%s1050 + $0x30] sm:$0xf] %vm226, %v906
      %v1065 = vld [vmem:[%s1050 + $0x34] sm:$0xf]
      %v1066 = vsel %vm1052, %v909, %v1065
      %1067 = vst [vmem:[%s1050 + $0x34] sm:$0xf] %v1066
      %1068 = vst.msk [vmem:[%s1050 + $0x40] sm:$0xf] %vm226, %v915
      %v1069 = vld [vmem:[%s1050 + $0x44] sm:$0xf]
      %v1070 = vsel %vm1052, %v918, %v1069
      %1071 = vst [vmem:[%s1050 + $0x44] sm:$0xf] %v1070
      %1072 = vst.msk [vmem:[%s1050 + $0x50] sm:$0xf] %vm226, %v924
      %v1073 = vld [vmem:[%s1050 + $0x54] sm:$0xf]
      %v1074 = vsel %vm1052, %v927, %v1073
      %1075 = vst [vmem:[%s1050 + $0x54] sm:$0xf] %v1074
      %1076 = vst.msk [vmem:[%s1050 + $0x60] sm:$0xf] %vm226, %v933
      %v1077 = vld [vmem:[%s1050 + $0x64] sm:$0xf]
      %v1078 = vsel %vm1052, %v936, %v1077
      %1079 = vst [vmem:[%s1050 + $0x64] sm:$0xf] %v1078
      %1080 = vst.msk [vmem:[%s1050 + $0x70] sm:$0xf] %vm226, %v942
      %v1081 = vld [vmem:[%s1050 + $0x74] sm:$0xf]
      %v1082 = vsel %vm1052, %v945, %v1081
      %1083 = vst [vmem:[%s1050 + $0x74] sm:$0xf] %v1082
      %1084 = vst.msk [vmem:[%s1050 + $0x80] sm:$0xf] %vm226, %v951
      %v1085 = vld [vmem:[%s1050 + $0x84] sm:$0xf]
      %v1086 = vsel %vm1052, %v954, %v1085
      %1087 = vst [vmem:[%s1050 + $0x84] sm:$0xf] %v1086
      %1088 = vst.msk [vmem:[%s1050 + $0x90] sm:$0xf] %vm226, %v960
      %v1089 = vld [vmem:[%s1050 + $0x94] sm:$0xf]
      %v1090 = vsel %vm1052, %v963, %v1089
      %1091 = vst [vmem:[%s1050 + $0x94] sm:$0xf] %v1090
      %1092 = vst.msk [vmem:[%s1050 + $0xa0] sm:$0xf] %vm226, %v969
      %v1093 = vld [vmem:[%s1050 + $0xa4] sm:$0xf]
      %v1094 = vsel %vm1052, %v972, %v1093
      %1095 = vst [vmem:[%s1050 + $0xa4] sm:$0xf] %v1094
      %1096 = vst.msk [vmem:[%s1050 + $0xb0] sm:$0xf] %vm226, %v978
      %v1097 = vld [vmem:[%s1050 + $0xb4] sm:$0xf]
      %v1098 = vsel %vm1052, %v981, %v1097
      %1099 = vst [vmem:[%s1050 + $0xb4] sm:$0xf] %v1098
      %1100 = vst.msk [vmem:[%s1050 + $0xc0] sm:$0xf] %vm226, %v987
      %v1101 = vld [vmem:[%s1050 + $0xc4] sm:$0xf]
      %v1102 = vsel %vm1052, %v990, %v1101
      %1103 = vst [vmem:[%s1050 + $0xc4] sm:$0xf] %v1102
      %1104 = vst.msk [vmem:[%s1050 + $0xd0] sm:$0xf] %vm226, %v996
      %v1105 = vld [vmem:[%s1050 + $0xd4] sm:$0xf]
      %v1106 = vsel %vm1052, %v999, %v1105
      %1107 = vst [vmem:[%s1050 + $0xd4] sm:$0xf] %v1106
      %1108 = vst.msk [vmem:[%s1050 + $0xe0] sm:$0xf] %vm226, %v1005
      %v1109 = vld [vmem:[%s1050 + $0xe4] sm:$0xf]
      %v1110 = vsel %vm1052, %v1008, %v1109
      %1111 = vst [vmem:[%s1050 + $0xe4] sm:$0xf] %v1110
      %1112 = vst.msk [vmem:[%s1050 + $0xf0] sm:$0xf] %vm226, %v1014
      %v1113 = vld [vmem:[%s1050 + $0xf4] sm:$0xf]
      %v1114 = vsel %vm1052, %v1017, %v1113
      %1115 = vst [vmem:[%s1050 + $0xf4] sm:$0xf] %v1114
      %v1116 = vld [vmem:[#allocation2] sm:$0xf]
      %v1117 = vld [vmem:[#allocation2 + $0x4] sm:$0xf]
      %v1118 = vld [vmem:[#allocation2 + $0x8] sm:$0xf]
      %v1119 = vld [vmem:[#allocation2 + $0xc] sm:$0xf]
      %v1120 = vld [vmem:[#allocation2 + $0x10] sm:$0xf]
      %v1121 = vld [vmem:[#allocation2 + $0x14] sm:$0xf]
      %v1122 = vld [vmem:[#allocation2 + $0x18] sm:$0xf]
      %v1123 = vld [vmem:[#allocation2 + $0x1c] sm:$0xf]
      %v1124 = vld [vmem:[#allocation2 + $0x20] sm:$0xf]
      %v1125 = vld [vmem:[#allocation2 + $0x24] sm:$0xf]
      %v1126 = vld [vmem:[#allocation2 + $0x28] sm:$0xf]
      %v1127 = vld [vmem:[#allocation2 + $0x2c] sm:$0xf]
      %v1128 = vld [vmem:[#allocation2 + $0x30] sm:$0xf]
      %v1129 = vld [vmem:[#allocation2 + $0x34] sm:$0xf]
      %v1130 = vld [vmem:[#allocation2 + $0x38] sm:$0xf]
      %v1131 = vld [vmem:[#allocation2 + $0x3c] sm:$0xf]
      %v1132 = vld [vmem:[#allocation2 + $0x40] sm:$0xf]
      %v1133 = vld [vmem:[#allocation2 + $0x44] sm:$0xf]
      %v1134 = vld [vmem:[#allocation2 + $0x48] sm:$0xf]
      %v1135 = vld [vmem:[#allocation2 + $0x4c] sm:$0xf]
      %v1136 = vld [vmem:[#allocation2 + $0x50] sm:$0xf]
      %v1137 = vld [vmem:[#allocation2 + $0x54] sm:$0xf]
      %v1138 = vld [vmem:[#allocation2 + $0x58] sm:$0xf]
      %v1139 = vld [vmem:[#allocation2 + $0x5c] sm:$0xf]
      %v1140 = vld [vmem:[#allocation2 + $0x60] sm:$0xf]
      %v1141 = vld [vmem:[#allocation2 + $0x64] sm:$0xf]
      %v1142 = vld [vmem:[#allocation2 + $0x68] sm:$0xf]
      %v1143 = vld [vmem:[#allocation2 + $0x6c] sm:$0xf]
      %v1144 = vld [vmem:[#allocation2 + $0x70] sm:$0xf]
      %v1145 = vld [vmem:[#allocation2 + $0x74] sm:$0xf]
      %v1146 = vld [vmem:[#allocation2 + $0x78] sm:$0xf]
      %v1147 = vld [vmem:[#allocation2 + $0x7c] sm:$0xf]
      %v1148 = vld [vmem:[#allocation2 + $0x80] sm:$0xf]
      %v1149 = vld [vmem:[#allocation2 + $0x84] sm:$0xf]
      %v1150 = vld [vmem:[#allocation2 + $0x88] sm:$0xf]
      %v1151 = vld [vmem:[#allocation2 + $0x8c] sm:$0xf]
      %v1152 = vld [vmem:[#allocation2 + $0x90] sm:$0xf]
      %v1153 = vld [vmem:[#allocation2 + $0x94] sm:$0xf]
      %v1154 = vld [vmem:[#allocation2 + $0x98] sm:$0xf]
      %v1155 = vld [vmem:[#allocation2 + $0x9c] sm:$0xf]
      %v1156 = vld [vmem:[#allocation2 + $0xa0] sm:$0xf]
      %v1157 = vld [vmem:[#allocation2 + $0xa4] sm:$0xf]
      %v1158 = vld [vmem:[#allocation2 + $0xa8] sm:$0xf]
      %v1159 = vld [vmem:[#allocation2 + $0xac] sm:$0xf]
      %v1160 = vld [vmem:[#allocation2 + $0xb0] sm:$0xf]
      %v1161 = vld [vmem:[#allocation2 + $0xb4] sm:$0xf]
      %v1162 = vld [vmem:[#allocation2 + $0xb8] sm:$0xf]
      %v1163 = vld [vmem:[#allocation2 + $0xbc] sm:$0xf]
      %v1164 = vld [vmem:[#allocation2 + $0xc0] sm:$0xf]
      %v1165 = vld [vmem:[#allocation2 + $0xc4] sm:$0xf]
      %v1166 = vld [vmem:[#allocation2 + $0xc8] sm:$0xf]
      %v1167 = vld [vmem:[#allocation2 + $0xcc] sm:$0xf]
      %v1168 = vld [vmem:[#allocation2 + $0xd0] sm:$0xf]
      %v1169 = vld [vmem:[#allocation2 + $0xd4] sm:$0xf]
      %v1170 = vld [vmem:[#allocation2 + $0xd8] sm:$0xf]
      %v1171 = vld [vmem:[#allocation2 + $0xdc] sm:$0xf]
      %v1172 = vld [vmem:[#allocation2 + $0xe0] sm:$0xf]
      %v1173 = vld [vmem:[#allocation2 + $0xe4] sm:$0xf]
      %v1174 = vld [vmem:[#allocation2 + $0xe8] sm:$0xf]
      %v1175 = vld [vmem:[#allocation2 + $0xec] sm:$0xf]
      %v1176 = vld [vmem:[#allocation2 + $0xf0] sm:$0xf]
      %v1177 = vld [vmem:[#allocation2 + $0xf4] sm:$0xf]
      %v1178 = vld [vmem:[#allocation2 + $0xf8] sm:$0xf]
      %v1179 = vld [vmem:[#allocation2 + $0xfc] sm:$0xf]
      %v1180 = vld [vmem:[#allocation2 + $0x100] sm:$0xf]
      %v1181 = vld [vmem:[#allocation2 + $0x104] sm:$0xf]
      %v1182 = vld [vmem:[#allocation2 + $0x108] sm:$0xf]
      %v1183 = vld [vmem:[#allocation2 + $0x10c] sm:$0xf]
      %v1184 = vld [vmem:[#allocation2 + $0x110] sm:$0xf]
      %v1185 = vld [vmem:[#allocation2 + $0x114] sm:$0xf]
      %v1186 = vld [vmem:[#allocation2 + $0x118] sm:$0xf]
      %v1187 = vld [vmem:[#allocation2 + $0x11c] sm:$0xf]
      %v1188 = vld [vmem:[#allocation3] sm:$0xf]
      %v1189 = vld [vmem:[#allocation3 + $0x4] sm:$0xf]
      %v1190 = vld [vmem:[#allocation3 + $0x8] sm:$0xf]
      %v1191 = vld [vmem:[#allocation3 + $0xc] sm:$0xf]
      %v1192 = vld [vmem:[#allocation3 + $0x10] sm:$0xf]
      %v1193 = vld [vmem:[#allocation3 + $0x14] sm:$0xf]
      %v1194 = vld [vmem:[#allocation3 + $0x18] sm:$0xf]
      %v1195 = vld [vmem:[#allocation3 + $0x1c] sm:$0xf]
      %v1196 = vld [vmem:[#allocation3 + $0x20] sm:$0xf]
      %v1197 = vld [vmem:[#allocation3 + $0x24] sm:$0xf]
      %v1198 = vld [vmem:[#allocation3 + $0x28] sm:$0xf]
      %v1199 = vld [vmem:[#allocation3 + $0x2c] sm:$0xf]
      %v1200 = vld [vmem:[#allocation3 + $0x30] sm:$0xf]
      %v1201 = vld [vmem:[#allocation3 + $0x34] sm:$0xf]
      %v1202 = vld [vmem:[#allocation3 + $0x38] sm:$0xf]
      %v1203 = vld [vmem:[#allocation3 + $0x3c] sm:$0xf]
      %v1204 = vld [vmem:[#allocation3 + $0x40] sm:$0xf]
      %v1205 = vld [vmem:[#allocation3 + $0x44] sm:$0xf]
      %v1206 = vld [vmem:[#allocation3 + $0x48] sm:$0xf]
      %v1207 = vld [vmem:[#allocation3 + $0x4c] sm:$0xf]
      %v1208 = vld [vmem:[#allocation3 + $0x50] sm:$0xf]
      %v1209 = vld [vmem:[#allocation3 + $0x54] sm:$0xf]
      %v1210 = vld [vmem:[#allocation3 + $0x58] sm:$0xf]
      %v1211 = vld [vmem:[#allocation3 + $0x5c] sm:$0xf]
      %v1212 = vld [vmem:[#allocation3 + $0x60] sm:$0xf]
      %v1213 = vld [vmem:[#allocation3 + $0x64] sm:$0xf]
      %v1214 = vld [vmem:[#allocation3 + $0x68] sm:$0xf]
      %v1215 = vld [vmem:[#allocation3 + $0x6c] sm:$0xf]
      %v1216 = vld [vmem:[#allocation3 + $0x70] sm:$0xf]
      %v1217 = vld [vmem:[#allocation3 + $0x74] sm:$0xf]
      %v1218 = vld [vmem:[#allocation3 + $0x78] sm:$0xf]
      %v1219 = vld [vmem:[#allocation3 + $0x7c] sm:$0xf]
      %v1220 = vld [vmem:[#allocation3 + $0x80] sm:$0xf]
      %v1221 = vld [vmem:[#allocation3 + $0x84] sm:$0xf]
      %v1222 = vld [vmem:[#allocation3 + $0x88] sm:$0xf]
      %v1223 = vld [vmem:[#allocation3 + $0x8c] sm:$0xf]
      %v1224 = vld [vmem:[#allocation3 + $0x90] sm:$0xf]
      %v1225 = vld [vmem:[#allocation3 + $0x94] sm:$0xf]
      %v1226 = vld [vmem:[#allocation3 + $0x98] sm:$0xf]
      %v1227 = vld [vmem:[#allocation3 + $0x9c] sm:$0xf]
      %v1228 = vld [vmem:[#allocation3 + $0xa0] sm:$0xf]
      %v1229 = vld [vmem:[#allocation3 + $0xa4] sm:$0xf]
      %v1230 = vld [vmem:[#allocation3 + $0xa8] sm:$0xf]
      %v1231 = vld [vmem:[#allocation3 + $0xac] sm:$0xf]
      %v1232 = vld [vmem:[#allocation3 + $0xb0] sm:$0xf]
      %v1233 = vld [vmem:[#allocation3 + $0xb4] sm:$0xf]
      %v1234 = vld [vmem:[#allocation3 + $0xb8] sm:$0xf]
      %v1235 = vld [vmem:[#allocation3 + $0xbc] sm:$0xf]
      %v1236 = vld [vmem:[#allocation3 + $0xc0] sm:$0xf]
      %v1237 = vld [vmem:[#allocation3 + $0xc4] sm:$0xf]
      %v1238 = vld [vmem:[#allocation3 + $0xc8] sm:$0xf]
      %v1239 = vld [vmem:[#allocation3 + $0xcc] sm:$0xf]
      %v1240 = vld [vmem:[#allocation3 + $0xd0] sm:$0xf]
      %v1241 = vld [vmem:[#allocation3 + $0xd4] sm:$0xf]
      %v1242 = vld [vmem:[#allocation3 + $0xd8] sm:$0xf]
      %v1243 = vld [vmem:[#allocation3 + $0xdc] sm:$0xf]
      %v1244 = vld [vmem:[#allocation3 + $0xe0] sm:$0xf]
      %v1245 = vld [vmem:[#allocation3 + $0xe4] sm:$0xf]
      %v1246 = vld [vmem:[#allocation3 + $0xe8] sm:$0xf]
      %v1247 = vld [vmem:[#allocation3 + $0xec] sm:$0xf]
      %v1248 = vld [vmem:[#allocation3 + $0xf0] sm:$0xf]
      %v1249 = vld [vmem:[#allocation3 + $0xf4] sm:$0xf]
      %v1250 = vld [vmem:[#allocation3 + $0xf8] sm:$0xf]
      %v1251 = vld [vmem:[#allocation3 + $0xfc] sm:$0xf]
      %v1252 = vld [vmem:[#allocation3 + $0x100] sm:$0xf]
      %v1253 = vld [vmem:[#allocation3 + $0x104] sm:$0xf]
      %v1254 = vld [vmem:[#allocation3 + $0x108] sm:$0xf]
      %v1255 = vld [vmem:[#allocation3 + $0x10c] sm:$0xf]
      %v1256 = vld [vmem:[#allocation3 + $0x110] sm:$0xf]
      %v1257 = vld [vmem:[#allocation3 + $0x114] sm:$0xf]
      %v1258 = vld [vmem:[#allocation3 + $0x118] sm:$0xf]
      %v1259 = vld [vmem:[#allocation3 + $0x11c] sm:$0xf]
      %v1260 = vld [vmem:[#allocation4] sm:$0xf]
      %v1261 = vld [vmem:[#allocation4 + $0x4] sm:$0xf]
      %v1262 = vld [vmem:[#allocation4 + $0x8] sm:$0xf]
      %v1263 = vld [vmem:[#allocation4 + $0xc] sm:$0xf]
      %v1264 = vld [vmem:[#allocation4 + $0x10] sm:$0xf]
      %v1265 = vld [vmem:[#allocation4 + $0x14] sm:$0xf]
      %v1266 = vld [vmem:[#allocation4 + $0x18] sm:$0xf]
      %v1267 = vld [vmem:[#allocation4 + $0x1c] sm:$0xf]
      %v1268 = vld [vmem:[#allocation4 + $0x20] sm:$0xf]
      %v1269 = vld [vmem:[#allocation4 + $0x24] sm:$0xf]
      %v1270 = vld [vmem:[#allocation4 + $0x28] sm:$0xf]
      %v1271 = vld [vmem:[#allocation4 + $0x2c] sm:$0xf]
      %v1272 = vld [vmem:[#allocation4 + $0x30] sm:$0xf]
      %v1273 = vld [vmem:[#allocation4 + $0x34] sm:$0xf]
      %v1274 = vld [vmem:[#allocation4 + $0x38] sm:$0xf]
      %v1275 = vld [vmem:[#allocation4 + $0x3c] sm:$0xf]
      %v1276 = vld [vmem:[#allocation4 + $0x40] sm:$0xf]
      %v1277 = vld [vmem:[#allocation4 + $0x44] sm:$0xf]
      %v1278 = vld [vmem:[#allocation4 + $0x48] sm:$0xf]
      %v1279 = vld [vmem:[#allocation4 + $0x4c] sm:$0xf]
      %v1280 = vld [vmem:[#allocation4 + $0x50] sm:$0xf]
      %v1281 = vld [vmem:[#allocation4 + $0x54] sm:$0xf]
      %v1282 = vld [vmem:[#allocation4 + $0x58] sm:$0xf]
      %v1283 = vld [vmem:[#allocation4 + $0x5c] sm:$0xf]
      %v1284 = vld [vmem:[#allocation4 + $0x60] sm:$0xf]
      %v1285 = vld [vmem:[#allocation4 + $0x64] sm:$0xf]
      %v1286 = vld [vmem:[#allocation4 + $0x68] sm:$0xf]
      %v1287 = vld [vmem:[#allocation4 + $0x6c] sm:$0xf]
      %v1288 = vld [vmem:[#allocation4 + $0x70] sm:$0xf]
      %v1289 = vld [vmem:[#allocation4 + $0x74] sm:$0xf]
      %v1290 = vld [vmem:[#allocation4 + $0x78] sm:$0xf]
      %v1291 = vld [vmem:[#allocation4 + $0x7c] sm:$0xf]
      %v1292 = vld [vmem:[#allocation4 + $0x80] sm:$0xf]
      %v1293 = vld [vmem:[#allocation4 + $0x84] sm:$0xf]
      %v1294 = vld [vmem:[#allocation4 + $0x88] sm:$0xf]
      %v1295 = vld [vmem:[#allocation4 + $0x8c] sm:$0xf]
      %v1296 = vld [vmem:[#allocation4 + $0x90] sm:$0xf]
      %v1297 = vld [vmem:[#allocation4 + $0x94] sm:$0xf]
      %v1298 = vld [vmem:[#allocation4 + $0x98] sm:$0xf]
      %v1299 = vld [vmem:[#allocation4 + $0x9c] sm:$0xf]
      %v1300 = vld [vmem:[#allocation4 + $0xa0] sm:$0xf]
      %v1301 = vld [vmem:[#allocation4 + $0xa4] sm:$0xf]
      %v1302 = vld [vmem:[#allocation4 + $0xa8] sm:$0xf]
      %v1303 = vld [vmem:[#allocation4 + $0xac] sm:$0xf]
      %v1304 = vld [vmem:[#allocation4 + $0xb0] sm:$0xf]
      %v1305 = vld [vmem:[#allocation4 + $0xb4] sm:$0xf]
      %v1306 = vld [vmem:[#allocation4 + $0xb8] sm:$0xf]
      %v1307 = vld [vmem:[#allocation4 + $0xbc] sm:$0xf]
      %v1308 = vld [vmem:[#allocation4 + $0xc0] sm:$0xf]
      %v1309 = vld [vmem:[#allocation4 + $0xc4] sm:$0xf]
      %v1310 = vld [vmem:[#allocation4 + $0xc8] sm:$0xf]
      %v1311 = vld [vmem:[#allocation4 + $0xcc] sm:$0xf]
      %v1312 = vld [vmem:[#allocation4 + $0xd0] sm:$0xf]
      %v1313 = vld [vmem:[#allocation4 + $0xd4] sm:$0xf]
      %v1314 = vld [vmem:[#allocation4 + $0xd8] sm:$0xf]
      %v1315 = vld [vmem:[#allocation4 + $0xdc] sm:$0xf]
      %v1316 = vld [vmem:[#allocation4 + $0xe0] sm:$0xf]
      %v1317 = vld [vmem:[#allocation4 + $0xe4] sm:$0xf]
      %v1318 = vld [vmem:[#allocation4 + $0xe8] sm:$0xf]
      %v1319 = vld [vmem:[#allocation4 + $0xec] sm:$0xf]
      %v1320 = vld [vmem:[#allocation4 + $0xf0] sm:$0xf]
      %v1321 = vld [vmem:[#allocation4 + $0xf4] sm:$0xf]
      %v1322 = vld [vmem:[#allocation4 + $0xf8] sm:$0xf]
      %v1323 = vld [vmem:[#allocation4 + $0xfc] sm:$0xf]
      %v1324 = vld [vmem:[#allocation4 + $0x100] sm:$0xf]
      %v1325 = vld [vmem:[#allocation4 + $0x104] sm:$0xf]
      %v1326 = vld [vmem:[#allocation4 + $0x108] sm:$0xf]
      %v1327 = vld [vmem:[#allocation4 + $0x10c] sm:$0xf]
      %v1328 = vld [vmem:[#allocation4 + $0x110] sm:$0xf]
      %v1329 = vld [vmem:[#allocation4 + $0x114] sm:$0xf]
      %v1330 = vld [vmem:[#allocation4 + $0x118] sm:$0xf]
      %v1331 = vld [vmem:[#allocation4 + $0x11c] sm:$0xf]
      %v1332 = vld [vmem:[%s1] sm:$0xf]
      %v1333 = vld [vmem:[%s1 + $0x4] sm:$0xf]
      %s1334 = scalar_lea.vmem %s1, 8
      %v1335 = vld [vmem:[%s1334] sm:$0xf]
      %v1336 = vld [vmem:[%s1334 + $0x4] sm:$0xf]
      %v1401 = vunpack.c.l.b16 %v1188
      %v1402 = vunpack.c.l.b16 %v1189
      %v1403 = vunpack.c.l.b16 %v1190
      %v1404 = vunpack.c.l.b16 %v1191
      %v1405 = vunpack.c.l.b16 %v1192
      %v1406 = vunpack.c.l.b16 %v1193
      %v1407 = vunpack.c.l.b16 %v1194
      %v1408 = vunpack.c.l.b16 %v1195
      %v1409 = vunpack.c.l.b16 %v1196
      %v1410 = vunpack.c.l.b16 %v1197
      %v1411 = vunpack.c.l.b16 %v1198
      %v1412 = vunpack.c.l.b16 %v1199
      %v1413 = vunpack.c.l.b16 %v1200
      %v1414 = vunpack.c.l.b16 %v1201
      %v1415 = vunpack.c.l.b16 %v1202
      %v1416 = vunpack.c.l.b16 %v1203
      %v1417 = vunpack.c.l.b16 %v1204
      %v1418 = vunpack.c.l.b16 %v1205
      %v1419 = vunpack.c.l.b16 %v1206
      %v1420 = vunpack.c.l.b16 %v1207
      %v1421 = vunpack.c.l.b16 %v1208
      %v1422 = vunpack.c.l.b16 %v1209
      %v1423 = vunpack.c.l.b16 %v1210
      %v1424 = vunpack.c.l.b16 %v1211
      %v1425 = vunpack.c.l.b16 %v1212
      %v1426 = vunpack.c.l.b16 %v1213
      %v1427 = vunpack.c.l.b16 %v1214
      %v1428 = vunpack.c.l.b16 %v1215
      %v1429 = vunpack.c.l.b16 %v1216
      %v1430 = vunpack.c.l.b16 %v1217
      %v1431 = vunpack.c.l.b16 %v1218
      %v1432 = vunpack.c.l.b16 %v1219
      %v1433 = vunpack.c.l.b16 %v1220
      %v1434 = vunpack.c.l.b16 %v1221
      %v1435 = vunpack.c.l.b16 %v1222
      %v1436 = vunpack.c.l.b16 %v1223
      %v1437 = vunpack.c.l.b16 %v1224
      %v1438 = vunpack.c.l.b16 %v1225
      %v1439 = vunpack.c.l.b16 %v1226
      %v1440 = vunpack.c.l.b16 %v1227
      %v1441 = vunpack.c.l.b16 %v1228
      %v1442 = vunpack.c.l.b16 %v1229
      %v1443 = vunpack.c.l.b16 %v1230
      %v1444 = vunpack.c.l.b16 %v1231
      %v1445 = vunpack.c.l.b16 %v1232
      %v1446 = vunpack.c.l.b16 %v1233
      %v1447 = vunpack.c.l.b16 %v1234
      %v1448 = vunpack.c.l.b16 %v1235
      %v1449 = vunpack.c.l.b16 %v1236
      %v1450 = vunpack.c.l.b16 %v1237
      %v1451 = vunpack.c.l.b16 %v1238
      %v1452 = vunpack.c.l.b16 %v1239
      %v1453 = vunpack.c.l.b16 %v1240
      %v1454 = vunpack.c.l.b16 %v1241
      %v1455 = vunpack.c.l.b16 %v1242
      %v1456 = vunpack.c.l.b16 %v1243
      %v1457 = vunpack.c.l.b16 %v1244
      %v1458 = vunpack.c.l.b16 %v1245
      %v1459 = vunpack.c.l.b16 %v1246
      %v1460 = vunpack.c.l.b16 %v1247
      %v1461 = vunpack.c.l.b16 %v1248
      %v1462 = vunpack.c.l.b16 %v1249
      %v1463 = vunpack.c.l.b16 %v1250
      %v1464 = vunpack.c.l.b16 %v1251
      %v1465 = vpack.c.b16 %v1402, %v1401
      %v1466 = vpack.c.b16 %v1404, %v1403
      %v1467 = vpack.c.b16 %v1406, %v1405
      %v1468 = vpack.c.b16 %v1408, %v1407
      %v1469 = vpack.c.b16 %v1410, %v1409
      %v1470 = vpack.c.b16 %v1412, %v1411
      %v1471 = vpack.c.b16 %v1414, %v1413
      %v1472 = vpack.c.b16 %v1416, %v1415
      %v1473 = vpack.c.b16 %v1418, %v1417
      %v1474 = vpack.c.b16 %v1420, %v1419
      %v1475 = vpack.c.b16 %v1422, %v1421
      %v1476 = vpack.c.b16 %v1424, %v1423
      %v1477 = vpack.c.b16 %v1426, %v1425
      %v1478 = vpack.c.b16 %v1428, %v1427
      %v1479 = vpack.c.b16 %v1430, %v1429
      %v1480 = vpack.c.b16 %v1432, %v1431
      %v1481 = vpack.c.b16 %v1434, %v1433
      %v1482 = vpack.c.b16 %v1436, %v1435
      %v1483 = vpack.c.b16 %v1438, %v1437
      %v1484 = vpack.c.b16 %v1440, %v1439
      %v1485 = vpack.c.b16 %v1442, %v1441
      %v1486 = vpack.c.b16 %v1444, %v1443
      %v1487 = vpack.c.b16 %v1446, %v1445
      %v1488 = vpack.c.b16 %v1448, %v1447
      %v1489 = vpack.c.b16 %v1450, %v1449
      %v1490 = vpack.c.b16 %v1452, %v1451
      %v1491 = vpack.c.b16 %v1454, %v1453
      %v1492 = vpack.c.b16 %v1456, %v1455
      %v1493 = vpack.c.b16 %v1458, %v1457
      %v1494 = vpack.c.b16 %v1460, %v1459
      %v1495 = vpack.c.b16 %v1462, %v1461
      %v1496 = vpack.c.b16 %v1464, %v1463
      %v1499 = vunpack.c.l.b16 %v1335
      %v1500 = vunpack.c.l.b16 %v1336
      %v1501 = vpack.c.b16 %v1500, %v1499
      %vm1503 = vcmask 130048
      %v1505 = vsel %vm1503, %v1465, 0
      %v1508 = vsel %vm1503, %v1466, 0
      %v1511 = vsel %vm1503, %v1467, 0
      %v1514 = vsel %vm1503, %v1468, 0
      %v1517 = vsel %vm1503, %v1469, 0
      %v1520 = vsel %vm1503, %v1470, 0
      %v1523 = vsel %vm1503, %v1471, 0
      %v1526 = vsel %vm1503, %v1472, 0
      %v1529 = vsel %vm1503, %v1473, 0
      %v1532 = vsel %vm1503, %v1474, 0
      %v1535 = vsel %vm1503, %v1475, 0
      %v1538 = vsel %vm1503, %v1476, 0
      %v1541 = vsel %vm1503, %v1477, 0
      %v1544 = vsel %vm1503, %v1478, 0
      %v1547 = vsel %vm1503, %v1479, 0
      %v1550 = vsel %vm1503, %v1480, 0
      %v1553 = vsel %vm1503, %v1481, 0
      %v1556 = vsel %vm1503, %v1482, 0
      %v1559 = vsel %vm1503, %v1483, 0
      %v1562 = vsel %vm1503, %v1484, 0
      %v1565 = vsel %vm1503, %v1485, 0
      %v1568 = vsel %vm1503, %v1486, 0
      %v1571 = vsel %vm1503, %v1487, 0
      %v1574 = vsel %vm1503, %v1488, 0
      %v1577 = vsel %vm1503, %v1489, 0
      %v1580 = vsel %vm1503, %v1490, 0
      %v1583 = vsel %vm1503, %v1491, 0
      %v1586 = vsel %vm1503, %v1492, 0
      %v1589 = vsel %vm1503, %v1493, 0
      %v1592 = vsel %vm1503, %v1494, 0
      %v1595 = vsel %vm1503, %v1495, 0
      %v1598 = vsel %vm1503, %v1496, 0
      %1600 = vmatpush.bf16.msra.mxu0 0
      %1601 = vmatpush.bf16.msra.mxu0 0
      %1602 = vmatpush.bf16.msra.mxu0 0
      %1603 = vmatpush.bf16.msra.mxu0 0
      %1604 = vmatpush.bf16.msra.mxu0 0
      %1605 = vmatpush.bf16.msra.mxu0 0
      %1606 = vmatpush.bf16.msra.mxu0 0
      %1607 = vmatpush.bf16.msra.mxu0 %v1501
      %1608 = vmatmul.bf16.gmra.mxu0 %v1505
      %v1609 = vpop.f32.mrf.mxu0
      %v1610 = vadd.f32 0.0, %v1609
      %v1611 = vpop.f32.mrf.mxu0
      %v1612 = vadd.f32 0.0, %v1611
      %1613 = vmatmul.bf16.gmra.mxu0 %v1508
      %v1614 = vpop.f32.mrf.mxu0
      %v1615 = vpop.f32.mrf.mxu0
      %1616 = vmatmul.bf16.gmra.mxu0 %v1511
      %v1617 = vpop.f32.mrf.mxu0
      %v1618 = vadd.f32 0.0, %v1617
      %v1619 = vpop.f32.mrf.mxu0
      %v1620 = vadd.f32 0.0, %v1619
      %1621 = vmatmul.bf16.gmra.mxu0 %v1514
      %v1622 = vpop.f32.mrf.mxu0
      %v1623 = vpop.f32.mrf.mxu0
      %1624 = vmatmul.bf16.gmra.mxu0 %v1517
      %v1625 = vpop.f32.mrf.mxu0
      %v1626 = vadd.f32 0.0, %v1625
      %v1627 = vpop.f32.mrf.mxu0
      %v1628 = vadd.f32 0.0, %v1627
      %1629 = vmatmul.bf16.gmra.mxu0 %v1520
      %v1630 = vpop.f32.mrf.mxu0
      %v1631 = vpop.f32.mrf.mxu0
      %1632 = vmatmul.bf16.gmra.mxu0 %v1523
      %v1633 = vpop.f32.mrf.mxu0
      %v1634 = vadd.f32 0.0, %v1633
      %v1635 = vpop.f32.mrf.mxu0
      %v1636 = vadd.f32 0.0, %v1635
      %1637 = vmatmul.bf16.gmra.mxu0 %v1526
      %v1638 = vpop.f32.mrf.mxu0
      %v1639 = vpop.f32.mrf.mxu0
      %1640 = vmatmul.bf16.gmra.mxu0 %v1529
      %v1641 = vpop.f32.mrf.mxu0
      %v1642 = vadd.f32 0.0, %v1641
      %v1643 = vpop.f32.mrf.mxu0
      %v1644 = vadd.f32 0.0, %v1643
      %1645 = vmatmul.bf16.gmra.mxu0 %v1532
      %v1646 = vpop.f32.mrf.mxu0
      %v1647 = vpop.f32.mrf.mxu0
      %1648 = vmatmul.bf16.gmra.mxu0 %v1535
      %v1649 = vpop.f32.mrf.mxu0
      %v1650 = vadd.f32 0.0, %v1649
      %v1651 = vpop.f32.mrf.mxu0
      %v1652 = vadd.f32 0.0, %v1651
      %1653 = vmatmul.bf16.gmra.mxu0 %v1538
      %v1654 = vpop.f32.mrf.mxu0
      %v1655 = vpop.f32.mrf.mxu0
      %1656 = vmatmul.bf16.gmra.mxu0 %v1541
      %v1657 = vpop.f32.mrf.mxu0
      %v1658 = vadd.f32 0.0, %v1657
      %v1659 = vpop.f32.mrf.mxu0
      %v1660 = vadd.f32 0.0, %v1659
      %1661 = vmatmul.bf16.gmra.mxu0 %v1544
      %v1662 = vpop.f32.mrf.mxu0
      %v1663 = vpop.f32.mrf.mxu0
      %1664 = vmatmul.bf16.gmra.mxu0 %v1547
      %v1665 = vpop.f32.mrf.mxu0
      %v1666 = vadd.f32 0.0, %v1665
      %v1667 = vpop.f32.mrf.mxu0
      %v1668 = vadd.f32 0.0, %v1667
      %1669 = vmatmul.bf16.gmra.mxu0 %v1550
      %v1670 = vpop.f32.mrf.mxu0
      %v1671 = vpop.f32.mrf.mxu0
      %1672 = vmatmul.bf16.gmra.mxu0 %v1553
      %v1673 = vpop.f32.mrf.mxu0
      %v1674 = vadd.f32 0.0, %v1673
      %v1675 = vpop.f32.mrf.mxu0
      %v1676 = vadd.f32 0.0, %v1675
      %1677 = vmatmul.bf16.gmra.mxu0 %v1556
      %v1678 = vpop.f32.mrf.mxu0
      %v1679 = vpop.f32.mrf.mxu0
      %1680 = vmatmul.bf16.gmra.mxu0 %v1559
      %v1681 = vpop.f32.mrf.mxu0
      %v1682 = vadd.f32 0.0, %v1681
      %v1683 = vpop.f32.mrf.mxu0
      %v1684 = vadd.f32 0.0, %v1683
      %1685 = vmatmul.bf16.gmra.mxu0 %v1562
      %v1686 = vpop.f32.mrf.mxu0
      %v1687 = vpop.f32.mrf.mxu0
      %1688 = vmatmul.bf16.gmra.mxu0 %v1565
      %v1689 = vpop.f32.mrf.mxu0
      %v1690 = vadd.f32 0.0, %v1689
      %v1691 = vpop.f32.mrf.mxu0
      %v1692 = vadd.f32 0.0, %v1691
      %1693 = vmatmul.bf16.gmra.mxu0 %v1568
      %v1694 = vpop.f32.mrf.mxu0
      %v1695 = vpop.f32.mrf.mxu0
      %1696 = vmatmul.bf16.gmra.mxu0 %v1571
      %v1697 = vpop.f32.mrf.mxu0
      %v1698 = vadd.f32 0.0, %v1697
      %v1699 = vpop.f32.mrf.mxu0
      %v1700 = vadd.f32 0.0, %v1699
      %1701 = vmatmul.bf16.gmra.mxu0 %v1574
      %v1702 = vpop.f32.mrf.mxu0
      %v1703 = vpop.f32.mrf.mxu0
      %1704 = vmatmul.bf16.gmra.mxu0 %v1577
      %v1705 = vpop.f32.mrf.mxu0
      %v1706 = vadd.f32 0.0, %v1705
      %v1707 = vpop.f32.mrf.mxu0
      %v1708 = vadd.f32 0.0, %v1707
      %1709 = vmatmul.bf16.gmra.mxu0 %v1580
      %v1710 = vpop.f32.mrf.mxu0
      %v1711 = vpop.f32.mrf.mxu0
      %1712 = vmatmul.bf16.gmra.mxu0 %v1583
      %v1713 = vpop.f32.mrf.mxu0
      %v1714 = vadd.f32 0.0, %v1713
      %v1715 = vpop.f32.mrf.mxu0
      %v1716 = vadd.f32 0.0, %v1715
      %1717 = vmatmul.bf16.gmra.mxu0 %v1586
      %v1718 = vpop.f32.mrf.mxu0
      %v1719 = vpop.f32.mrf.mxu0
      %1720 = vmatmul.bf16.gmra.mxu0 %v1589
      %v1721 = vpop.f32.mrf.mxu0
      %v1722 = vadd.f32 0.0, %v1721
      %v1723 = vpop.f32.mrf.mxu0
      %v1724 = vadd.f32 0.0, %v1723
      %1725 = vmatmul.bf16.gmra.mxu0 %v1592
      %v1726 = vpop.f32.mrf.mxu0
      %v1727 = vpop.f32.mrf.mxu0
      %1728 = vmatmul.bf16.gmra.mxu0 %v1595
      %v1729 = vpop.f32.mrf.mxu0
      %v1730 = vadd.f32 0.0, %v1729
      %v1731 = vpop.f32.mrf.mxu0
      %v1732 = vadd.f32 0.0, %v1731
      %1733 = vmatmul.bf16.gmra.mxu0 %v1598
      %v1734 = vpop.f32.mrf.mxu0
      %v1735 = vpop.f32.mrf.mxu0
      %1736 = vdwg.mxu0
      %v1801 = vunpack.c.l.b16 %v1116
      %v1802 = vunpack.c.l.b16 %v1117
      %v1803 = vunpack.c.l.b16 %v1118
      %v1804 = vunpack.c.l.b16 %v1119
      %v1805 = vunpack.c.l.b16 %v1120
      %v1806 = vunpack.c.l.b16 %v1121
      %v1807 = vunpack.c.l.b16 %v1122
      %v1808 = vunpack.c.l.b16 %v1123
      %v1809 = vunpack.c.l.b16 %v1124
      %v1810 = vunpack.c.l.b16 %v1125
      %v1811 = vunpack.c.l.b16 %v1126
      %v1812 = vunpack.c.l.b16 %v1127
      %v1813 = vunpack.c.l.b16 %v1128
      %v1814 = vunpack.c.l.b16 %v1129
      %v1815 = vunpack.c.l.b16 %v1130
      %v1816 = vunpack.c.l.b16 %v1131
      %v1817 = vunpack.c.l.b16 %v1132
      %v1818 = vunpack.c.l.b16 %v1133
      %v1819 = vunpack.c.l.b16 %v1134
      %v1820 = vunpack.c.l.b16 %v1135
      %v1821 = vunpack.c.l.b16 %v1136
      %v1822 = vunpack.c.l.b16 %v1137
      %v1823 = vunpack.c.l.b16 %v1138
      %v1824 = vunpack.c.l.b16 %v1139
      %v1825 = vunpack.c.l.b16 %v1140
      %v1826 = vunpack.c.l.b16 %v1141
      %v1827 = vunpack.c.l.b16 %v1142
      %v1828 = vunpack.c.l.b16 %v1143
      %v1829 = vunpack.c.l.b16 %v1144
      %v1830 = vunpack.c.l.b16 %v1145
      %v1831 = vunpack.c.l.b16 %v1146
      %v1832 = vunpack.c.l.b16 %v1147
      %v1833 = vunpack.c.l.b16 %v1148
      %v1834 = vunpack.c.l.b16 %v1149
      %v1835 = vunpack.c.l.b16 %v1150
      %v1836 = vunpack.c.l.b16 %v1151
      %v1837 = vunpack.c.l.b16 %v1152
      %v1838 = vunpack.c.l.b16 %v1153
      %v1839 = vunpack.c.l.b16 %v1154
      %v1840 = vunpack.c.l.b16 %v1155
      %v1841 = vunpack.c.l.b16 %v1156
      %v1842 = vunpack.c.l.b16 %v1157
      %v1843 = vunpack.c.l.b16 %v1158
      %v1844 = vunpack.c.l.b16 %v1159
      %v1845 = vunpack.c.l.b16 %v1160
      %v1846 = vunpack.c.l.b16 %v1161
      %v1847 = vunpack.c.l.b16 %v1162
      %v1848 = vunpack.c.l.b16 %v1163
      %v1849 = vunpack.c.l.b16 %v1164
      %v1850 = vunpack.c.l.b16 %v1165
      %v1851 = vunpack.c.l.b16 %v1166
      %v1852 = vunpack.c.l.b16 %v1167
      %v1853 = vunpack.c.l.b16 %v1168
      %v1854 = vunpack.c.l.b16 %v1169
      %v1855 = vunpack.c.l.b16 %v1170
      %v1856 = vunpack.c.l.b16 %v1171
      %v1857 = vunpack.c.l.b16 %v1172
      %v1858 = vunpack.c.l.b16 %v1173
      %v1859 = vunpack.c.l.b16 %v1174
      %v1860 = vunpack.c.l.b16 %v1175
      %v1861 = vunpack.c.l.b16 %v1176
      %v1862 = vunpack.c.l.b16 %v1177
      %v1863 = vunpack.c.l.b16 %v1178
      %v1864 = vunpack.c.l.b16 %v1179
      %v1865 = vpack.c.b16 %v1802, %v1801
      %v1866 = vpack.c.b16 %v1804, %v1803
      %v1867 = vpack.c.b16 %v1806, %v1805
      %v1868 = vpack.c.b16 %v1808, %v1807
      %v1869 = vpack.c.b16 %v1810, %v1809
      %v1870 = vpack.c.b16 %v1812, %v1811
      %v1871 = vpack.c.b16 %v1814, %v1813
      %v1872 = vpack.c.b16 %v1816, %v1815
      %v1873 = vpack.c.b16 %v1818, %v1817
      %v1874 = vpack.c.b16 %v1820, %v1819
      %v1875 = vpack.c.b16 %v1822, %v1821
      %v1876 = vpack.c.b16 %v1824, %v1823
      %v1877 = vpack.c.b16 %v1826, %v1825
      %v1878 = vpack.c.b16 %v1828, %v1827
      %v1879 = vpack.c.b16 %v1830, %v1829
      %v1880 = vpack.c.b16 %v1832, %v1831
      %v1881 = vpack.c.b16 %v1834, %v1833
      %v1882 = vpack.c.b16 %v1836, %v1835
      %v1883 = vpack.c.b16 %v1838, %v1837
      %v1884 = vpack.c.b16 %v1840, %v1839
      %v1885 = vpack.c.b16 %v1842, %v1841
      %v1886 = vpack.c.b16 %v1844, %v1843
      %v1887 = vpack.c.b16 %v1846, %v1845
      %v1888 = vpack.c.b16 %v1848, %v1847
      %v1889 = vpack.c.b16 %v1850, %v1849
      %v1890 = vpack.c.b16 %v1852, %v1851
      %v1891 = vpack.c.b16 %v1854, %v1853
      %v1892 = vpack.c.b16 %v1856, %v1855
      %v1893 = vpack.c.b16 %v1858, %v1857
      %v1894 = vpack.c.b16 %v1860, %v1859
      %v1895 = vpack.c.b16 %v1862, %v1861
      %v1896 = vpack.c.b16 %v1864, %v1863
      %v1899 = vunpack.c.l.b16 %v1332
      %v1900 = vunpack.c.l.b16 %v1333
      %v1901 = vpack.c.b16 %v1900, %v1899
      %v1904 = vsel %vm1503, %v1865, 0
      %v1907 = vsel %vm1503, %v1866, 0
      %v1910 = vsel %vm1503, %v1867, 0
      %v1913 = vsel %vm1503, %v1868, 0
      %v1916 = vsel %vm1503, %v1869, 0
      %v1919 = vsel %vm1503, %v1870, 0
      %v1922 = vsel %vm1503, %v1871, 0
      %v1925 = vsel %vm1503, %v1872, 0
      %v1928 = vsel %vm1503, %v1873, 0
      %v1931 = vsel %vm1503, %v1874, 0
      %v1934 = vsel %vm1503, %v1875, 0
      %v1937 = vsel %vm1503, %v1876, 0
      %v1940 = vsel %vm1503, %v1877, 0
      %v1943 = vsel %vm1503, %v1878, 0
      %v1946 = vsel %vm1503, %v1879, 0
      %v1949 = vsel %vm1503, %v1880, 0
      %v1952 = vsel %vm1503, %v1881, 0
      %v1955 = vsel %vm1503, %v1882, 0
      %v1958 = vsel %vm1503, %v1883, 0
      %v1961 = vsel %vm1503, %v1884, 0
      %v1964 = vsel %vm1503, %v1885, 0
      %v1967 = vsel %vm1503, %v1886, 0
      %v1970 = vsel %vm1503, %v1887, 0
      %v1973 = vsel %vm1503, %v1888, 0
      %v1976 = vsel %vm1503, %v1889, 0
      %v1979 = vsel %vm1503, %v1890, 0
      %v1982 = vsel %vm1503, %v1891, 0
      %v1985 = vsel %vm1503, %v1892, 0
      %v1988 = vsel %vm1503, %v1893, 0
      %v1991 = vsel %vm1503, %v1894, 0
      %v1994 = vsel %vm1503, %v1895, 0
      %v1997 = vsel %vm1503, %v1896, 0
      %1999 = vmatpush.bf16.msra.mxu0 0
      %2000 = vmatpush.bf16.msra.mxu0 0
      %2001 = vmatpush.bf16.msra.mxu0 0
      %2002 = vmatpush.bf16.msra.mxu0 0
      %2003 = vmatpush.bf16.msra.mxu0 0
      %2004 = vmatpush.bf16.msra.mxu0 0
      %2005 = vmatpush.bf16.msra.mxu0 0
      %2006 = vmatpush.bf16.msra.mxu0 %v1901
      %2007 = vmatmul.bf16.gmra.mxu0 %v1904
      %v2008 = vpop.f32.mrf.mxu0
      %v2009 = vadd.f32 %v1610, %v2008
      %v2010 = vpop.f32.mrf.mxu0
      %v2011 = vadd.f32 %v1612, %v2010
      %2012 = vmatmul.bf16.gmra.mxu0 %v1907
      %v2013 = vpop.f32.mrf.mxu0
      %v2014 = vpop.f32.mrf.mxu0
      %2015 = vmatmul.bf16.gmra.mxu0 %v1910
      %v2016 = vpop.f32.mrf.mxu0
      %v2017 = vadd.f32 %v1618, %v2016
      %v2018 = vpop.f32.mrf.mxu0
      %v2019 = vadd.f32 %v1620, %v2018
      %2020 = vmatmul.bf16.gmra.mxu0 %v1913
      %v2021 = vpop.f32.mrf.mxu0
      %v2022 = vpop.f32.mrf.mxu0
      %2023 = vmatmul.bf16.gmra.mxu0 %v1916
      %v2024 = vpop.f32.mrf.mxu0
      %v2025 = vadd.f32 %v1626, %v2024
      %v2026 = vpop.f32.mrf.mxu0
      %v2027 = vadd.f32 %v1628, %v2026
      %2028 = vmatmul.bf16.gmra.mxu0 %v1919
      %v2029 = vpop.f32.mrf.mxu0
      %v2030 = vpop.f32.mrf.mxu0
      %2031 = vmatmul.bf16.gmra.mxu0 %v1922
      %v2032 = vpop.f32.mrf.mxu0
      %v2033 = vadd.f32 %v1634, %v2032
      %v2034 = vpop.f32.mrf.mxu0
      %v2035 = vadd.f32 %v1636, %v2034
      %2036 = vmatmul.bf16.gmra.mxu0 %v1925
      %v2037 = vpop.f32.mrf.mxu0
      %v2038 = vpop.f32.mrf.mxu0
      %2039 = vmatmul.bf16.gmra.mxu0 %v1928
      %v2040 = vpop.f32.mrf.mxu0
      %v2041 = vadd.f32 %v1642, %v2040
      %v2042 = vpop.f32.mrf.mxu0
      %v2043 = vadd.f32 %v1644, %v2042
      %2044 = vmatmul.bf16.gmra.mxu0 %v1931
      %v2045 = vpop.f32.mrf.mxu0
      %v2046 = vpop.f32.mrf.mxu0
      %2047 = vmatmul.bf16.gmra.mxu0 %v1934
      %v2048 = vpop.f32.mrf.mxu0
      %v2049 = vadd.f32 %v1650, %v2048
      %v2050 = vpop.f32.mrf.mxu0
      %v2051 = vadd.f32 %v1652, %v2050
      %2052 = vmatmul.bf16.gmra.mxu0 %v1937
      %v2053 = vpop.f32.mrf.mxu0
      %v2054 = vpop.f32.mrf.mxu0
      %2055 = vmatmul.bf16.gmra.mxu0 %v1940
      %v2056 = vpop.f32.mrf.mxu0
      %v2057 = vadd.f32 %v1658, %v2056
      %v2058 = vpop.f32.mrf.mxu0
      %v2059 = vadd.f32 %v1660, %v2058
      %2060 = vmatmul.bf16.gmra.mxu0 %v1943
      %v2061 = vpop.f32.mrf.mxu0
      %v2062 = vpop.f32.mrf.mxu0
      %2063 = vmatmul.bf16.gmra.mxu0 %v1946
      %v2064 = vpop.f32.mrf.mxu0
      %v2065 = vadd.f32 %v1666, %v2064
      %v2066 = vpop.f32.mrf.mxu0
      %v2067 = vadd.f32 %v1668, %v2066
      %2068 = vmatmul.bf16.gmra.mxu0 %v1949
      %v2069 = vpop.f32.mrf.mxu0
      %v2070 = vpop.f32.mrf.mxu0
      %2071 = vmatmul.bf16.gmra.mxu0 %v1952
      %v2072 = vpop.f32.mrf.mxu0
      %v2073 = vadd.f32 %v1674, %v2072
      %v2074 = vpop.f32.mrf.mxu0
      %v2075 = vadd.f32 %v1676, %v2074
      %2076 = vmatmul.bf16.gmra.mxu0 %v1955
      %v2077 = vpop.f32.mrf.mxu0
      %v2078 = vpop.f32.mrf.mxu0
      %2079 = vmatmul.bf16.gmra.mxu0 %v1958
      %v2080 = vpop.f32.mrf.mxu0
      %v2081 = vadd.f32 %v1682, %v2080
      %v2082 = vpop.f32.mrf.mxu0
      %v2083 = vadd.f32 %v1684, %v2082
      %2084 = vmatmul.bf16.gmra.mxu0 %v1961
      %v2085 = vpop.f32.mrf.mxu0
      %v2086 = vpop.f32.mrf.mxu0
      %2087 = vmatmul.bf16.gmra.mxu0 %v1964
      %v2088 = vpop.f32.mrf.mxu0
      %v2089 = vadd.f32 %v1690, %v2088
      %v2090 = vpop.f32.mrf.mxu0
      %v2091 = vadd.f32 %v1692, %v2090
      %2092 = vmatmul.bf16.gmra.mxu0 %v1967
      %v2093 = vpop.f32.mrf.mxu0
      %v2094 = vpop.f32.mrf.mxu0
      %2095 = vmatmul.bf16.gmra.mxu0 %v1970
      %v2096 = vpop.f32.mrf.mxu0
      %v2097 = vadd.f32 %v1698, %v2096
      %v2098 = vpop.f32.mrf.mxu0
      %v2099 = vadd.f32 %v1700, %v2098
      %2100 = vmatmul.bf16.gmra.mxu0 %v1973
      %v2101 = vpop.f32.mrf.mxu0
      %v2102 = vpop.f32.mrf.mxu0
      %2103 = vmatmul.bf16.gmra.mxu0 %v1976
      %v2104 = vpop.f32.mrf.mxu0
      %v2105 = vadd.f32 %v1706, %v2104
      %v2106 = vpop.f32.mrf.mxu0
      %v2107 = vadd.f32 %v1708, %v2106
      %2108 = vmatmul.bf16.gmra.mxu0 %v1979
      %v2109 = vpop.f32.mrf.mxu0
      %v2110 = vpop.f32.mrf.mxu0
      %2111 = vmatmul.bf16.gmra.mxu0 %v1982
      %v2112 = vpop.f32.mrf.mxu0
      %v2113 = vadd.f32 %v1714, %v2112
      %v2114 = vpop.f32.mrf.mxu0
      %v2115 = vadd.f32 %v1716, %v2114
      %2116 = vmatmul.bf16.gmra.mxu0 %v1985
      %v2117 = vpop.f32.mrf.mxu0
      %v2118 = vpop.f32.mrf.mxu0
      %2119 = vmatmul.bf16.gmra.mxu0 %v1988
      %v2120 = vpop.f32.mrf.mxu0
      %v2121 = vadd.f32 %v1722, %v2120
      %v2122 = vpop.f32.mrf.mxu0
      %v2123 = vadd.f32 %v1724, %v2122
      %2124 = vmatmul.bf16.gmra.mxu0 %v1991
      %v2125 = vpop.f32.mrf.mxu0
      %v2126 = vpop.f32.mrf.mxu0
      %2127 = vmatmul.bf16.gmra.mxu0 %v1994
      %v2128 = vpop.f32.mrf.mxu0
      %v2129 = vadd.f32 %v1730, %v2128
      %v2130 = vpop.f32.mrf.mxu0
      %v2131 = vadd.f32 %v1732, %v2130
      %2132 = vmatmul.bf16.gmra.mxu0 %v1997
      %v2133 = vpop.f32.mrf.mxu0
      %v2134 = vpop.f32.mrf.mxu0
      %2135 = vdwg.mxu0
      %s2136 = scalar_lea.vmem %s1, 16
      %v2137 = vld [vmem:[%s2136] sm:$0xf]
      %v2138 = vld [vmem:[%s2136 + $0x4] sm:$0xf]
      %v2203 = vunpack.c.l.b16 %v1260
      %v2204 = vunpack.c.l.b16 %v1261
      %v2205 = vunpack.c.l.b16 %v1262
      %v2206 = vunpack.c.l.b16 %v1263
      %v2207 = vunpack.c.l.b16 %v1264
      %v2208 = vunpack.c.l.b16 %v1265
      %v2209 = vunpack.c.l.b16 %v1266
      %v2210 = vunpack.c.l.b16 %v1267
      %v2211 = vunpack.c.l.b16 %v1268
      %v2212 = vunpack.c.l.b16 %v1269
      %v2213 = vunpack.c.l.b16 %v1270
      %v2214 = vunpack.c.l.b16 %v1271
      %v2215 = vunpack.c.l.b16 %v1272
      %v2216 = vunpack.c.l.b16 %v1273
      %v2217 = vunpack.c.l.b16 %v1274
      %v2218 = vunpack.c.l.b16 %v1275
      %v2219 = vunpack.c.l.b16 %v1276
      %v2220 = vunpack.c.l.b16 %v1277
      %v2221 = vunpack.c.l.b16 %v1278
      %v2222 = vunpack.c.l.b16 %v1279
      %v2223 = vunpack.c.l.b16 %v1280
      %v2224 = vunpack.c.l.b16 %v1281
      %v2225 = vunpack.c.l.b16 %v1282
      %v2226 = vunpack.c.l.b16 %v1283
      %v2227 = vunpack.c.l.b16 %v1284
      %v2228 = vunpack.c.l.b16 %v1285
      %v2229 = vunpack.c.l.b16 %v1286
      %v2230 = vunpack.c.l.b16 %v1287
      %v2231 = vunpack.c.l.b16 %v1288
      %v2232 = vunpack.c.l.b16 %v1289
      %v2233 = vunpack.c.l.b16 %v1290
      %v2234 = vunpack.c.l.b16 %v1291
      %v2235 = vunpack.c.l.b16 %v1292
      %v2236 = vunpack.c.l.b16 %v1293
      %v2237 = vunpack.c.l.b16 %v1294
      %v2238 = vunpack.c.l.b16 %v1295
      %v2239 = vunpack.c.l.b16 %v1296
      %v2240 = vunpack.c.l.b16 %v1297
      %v2241 = vunpack.c.l.b16 %v1298
      %v2242 = vunpack.c.l.b16 %v1299
      %v2243 = vunpack.c.l.b16 %v1300
      %v2244 = vunpack.c.l.b16 %v1301
      %v2245 = vunpack.c.l.b16 %v1302
      %v2246 = vunpack.c.l.b16 %v1303
      %v2247 = vunpack.c.l.b16 %v1304
      %v2248 = vunpack.c.l.b16 %v1305
      %v2249 = vunpack.c.l.b16 %v1306
      %v2250 = vunpack.c.l.b16 %v1307
      %v2251 = vunpack.c.l.b16 %v1308
      %v2252 = vunpack.c.l.b16 %v1309
      %v2253 = vunpack.c.l.b16 %v1310
      %v2254 = vunpack.c.l.b16 %v1311
      %v2255 = vunpack.c.l.b16 %v1312
      %v2256 = vunpack.c.l.b16 %v1313
      %v2257 = vunpack.c.l.b16 %v1314
      %v2258 = vunpack.c.l.b16 %v1315
      %v2259 = vunpack.c.l.b16 %v1316
      %v2260 = vunpack.c.l.b16 %v1317
      %v2261 = vunpack.c.l.b16 %v1318
      %v2262 = vunpack.c.l.b16 %v1319
      %v2263 = vunpack.c.l.b16 %v1320
      %v2264 = vunpack.c.l.b16 %v1321
      %v2265 = vunpack.c.l.b16 %v1322
      %v2266 = vunpack.c.l.b16 %v1323
      %v2267 = vpack.c.b16 %v2204, %v2203
      %v2268 = vpack.c.b16 %v2206, %v2205
      %v2269 = vpack.c.b16 %v2208, %v2207
      %v2270 = vpack.c.b16 %v2210, %v2209
      %v2271 = vpack.c.b16 %v2212, %v2211
      %v2272 = vpack.c.b16 %v2214, %v2213
      %v2273 = vpack.c.b16 %v2216, %v2215
      %v2274 = vpack.c.b16 %v2218, %v2217
      %v2275 = vpack.c.b16 %v2220, %v2219
      %v2276 = vpack.c.b16 %v2222, %v2221
      %v2277 = vpack.c.b16 %v2224, %v2223
      %v2278 = vpack.c.b16 %v2226, %v2225
      %v2279 = vpack.c.b16 %v2228, %v2227
      %v2280 = vpack.c.b16 %v2230, %v2229
      %v2281 = vpack.c.b16 %v2232, %v2231
      %v2282 = vpack.c.b16 %v2234, %v2233
      %v2283 = vpack.c.b16 %v2236, %v2235
      %v2284 = vpack.c.b16 %v2238, %v2237
      %v2285 = vpack.c.b16 %v2240, %v2239
      %v2286 = vpack.c.b16 %v2242, %v2241
      %v2287 = vpack.c.b16 %v2244, %v2243
      %v2288 = vpack.c.b16 %v2246, %v2245
      %v2289 = vpack.c.b16 %v2248, %v2247
      %v2290 = vpack.c.b16 %v2250, %v2249
      %v2291 = vpack.c.b16 %v2252, %v2251
      %v2292 = vpack.c.b16 %v2254, %v2253
      %v2293 = vpack.c.b16 %v2256, %v2255
      %v2294 = vpack.c.b16 %v2258, %v2257
      %v2295 = vpack.c.b16 %v2260, %v2259
      %v2296 = vpack.c.b16 %v2262, %v2261
      %v2297 = vpack.c.b16 %v2264, %v2263
      %v2298 = vpack.c.b16 %v2266, %v2265
      %v2301 = vunpack.c.l.b16 %v2137
      %v2302 = vunpack.c.l.b16 %v2138
      %v2303 = vpack.c.b16 %v2302, %v2301
      %v2306 = vsel %vm1503, %v2267, 0
      %v2309 = vsel %vm1503, %v2268, 0
      %v2312 = vsel %vm1503, %v2269, 0
      %v2315 = vsel %vm1503, %v2270, 0
      %v2318 = vsel %vm1503, %v2271, 0
      %v2321 = vsel %vm1503, %v2272, 0
      %v2324 = vsel %vm1503, %v2273, 0
      %v2327 = vsel %vm1503, %v2274, 0
      %v2330 = vsel %vm1503, %v2275, 0
      %v2333 = vsel %vm1503, %v2276, 0
      %v2336 = vsel %vm1503, %v2277, 0
      %v2339 = vsel %vm1503, %v2278, 0
      %v2342 = vsel %vm1503, %v2279, 0
      %v2345 = vsel %vm1503, %v2280, 0
      %v2348 = vsel %vm1503, %v2281, 0
      %v2351 = vsel %vm1503, %v2282, 0
      %v2354 = vsel %vm1503, %v2283, 0
      %v2357 = vsel %vm1503, %v2284, 0
      %v2360 = vsel %vm1503, %v2285, 0
      %v2363 = vsel %vm1503, %v2286, 0
      %v2366 = vsel %vm1503, %v2287, 0
      %v2369 = vsel %vm1503, %v2288, 0
      %v2372 = vsel %vm1503, %v2289, 0
      %v2375 = vsel %vm1503, %v2290, 0
      %v2378 = vsel %vm1503, %v2291, 0
      %v2381 = vsel %vm1503, %v2292, 0
      %v2384 = vsel %vm1503, %v2293, 0
      %v2387 = vsel %vm1503, %v2294, 0
      %v2390 = vsel %vm1503, %v2295, 0
      %v2393 = vsel %vm1503, %v2296, 0
      %v2396 = vsel %vm1503, %v2297, 0
      %v2399 = vsel %vm1503, %v2298, 0
      %2401 = vmatpush.bf16.msra.mxu0 0
      %2402 = vmatpush.bf16.msra.mxu0 0
      %2403 = vmatpush.bf16.msra.mxu0 0
      %2404 = vmatpush.bf16.msra.mxu0 0
      %2405 = vmatpush.bf16.msra.mxu0 0
      %2406 = vmatpush.bf16.msra.mxu0 0
      %2407 = vmatpush.bf16.msra.mxu0 0
      %2408 = vmatpush.bf16.msra.mxu0 %v2303
      %2409 = vmatmul.bf16.gmra.mxu0 %v2306
      %v2410 = vpop.f32.mrf.mxu0
      %v2411 = vadd.f32 0.0, %v2410
      %v2412 = vpop.f32.mrf.mxu0
      %v2413 = vadd.f32 0.0, %v2412
      %2414 = vmatmul.bf16.gmra.mxu0 %v2309
      %v2415 = vpop.f32.mrf.mxu0
      %v2416 = vpop.f32.mrf.mxu0
      %2417 = vmatmul.bf16.gmra.mxu0 %v2312
      %v2418 = vpop.f32.mrf.mxu0
      %v2419 = vadd.f32 0.0, %v2418
      %v2420 = vpop.f32.mrf.mxu0
      %v2421 = vadd.f32 0.0, %v2420
      %2422 = vmatmul.bf16.gmra.mxu0 %v2315
      %v2423 = vpop.f32.mrf.mxu0
      %v2424 = vpop.f32.mrf.mxu0
      %2425 = vmatmul.bf16.gmra.mxu0 %v2318
      %v2426 = vpop.f32.mrf.mxu0
      %v2427 = vadd.f32 0.0, %v2426
      %v2428 = vpop.f32.mrf.mxu0
      %v2429 = vadd.f32 0.0, %v2428
      %2430 = vmatmul.bf16.gmra.mxu0 %v2321
      %v2431 = vpop.f32.mrf.mxu0
      %v2432 = vpop.f32.mrf.mxu0
      %2433 = vmatmul.bf16.gmra.mxu0 %v2324
      %v2434 = vpop.f32.mrf.mxu0
      %v2435 = vadd.f32 0.0, %v2434
      %v2436 = vpop.f32.mrf.mxu0
      %v2437 = vadd.f32 0.0, %v2436
      %2438 = vmatmul.bf16.gmra.mxu0 %v2327
      %v2439 = vpop.f32.mrf.mxu0
      %v2440 = vpop.f32.mrf.mxu0
      %2441 = vmatmul.bf16.gmra.mxu0 %v2330
      %v2442 = vpop.f32.mrf.mxu0
      %v2443 = vadd.f32 0.0, %v2442
      %v2444 = vpop.f32.mrf.mxu0
      %v2445 = vadd.f32 0.0, %v2444
      %2446 = vmatmul.bf16.gmra.mxu0 %v2333
      %v2447 = vpop.f32.mrf.mxu0
      %v2448 = vpop.f32.mrf.mxu0
      %2449 = vmatmul.bf16.gmra.mxu0 %v2336
      %v2450 = vpop.f32.mrf.mxu0
      %v2451 = vadd.f32 0.0, %v2450
      %v2452 = vpop.f32.mrf.mxu0
      %v2453 = vadd.f32 0.0, %v2452
      %2454 = vmatmul.bf16.gmra.mxu0 %v2339
      %v2455 = vpop.f32.mrf.mxu0
      %v2456 = vpop.f32.mrf.mxu0
      %2457 = vmatmul.bf16.gmra.mxu0 %v2342
      %v2458 = vpop.f32.mrf.mxu0
      %v2459 = vadd.f32 0.0, %v2458
      %v2460 = vpop.f32.mrf.mxu0
      %v2461 = vadd.f32 0.0, %v2460
      %2462 = vmatmul.bf16.gmra.mxu0 %v2345
      %v2463 = vpop.f32.mrf.mxu0
      %v2464 = vpop.f32.mrf.mxu0
      %2465 = vmatmul.bf16.gmra.mxu0 %v2348
      %v2466 = vpop.f32.mrf.mxu0
      %v2467 = vadd.f32 0.0, %v2466
      %v2468 = vpop.f32.mrf.mxu0
      %v2469 = vadd.f32 0.0, %v2468
      %2470 = vmatmul.bf16.gmra.mxu0 %v2351
      %v2471 = vpop.f32.mrf.mxu0
      %v2472 = vpop.f32.mrf.mxu0
      %2473 = vmatmul.bf16.gmra.mxu0 %v2354
      %v2474 = vpop.f32.mrf.mxu0
      %v2475 = vadd.f32 0.0, %v2474
      %v2476 = vpop.f32.mrf.mxu0
      %v2477 = vadd.f32 0.0, %v2476
      %2478 = vmatmul.bf16.gmra.mxu0 %v2357
      %v2479 = vpop.f32.mrf.mxu0
      %v2480 = vpop.f32.mrf.mxu0
      %2481 = vmatmul.bf16.gmra.mxu0 %v2360
      %v2482 = vpop.f32.mrf.mxu0
      %v2483 = vadd.f32 0.0, %v2482
      %v2484 = vpop.f32.mrf.mxu0
      %v2485 = vadd.f32 0.0, %v2484
      %2486 = vmatmul.bf16.gmra.mxu0 %v2363
      %v2487 = vpop.f32.mrf.mxu0
      %v2488 = vpop.f32.mrf.mxu0
      %2489 = vmatmul.bf16.gmra.mxu0 %v2366
      %v2490 = vpop.f32.mrf.mxu0
      %v2491 = vadd.f32 0.0, %v2490
      %v2492 = vpop.f32.mrf.mxu0
      %v2493 = vadd.f32 0.0, %v2492
      %2494 = vmatmul.bf16.gmra.mxu0 %v2369
      %v2495 = vpop.f32.mrf.mxu0
      %v2496 = vpop.f32.mrf.mxu0
      %2497 = vmatmul.bf16.gmra.mxu0 %v2372
      %v2498 = vpop.f32.mrf.mxu0
      %v2499 = vadd.f32 0.0, %v2498
      %v2500 = vpop.f32.mrf.mxu0
      %v2501 = vadd.f32 0.0, %v2500
      %2502 = vmatmul.bf16.gmra.mxu0 %v2375
      %v2503 = vpop.f32.mrf.mxu0
      %v2504 = vpop.f32.mrf.mxu0
      %2505 = vmatmul.bf16.gmra.mxu0 %v2378
      %v2506 = vpop.f32.mrf.mxu0
      %v2507 = vadd.f32 0.0, %v2506
      %v2508 = vpop.f32.mrf.mxu0
      %v2509 = vadd.f32 0.0, %v2508
      %2510 = vmatmul.bf16.gmra.mxu0 %v2381
      %v2511 = vpop.f32.mrf.mxu0
      %v2512 = vpop.f32.mrf.mxu0
      %2513 = vmatmul.bf16.gmra.mxu0 %v2384
      %v2514 = vpop.f32.mrf.mxu0
      %v2515 = vadd.f32 0.0, %v2514
      %v2516 = vpop.f32.mrf.mxu0
      %v2517 = vadd.f32 0.0, %v2516
      %2518 = vmatmul.bf16.gmra.mxu0 %v2387
      %v2519 = vpop.f32.mrf.mxu0
      %v2520 = vpop.f32.mrf.mxu0
      %2521 = vmatmul.bf16.gmra.mxu0 %v2390
      %v2522 = vpop.f32.mrf.mxu0
      %v2523 = vadd.f32 0.0, %v2522
      %v2524 = vpop.f32.mrf.mxu0
      %v2525 = vadd.f32 0.0, %v2524
      %2526 = vmatmul.bf16.gmra.mxu0 %v2393
      %v2527 = vpop.f32.mrf.mxu0
      %v2528 = vpop.f32.mrf.mxu0
      %2529 = vmatmul.bf16.gmra.mxu0 %v2396
      %v2530 = vpop.f32.mrf.mxu0
      %v2531 = vadd.f32 0.0, %v2530
      %v2532 = vpop.f32.mrf.mxu0
      %v2533 = vadd.f32 0.0, %v2532
      %2534 = vmatmul.bf16.gmra.mxu0 %v2399
      %v2535 = vpop.f32.mrf.mxu0
      %v2536 = vpop.f32.mrf.mxu0
      %2537 = vdwg.mxu0
      %v2538 = vadd.f32 %v2009, %v2411
      %v2539 = vadd.f32 %v2011, %v2413
      %v2540 = vadd.f32 %v2017, %v2419
      %v2541 = vadd.f32 %v2019, %v2421
      %v2542 = vadd.f32 %v2025, %v2427
      %v2543 = vadd.f32 %v2027, %v2429
      %v2544 = vadd.f32 %v2033, %v2435
      %v2545 = vadd.f32 %v2035, %v2437
      %v2546 = vadd.f32 %v2041, %v2443
      %v2547 = vadd.f32 %v2043, %v2445
      %v2548 = vadd.f32 %v2049, %v2451
      %v2549 = vadd.f32 %v2051, %v2453
      %v2550 = vadd.f32 %v2057, %v2459
      %v2551 = vadd.f32 %v2059, %v2461
      %v2552 = vadd.f32 %v2065, %v2467
      %v2553 = vadd.f32 %v2067, %v2469
      %v2554 = vadd.f32 %v2073, %v2475
      %v2555 = vadd.f32 %v2075, %v2477
      %v2556 = vadd.f32 %v2081, %v2483
      %v2557 = vadd.f32 %v2083, %v2485
      %v2558 = vadd.f32 %v2089, %v2491
      %v2559 = vadd.f32 %v2091, %v2493
      %v2560 = vadd.f32 %v2097, %v2499
      %v2561 = vadd.f32 %v2099, %v2501
      %v2562 = vadd.f32 %v2105, %v2507
      %v2563 = vadd.f32 %v2107, %v2509
      %v2564 = vadd.f32 %v2113, %v2515
      %v2565 = vadd.f32 %v2115, %v2517
      %v2566 = vadd.f32 %v2121, %v2523
      %v2567 = vadd.f32 %v2123, %v2525
      %v2568 = vadd.f32 %v2129, %v2531
      %v2569 = vadd.f32 %v2131, %v2533
      %s2570 = scalar_lea.vmem %s1, 24
      %v2571 = vld [vmem:[%s2570] sm:$0xf]
      %v2572 = vld [vmem:[%s2570 + $0x4] sm:$0xf]
      %v2577 = vunpack.c.l.b16 %v1180
      %v2578 = vunpack.c.l.b16 %v1181
      %v2579 = vunpack.c.l.b16 %v1182
      %v2580 = vunpack.c.l.b16 %v1183
      %v2581 = vpack.c.b16 %v2578, %v2577
      %v2582 = vpack.c.b16 %v2580, %v2579
      %v2585 = vunpack.c.l.b16 %v2571
      %v2586 = vunpack.c.l.b16 %v2572
      %v2587 = vpack.c.b16 %v2586, %v2585
      %v2590 = vsel %vm1503, %v2581, 0
      %v2593 = vsel %vm1503, %v2582, 0
      %2595 = vmatpush.bf16.msra.mxu0 0
      %2596 = vmatpush.bf16.msra.mxu0 0
      %2597 = vmatpush.bf16.msra.mxu0 0
      %2598 = vmatpush.bf16.msra.mxu0 0
      %2599 = vmatpush.bf16.msra.mxu0 0
      %2600 = vmatpush.bf16.msra.mxu0 0
      %2601 = vmatpush.bf16.msra.mxu0 0
      %2602 = vmatpush.bf16.msra.mxu0 %v2587
      %2603 = vmatmul.bf16.gmra.mxu0 %v1910
      %v2604 = vpop.f32.mrf.mxu0
      %v2605 = vadd.f32 0.0, %v2604
      %v2606 = vpop.f32.mrf.mxu0
      %v2607 = vadd.f32 0.0, %v2606
      %2608 = vmatmul.bf16.gmra.mxu0 %v1913
      %v2609 = vpop.f32.mrf.mxu0
      %v2610 = vpop.f32.mrf.mxu0
      %2611 = vmatmul.bf16.gmra.mxu0 %v1916
      %v2612 = vpop.f32.mrf.mxu0
      %v2613 = vadd.f32 0.0, %v2612
      %v2614 = vpop.f32.mrf.mxu0
      %v2615 = vadd.f32 0.0, %v2614
      %2616 = vmatmul.bf16.gmra.mxu0 %v1919
      %v2617 = vpop.f32.mrf.mxu0
      %v2618 = vpop.f32.mrf.mxu0
      %2619 = vmatmul.bf16.gmra.mxu0 %v1922
      %v2620 = vpop.f32.mrf.mxu0
      %v2621 = vadd.f32 0.0, %v2620
      %v2622 = vpop.f32.mrf.mxu0
      %v2623 = vadd.f32 0.0, %v2622
      %2624 = vmatmul.bf16.gmra.mxu0 %v1925
      %v2625 = vpop.f32.mrf.mxu0
      %v2626 = vpop.f32.mrf.mxu0
      %2627 = vmatmul.bf16.gmra.mxu0 %v1928
      %v2628 = vpop.f32.mrf.mxu0
      %v2629 = vadd.f32 0.0, %v2628
      %v2630 = vpop.f32.mrf.mxu0
      %v2631 = vadd.f32 0.0, %v2630
      %2632 = vmatmul.bf16.gmra.mxu0 %v1931
      %v2633 = vpop.f32.mrf.mxu0
      %v2634 = vpop.f32.mrf.mxu0
      %2635 = vmatmul.bf16.gmra.mxu0 %v1934
      %v2636 = vpop.f32.mrf.mxu0
      %v2637 = vadd.f32 0.0, %v2636
      %v2638 = vpop.f32.mrf.mxu0
      %v2639 = vadd.f32 0.0, %v2638
      %2640 = vmatmul.bf16.gmra.mxu0 %v1937
      %v2641 = vpop.f32.mrf.mxu0
      %v2642 = vpop.f32.mrf.mxu0
      %2643 = vmatmul.bf16.gmra.mxu0 %v1940
      %v2644 = vpop.f32.mrf.mxu0
      %v2645 = vadd.f32 0.0, %v2644
      %v2646 = vpop.f32.mrf.mxu0
      %v2647 = vadd.f32 0.0, %v2646
      %2648 = vmatmul.bf16.gmra.mxu0 %v1943
      %v2649 = vpop.f32.mrf.mxu0
      %v2650 = vpop.f32.mrf.mxu0
      %2651 = vmatmul.bf16.gmra.mxu0 %v1946
      %v2652 = vpop.f32.mrf.mxu0
      %v2653 = vadd.f32 0.0, %v2652
      %v2654 = vpop.f32.mrf.mxu0
      %v2655 = vadd.f32 0.0, %v2654
      %2656 = vmatmul.bf16.gmra.mxu0 %v1949
      %v2657 = vpop.f32.mrf.mxu0
      %v2658 = vpop.f32.mrf.mxu0
      %2659 = vmatmul.bf16.gmra.mxu0 %v1952
      %v2660 = vpop.f32.mrf.mxu0
      %v2661 = vadd.f32 0.0, %v2660
      %v2662 = vpop.f32.mrf.mxu0
      %v2663 = vadd.f32 0.0, %v2662
      %2664 = vmatmul.bf16.gmra.mxu0 %v1955
      %v2665 = vpop.f32.mrf.mxu0
      %v2666 = vpop.f32.mrf.mxu0
      %2667 = vmatmul.bf16.gmra.mxu0 %v1958
      %v2668 = vpop.f32.mrf.mxu0
      %v2669 = vadd.f32 0.0, %v2668
      %v2670 = vpop.f32.mrf.mxu0
      %v2671 = vadd.f32 0.0, %v2670
      %2672 = vmatmul.bf16.gmra.mxu0 %v1961
      %v2673 = vpop.f32.mrf.mxu0
      %v2674 = vpop.f32.mrf.mxu0
      %2675 = vmatmul.bf16.gmra.mxu0 %v1964
      %v2676 = vpop.f32.mrf.mxu0
      %v2677 = vadd.f32 0.0, %v2676
      %v2678 = vpop.f32.mrf.mxu0
      %v2679 = vadd.f32 0.0, %v2678
      %2680 = vmatmul.bf16.gmra.mxu0 %v1967
      %v2681 = vpop.f32.mrf.mxu0
      %v2682 = vpop.f32.mrf.mxu0
      %2683 = vmatmul.bf16.gmra.mxu0 %v1970
      %v2684 = vpop.f32.mrf.mxu0
      %v2685 = vadd.f32 0.0, %v2684
      %v2686 = vpop.f32.mrf.mxu0
      %v2687 = vadd.f32 0.0, %v2686
      %2688 = vmatmul.bf16.gmra.mxu0 %v1973
      %v2689 = vpop.f32.mrf.mxu0
      %v2690 = vpop.f32.mrf.mxu0
      %2691 = vmatmul.bf16.gmra.mxu0 %v1976
      %v2692 = vpop.f32.mrf.mxu0
      %v2693 = vadd.f32 0.0, %v2692
      %v2694 = vpop.f32.mrf.mxu0
      %v2695 = vadd.f32 0.0, %v2694
      %2696 = vmatmul.bf16.gmra.mxu0 %v1979
      %v2697 = vpop.f32.mrf.mxu0
      %v2698 = vpop.f32.mrf.mxu0
      %2699 = vmatmul.bf16.gmra.mxu0 %v1982
      %v2700 = vpop.f32.mrf.mxu0
      %v2701 = vadd.f32 0.0, %v2700
      %v2702 = vpop.f32.mrf.mxu0
      %v2703 = vadd.f32 0.0, %v2702
      %2704 = vmatmul.bf16.gmra.mxu0 %v1985
      %v2705 = vpop.f32.mrf.mxu0
      %v2706 = vpop.f32.mrf.mxu0
      %2707 = vmatmul.bf16.gmra.mxu0 %v1988
      %v2708 = vpop.f32.mrf.mxu0
      %v2709 = vadd.f32 0.0, %v2708
      %v2710 = vpop.f32.mrf.mxu0
      %v2711 = vadd.f32 0.0, %v2710
      %2712 = vmatmul.bf16.gmra.mxu0 %v1991
      %v2713 = vpop.f32.mrf.mxu0
      %v2714 = vpop.f32.mrf.mxu0
      %2715 = vmatmul.bf16.gmra.mxu0 %v1994
      %v2716 = vpop.f32.mrf.mxu0
      %v2717 = vadd.f32 0.0, %v2716
      %v2718 = vpop.f32.mrf.mxu0
      %v2719 = vadd.f32 0.0, %v2718
      %2720 = vmatmul.bf16.gmra.mxu0 %v1997
      %v2721 = vpop.f32.mrf.mxu0
      %v2722 = vpop.f32.mrf.mxu0
      %2723 = vmatmul.bf16.gmra.mxu0 %v2590
      %v2724 = vpop.f32.mrf.mxu0
      %v2725 = vadd.f32 0.0, %v2724
      %v2726 = vpop.f32.mrf.mxu0
      %v2727 = vadd.f32 0.0, %v2726
      %2728 = vmatmul.bf16.gmra.mxu0 %v2593
      %v2729 = vpop.f32.mrf.mxu0
      %v2730 = vpop.f32.mrf.mxu0
      %2731 = vdwg.mxu0
      %v2732 = vadd.f32 %v2538, %v2605
      %v2733 = vadd.f32 %v2539, %v2607
      %v2734 = vadd.f32 %v2540, %v2613
      %v2735 = vadd.f32 %v2541, %v2615
      %v2736 = vadd.f32 %v2542, %v2621
      %v2737 = vadd.f32 %v2543, %v2623
      %v2738 = vadd.f32 %v2544, %v2629
      %v2739 = vadd.f32 %v2545, %v2631
      %v2740 = vadd.f32 %v2546, %v2637
      %v2741 = vadd.f32 %v2547, %v2639
      %v2742 = vadd.f32 %v2548, %v2645
      %v2743 = vadd.f32 %v2549, %v2647
      %v2744 = vadd.f32 %v2550, %v2653
      %v2745 = vadd.f32 %v2551, %v2655
      %v2746 = vadd.f32 %v2552, %v2661
      %v2747 = vadd.f32 %v2553, %v2663
      %v2748 = vadd.f32 %v2554, %v2669
      %v2749 = vadd.f32 %v2555, %v2671
      %v2750 = vadd.f32 %v2556, %v2677
      %v2751 = vadd.f32 %v2557, %v2679
      %v2752 = vadd.f32 %v2558, %v2685
      %v2753 = vadd.f32 %v2559, %v2687
      %v2754 = vadd.f32 %v2560, %v2693
      %v2755 = vadd.f32 %v2561, %v2695
      %v2756 = vadd.f32 %v2562, %v2701
      %v2757 = vadd.f32 %v2563, %v2703
      %v2758 = vadd.f32 %v2564, %v2709
      %v2759 = vadd.f32 %v2565, %v2711
      %v2760 = vadd.f32 %v2566, %v2717
      %v2761 = vadd.f32 %v2567, %v2719
      %v2762 = vadd.f32 %v2568, %v2725
      %v2763 = vadd.f32 %v2569, %v2727
      %s2764 = scalar_lea.vmem %s1, 32
      %v2765 = vld [vmem:[%s2764] sm:$0xf]
      %v2766 = vld [vmem:[%s2764 + $0x4] sm:$0xf]
      %v2771 = vunpack.c.l.b16 %v1252
      %v2772 = vunpack.c.l.b16 %v1253
      %v2773 = vunpack.c.l.b16 %v1254
      %v2774 = vunpack.c.l.b16 %v1255
      %v2775 = vpack.c.b16 %v2772, %v2771
      %v2776 = vpack.c.b16 %v2774, %v2773
      %v2779 = vunpack.c.l.b16 %v2765
      %v2780 = vunpack.c.l.b16 %v2766
      %v2781 = vpack.c.b16 %v2780, %v2779
      %v2784 = vsel %vm1503, %v2775, 0
      %v2787 = vsel %vm1503, %v2776, 0
      %2789 = vmatpush.bf16.msra.mxu0 0
      %2790 = vmatpush.bf16.msra.mxu0 0
      %2791 = vmatpush.bf16.msra.mxu0 0
      %2792 = vmatpush.bf16.msra.mxu0 0
      %2793 = vmatpush.bf16.msra.mxu0 0
      %2794 = vmatpush.bf16.msra.mxu0 0
      %2795 = vmatpush.bf16.msra.mxu0 0
      %2796 = vmatpush.bf16.msra.mxu0 %v2781
      %2797 = vmatmul.bf16.gmra.mxu0 %v1511
      %v2798 = vpop.f32.mrf.mxu0
      %v2799 = vadd.f32 0.0, %v2798
      %v2800 = vpop.f32.mrf.mxu0
      %v2801 = vadd.f32 0.0, %v2800
      %2802 = vmatmul.bf16.gmra.mxu0 %v1514
      %v2803 = vpop.f32.mrf.mxu0
      %v2804 = vpop.f32.mrf.mxu0
      %2805 = vmatmul.bf16.gmra.mxu0 %v1517
      %v2806 = vpop.f32.mrf.mxu0
      %v2807 = vadd.f32 0.0, %v2806
      %v2808 = vpop.f32.mrf.mxu0
      %v2809 = vadd.f32 0.0, %v2808
      %2810 = vmatmul.bf16.gmra.mxu0 %v1520
      %v2811 = vpop.f32.mrf.mxu0
      %v2812 = vpop.f32.mrf.mxu0
      %2813 = vmatmul.bf16.gmra.mxu0 %v1523
      %v2814 = vpop.f32.mrf.mxu0
      %v2815 = vadd.f32 0.0, %v2814
      %v2816 = vpop.f32.mrf.mxu0
      %v2817 = vadd.f32 0.0, %v2816
      %2818 = vmatmul.bf16.gmra.mxu0 %v1526
      %v2819 = vpop.f32.mrf.mxu0
      %v2820 = vpop.f32.mrf.mxu0
      %2821 = vmatmul.bf16.gmra.mxu0 %v1529
      %v2822 = vpop.f32.mrf.mxu0
      %v2823 = vadd.f32 0.0, %v2822
      %v2824 = vpop.f32.mrf.mxu0
      %v2825 = vadd.f32 0.0, %v2824
      %2826 = vmatmul.bf16.gmra.mxu0 %v1532
      %v2827 = vpop.f32.mrf.mxu0
      %v2828 = vpop.f32.mrf.mxu0
      %2829 = vmatmul.bf16.gmra.mxu0 %v1535
      %v2830 = vpop.f32.mrf.mxu0
      %v2831 = vadd.f32 0.0, %v2830
      %v2832 = vpop.f32.mrf.mxu0
      %v2833 = vadd.f32 0.0, %v2832
      %2834 = vmatmul.bf16.gmra.mxu0 %v1538
      %v2835 = vpop.f32.mrf.mxu0
      %v2836 = vpop.f32.mrf.mxu0
      %2837 = vmatmul.bf16.gmra.mxu0 %v1541
      %v2838 = vpop.f32.mrf.mxu0
      %v2839 = vadd.f32 0.0, %v2838
      %v2840 = vpop.f32.mrf.mxu0
      %v2841 = vadd.f32 0.0, %v2840
      %2842 = vmatmul.bf16.gmra.mxu0 %v1544
      %v2843 = vpop.f32.mrf.mxu0
      %v2844 = vpop.f32.mrf.mxu0
      %2845 = vmatmul.bf16.gmra.mxu0 %v1547
      %v2846 = vpop.f32.mrf.mxu0
      %v2847 = vadd.f32 0.0, %v2846
      %v2848 = vpop.f32.mrf.mxu0
      %v2849 = vadd.f32 0.0, %v2848
      %2850 = vmatmul.bf16.gmra.mxu0 %v1550
      %v2851 = vpop.f32.mrf.mxu0
      %v2852 = vpop.f32.mrf.mxu0
      %2853 = vmatmul.bf16.gmra.mxu0 %v1553
      %v2854 = vpop.f32.mrf.mxu0
      %v2855 = vadd.f32 0.0, %v2854
      %v2856 = vpop.f32.mrf.mxu0
      %v2857 = vadd.f32 0.0, %v2856
      %2858 = vmatmul.bf16.gmra.mxu0 %v1556
      %v2859 = vpop.f32.mrf.mxu0
      %v2860 = vpop.f32.mrf.mxu0
      %2861 = vmatmul.bf16.gmra.mxu0 %v1559
      %v2862 = vpop.f32.mrf.mxu0
      %v2863 = vadd.f32 0.0, %v2862
      %v2864 = vpop.f32.mrf.mxu0
      %v2865 = vadd.f32 0.0, %v2864
      %2866 = vmatmul.bf16.gmra.mxu0 %v1562
      %v2867 = vpop.f32.mrf.mxu0
      %v2868 = vpop.f32.mrf.mxu0
      %2869 = vmatmul.bf16.gmra.mxu0 %v1565
      %v2870 = vpop.f32.mrf.mxu0
      %v2871 = vadd.f32 0.0, %v2870
      %v2872 = vpop.f32.mrf.mxu0
      %v2873 = vadd.f32 0.0, %v2872
      %2874 = vmatmul.bf16.gmra.mxu0 %v1568
      %v2875 = vpop.f32.mrf.mxu0
      %v2876 = vpop.f32.mrf.mxu0
      %2877 = vmatmul.bf16.gmra.mxu0 %v1571
      %v2878 = vpop.f32.mrf.mxu0
      %v2879 = vadd.f32 0.0, %v2878
      %v2880 = vpop.f32.mrf.mxu0
      %v2881 = vadd.f32 0.0, %v2880
      %2882 = vmatmul.bf16.gmra.mxu0 %v1574
      %v2883 = vpop.f32.mrf.mxu0
      %v2884 = vpop.f32.mrf.mxu0
      %2885 = vmatmul.bf16.gmra.mxu0 %v1577
      %v2886 = vpop.f32.mrf.mxu0
      %v2887 = vadd.f32 0.0, %v2886
      %v2888 = vpop.f32.mrf.mxu0
      %v2889 = vadd.f32 0.0, %v2888
      %2890 = vmatmul.bf16.gmra.mxu0 %v1580
      %v2891 = vpop.f32.mrf.mxu0
      %v2892 = vpop.f32.mrf.mxu0
      %2893 = vmatmul.bf16.gmra.mxu0 %v1583
      %v2894 = vpop.f32.mrf.mxu0
      %v2895 = vadd.f32 0.0, %v2894
      %v2896 = vpop.f32.mrf.mxu0
      %v2897 = vadd.f32 0.0, %v2896
      %2898 = vmatmul.bf16.gmra.mxu0 %v1586
      %v2899 = vpop.f32.mrf.mxu0
      %v2900 = vpop.f32.mrf.mxu0
      %2901 = vmatmul.bf16.gmra.mxu0 %v1589
      %v2902 = vpop.f32.mrf.mxu0
      %v2903 = vadd.f32 0.0, %v2902
      %v2904 = vpop.f32.mrf.mxu0
      %v2905 = vadd.f32 0.0, %v2904
      %2906 = vmatmul.bf16.gmra.mxu0 %v1592
      %v2907 = vpop.f32.mrf.mxu0
      %v2908 = vpop.f32.mrf.mxu0
      %2909 = vmatmul.bf16.gmra.mxu0 %v1595
      %v2910 = vpop.f32.mrf.mxu0
      %v2911 = vadd.f32 0.0, %v2910
      %v2912 = vpop.f32.mrf.mxu0
      %v2913 = vadd.f32 0.0, %v2912
      %2914 = vmatmul.bf16.gmra.mxu0 %v1598
      %v2915 = vpop.f32.mrf.mxu0
      %v2916 = vpop.f32.mrf.mxu0
      %2917 = vmatmul.bf16.gmra.mxu0 %v2784
      %v2918 = vpop.f32.mrf.mxu0
      %v2919 = vadd.f32 0.0, %v2918
      %v2920 = vpop.f32.mrf.mxu0
      %v2921 = vadd.f32 0.0, %v2920
      %2922 = vmatmul.bf16.gmra.mxu0 %v2787
      %v2923 = vpop.f32.mrf.mxu0
      %v2924 = vpop.f32.mrf.mxu0
      %2925 = vdwg.mxu0
      %v2926 = vadd.f32 %v2732, %v2799
      %v2927 = vadd.f32 %v2733, %v2801
      %v2928 = vadd.f32 %v2734, %v2807
      %v2929 = vadd.f32 %v2735, %v2809
      %v2930 = vadd.f32 %v2736, %v2815
      %v2931 = vadd.f32 %v2737, %v2817
      %v2932 = vadd.f32 %v2738, %v2823
      %v2933 = vadd.f32 %v2739, %v2825
      %v2934 = vadd.f32 %v2740, %v2831
      %v2935 = vadd.f32 %v2741, %v2833
      %v2936 = vadd.f32 %v2742, %v2839
      %v2937 = vadd.f32 %v2743, %v2841
      %v2938 = vadd.f32 %v2744, %v2847
      %v2939 = vadd.f32 %v2745, %v2849
      %v2940 = vadd.f32 %v2746, %v2855
      %v2941 = vadd.f32 %v2747, %v2857
      %v2942 = vadd.f32 %v2748, %v2863
      %v2943 = vadd.f32 %v2749, %v2865
      %v2944 = vadd.f32 %v2750, %v2871
      %v2945 = vadd.f32 %v2751, %v2873
      %v2946 = vadd.f32 %v2752, %v2879
      %v2947 = vadd.f32 %v2753, %v2881
      %v2948 = vadd.f32 %v2754, %v2887
      %v2949 = vadd.f32 %v2755, %v2889
      %v2950 = vadd.f32 %v2756, %v2895
      %v2951 = vadd.f32 %v2757, %v2897
      %v2952 = vadd.f32 %v2758, %v2903
      %v2953 = vadd.f32 %v2759, %v2905
      %v2954 = vadd.f32 %v2760, %v2911
      %v2955 = vadd.f32 %v2761, %v2913
      %v2956 = vadd.f32 %v2762, %v2919
      %v2957 = vadd.f32 %v2763, %v2921
      %s2958 = scalar_lea.vmem %s1, 40
      %v2959 = vld [vmem:[%s2958] sm:$0xf]
      %v2960 = vld [vmem:[%s2958 + $0x4] sm:$0xf]
      %v2965 = vunpack.c.l.b16 %v1324
      %v2966 = vunpack.c.l.b16 %v1325
      %v2967 = vunpack.c.l.b16 %v1326
      %v2968 = vunpack.c.l.b16 %v1327
      %v2969 = vpack.c.b16 %v2966, %v2965
      %v2970 = vpack.c.b16 %v2968, %v2967
      %v2973 = vunpack.c.l.b16 %v2959
      %v2974 = vunpack.c.l.b16 %v2960
      %v2975 = vpack.c.b16 %v2974, %v2973
      %v2978 = vsel %vm1503, %v2969, 0
      %v2981 = vsel %vm1503, %v2970, 0
      %2983 = vmatpush.bf16.msra.mxu0 0
      %2984 = vmatpush.bf16.msra.mxu0 0
      %2985 = vmatpush.bf16.msra.mxu0 0
      %2986 = vmatpush.bf16.msra.mxu0 0
      %2987 = vmatpush.bf16.msra.mxu0 0
      %2988 = vmatpush.bf16.msra.mxu0 0
      %2989 = vmatpush.bf16.msra.mxu0 0
      %2990 = vmatpush.bf16.msra.mxu0 %v2975
      %2991 = vmatmul.bf16.gmra.mxu0 %v2312
      %v2992 = vpop.f32.mrf.mxu0
      %v2993 = vadd.f32 0.0, %v2992
      %v2994 = vpop.f32.mrf.mxu0
      %v2995 = vadd.f32 0.0, %v2994
      %2996 = vmatmul.bf16.gmra.mxu0 %v2315
      %v2997 = vpop.f32.mrf.mxu0
      %v2998 = vpop.f32.mrf.mxu0
      %2999 = vmatmul.bf16.gmra.mxu0 %v2318
      %v3000 = vpop.f32.mrf.mxu0
      %v3001 = vadd.f32 0.0, %v3000
      %v3002 = vpop.f32.mrf.mxu0
      %v3003 = vadd.f32 0.0, %v3002
      %3004 = vmatmul.bf16.gmra.mxu0 %v2321
      %v3005 = vpop.f32.mrf.mxu0
      %v3006 = vpop.f32.mrf.mxu0
      %3007 = vmatmul.bf16.gmra.mxu0 %v2324
      %v3008 = vpop.f32.mrf.mxu0
      %v3009 = vadd.f32 0.0, %v3008
      %v3010 = vpop.f32.mrf.mxu0
      %v3011 = vadd.f32 0.0, %v3010
      %3012 = vmatmul.bf16.gmra.mxu0 %v2327
      %v3013 = vpop.f32.mrf.mxu0
      %v3014 = vpop.f32.mrf.mxu0
      %3015 = vmatmul.bf16.gmra.mxu0 %v2330
      %v3016 = vpop.f32.mrf.mxu0
      %v3017 = vadd.f32 0.0, %v3016
      %v3018 = vpop.f32.mrf.mxu0
      %v3019 = vadd.f32 0.0, %v3018
      %3020 = vmatmul.bf16.gmra.mxu0 %v2333
      %v3021 = vpop.f32.mrf.mxu0
      %v3022 = vpop.f32.mrf.mxu0
      %3023 = vmatmul.bf16.gmra.mxu0 %v2336
      %v3024 = vpop.f32.mrf.mxu0
      %v3025 = vadd.f32 0.0, %v3024
      %v3026 = vpop.f32.mrf.mxu0
      %v3027 = vadd.f32 0.0, %v3026
      %3028 = vmatmul.bf16.gmra.mxu0 %v2339
      %v3029 = vpop.f32.mrf.mxu0
      %v3030 = vpop.f32.mrf.mxu0
      %3031 = vmatmul.bf16.gmra.mxu0 %v2342
      %v3032 = vpop.f32.mrf.mxu0
      %v3033 = vadd.f32 0.0, %v3032
      %v3034 = vpop.f32.mrf.mxu0
      %v3035 = vadd.f32 0.0, %v3034
      %3036 = vmatmul.bf16.gmra.mxu0 %v2345
      %v3037 = vpop.f32.mrf.mxu0
      %v3038 = vpop.f32.mrf.mxu0
      %3039 = vmatmul.bf16.gmra.mxu0 %v2348
      %v3040 = vpop.f32.mrf.mxu0
      %v3041 = vadd.f32 0.0, %v3040
      %v3042 = vpop.f32.mrf.mxu0
      %v3043 = vadd.f32 0.0, %v3042
      %3044 = vmatmul.bf16.gmra.mxu0 %v2351
      %v3045 = vpop.f32.mrf.mxu0
      %v3046 = vpop.f32.mrf.mxu0
      %3047 = vmatmul.bf16.gmra.mxu0 %v2354
      %v3048 = vpop.f32.mrf.mxu0
      %v3049 = vadd.f32 0.0, %v3048
      %v3050 = vpop.f32.mrf.mxu0
      %v3051 = vadd.f32 0.0, %v3050
      %3052 = vmatmul.bf16.gmra.mxu0 %v2357
      %v3053 = vpop.f32.mrf.mxu0
      %v3054 = vpop.f32.mrf.mxu0
      %3055 = vmatmul.bf16.gmra.mxu0 %v2360
      %v3056 = vpop.f32.mrf.mxu0
      %v3057 = vadd.f32 0.0, %v3056
      %v3058 = vpop.f32.mrf.mxu0
      %v3059 = vadd.f32 0.0, %v3058
      %3060 = vmatmul.bf16.gmra.mxu0 %v2363
      %v3061 = vpop.f32.mrf.mxu0
      %v3062 = vpop.f32.mrf.mxu0
      %3063 = vmatmul.bf16.gmra.mxu0 %v2366
      %v3064 = vpop.f32.mrf.mxu0
      %v3065 = vadd.f32 0.0, %v3064
      %v3066 = vpop.f32.mrf.mxu0
      %v3067 = vadd.f32 0.0, %v3066
      %3068 = vmatmul.bf16.gmra.mxu0 %v2369
      %v3069 = vpop.f32.mrf.mxu0
      %v3070 = vpop.f32.mrf.mxu0
      %3071 = vmatmul.bf16.gmra.mxu0 %v2372
      %v3072 = vpop.f32.mrf.mxu0
      %v3073 = vadd.f32 0.0, %v3072
      %v3074 = vpop.f32.mrf.mxu0
      %v3075 = vadd.f32 0.0, %v3074
      %3076 = vmatmul.bf16.gmra.mxu0 %v2375
      %v3077 = vpop.f32.mrf.mxu0
      %v3078 = vpop.f32.mrf.mxu0
      %3079 = vmatmul.bf16.gmra.mxu0 %v2378
      %v3080 = vpop.f32.mrf.mxu0
      %v3081 = vadd.f32 0.0, %v3080
      %v3082 = vpop.f32.mrf.mxu0
      %v3083 = vadd.f32 0.0, %v3082
      %3084 = vmatmul.bf16.gmra.mxu0 %v2381
      %v3085 = vpop.f32.mrf.mxu0
      %v3086 = vpop.f32.mrf.mxu0
      %3087 = vmatmul.bf16.gmra.mxu0 %v2384
      %v3088 = vpop.f32.mrf.mxu0
      %v3089 = vadd.f32 0.0, %v3088
      %v3090 = vpop.f32.mrf.mxu0
      %v3091 = vadd.f32 0.0, %v3090
      %3092 = vmatmul.bf16.gmra.mxu0 %v2387
      %v3093 = vpop.f32.mrf.mxu0
      %v3094 = vpop.f32.mrf.mxu0
      %3095 = vmatmul.bf16.gmra.mxu0 %v2390
      %v3096 = vpop.f32.mrf.mxu0
      %v3097 = vadd.f32 0.0, %v3096
      %v3098 = vpop.f32.mrf.mxu0
      %v3099 = vadd.f32 0.0, %v3098
      %3100 = vmatmul.bf16.gmra.mxu0 %v2393
      %v3101 = vpop.f32.mrf.mxu0
      %v3102 = vpop.f32.mrf.mxu0
      %3103 = vmatmul.bf16.gmra.mxu0 %v2396
      %v3104 = vpop.f32.mrf.mxu0
      %v3105 = vadd.f32 0.0, %v3104
      %v3106 = vpop.f32.mrf.mxu0
      %v3107 = vadd.f32 0.0, %v3106
      %3108 = vmatmul.bf16.gmra.mxu0 %v2399
      %v3109 = vpop.f32.mrf.mxu0
      %v3110 = vpop.f32.mrf.mxu0
      %3111 = vmatmul.bf16.gmra.mxu0 %v2978
      %v3112 = vpop.f32.mrf.mxu0
      %v3113 = vadd.f32 0.0, %v3112
      %v3114 = vpop.f32.mrf.mxu0
      %v3115 = vadd.f32 0.0, %v3114
      %3116 = vmatmul.bf16.gmra.mxu0 %v2981
      %v3117 = vpop.f32.mrf.mxu0
      %v3118 = vpop.f32.mrf.mxu0
      %3119 = vdwg.mxu0
      %v3120 = vadd.f32 %v2926, %v2993
      %v3121 = vadd.f32 %v2927, %v2995
      %v3122 = vadd.f32 %v2928, %v3001
      %v3123 = vadd.f32 %v2929, %v3003
      %v3124 = vadd.f32 %v2930, %v3009
      %v3125 = vadd.f32 %v2931, %v3011
      %v3126 = vadd.f32 %v2932, %v3017
      %v3127 = vadd.f32 %v2933, %v3019
      %v3128 = vadd.f32 %v2934, %v3025
      %v3129 = vadd.f32 %v2935, %v3027
      %v3130 = vadd.f32 %v2936, %v3033
      %v3131 = vadd.f32 %v2937, %v3035
      %v3132 = vadd.f32 %v2938, %v3041
      %v3133 = vadd.f32 %v2939, %v3043
      %v3134 = vadd.f32 %v2940, %v3049
      %v3135 = vadd.f32 %v2941, %v3051
      %v3136 = vadd.f32 %v2942, %v3057
      %v3137 = vadd.f32 %v2943, %v3059
      %v3138 = vadd.f32 %v2944, %v3065
      %v3139 = vadd.f32 %v2945, %v3067
      %v3140 = vadd.f32 %v2946, %v3073
      %v3141 = vadd.f32 %v2947, %v3075
      %v3142 = vadd.f32 %v2948, %v3081
      %v3143 = vadd.f32 %v2949, %v3083
      %v3144 = vadd.f32 %v2950, %v3089
      %v3145 = vadd.f32 %v2951, %v3091
      %v3146 = vadd.f32 %v2952, %v3097
      %v3147 = vadd.f32 %v2953, %v3099
      %v3148 = vadd.f32 %v2954, %v3105
      %v3149 = vadd.f32 %v2955, %v3107
      %v3150 = vadd.f32 %v2956, %v3113
      %v3151 = vadd.f32 %v2957, %v3115
      %s3152 = scalar_lea.vmem %s1, 48
      %v3153 = vld [vmem:[%s3152] sm:$0xf]
      %v3154 = vld [vmem:[%s3152 + $0x4] sm:$0xf]
      %v3159 = vunpack.c.l.b16 %v1184
      %v3160 = vunpack.c.l.b16 %v1185
      %v3161 = vunpack.c.l.b16 %v1186
      %v3162 = vunpack.c.l.b16 %v1187
      %v3163 = vpack.c.b16 %v3160, %v3159
      %v3164 = vpack.c.b16 %v3162, %v3161
      %v3167 = vunpack.c.l.b16 %v3153
      %v3168 = vunpack.c.l.b16 %v3154
      %v3169 = vpack.c.b16 %v3168, %v3167
      %v3172 = vsel %vm1503, %v3163, 0
      %v3175 = vsel %vm1503, %v3164, 0
      %3177 = vmatpush.bf16.msra.mxu0 0
      %3178 = vmatpush.bf16.msra.mxu0 0
      %3179 = vmatpush.bf16.msra.mxu0 0
      %3180 = vmatpush.bf16.msra.mxu0 0
      %3181 = vmatpush.bf16.msra.mxu0 0
      %3182 = vmatpush.bf16.msra.mxu0 0
      %3183 = vmatpush.bf16.msra.mxu0 0
      %3184 = vmatpush.bf16.msra.mxu0 %v3169
      %3185 = vmatmul.bf16.gmra.mxu0 %v1916
      %v3186 = vpop.f32.mrf.mxu0
      %v3187 = vadd.f32 0.0, %v3186
      %v3188 = vpop.f32.mrf.mxu0
      %v3189 = vadd.f32 0.0, %v3188
      %3190 = vmatmul.bf16.gmra.mxu0 %v1919
      %v3191 = vpop.f32.mrf.mxu0
      %v3192 = vpop.f32.mrf.mxu0
      %3193 = vmatmul.bf16.gmra.mxu0 %v1922
      %v3194 = vpop.f32.mrf.mxu0
      %v3195 = vadd.f32 0.0, %v3194
      %v3196 = vpop.f32.mrf.mxu0
      %v3197 = vadd.f32 0.0, %v3196
      %3198 = vmatmul.bf16.gmra.mxu0 %v1925
      %v3199 = vpop.f32.mrf.mxu0
      %v3200 = vpop.f32.mrf.mxu0
      %3201 = vmatmul.bf16.gmra.mxu0 %v1928
      %v3202 = vpop.f32.mrf.mxu0
      %v3203 = vadd.f32 0.0, %v3202
      %v3204 = vpop.f32.mrf.mxu0
      %v3205 = vadd.f32 0.0, %v3204
      %3206 = vmatmul.bf16.gmra.mxu0 %v1931
      %v3207 = vpop.f32.mrf.mxu0
      %v3208 = vpop.f32.mrf.mxu0
      %3209 = vmatmul.bf16.gmra.mxu0 %v1934
      %v3210 = vpop.f32.mrf.mxu0
      %v3211 = vadd.f32 0.0, %v3210
      %v3212 = vpop.f32.mrf.mxu0
      %v3213 = vadd.f32 0.0, %v3212
      %3214 = vmatmul.bf16.gmra.mxu0 %v1937
      %v3215 = vpop.f32.mrf.mxu0
      %v3216 = vpop.f32.mrf.mxu0
      %3217 = vmatmul.bf16.gmra.mxu0 %v1940
      %v3218 = vpop.f32.mrf.mxu0
      %v3219 = vadd.f32 0.0, %v3218
      %v3220 = vpop.f32.mrf.mxu0
      %v3221 = vadd.f32 0.0, %v3220
      %3222 = vmatmul.bf16.gmra.mxu0 %v1943
      %v3223 = vpop.f32.mrf.mxu0
      %v3224 = vpop.f32.mrf.mxu0
      %3225 = vmatmul.bf16.gmra.mxu0 %v1946
      %v3226 = vpop.f32.mrf.mxu0
      %v3227 = vadd.f32 0.0, %v3226
      %v3228 = vpop.f32.mrf.mxu0
      %v3229 = vadd.f32 0.0, %v3228
      %3230 = vmatmul.bf16.gmra.mxu0 %v1949
      %v3231 = vpop.f32.mrf.mxu0
      %v3232 = vpop.f32.mrf.mxu0
      %3233 = vmatmul.bf16.gmra.mxu0 %v1952
      %v3234 = vpop.f32.mrf.mxu0
      %v3235 = vadd.f32 0.0, %v3234
      %v3236 = vpop.f32.mrf.mxu0
      %v3237 = vadd.f32 0.0, %v3236
      %3238 = vmatmul.bf16.gmra.mxu0 %v1955
      %v3239 = vpop.f32.mrf.mxu0
      %v3240 = vpop.f32.mrf.mxu0
      %3241 = vmatmul.bf16.gmra.mxu0 %v1958
      %v3242 = vpop.f32.mrf.mxu0
      %v3243 = vadd.f32 0.0, %v3242
      %v3244 = vpop.f32.mrf.mxu0
      %v3245 = vadd.f32 0.0, %v3244
      %3246 = vmatmul.bf16.gmra.mxu0 %v1961
      %v3247 = vpop.f32.mrf.mxu0
      %v3248 = vpop.f32.mrf.mxu0
      %3249 = vmatmul.bf16.gmra.mxu0 %v1964
      %v3250 = vpop.f32.mrf.mxu0
      %v3251 = vadd.f32 0.0, %v3250
      %v3252 = vpop.f32.mrf.mxu0
      %v3253 = vadd.f32 0.0, %v3252
      %3254 = vmatmul.bf16.gmra.mxu0 %v1967
      %v3255 = vpop.f32.mrf.mxu0
      %v3256 = vpop.f32.mrf.mxu0
      %3257 = vmatmul.bf16.gmra.mxu0 %v1970
      %v3258 = vpop.f32.mrf.mxu0
      %v3259 = vadd.f32 0.0, %v3258
      %v3260 = vpop.f32.mrf.mxu0
      %v3261 = vadd.f32 0.0, %v3260
      %3262 = vmatmul.bf16.gmra.mxu0 %v1973
      %v3263 = vpop.f32.mrf.mxu0
      %v3264 = vpop.f32.mrf.mxu0
      %3265 = vmatmul.bf16.gmra.mxu0 %v1976
      %v3266 = vpop.f32.mrf.mxu0
      %v3267 = vadd.f32 0.0, %v3266
      %v3268 = vpop.f32.mrf.mxu0
      %v3269 = vadd.f32 0.0, %v3268
      %3270 = vmatmul.bf16.gmra.mxu0 %v1979
      %v3271 = vpop.f32.mrf.mxu0
      %v3272 = vpop.f32.mrf.mxu0
      %3273 = vmatmul.bf16.gmra.mxu0 %v1982
      %v3274 = vpop.f32.mrf.mxu0
      %v3275 = vadd.f32 0.0, %v3274
      %v3276 = vpop.f32.mrf.mxu0
      %v3277 = vadd.f32 0.0, %v3276
      %3278 = vmatmul.bf16.gmra.mxu0 %v1985
      %v3279 = vpop.f32.mrf.mxu0
      %v3280 = vpop.f32.mrf.mxu0
      %3281 = vmatmul.bf16.gmra.mxu0 %v1988
      %v3282 = vpop.f32.mrf.mxu0
      %v3283 = vadd.f32 0.0, %v3282
      %v3284 = vpop.f32.mrf.mxu0
      %v3285 = vadd.f32 0.0, %v3284
      %3286 = vmatmul.bf16.gmra.mxu0 %v1991
      %v3287 = vpop.f32.mrf.mxu0
      %v3288 = vpop.f32.mrf.mxu0
      %3289 = vmatmul.bf16.gmra.mxu0 %v1994
      %v3290 = vpop.f32.mrf.mxu0
      %v3291 = vadd.f32 0.0, %v3290
      %v3292 = vpop.f32.mrf.mxu0
      %v3293 = vadd.f32 0.0, %v3292
      %3294 = vmatmul.bf16.gmra.mxu0 %v1997
      %v3295 = vpop.f32.mrf.mxu0
      %v3296 = vpop.f32.mrf.mxu0
      %3297 = vmatmul.bf16.gmra.mxu0 %v2590
      %v3298 = vpop.f32.mrf.mxu0
      %v3299 = vadd.f32 0.0, %v3298
      %v3300 = vpop.f32.mrf.mxu0
      %v3301 = vadd.f32 0.0, %v3300
      %3302 = vmatmul.bf16.gmra.mxu0 %v2593
      %v3303 = vpop.f32.mrf.mxu0
      %v3304 = vpop.f32.mrf.mxu0
      %3305 = vmatmul.bf16.gmra.mxu0 %v3172
      %v3306 = vpop.f32.mrf.mxu0
      %v3307 = vadd.f32 0.0, %v3306
      %v3308 = vpop.f32.mrf.mxu0
      %v3309 = vadd.f32 0.0, %v3308
      %3310 = vmatmul.bf16.gmra.mxu0 %v3175
      %v3311 = vpop.f32.mrf.mxu0
      %v3312 = vpop.f32.mrf.mxu0
      %3313 = vdwg.mxu0
      %v3314 = vadd.f32 %v3120, %v3187
      %v3315 = vadd.f32 %v3121, %v3189
      %v3316 = vadd.f32 %v3122, %v3195
      %v3317 = vadd.f32 %v3123, %v3197
      %v3318 = vadd.f32 %v3124, %v3203
      %v3319 = vadd.f32 %v3125, %v3205
      %v3320 = vadd.f32 %v3126, %v3211
      %v3321 = vadd.f32 %v3127, %v3213
      %v3322 = vadd.f32 %v3128, %v3219
      %v3323 = vadd.f32 %v3129, %v3221
      %v3324 = vadd.f32 %v3130, %v3227
      %v3325 = vadd.f32 %v3131, %v3229
      %v3326 = vadd.f32 %v3132, %v3235
      %v3327 = vadd.f32 %v3133, %v3237
      %v3328 = vadd.f32 %v3134, %v3243
      %v3329 = vadd.f32 %v3135, %v3245
      %v3330 = vadd.f32 %v3136, %v3251
      %v3331 = vadd.f32 %v3137, %v3253
      %v3332 = vadd.f32 %v3138, %v3259
      %v3333 = vadd.f32 %v3139, %v3261
      %v3334 = vadd.f32 %v3140, %v3267
      %v3335 = vadd.f32 %v3141, %v3269
      %v3336 = vadd.f32 %v3142, %v3275
      %v3337 = vadd.f32 %v3143, %v3277
      %v3338 = vadd.f32 %v3144, %v3283
      %v3339 = vadd.f32 %v3145, %v3285
      %v3340 = vadd.f32 %v3146, %v3291
      %v3341 = vadd.f32 %v3147, %v3293
      %v3342 = vadd.f32 %v3148, %v3299
      %v3343 = vadd.f32 %v3149, %v3301
      %v3344 = vadd.f32 %v3150, %v3307
      %v3345 = vadd.f32 %v3151, %v3309
      %s3346 = scalar_lea.vmem %s1, 56
      %v3347 = vld [vmem:[%s3346] sm:$0xf]
      %v3348 = vld [vmem:[%s3346 + $0x4] sm:$0xf]
      %v3353 = vunpack.c.l.b16 %v1256
      %v3354 = vunpack.c.l.b16 %v1257
      %v3355 = vunpack.c.l.b16 %v1258
      %v3356 = vunpack.c.l.b16 %v1259
      %v3357 = vpack.c.b16 %v3354, %v3353
      %v3358 = vpack.c.b16 %v3356, %v3355
      %v3361 = vunpack.c.l.b16 %v3347
      %v3362 = vunpack.c.l.b16 %v3348
      %v3363 = vpack.c.b16 %v3362, %v3361
      %v3366 = vsel %vm1503, %v3357, 0
      %v3369 = vsel %vm1503, %v3358, 0
      %3371 = vmatpush.bf16.msra.mxu0 0
      %3372 = vmatpush.bf16.msra.mxu0 0
      %3373 = vmatpush.bf16.msra.mxu0 0
      %3374 = vmatpush.bf16.msra.mxu0 0
      %3375 = vmatpush.bf16.msra.mxu0 0
      %3376 = vmatpush.bf16.msra.mxu0 0
      %3377 = vmatpush.bf16.msra.mxu0 0
      %3378 = vmatpush.bf16.msra.mxu0 %v3363
      %3379 = vmatmul.bf16.gmra.mxu0 %v1517
      %v3380 = vpop.f32.mrf.mxu0
      %v3381 = vadd.f32 0.0, %v3380
      %v3382 = vpop.f32.mrf.mxu0
      %v3383 = vadd.f32 0.0, %v3382
      %3384 = vmatmul.bf16.gmra.mxu0 %v1520
      %v3385 = vpop.f32.mrf.mxu0
      %v3386 = vpop.f32.mrf.mxu0
      %3387 = vmatmul.bf16.gmra.mxu0 %v1523
      %v3388 = vpop.f32.mrf.mxu0
      %v3389 = vadd.f32 0.0, %v3388
      %v3390 = vpop.f32.mrf.mxu0
      %v3391 = vadd.f32 0.0, %v3390
      %3392 = vmatmul.bf16.gmra.mxu0 %v1526
      %v3393 = vpop.f32.mrf.mxu0
      %v3394 = vpop.f32.mrf.mxu0
      %3395 = vmatmul.bf16.gmra.mxu0 %v1529
      %v3396 = vpop.f32.mrf.mxu0
      %v3397 = vadd.f32 0.0, %v3396
      %v3398 = vpop.f32.mrf.mxu0
      %v3399 = vadd.f32 0.0, %v3398
      %3400 = vmatmul.bf16.gmra.mxu0 %v1532
      %v3401 = vpop.f32.mrf.mxu0
      %v3402 = vpop.f32.mrf.mxu0
      %3403 = vmatmul.bf16.gmra.mxu0 %v1535
      %v3404 = vpop.f32.mrf.mxu0
      %v3405 = vadd.f32 0.0, %v3404
      %v3406 = vpop.f32.mrf.mxu0
      %v3407 = vadd.f32 0.0, %v3406
      %3408 = vmatmul.bf16.gmra.mxu0 %v1538
      %v3409 = vpop.f32.mrf.mxu0
      %v3410 = vpop.f32.mrf.mxu0
      %3411 = vmatmul.bf16.gmra.mxu0 %v1541
      %v3412 = vpop.f32.mrf.mxu0
      %v3413 = vadd.f32 0.0, %v3412
      %v3414 = vpop.f32.mrf.mxu0
      %v3415 = vadd.f32 0.0, %v3414
      %3416 = vmatmul.bf16.gmra.mxu0 %v1544
      %v3417 = vpop.f32.mrf.mxu0
      %v3418 = vpop.f32.mrf.mxu0
      %3419 = vmatmul.bf16.gmra.mxu0 %v1547
      %v3420 = vpop.f32.mrf.mxu0
      %v3421 = vadd.f32 0.0, %v3420
      %v3422 = vpop.f32.mrf.mxu0
      %v3423 = vadd.f32 0.0, %v3422
      %3424 = vmatmul.bf16.gmra.mxu0 %v1550
      %v3425 = vpop.f32.mrf.mxu0
      %v3426 = vpop.f32.mrf.mxu0
      %3427 = vmatmul.bf16.gmra.mxu0 %v1553
      %v3428 = vpop.f32.mrf.mxu0
      %v3429 = vadd.f32 0.0, %v3428
      %v3430 = vpop.f32.mrf.mxu0
      %v3431 = vadd.f32 0.0, %v3430
      %3432 = vmatmul.bf16.gmra.mxu0 %v1556
      %v3433 = vpop.f32.mrf.mxu0
      %v3434 = vpop.f32.mrf.mxu0
      %3435 = vmatmul.bf16.gmra.mxu0 %v1559
      %v3436 = vpop.f32.mrf.mxu0
      %v3437 = vadd.f32 0.0, %v3436
      %v3438 = vpop.f32.mrf.mxu0
      %v3439 = vadd.f32 0.0, %v3438
      %3440 = vmatmul.bf16.gmra.mxu0 %v1562
      %v3441 = vpop.f32.mrf.mxu0
      %v3442 = vpop.f32.mrf.mxu0
      %3443 = vmatmul.bf16.gmra.mxu0 %v1565
      %v3444 = vpop.f32.mrf.mxu0
      %v3445 = vadd.f32 0.0, %v3444
      %v3446 = vpop.f32.mrf.mxu0
      %v3447 = vadd.f32 0.0, %v3446
      %3448 = vmatmul.bf16.gmra.mxu0 %v1568
      %v3449 = vpop.f32.mrf.mxu0
      %v3450 = vpop.f32.mrf.mxu0
      %3451 = vmatmul.bf16.gmra.mxu0 %v1571
      %v3452 = vpop.f32.mrf.mxu0
      %v3453 = vadd.f32 0.0, %v3452
      %v3454 = vpop.f32.mrf.mxu0
      %v3455 = vadd.f32 0.0, %v3454
      %3456 = vmatmul.bf16.gmra.mxu0 %v1574
      %v3457 = vpop.f32.mrf.mxu0
      %v3458 = vpop.f32.mrf.mxu0
      %3459 = vmatmul.bf16.gmra.mxu0 %v1577
      %v3460 = vpop.f32.mrf.mxu0
      %v3461 = vadd.f32 0.0, %v3460
      %v3462 = vpop.f32.mrf.mxu0
      %v3463 = vadd.f32 0.0, %v3462
      %3464 = vmatmul.bf16.gmra.mxu0 %v1580
      %v3465 = vpop.f32.mrf.mxu0
      %v3466 = vpop.f32.mrf.mxu0
      %3467 = vmatmul.bf16.gmra.mxu0 %v1583
      %v3468 = vpop.f32.mrf.mxu0
      %v3469 = vadd.f32 0.0, %v3468
      %v3470 = vpop.f32.mrf.mxu0
      %v3471 = vadd.f32 0.0, %v3470
      %3472 = vmatmul.bf16.gmra.mxu0 %v1586
      %v3473 = vpop.f32.mrf.mxu0
      %v3474 = vpop.f32.mrf.mxu0
      %3475 = vmatmul.bf16.gmra.mxu0 %v1589
      %v3476 = vpop.f32.mrf.mxu0
      %v3477 = vadd.f32 0.0, %v3476
      %v3478 = vpop.f32.mrf.mxu0
      %v3479 = vadd.f32 0.0, %v3478
      %3480 = vmatmul.bf16.gmra.mxu0 %v1592
      %v3481 = vpop.f32.mrf.mxu0
      %v3482 = vpop.f32.mrf.mxu0
      %3483 = vmatmul.bf16.gmra.mxu0 %v1595
      %v3484 = vpop.f32.mrf.mxu0
      %v3485 = vadd.f32 0.0, %v3484
      %v3486 = vpop.f32.mrf.mxu0
      %v3487 = vadd.f32 0.0, %v3486
      %3488 = vmatmul.bf16.gmra.mxu0 %v1598
      %v3489 = vpop.f32.mrf.mxu0
      %v3490 = vpop.f32.mrf.mxu0
      %3491 = vmatmul.bf16.gmra.mxu0 %v2784
      %v3492 = vpop.f32.mrf.mxu0
      %v3493 = vadd.f32 0.0, %v3492
      %v3494 = vpop.f32.mrf.mxu0
      %v3495 = vadd.f32 0.0, %v3494
      %3496 = vmatmul.bf16.gmra.mxu0 %v2787
      %v3497 = vpop.f32.mrf.mxu0
      %v3498 = vpop.f32.mrf.mxu0
      %3499 = vmatmul.bf16.gmra.mxu0 %v3366
      %v3500 = vpop.f32.mrf.mxu0
      %v3501 = vadd.f32 0.0, %v3500
      %v3502 = vpop.f32.mrf.mxu0
      %v3503 = vadd.f32 0.0, %v3502
      %3504 = vmatmul.bf16.gmra.mxu0 %v3369
      %v3505 = vpop.f32.mrf.mxu0
      %v3506 = vpop.f32.mrf.mxu0
      %3507 = vdwg.mxu0
      %v3508 = vadd.f32 %v3314, %v3381
      %v3509 = vadd.f32 %v3315, %v3383
      %v3510 = vadd.f32 %v3316, %v3389
      %v3511 = vadd.f32 %v3317, %v3391
      %v3512 = vadd.f32 %v3318, %v3397
      %v3513 = vadd.f32 %v3319, %v3399
      %v3514 = vadd.f32 %v3320, %v3405
      %v3515 = vadd.f32 %v3321, %v3407
      %v3516 = vadd.f32 %v3322, %v3413
      %v3517 = vadd.f32 %v3323, %v3415
      %v3518 = vadd.f32 %v3324, %v3421
      %v3519 = vadd.f32 %v3325, %v3423
      %v3520 = vadd.f32 %v3326, %v3429
      %v3521 = vadd.f32 %v3327, %v3431
      %v3522 = vadd.f32 %v3328, %v3437
      %v3523 = vadd.f32 %v3329, %v3439
      %v3524 = vadd.f32 %v3330, %v3445
      %v3525 = vadd.f32 %v3331, %v3447
      %v3526 = vadd.f32 %v3332, %v3453
      %v3527 = vadd.f32 %v3333, %v3455
      %v3528 = vadd.f32 %v3334, %v3461
      %v3529 = vadd.f32 %v3335, %v3463
      %v3530 = vadd.f32 %v3336, %v3469
      %v3531 = vadd.f32 %v3337, %v3471
      %v3532 = vadd.f32 %v3338, %v3477
      %v3533 = vadd.f32 %v3339, %v3479
      %v3534 = vadd.f32 %v3340, %v3485
      %v3535 = vadd.f32 %v3341, %v3487
      %v3536 = vadd.f32 %v3342, %v3493
      %v3537 = vadd.f32 %v3343, %v3495
      %v3538 = vadd.f32 %v3344, %v3501
      %v3539 = vadd.f32 %v3345, %v3503
      %s3540 = scalar_lea.vmem %s1, 64
      %v3541 = vld [vmem:[%s3540] sm:$0xf]
      %v3542 = vld [vmem:[%s3540 + $0x4] sm:$0xf]
      %v3547 = vunpack.c.l.b16 %v1328
      %v3548 = vunpack.c.l.b16 %v1329
      %v3549 = vunpack.c.l.b16 %v1330
      %v3550 = vunpack.c.l.b16 %v1331
      %v3551 = vpack.c.b16 %v3548, %v3547
      %v3552 = vpack.c.b16 %v3550, %v3549
      %v3555 = vunpack.c.l.b16 %v3541
      %v3556 = vunpack.c.l.b16 %v3542
      %v3557 = vpack.c.b16 %v3556, %v3555
      %v3560 = vsel %vm1503, %v3551, 0
      %v3563 = vsel %vm1503, %v3552, 0
      %3565 = vmatpush.bf16.msra.mxu0 0
      %3566 = vmatpush.bf16.msra.mxu0 0
      %3567 = vmatpush.bf16.msra.mxu0 0
      %3568 = vmatpush.bf16.msra.mxu0 0
      %3569 = vmatpush.bf16.msra.mxu0 0
      %3570 = vmatpush.bf16.msra.mxu0 0
      %3571 = vmatpush.bf16.msra.mxu0 0
      %3572 = vmatpush.bf16.msra.mxu0 %v3557
      %3573 = vmatmul.bf16.gmra.mxu0 %v2318
      %v3574 = vpop.f32.mrf.mxu0
      %v3575 = vadd.f32 0.0, %v3574
      %v3576 = vpop.f32.mrf.mxu0
      %v3577 = vadd.f32 0.0, %v3576
      %3578 = vmatmul.bf16.gmra.mxu0 %v2321
      %v3579 = vpop.f32.mrf.mxu0
      %v3580 = vpop.f32.mrf.mxu0
      %3581 = vmatmul.bf16.gmra.mxu0 %v2324
      %v3582 = vpop.f32.mrf.mxu0
      %v3583 = vadd.f32 0.0, %v3582
      %v3584 = vpop.f32.mrf.mxu0
      %v3585 = vadd.f32 0.0, %v3584
      %3586 = vmatmul.bf16.gmra.mxu0 %v2327
      %v3587 = vpop.f32.mrf.mxu0
      %v3588 = vpop.f32.mrf.mxu0
      %3589 = vmatmul.bf16.gmra.mxu0 %v2330
      %v3590 = vpop.f32.mrf.mxu0
      %v3591 = vadd.f32 0.0, %v3590
      %v3592 = vpop.f32.mrf.mxu0
      %v3593 = vadd.f32 0.0, %v3592
      %3594 = vmatmul.bf16.gmra.mxu0 %v2333
      %v3595 = vpop.f32.mrf.mxu0
      %v3596 = vpop.f32.mrf.mxu0
      %3597 = vmatmul.bf16.gmra.mxu0 %v2336
      %v3598 = vpop.f32.mrf.mxu0
      %v3599 = vadd.f32 0.0, %v3598
      %v3600 = vpop.f32.mrf.mxu0
      %v3601 = vadd.f32 0.0, %v3600
      %3602 = vmatmul.bf16.gmra.mxu0 %v2339
      %v3603 = vpop.f32.mrf.mxu0
      %v3604 = vpop.f32.mrf.mxu0
      %3605 = vmatmul.bf16.gmra.mxu0 %v2342
      %v3606 = vpop.f32.mrf.mxu0
      %v3607 = vadd.f32 0.0, %v3606
      %v3608 = vpop.f32.mrf.mxu0
      %v3609 = vadd.f32 0.0, %v3608
      %3610 = vmatmul.bf16.gmra.mxu0 %v2345
      %v3611 = vpop.f32.mrf.mxu0
      %v3612 = vpop.f32.mrf.mxu0
      %3613 = vmatmul.bf16.gmra.mxu0 %v2348
      %v3614 = vpop.f32.mrf.mxu0
      %v3615 = vadd.f32 0.0, %v3614
      %v3616 = vpop.f32.mrf.mxu0
      %v3617 = vadd.f32 0.0, %v3616
      %3618 = vmatmul.bf16.gmra.mxu0 %v2351
      %v3619 = vpop.f32.mrf.mxu0
      %v3620 = vpop.f32.mrf.mxu0
      %3621 = vmatmul.bf16.gmra.mxu0 %v2354
      %v3622 = vpop.f32.mrf.mxu0
      %v3623 = vadd.f32 0.0, %v3622
      %v3624 = vpop.f32.mrf.mxu0
      %v3625 = vadd.f32 0.0, %v3624
      %3626 = vmatmul.bf16.gmra.mxu0 %v2357
      %v3627 = vpop.f32.mrf.mxu0
      %v3628 = vpop.f32.mrf.mxu0
      %3629 = vmatmul.bf16.gmra.mxu0 %v2360
      %v3630 = vpop.f32.mrf.mxu0
      %v3631 = vadd.f32 0.0, %v3630
      %v3632 = vpop.f32.mrf.mxu0
      %v3633 = vadd.f32 0.0, %v3632
      %3634 = vmatmul.bf16.gmra.mxu0 %v2363
      %v3635 = vpop.f32.mrf.mxu0
      %v3636 = vpop.f32.mrf.mxu0
      %3637 = vmatmul.bf16.gmra.mxu0 %v2366
      %v3638 = vpop.f32.mrf.mxu0
      %v3639 = vadd.f32 0.0, %v3638
      %v3640 = vpop.f32.mrf.mxu0
      %v3641 = vadd.f32 0.0, %v3640
      %3642 = vmatmul.bf16.gmra.mxu0 %v2369
      %v3643 = vpop.f32.mrf.mxu0
      %v3644 = vpop.f32.mrf.mxu0
      %3645 = vmatmul.bf16.gmra.mxu0 %v2372
      %v3646 = vpop.f32.mrf.mxu0
      %v3647 = vadd.f32 0.0, %v3646
      %v3648 = vpop.f32.mrf.mxu0
      %v3649 = vadd.f32 0.0, %v3648
      %3650 = vmatmul.bf16.gmra.mxu0 %v2375
      %v3651 = vpop.f32.mrf.mxu0
      %v3652 = vpop.f32.mrf.mxu0
      %3653 = vmatmul.bf16.gmra.mxu0 %v2378
      %v3654 = vpop.f32.mrf.mxu0
      %v3655 = vadd.f32 0.0, %v3654
      %v3656 = vpop.f32.mrf.mxu0
      %v3657 = vadd.f32 0.0, %v3656
      %3658 = vmatmul.bf16.gmra.mxu0 %v2381
      %v3659 = vpop.f32.mrf.mxu0
      %v3660 = vpop.f32.mrf.mxu0
      %3661 = vmatmul.bf16.gmra.mxu0 %v2384
      %v3662 = vpop.f32.mrf.mxu0
      %v3663 = vadd.f32 0.0, %v3662
      %v3664 = vpop.f32.mrf.mxu0
      %v3665 = vadd.f32 0.0, %v3664
      %3666 = vmatmul.bf16.gmra.mxu0 %v2387
      %v3667 = vpop.f32.mrf.mxu0
      %v3668 = vpop.f32.mrf.mxu0
      %3669 = vmatmul.bf16.gmra.mxu0 %v2390
      %v3670 = vpop.f32.mrf.mxu0
      %v3671 = vadd.f32 0.0, %v3670
      %v3672 = vpop.f32.mrf.mxu0
      %v3673 = vadd.f32 0.0, %v3672
      %3674 = vmatmul.bf16.gmra.mxu0 %v2393
      %v3675 = vpop.f32.mrf.mxu0
      %v3676 = vpop.f32.mrf.mxu0
      %3677 = vmatmul.bf16.gmra.mxu0 %v2396
      %v3678 = vpop.f32.mrf.mxu0
      %v3679 = vadd.f32 0.0, %v3678
      %v3680 = vpop.f32.mrf.mxu0
      %v3681 = vadd.f32 0.0, %v3680
      %3682 = vmatmul.bf16.gmra.mxu0 %v2399
      %v3683 = vpop.f32.mrf.mxu0
      %v3684 = vpop.f32.mrf.mxu0
      %3685 = vmatmul.bf16.gmra.mxu0 %v2978
      %v3686 = vpop.f32.mrf.mxu0
      %v3687 = vadd.f32 0.0, %v3686
      %v3688 = vpop.f32.mrf.mxu0
      %v3689 = vadd.f32 0.0, %v3688
      %3690 = vmatmul.bf16.gmra.mxu0 %v2981
      %v3691 = vpop.f32.mrf.mxu0
      %v3692 = vpop.f32.mrf.mxu0
      %3693 = vmatmul.bf16.gmra.mxu0 %v3560
      %v3694 = vpop.f32.mrf.mxu0
      %v3695 = vadd.f32 0.0, %v3694
      %v3696 = vpop.f32.mrf.mxu0
      %v3697 = vadd.f32 0.0, %v3696
      %3698 = vmatmul.bf16.gmra.mxu0 %v3563
      %v3699 = vpop.f32.mrf.mxu0
      %v3700 = vpop.f32.mrf.mxu0
      %3701 = vdwg.mxu0
      %v3702 = vadd.f32 %v3508, %v3575
      %v3703 = vadd.f32 %v3509, %v3577
      %v3704 = vadd.f32 %v3510, %v3583
      %v3705 = vadd.f32 %v3511, %v3585
      %v3706 = vadd.f32 %v3512, %v3591
      %v3707 = vadd.f32 %v3513, %v3593
      %v3708 = vadd.f32 %v3514, %v3599
      %v3709 = vadd.f32 %v3515, %v3601
      %v3710 = vadd.f32 %v3516, %v3607
      %v3711 = vadd.f32 %v3517, %v3609
      %v3712 = vadd.f32 %v3518, %v3615
      %v3713 = vadd.f32 %v3519, %v3617
      %v3714 = vadd.f32 %v3520, %v3623
      %v3715 = vadd.f32 %v3521, %v3625
      %v3716 = vadd.f32 %v3522, %v3631
      %v3717 = vadd.f32 %v3523, %v3633
      %v3718 = vadd.f32 %v3524, %v3639
      %v3719 = vadd.f32 %v3525, %v3641
      %v3720 = vadd.f32 %v3526, %v3647
      %v3721 = vadd.f32 %v3527, %v3649
      %v3722 = vadd.f32 %v3528, %v3655
      %v3723 = vadd.f32 %v3529, %v3657
      %v3724 = vadd.f32 %v3530, %v3663
      %v3725 = vadd.f32 %v3531, %v3665
      %v3726 = vadd.f32 %v3532, %v3671
      %v3727 = vadd.f32 %v3533, %v3673
      %v3728 = vadd.f32 %v3534, %v3679
      %v3729 = vadd.f32 %v3535, %v3681
      %v3730 = vadd.f32 %v3536, %v3687
      %v3731 = vadd.f32 %v3537, %v3689
      %v3732 = vadd.f32 %v3538, %v3695
      %v3733 = vadd.f32 %v3539, %v3697
      %v3734 = vld [vmem:[%s2] sm:$0x1]
      %v3736 = vperm.slane %v3734, 0
      %v3738 = vadd.f32 %v3702, %v3736
      %v3739 = vadd.f32 %v3703, %v3736
      %v3740 = vadd.f32 %v3704, %v3736
      %v3741 = vadd.f32 %v3705, %v3736
      %v3742 = vadd.f32 %v3706, %v3736
      %v3743 = vadd.f32 %v3707, %v3736
      %v3744 = vadd.f32 %v3708, %v3736
      %v3745 = vadd.f32 %v3709, %v3736
      %v3746 = vadd.f32 %v3710, %v3736
      %v3747 = vadd.f32 %v3711, %v3736
      %v3748 = vadd.f32 %v3712, %v3736
      %v3749 = vadd.f32 %v3713, %v3736
      %v3750 = vadd.f32 %v3714, %v3736
      %v3751 = vadd.f32 %v3715, %v3736
      %v3752 = vadd.f32 %v3716, %v3736
      %v3753 = vadd.f32 %v3717, %v3736
      %v3754 = vadd.f32 %v3718, %v3736
      %v3755 = vadd.f32 %v3719, %v3736
      %v3756 = vadd.f32 %v3720, %v3736
      %v3757 = vadd.f32 %v3721, %v3736
      %v3758 = vadd.f32 %v3722, %v3736
      %v3759 = vadd.f32 %v3723, %v3736
      %v3760 = vadd.f32 %v3724, %v3736
      %v3761 = vadd.f32 %v3725, %v3736
      %v3762 = vadd.f32 %v3726, %v3736
      %v3763 = vadd.f32 %v3727, %v3736
      %v3764 = vadd.f32 %v3728, %v3736
      %v3765 = vadd.f32 %v3729, %v3736
      %v3766 = vadd.f32 %v3730, %v3736
      %v3767 = vadd.f32 %v3731, %v3736
      %v3768 = vadd.f32 %v3732, %v3736
      %v3769 = vadd.f32 %v3733, %v3736
      %v3770 = vsub.f32 0.0, %v3738
      %v3771 = vsub.f32 0.0, %v3739
      %v3772 = vsub.f32 0.0, %v3740
      %v3773 = vsub.f32 0.0, %v3741
      %v3774 = vsub.f32 0.0, %v3742
      %v3775 = vsub.f32 0.0, %v3743
      %v3776 = vsub.f32 0.0, %v3744
      %v3777 = vsub.f32 0.0, %v3745
      %v3778 = vsub.f32 0.0, %v3746
      %v3779 = vsub.f32 0.0, %v3747
      %v3780 = vsub.f32 0.0, %v3748
      %v3781 = vsub.f32 0.0, %v3749
      %v3782 = vsub.f32 0.0, %v3750
      %v3783 = vsub.f32 0.0, %v3751
      %v3784 = vsub.f32 0.0, %v3752
      %v3785 = vsub.f32 0.0, %v3753
      %v3786 = vsub.f32 0.0, %v3754
      %v3787 = vsub.f32 0.0, %v3755
      %v3788 = vsub.f32 0.0, %v3756
      %v3789 = vsub.f32 0.0, %v3757
      %v3790 = vsub.f32 0.0, %v3758
      %v3791 = vsub.f32 0.0, %v3759
      %v3792 = vsub.f32 0.0, %v3760
      %v3793 = vsub.f32 0.0, %v3761
      %v3794 = vsub.f32 0.0, %v3762
      %v3795 = vsub.f32 0.0, %v3763
      %v3796 = vsub.f32 0.0, %v3764
      %v3797 = vsub.f32 0.0, %v3765
      %v3798 = vsub.f32 0.0, %v3766
      %v3799 = vsub.f32 0.0, %v3767
      %v3800 = vsub.f32 0.0, %v3768
      %v3801 = vsub.f32 0.0, %v3769
      %v3802 = vmul.f32 %v3770, 1.442695
      %v3803 = vpow.pop %v3802
      %v3804 = vmul.f32 %v3771, 1.442695
      %v3805 = vpow.pop %v3804
      %v3806 = vmul.f32 %v3772, 1.442695
      %v3807 = vpow.pop %v3806
      %v3808 = vmul.f32 %v3773, 1.442695
      %v3809 = vpow.pop %v3808
      %v3810 = vmul.f32 %v3774, 1.442695
      %v3811 = vpow.pop %v3810
      %v3812 = vmul.f32 %v3775, 1.442695
      %v3813 = vpow.pop %v3812
      %v3814 = vmul.f32 %v3776, 1.442695
      %v3815 = vpow.pop %v3814
      %v3816 = vmul.f32 %v3777, 1.442695
      %v3817 = vpow.pop %v3816
      %v3818 = vmul.f32 %v3778, 1.442695
      %v3819 = vpow.pop %v3818
      %v3820 = vmul.f32 %v3779, 1.442695
      %v3821 = vpow.pop %v3820
      %v3822 = vmul.f32 %v3780, 1.442695
      %v3823 = vpow.pop %v3822
      %v3824 = vmul.f32 %v3781, 1.442695
      %v3825 = vpow.pop %v3824
      %v3826 = vmul.f32 %v3782, 1.442695
      %v3827 = vpow.pop %v3826
      %v3828 = vmul.f32 %v3783, 1.442695
      %v3829 = vpow.pop %v3828
      %v3830 = vmul.f32 %v3784, 1.442695
      %v3831 = vpow.pop %v3830
      %v3832 = vmul.f32 %v3785, 1.442695
      %v3833 = vpow.pop %v3832
      %v3834 = vmul.f32 %v3786, 1.442695
      %v3835 = vpow.pop %v3834
      %v3836 = vmul.f32 %v3787, 1.442695
      %v3837 = vpow.pop %v3836
      %v3838 = vmul.f32 %v3788, 1.442695
      %v3839 = vpow.pop %v3838
      %v3840 = vmul.f32 %v3789, 1.442695
      %v3841 = vpow.pop %v3840
      %v3842 = vmul.f32 %v3790, 1.442695
      %v3843 = vpow.pop %v3842
      %v3844 = vmul.f32 %v3791, 1.442695
      %v3845 = vpow.pop %v3844
      %v3846 = vmul.f32 %v3792, 1.442695
      %v3847 = vpow.pop %v3846
      %v3848 = vmul.f32 %v3793, 1.442695
      %v3849 = vpow.pop %v3848
      %v3850 = vmul.f32 %v3794, 1.442695
      %v3851 = vpow.pop %v3850
      %v3852 = vmul.f32 %v3795, 1.442695
      %v3853 = vpow.pop %v3852
      %v3854 = vmul.f32 %v3796, 1.442695
      %v3855 = vpow.pop %v3854
      %v3856 = vmul.f32 %v3797, 1.442695
      %v3857 = vpow.pop %v3856
      %v3858 = vmul.f32 %v3798, 1.442695
      %v3859 = vpow.pop %v3858
      %v3860 = vmul.f32 %v3799, 1.442695
      %v3861 = vpow.pop %v3860
      %v3862 = vmul.f32 %v3800, 1.442695
      %v3863 = vpow.pop %v3862
      %v3864 = vmul.f32 %v3801, 1.442695
      %v3865 = vpow.pop %v3864
      %v3866 = vadd.f32 %v3803, 1.0
      %v3867 = vadd.f32 %v3805, 1.0
      %v3868 = vadd.f32 %v3807, 1.0
      %v3869 = vadd.f32 %v3809, 1.0
      %v3870 = vadd.f32 %v3811, 1.0
      %v3871 = vadd.f32 %v3813, 1.0
      %v3872 = vadd.f32 %v3815, 1.0
      %v3873 = vadd.f32 %v3817, 1.0
      %v3874 = vadd.f32 %v3819, 1.0
      %v3875 = vadd.f32 %v3821, 1.0
      %v3876 = vadd.f32 %v3823, 1.0
      %v3877 = vadd.f32 %v3825, 1.0
      %v3878 = vadd.f32 %v3827, 1.0
      %v3879 = vadd.f32 %v3829, 1.0
      %v3880 = vadd.f32 %v3831, 1.0
      %v3881 = vadd.f32 %v3833, 1.0
      %v3882 = vadd.f32 %v3835, 1.0
      %v3883 = vadd.f32 %v3837, 1.0
      %v3884 = vadd.f32 %v3839, 1.0
      %v3885 = vadd.f32 %v3841, 1.0
      %v3886 = vadd.f32 %v3843, 1.0
      %v3887 = vadd.f32 %v3845, 1.0
      %v3888 = vadd.f32 %v3847, 1.0
      %v3889 = vadd.f32 %v3849, 1.0
      %v3890 = vadd.f32 %v3851, 1.0
      %v3891 = vadd.f32 %v3853, 1.0
      %v3892 = vadd.f32 %v3855, 1.0
      %v3893 = vadd.f32 %v3857, 1.0
      %v3894 = vadd.f32 %v3859, 1.0
      %v3895 = vadd.f32 %v3861, 1.0
      %v3896 = vadd.f32 %v3863, 1.0
      %v3897 = vadd.f32 %v3865, 1.0
      %v3898 = vrcp.pop %v3866
      %v3899 = vrcp.pop %v3867
      %v3900 = vrcp.pop %v3868
      %v3901 = vrcp.pop %v3869
      %v3902 = vrcp.pop %v3870
      %v3903 = vrcp.pop %v3871
      %v3904 = vrcp.pop %v3872
      %v3905 = vrcp.pop %v3873
      %v3906 = vrcp.pop %v3874
      %v3907 = vrcp.pop %v3875
      %v3908 = vrcp.pop %v3876
      %v3909 = vrcp.pop %v3877
      %v3910 = vrcp.pop %v3878
      %v3911 = vrcp.pop %v3879
      %v3912 = vrcp.pop %v3880
      %v3913 = vrcp.pop %v3881
      %v3914 = vrcp.pop %v3882
      %v3915 = vrcp.pop %v3883
      %v3916 = vrcp.pop %v3884
      %v3917 = vrcp.pop %v3885
      %v3918 = vrcp.pop %v3886
      %v3919 = vrcp.pop %v3887
      %v3920 = vrcp.pop %v3888
      %v3921 = vrcp.pop %v3889
      %v3922 = vrcp.pop %v3890
      %v3923 = vrcp.pop %v3891
      %v3924 = vrcp.pop %v3892
      %v3925 = vrcp.pop %v3893
      %v3926 = vrcp.pop %v3894
      %v3927 = vrcp.pop %v3895
      %v3928 = vrcp.pop %v3896
      %v3929 = vrcp.pop %v3897
      %v3930 = vmul.f32 %v3738, %v3898
      %v3931 = vmul.f32 %v3739, %v3899
      %v3932 = vmul.f32 %v3740, %v3900
      %v3933 = vmul.f32 %v3741, %v3901
      %v3934 = vmul.f32 %v3742, %v3902
      %v3935 = vmul.f32 %v3743, %v3903
      %v3936 = vmul.f32 %v3744, %v3904
      %v3937 = vmul.f32 %v3745, %v3905
      %v3938 = vmul.f32 %v3746, %v3906
      %v3939 = vmul.f32 %v3747, %v3907
      %v3940 = vmul.f32 %v3748, %v3908
      %v3941 = vmul.f32 %v3749, %v3909
      %v3942 = vmul.f32 %v3750, %v3910
      %v3943 = vmul.f32 %v3751, %v3911
      %v3944 = vmul.f32 %v3752, %v3912
      %v3945 = vmul.f32 %v3753, %v3913
      %v3946 = vmul.f32 %v3754, %v3914
      %v3947 = vmul.f32 %v3755, %v3915
      %v3948 = vmul.f32 %v3756, %v3916
      %v3949 = vmul.f32 %v3757, %v3917
      %v3950 = vmul.f32 %v3758, %v3918
      %v3951 = vmul.f32 %v3759, %v3919
      %v3952 = vmul.f32 %v3760, %v3920
      %v3953 = vmul.f32 %v3761, %v3921
      %v3954 = vmul.f32 %v3762, %v3922
      %v3955 = vmul.f32 %v3763, %v3923
      %v3956 = vmul.f32 %v3764, %v3924
      %v3957 = vmul.f32 %v3765, %v3925
      %v3958 = vmul.f32 %v3766, %v3926
      %v3959 = vmul.f32 %v3767, %v3927
      %v3960 = vmul.f32 %v3768, %v3928
      %v3961 = vmul.f32 %v3769, %v3929
      %v3962 = vpack.c.bf16 %v3930, %v3930
      %v3963 = vpack.c.bf16 %v3931, %v3931
      %v3964 = vpack.c.bf16 %v3932, %v3932
      %v3965 = vpack.c.bf16 %v3933, %v3933
      %v3966 = vpack.c.bf16 %v3934, %v3934
      %v3967 = vpack.c.bf16 %v3935, %v3935
      %v3968 = vpack.c.bf16 %v3936, %v3936
      %v3969 = vpack.c.bf16 %v3937, %v3937
      %v3970 = vpack.c.bf16 %v3938, %v3938
      %v3971 = vpack.c.bf16 %v3939, %v3939
      %v3972 = vpack.c.bf16 %v3940, %v3940
      %v3973 = vpack.c.bf16 %v3941, %v3941
      %v3974 = vpack.c.bf16 %v3942, %v3942
      %v3975 = vpack.c.bf16 %v3943, %v3943
      %v3976 = vpack.c.bf16 %v3944, %v3944
      %v3977 = vpack.c.bf16 %v3945, %v3945
      %v3978 = vpack.c.bf16 %v3946, %v3946
      %v3979 = vpack.c.bf16 %v3947, %v3947
      %v3980 = vpack.c.bf16 %v3948, %v3948
      %v3981 = vpack.c.bf16 %v3949, %v3949
      %v3982 = vpack.c.bf16 %v3950, %v3950
      %v3983 = vpack.c.bf16 %v3951, %v3951
      %v3984 = vpack.c.bf16 %v3952, %v3952
      %v3985 = vpack.c.bf16 %v3953, %v3953
      %v3986 = vpack.c.bf16 %v3954, %v3954
      %v3987 = vpack.c.bf16 %v3955, %v3955
      %v3988 = vpack.c.bf16 %v3956, %v3956
      %v3989 = vpack.c.bf16 %v3957, %v3957
      %v3990 = vpack.c.bf16 %v3958, %v3958
      %v3991 = vpack.c.bf16 %v3959, %v3959
      %v3992 = vpack.c.bf16 %v3960, %v3960
      %v3993 = vpack.c.bf16 %v3961, %v3961
      %v3995 = vshrl.u32 %v3962, 16
      %v3997 = vrot.slane %v3995, 7
      %v3998 = vshll.u32 %v3962, 16
      %v4000 = vor.u32 %v3997, %v3998
      %v4001 = vrot.slane %v3997, 4
      %v4003 = vshrl.u32 %v3963, 16
      %v4005 = vrot.slane %v4003, 7
      %v4006 = vshll.u32 %v3963, 16
      %v4008 = vor.u32 %v4005, %v4006
      %v4009 = vsel %vm401, %v4001, %v4008
      %v4010 = vrot.slane %v4005, 4
      %v4012 = vshrl.u32 %v3964, 16
      %v4014 = vrot.slane %v4012, 7
      %v4015 = vshll.u32 %v3964, 16
      %v4017 = vor.u32 %v4014, %v4015
      %v4018 = vrot.slane %v4014, 4
      %v4020 = vshrl.u32 %v3965, 16
      %v4022 = vrot.slane %v4020, 7
      %v4023 = vshll.u32 %v3965, 16
      %v4025 = vor.u32 %v4022, %v4023
      %v4026 = vsel %vm401, %v4018, %v4025
      %v4027 = vrot.slane %v4022, 4
      %v4029 = vshrl.u32 %v3966, 16
      %v4031 = vrot.slane %v4029, 7
      %v4032 = vshll.u32 %v3966, 16
      %v4034 = vor.u32 %v4031, %v4032
      %v4035 = vrot.slane %v4031, 4
      %v4037 = vshrl.u32 %v3967, 16
      %v4039 = vrot.slane %v4037, 7
      %v4040 = vshll.u32 %v3967, 16
      %v4042 = vor.u32 %v4039, %v4040
      %v4043 = vsel %vm401, %v4035, %v4042
      %v4044 = vrot.slane %v4039, 4
      %v4046 = vshrl.u32 %v3968, 16
      %v4048 = vrot.slane %v4046, 7
      %v4049 = vshll.u32 %v3968, 16
      %v4051 = vor.u32 %v4048, %v4049
      %v4052 = vrot.slane %v4048, 4
      %v4054 = vshrl.u32 %v3969, 16
      %v4056 = vrot.slane %v4054, 7
      %v4057 = vshll.u32 %v3969, 16
      %v4059 = vor.u32 %v4056, %v4057
      %v4060 = vsel %vm401, %v4052, %v4059
      %v4061 = vrot.slane %v4056, 4
      %v4063 = vshrl.u32 %v3970, 16
      %v4065 = vrot.slane %v4063, 7
      %v4066 = vshll.u32 %v3970, 16
      %v4068 = vor.u32 %v4065, %v4066
      %v4069 = vrot.slane %v4065, 4
      %v4071 = vshrl.u32 %v3971, 16
      %v4073 = vrot.slane %v4071, 7
      %v4074 = vshll.u32 %v3971, 16
      %v4076 = vor.u32 %v4073, %v4074
      %v4077 = vsel %vm401, %v4069, %v4076
      %v4078 = vrot.slane %v4073, 4
      %v4080 = vshrl.u32 %v3972, 16
      %v4082 = vrot.slane %v4080, 7
      %v4083 = vshll.u32 %v3972, 16
      %v4085 = vor.u32 %v4082, %v4083
      %v4086 = vrot.slane %v4082, 4
      %v4088 = vshrl.u32 %v3973, 16
      %v4090 = vrot.slane %v4088, 7
      %v4091 = vshll.u32 %v3973, 16
      %v4093 = vor.u32 %v4090, %v4091
      %v4094 = vsel %vm401, %v4086, %v4093
      %v4095 = vrot.slane %v4090, 4
      %v4097 = vshrl.u32 %v3974, 16
      %v4099 = vrot.slane %v4097, 7
      %v4100 = vshll.u32 %v3974, 16
      %v4102 = vor.u32 %v4099, %v4100
      %v4103 = vrot.slane %v4099, 4
      %v4105 = vshrl.u32 %v3975, 16
      %v4107 = vrot.slane %v4105, 7
      %v4108 = vshll.u32 %v3975, 16
      %v4110 = vor.u32 %v4107, %v4108
      %v4111 = vsel %vm401, %v4103, %v4110
      %v4112 = vrot.slane %v4107, 4
      %v4114 = vshrl.u32 %v3976, 16
      %v4116 = vrot.slane %v4114, 7
      %v4117 = vshll.u32 %v3976, 16
      %v4119 = vor.u32 %v4116, %v4117
      %v4120 = vrot.slane %v4116, 4
      %v4122 = vshrl.u32 %v3977, 16
      %v4124 = vrot.slane %v4122, 7
      %v4125 = vshll.u32 %v3977, 16
      %v4127 = vor.u32 %v4124, %v4125
      %v4128 = vsel %vm401, %v4120, %v4127
      %v4129 = vrot.slane %v4124, 4
      %v4131 = vshrl.u32 %v3978, 16
      %v4133 = vrot.slane %v4131, 7
      %v4134 = vshll.u32 %v3978, 16
      %v4136 = vor.u32 %v4133, %v4134
      %v4137 = vrot.slane %v4133, 4
      %v4139 = vshrl.u32 %v3979, 16
      %v4141 = vrot.slane %v4139, 7
      %v4142 = vshll.u32 %v3979, 16
      %v4144 = vor.u32 %v4141, %v4142
      %v4145 = vsel %vm401, %v4137, %v4144
      %v4146 = vrot.slane %v4141, 4
      %v4148 = vshrl.u32 %v3980, 16
      %v4150 = vrot.slane %v4148, 7
      %v4151 = vshll.u32 %v3980, 16
      %v4153 = vor.u32 %v4150, %v4151
      %v4154 = vrot.slane %v4150, 4
      %v4156 = vshrl.u32 %v3981, 16
      %v4158 = vrot.slane %v4156, 7
      %v4159 = vshll.u32 %v3981, 16
      %v4161 = vor.u32 %v4158, %v4159
      %v4162 = vsel %vm401, %v4154, %v4161
      %v4163 = vrot.slane %v4158, 4
      %v4165 = vshrl.u32 %v3982, 16
      %v4167 = vrot.slane %v4165, 7
      %v4168 = vshll.u32 %v3982, 16
      %v4170 = vor.u32 %v4167, %v4168
      %v4171 = vrot.slane %v4167, 4
      %v4173 = vshrl.u32 %v3983, 16
      %v4175 = vrot.slane %v4173, 7
      %v4176 = vshll.u32 %v3983, 16
      %v4178 = vor.u32 %v4175, %v4176
      %v4179 = vsel %vm401, %v4171, %v4178
      %v4180 = vrot.slane %v4175, 4
      %v4182 = vshrl.u32 %v3984, 16
      %v4184 = vrot.slane %v4182, 7
      %v4185 = vshll.u32 %v3984, 16
      %v4187 = vor.u32 %v4184, %v4185
      %v4188 = vrot.slane %v4184, 4
      %v4190 = vshrl.u32 %v3985, 16
      %v4192 = vrot.slane %v4190, 7
      %v4193 = vshll.u32 %v3985, 16
      %v4195 = vor.u32 %v4192, %v4193
      %v4196 = vsel %vm401, %v4188, %v4195
      %v4197 = vrot.slane %v4192, 4
      %v4199 = vshrl.u32 %v3986, 16
      %v4201 = vrot.slane %v4199, 7
      %v4202 = vshll.u32 %v3986, 16
      %v4204 = vor.u32 %v4201, %v4202
      %v4205 = vrot.slane %v4201, 4
      %v4207 = vshrl.u32 %v3987, 16
      %v4209 = vrot.slane %v4207, 7
      %v4210 = vshll.u32 %v3987, 16
      %v4212 = vor.u32 %v4209, %v4210
      %v4213 = vsel %vm401, %v4205, %v4212
      %v4214 = vrot.slane %v4209, 4
      %v4216 = vshrl.u32 %v3988, 16
      %v4218 = vrot.slane %v4216, 7
      %v4219 = vshll.u32 %v3988, 16
      %v4221 = vor.u32 %v4218, %v4219
      %v4222 = vrot.slane %v4218, 4
      %v4224 = vshrl.u32 %v3989, 16
      %v4226 = vrot.slane %v4224, 7
      %v4227 = vshll.u32 %v3989, 16
      %v4229 = vor.u32 %v4226, %v4227
      %v4230 = vsel %vm401, %v4222, %v4229
      %v4231 = vrot.slane %v4226, 4
      %v4233 = vshrl.u32 %v3990, 16
      %v4235 = vrot.slane %v4233, 7
      %v4236 = vshll.u32 %v3990, 16
      %v4238 = vor.u32 %v4235, %v4236
      %v4239 = vrot.slane %v4235, 4
      %v4241 = vshrl.u32 %v3991, 16
      %v4243 = vrot.slane %v4241, 7
      %v4244 = vshll.u32 %v3991, 16
      %v4246 = vor.u32 %v4243, %v4244
      %v4247 = vsel %vm401, %v4239, %v4246
      %v4248 = vrot.slane %v4243, 4
      %v4250 = vshrl.u32 %v3992, 16
      %v4252 = vrot.slane %v4250, 7
      %v4253 = vshll.u32 %v3992, 16
      %v4255 = vor.u32 %v4252, %v4253
      %v4256 = vrot.slane %v4252, 4
      %v4258 = vshrl.u32 %v3993, 16
      %v4260 = vrot.slane %v4258, 7
      %v4261 = vshll.u32 %v3993, 16
      %v4263 = vor.u32 %v4260, %v4261
      %v4264 = vsel %vm401, %v4256, %v4263
      %v4265 = vrot.slane %v4260, 4
      %v4314 = vld [vmem:[%s722] sm:$0xf]
      %v4315 = vsel %vm725, %v4000, %v4314
      %4316 = vst [vmem:[%s722] sm:$0xf] %v4315
      %4317 = vst.msk [vmem:[%s722 + $0x4] sm:$0xf] %vm226, %v4009
      %v4318 = vld [vmem:[%s722 + $0x8] sm:$0x1]
      %v4319 = vsel %vm256, %v4010, %v4318
      %4320 = vst [vmem:[%s722 + $0x8] sm:$0x1] %v4319
      %v4321 = vld [vmem:[%s722 + $0x10] sm:$0xf]
      %v4322 = vsel %vm725, %v4017, %v4321
      %4323 = vst [vmem:[%s722 + $0x10] sm:$0xf] %v4322
      %4324 = vst.msk [vmem:[%s722 + $0x14] sm:$0xf] %vm226, %v4026
      %v4325 = vld [vmem:[%s722 + $0x18] sm:$0x1]
      %v4326 = vsel %vm256, %v4027, %v4325
      %4327 = vst [vmem:[%s722 + $0x18] sm:$0x1] %v4326
      %v4328 = vld [vmem:[%s722 + $0x20] sm:$0xf]
      %v4329 = vsel %vm725, %v4034, %v4328
      %4330 = vst [vmem:[%s722 + $0x20] sm:$0xf] %v4329
      %4331 = vst.msk [vmem:[%s722 + $0x24] sm:$0xf] %vm226, %v4043
      %v4332 = vld [vmem:[%s722 + $0x28] sm:$0x1]
      %v4333 = vsel %vm256, %v4044, %v4332
      %4334 = vst [vmem:[%s722 + $0x28] sm:$0x1] %v4333
      %v4335 = vld [vmem:[%s722 + $0x30] sm:$0xf]
      %v4336 = vsel %vm725, %v4051, %v4335
      %4337 = vst [vmem:[%s722 + $0x30] sm:$0xf] %v4336
      %4338 = vst.msk [vmem:[%s722 + $0x34] sm:$0xf] %vm226, %v4060
      %v4339 = vld [vmem:[%s722 + $0x38] sm:$0x1]
      %v4340 = vsel %vm256, %v4061, %v4339
      %4341 = vst [vmem:[%s722 + $0x38] sm:$0x1] %v4340
      %v4342 = vld [vmem:[%s722 + $0x40] sm:$0xf]
      %v4343 = vsel %vm725, %v4068, %v4342
      %4344 = vst [vmem:[%s722 + $0x40] sm:$0xf] %v4343
      %4345 = vst.msk [vmem:[%s722 + $0x44] sm:$0xf] %vm226, %v4077
      %v4346 = vld [vmem:[%s722 + $0x48] sm:$0x1]
      %v4347 = vsel %vm256, %v4078, %v4346
      %4348 = vst [vmem:[%s722 + $0x48] sm:$0x1] %v4347
      %v4349 = vld [vmem:[%s722 + $0x50] sm:$0xf]
      %v4350 = vsel %vm725, %v4085, %v4349
      %4351 = vst [vmem:[%s722 + $0x50] sm:$0xf] %v4350
      %4352 = vst.msk [vmem:[%s722 + $0x54] sm:$0xf] %vm226, %v4094
      %v4353 = vld [vmem:[%s722 + $0x58] sm:$0x1]
      %v4354 = vsel %vm256, %v4095, %v4353
      %4355 = vst [vmem:[%s722 + $0x58] sm:$0x1] %v4354
      %v4356 = vld [vmem:[%s722 + $0x60] sm:$0xf]
      %v4357 = vsel %vm725, %v4102, %v4356
      %4358 = vst [vmem:[%s722 + $0x60] sm:$0xf] %v4357
      %4359 = vst.msk [vmem:[%s722 + $0x64] sm:$0xf] %vm226, %v4111
      %v4360 = vld [vmem:[%s722 + $0x68] sm:$0x1]
      %v4361 = vsel %vm256, %v4112, %v4360
      %4362 = vst [vmem:[%s722 + $0x68] sm:$0x1] %v4361
      %v4363 = vld [vmem:[%s722 + $0x70] sm:$0xf]
      %v4364 = vsel %vm725, %v4119, %v4363
      %4365 = vst [vmem:[%s722 + $0x70] sm:$0xf] %v4364
      %4366 = vst.msk [vmem:[%s722 + $0x74] sm:$0xf] %vm226, %v4128
      %v4367 = vld [vmem:[%s722 + $0x78] sm:$0x1]
      %v4368 = vsel %vm256, %v4129, %v4367
      %4369 = vst [vmem:[%s722 + $0x78] sm:$0x1] %v4368
      %v4370 = vld [vmem:[%s722 + $0x80] sm:$0xf]
      %v4371 = vsel %vm725, %v4136, %v4370
      %4372 = vst [vmem:[%s722 + $0x80] sm:$0xf] %v4371
      %4373 = vst.msk [vmem:[%s722 + $0x84] sm:$0xf] %vm226, %v4145
      %v4374 = vld [vmem:[%s722 + $0x88] sm:$0x1]
      %v4375 = vsel %vm256, %v4146, %v4374
      %4376 = vst [vmem:[%s722 + $0x88] sm:$0x1] %v4375
      %v4377 = vld [vmem:[%s722 + $0x90] sm:$0xf]
      %v4378 = vsel %vm725, %v4153, %v4377
      %4379 = vst [vmem:[%s722 + $0x90] sm:$0xf] %v4378
      %4380 = vst.msk [vmem:[%s722 + $0x94] sm:$0xf] %vm226, %v4162
      %v4381 = vld [vmem:[%s722 + $0x98] sm:$0x1]
      %v4382 = vsel %vm256, %v4163, %v4381
      %4383 = vst [vmem:[%s722 + $0x98] sm:$0x1] %v4382
      %v4384 = vld [vmem:[%s722 + $0xa0] sm:$0xf]
      %v4385 = vsel %vm725, %v4170, %v4384
      %4386 = vst [vmem:[%s722 + $0xa0] sm:$0xf] %v4385
      %4387 = vst.msk [vmem:[%s722 + $0xa4] sm:$0xf] %vm226, %v4179
      %v4388 = vld [vmem:[%s722 + $0xa8] sm:$0x1]
      %v4389 = vsel %vm256, %v4180, %v4388
      %4390 = vst [vmem:[%s722 + $0xa8] sm:$0x1] %v4389
      %v4391 = vld [vmem:[%s722 + $0xb0] sm:$0xf]
      %v4392 = vsel %vm725, %v4187, %v4391
      %4393 = vst [vmem:[%s722 + $0xb0] sm:$0xf] %v4392
      %4394 = vst.msk [vmem:[%s722 + $0xb4] sm:$0xf] %vm226, %v4196
      %v4395 = vld [vmem:[%s722 + $0xb8] sm:$0x1]
      %v4396 = vsel %vm256, %v4197, %v4395
      %4397 = vst [vmem:[%s722 + $0xb8] sm:$0x1] %v4396
      %v4398 = vld [vmem:[%s722 + $0xc0] sm:$0xf]
      %v4399 = vsel %vm725, %v4204, %v4398
      %4400 = vst [vmem:[%s722 + $0xc0] sm:$0xf] %v4399
      %4401 = vst.msk [vmem:[%s722 + $0xc4] sm:$0xf] %vm226, %v4213
      %v4402 = vld [vmem:[%s722 + $0xc8] sm:$0x1]
      %v4403 = vsel %vm256, %v4214, %v4402
      %4404 = vst [vmem:[%s722 + $0xc8] sm:$0x1] %v4403
      %v4405 = vld [vmem:[%s722 + $0xd0] sm:$0xf]
      %v4406 = vsel %vm725, %v4221, %v4405
      %4407 = vst [vmem:[%s722 + $0xd0] sm:$0xf] %v4406
      %4408 = vst.msk [vmem:[%s722 + $0xd4] sm:$0xf] %vm226, %v4230
      %v4409 = vld [vmem:[%s722 + $0xd8] sm:$0x1]
      %v4410 = vsel %vm256, %v4231, %v4409
      %4411 = vst [vmem:[%s722 + $0xd8] sm:$0x1] %v4410
      %v4412 = vld [vmem:[%s722 + $0xe0] sm:$0xf]
      %v4413 = vsel %vm725, %v4238, %v4412
      %4414 = vst [vmem:[%s722 + $0xe0] sm:$0xf] %v4413
      %4415 = vst.msk [vmem:[%s722 + $0xe4] sm:$0xf] %vm226, %v4247
      %v4416 = vld [vmem:[%s722 + $0xe8] sm:$0x1]
      %v4417 = vsel %vm256, %v4248, %v4416
      %4418 = vst [vmem:[%s722 + $0xe8] sm:$0x1] %v4417
      %v4419 = vld [vmem:[%s722 + $0xf0] sm:$0xf]
      %v4420 = vsel %vm725, %v4255, %v4419
      %4421 = vst [vmem:[%s722 + $0xf0] sm:$0xf] %v4420
      %4422 = vst.msk [vmem:[%s722 + $0xf4] sm:$0xf] %vm226, %v4264
      %v4423 = vld [vmem:[%s722 + $0xf8] sm:$0x1]
      %v4424 = vsel %vm256, %v4265, %v4423
      %4425 = vst [vmem:[%s722 + $0xf8] sm:$0x1] %v4424
      %4426 = vst.msk [vmem:[%s838] sm:$0xf] %vm226, %v3962
      %4427 = vst.msk [vmem:[%s838 + $0x4] sm:$0xf] %vm226, %v3963
      %4428 = vst.msk [vmem:[%s838 + $0x10] sm:$0xf] %vm226, %v3964
      %4429 = vst.msk [vmem:[%s838 + $0x14] sm:$0xf] %vm226, %v3965
      %4430 = vst.msk [vmem:[%s838 + $0x20] sm:$0xf] %vm226, %v3966
      %4431 = vst.msk [vmem:[%s838 + $0x24] sm:$0xf] %vm226, %v3967
      %4432 = vst.msk [vmem:[%s838 + $0x30] sm:$0xf] %vm226, %v3968
      %4433 = vst.msk [vmem:[%s838 + $0x34] sm:$0xf] %vm226, %v3969
      %4434 = vst.msk [vmem:[%s838 + $0x40] sm:$0xf] %vm226, %v3970
      %4435 = vst.msk [vmem:[%s838 + $0x44] sm:$0xf] %vm226, %v3971
      %4436 = vst.msk [vmem:[%s838 + $0x50] sm:$0xf] %vm226, %v3972
      %4437 = vst.msk [vmem:[%s838 + $0x54] sm:$0xf] %vm226, %v3973
      %4438 = vst.msk [vmem:[%s838 + $0x60] sm:$0xf] %vm226, %v3974
      %4439 = vst.msk [vmem:[%s838 + $0x64] sm:$0xf] %vm226, %v3975
      %4440 = vst.msk [vmem:[%s838 + $0x70] sm:$0xf] %vm226, %v3976
      %4441 = vst.msk [vmem:[%s838 + $0x74] sm:$0xf] %vm226, %v3977
      %4442 = vst.msk [vmem:[%s838 + $0x80] sm:$0xf] %vm226, %v3978
      %4443 = vst.msk [vmem:[%s838 + $0x84] sm:$0xf] %vm226, %v3979
      %4444 = vst.msk [vmem:[%s838 + $0x90] sm:$0xf] %vm226, %v3980
      %4445 = vst.msk [vmem:[%s838 + $0x94] sm:$0xf] %vm226, %v3981
      %4446 = vst.msk [vmem:[%s838 + $0xa0] sm:$0xf] %vm226, %v3982
      %4447 = vst.msk [vmem:[%s838 + $0xa4] sm:$0xf] %vm226, %v3983
      %4448 = vst.msk [vmem:[%s838 + $0xb0] sm:$0xf] %vm226, %v3984
      %4449 = vst.msk [vmem:[%s838 + $0xb4] sm:$0xf] %vm226, %v3985
      %4450 = vst.msk [vmem:[%s838 + $0xc0] sm:$0xf] %vm226, %v3986
      %4451 = vst.msk [vmem:[%s838 + $0xc4] sm:$0xf] %vm226, %v3987
      %4452 = vst.msk [vmem:[%s838 + $0xd0] sm:$0xf] %vm226, %v3988
      %4453 = vst.msk [vmem:[%s838 + $0xd4] sm:$0xf] %vm226, %v3989
      %4454 = vst.msk [vmem:[%s838 + $0xe0] sm:$0xf] %vm226, %v3990
      %4455 = vst.msk [vmem:[%s838 + $0xe4] sm:$0xf] %vm226, %v3991
      %4456 = vst.msk [vmem:[%s838 + $0xf0] sm:$0xf] %vm226, %v3992
      %4457 = vst.msk [vmem:[%s838 + $0xf4] sm:$0xf] %vm226, %v3993
      %v4458 = vrot.slane %v3995, 4
      %v4459 = vrot.slane %v3998, 5
      %v4460 = vor.u32 %v4458, %v4459
      %v4461 = vrot.slane %v4460, 4
      %v4462 = vrot.slane %v4006, 5
      %v4463 = vsel %vm873, %v4461, %v4462
      %v4464 = vrot.slane %v4003, 4
      %v4465 = vor.u32 %v4464, %v4462
      %v4466 = vrot.slane %v4465, 4
      %v4467 = vrot.slane %v4012, 4
      %v4468 = vrot.slane %v4015, 5
      %v4469 = vor.u32 %v4467, %v4468
      %v4470 = vrot.slane %v4469, 4
      %v4471 = vrot.slane %v4023, 5
      %v4472 = vsel %vm873, %v4470, %v4471
      %v4473 = vrot.slane %v4020, 4
      %v4474 = vor.u32 %v4473, %v4471
      %v4475 = vrot.slane %v4474, 4
      %v4476 = vrot.slane %v4029, 4
      %v4477 = vrot.slane %v4032, 5
      %v4478 = vor.u32 %v4476, %v4477
      %v4479 = vrot.slane %v4478, 4
      %v4480 = vrot.slane %v4040, 5
      %v4481 = vsel %vm873, %v4479, %v4480
      %v4482 = vrot.slane %v4037, 4
      %v4483 = vor.u32 %v4482, %v4480
      %v4484 = vrot.slane %v4483, 4
      %v4485 = vrot.slane %v4046, 4
      %v4486 = vrot.slane %v4049, 5
      %v4487 = vor.u32 %v4485, %v4486
      %v4488 = vrot.slane %v4487, 4
      %v4489 = vrot.slane %v4057, 5
      %v4490 = vsel %vm873, %v4488, %v4489
      %v4491 = vrot.slane %v4054, 4
      %v4492 = vor.u32 %v4491, %v4489
      %v4493 = vrot.slane %v4492, 4
      %v4494 = vrot.slane %v4063, 4
      %v4495 = vrot.slane %v4066, 5
      %v4496 = vor.u32 %v4494, %v4495
      %v4497 = vrot.slane %v4496, 4
      %v4498 = vrot.slane %v4074, 5
      %v4499 = vsel %vm873, %v4497, %v4498
      %v4500 = vrot.slane %v4071, 4
      %v4501 = vor.u32 %v4500, %v4498
      %v4502 = vrot.slane %v4501, 4
      %v4503 = vrot.slane %v4080, 4
      %v4504 = vrot.slane %v4083, 5
      %v4505 = vor.u32 %v4503, %v4504
      %v4506 = vrot.slane %v4505, 4
      %v4507 = vrot.slane %v4091, 5
      %v4508 = vsel %vm873, %v4506, %v4507
      %v4509 = vrot.slane %v4088, 4
      %v4510 = vor.u32 %v4509, %v4507
      %v4511 = vrot.slane %v4510, 4
      %v4512 = vrot.slane %v4097, 4
      %v4513 = vrot.slane %v4100, 5
      %v4514 = vor.u32 %v4512, %v4513
      %v4515 = vrot.slane %v4514, 4
      %v4516 = vrot.slane %v4108, 5
      %v4517 = vsel %vm873, %v4515, %v4516
      %v4518 = vrot.slane %v4105, 4
      %v4519 = vor.u32 %v4518, %v4516
      %v4520 = vrot.slane %v4519, 4
      %v4521 = vrot.slane %v4114, 4
      %v4522 = vrot.slane %v4117, 5
      %v4523 = vor.u32 %v4521, %v4522
      %v4524 = vrot.slane %v4523, 4
      %v4525 = vrot.slane %v4125, 5
      %v4526 = vsel %vm873, %v4524, %v4525
      %v4527 = vrot.slane %v4122, 4
      %v4528 = vor.u32 %v4527, %v4525
      %v4529 = vrot.slane %v4528, 4
      %v4530 = vrot.slane %v4131, 4
      %v4531 = vrot.slane %v4134, 5
      %v4532 = vor.u32 %v4530, %v4531
      %v4533 = vrot.slane %v4532, 4
      %v4534 = vrot.slane %v4142, 5
      %v4535 = vsel %vm873, %v4533, %v4534
      %v4536 = vrot.slane %v4139, 4
      %v4537 = vor.u32 %v4536, %v4534
      %v4538 = vrot.slane %v4537, 4
      %v4539 = vrot.slane %v4148, 4
      %v4540 = vrot.slane %v4151, 5
      %v4541 = vor.u32 %v4539, %v4540
      %v4542 = vrot.slane %v4541, 4
      %v4543 = vrot.slane %v4159, 5
      %v4544 = vsel %vm873, %v4542, %v4543
      %v4545 = vrot.slane %v4156, 4
      %v4546 = vor.u32 %v4545, %v4543
      %v4547 = vrot.slane %v4546, 4
      %v4548 = vrot.slane %v4165, 4
      %v4549 = vrot.slane %v4168, 5
      %v4550 = vor.u32 %v4548, %v4549
      %v4551 = vrot.slane %v4550, 4
      %v4552 = vrot.slane %v4176, 5
      %v4553 = vsel %vm873, %v4551, %v4552
      %v4554 = vrot.slane %v4173, 4
      %v4555 = vor.u32 %v4554, %v4552
      %v4556 = vrot.slane %v4555, 4
      %v4557 = vrot.slane %v4182, 4
      %v4558 = vrot.slane %v4185, 5
      %v4559 = vor.u32 %v4557, %v4558
      %v4560 = vrot.slane %v4559, 4
      %v4561 = vrot.slane %v4193, 5
      %v4562 = vsel %vm873, %v4560, %v4561
      %v4563 = vrot.slane %v4190, 4
      %v4564 = vor.u32 %v4563, %v4561
      %v4565 = vrot.slane %v4564, 4
      %v4566 = vrot.slane %v4199, 4
      %v4567 = vrot.slane %v4202, 5
      %v4568 = vor.u32 %v4566, %v4567
      %v4569 = vrot.slane %v4568, 4
      %v4570 = vrot.slane %v4210, 5
      %v4571 = vsel %vm873, %v4569, %v4570
      %v4572 = vrot.slane %v4207, 4
      %v4573 = vor.u32 %v4572, %v4570
      %v4574 = vrot.slane %v4573, 4
      %v4575 = vrot.slane %v4216, 4
      %v4576 = vrot.slane %v4219, 5
      %v4577 = vor.u32 %v4575, %v4576
      %v4578 = vrot.slane %v4577, 4
      %v4579 = vrot.slane %v4227, 5
      %v4580 = vsel %vm873, %v4578, %v4579
      %v4581 = vrot.slane %v4224, 4
      %v4582 = vor.u32 %v4581, %v4579
      %v4583 = vrot.slane %v4582, 4
      %v4584 = vrot.slane %v4233, 4
      %v4585 = vrot.slane %v4236, 5
      %v4586 = vor.u32 %v4584, %v4585
      %v4587 = vrot.slane %v4586, 4
      %v4588 = vrot.slane %v4244, 5
      %v4589 = vsel %vm873, %v4587, %v4588
      %v4590 = vrot.slane %v4241, 4
      %v4591 = vor.u32 %v4590, %v4588
      %v4592 = vrot.slane %v4591, 4
      %v4593 = vrot.slane %v4250, 4
      %v4594 = vrot.slane %v4253, 5
      %v4595 = vor.u32 %v4593, %v4594
      %v4596 = vrot.slane %v4595, 4
      %v4597 = vrot.slane %v4261, 5
      %v4598 = vsel %vm873, %v4596, %v4597
      %v4599 = vrot.slane %v4258, 4
      %v4600 = vor.u32 %v4599, %v4597
      %v4601 = vrot.slane %v4600, 4
      %4634 = vst.msk [vmem:[%s1050] sm:$0xf] %vm226, %v4463
      %v4635 = vld [vmem:[%s1050 + $0x4] sm:$0xf]
      %v4636 = vsel %vm1052, %v4466, %v4635
      %4637 = vst [vmem:[%s1050 + $0x4] sm:$0xf] %v4636
      %4638 = vst.msk [vmem:[%s1050 + $0x10] sm:$0xf] %vm226, %v4472
      %v4639 = vld [vmem:[%s1050 + $0x14] sm:$0xf]
      %v4640 = vsel %vm1052, %v4475, %v4639
      %4641 = vst [vmem:[%s1050 + $0x14] sm:$0xf] %v4640
      %4642 = vst.msk [vmem:[%s1050 + $0x20] sm:$0xf] %vm226, %v4481
      %v4643 = vld [vmem:[%s1050 + $0x24] sm:$0xf]
      %v4644 = vsel %vm1052, %v4484, %v4643
      %4645 = vst [vmem:[%s1050 + $0x24] sm:$0xf] %v4644
      %4646 = vst.msk [vmem:[%s1050 + $0x30] sm:$0xf] %vm226, %v4490
      %v4647 = vld [vmem:[%s1050 + $0x34] sm:$0xf]
      %v4648 = vsel %vm1052, %v4493, %v4647
      %4649 = vst [vmem:[%s1050 + $0x34] sm:$0xf] %v4648
      %4650 = vst.msk [vmem:[%s1050 + $0x40] sm:$0xf] %vm226, %v4499
      %v4651 = vld [vmem:[%s1050 + $0x44] sm:$0xf]
      %v4652 = vsel %vm1052, %v4502, %v4651
      %4653 = vst [vmem:[%s1050 + $0x44] sm:$0xf] %v4652
      %4654 = vst.msk [vmem:[%s1050 + $0x50] sm:$0xf] %vm226, %v4508
      %v4655 = vld [vmem:[%s1050 + $0x54] sm:$0xf]
      %v4656 = vsel %vm1052, %v4511, %v4655
      %4657 = vst [vmem:[%s1050 + $0x54] sm:$0xf] %v4656
      %4658 = vst.msk [vmem:[%s1050 + $0x60] sm:$0xf] %vm226, %v4517
      %v4659 = vld [vmem:[%s1050 + $0x64] sm:$0xf]
      %v4660 = vsel %vm1052, %v4520, %v4659
      %4661 = vst [vmem:[%s1050 + $0x64] sm:$0xf] %v4660
      %4662 = vst.msk [vmem:[%s1050 + $0x70] sm:$0xf] %vm226, %v4526
      %v4663 = vld [vmem:[%s1050 + $0x74] sm:$0xf]
      %v4664 = vsel %vm1052, %v4529, %v4663
      %4665 = vst [vmem:[%s1050 + $0x74] sm:$0xf] %v4664
      %4666 = vst.msk [vmem:[%s1050 + $0x80] sm:$0xf] %vm226, %v4535
      %v4667 = vld [vmem:[%s1050 + $0x84] sm:$0xf]
      %v4668 = vsel %vm1052, %v4538, %v4667
      %4669 = vst [vmem:[%s1050 + $0x84] sm:$0xf] %v4668
      %4670 = vst.msk [vmem:[%s1050 + $0x90] sm:$0xf] %vm226, %v4544
      %v4671 = vld [vmem:[%s1050 + $0x94] sm:$0xf]
      %v4672 = vsel %vm1052, %v4547, %v4671
      %4673 = vst [vmem:[%s1050 + $0x94] sm:$0xf] %v4672
      %4674 = vst.msk [vmem:[%s1050 + $0xa0] sm:$0xf] %vm226, %v4553
      %v4675 = vld [vmem:[%s1050 + $0xa4] sm:$0xf]
      %v4676 = vsel %vm1052, %v4556, %v4675
      %4677 = vst [vmem:[%s1050 + $0xa4] sm:$0xf] %v4676
      %4678 = vst.msk [vmem:[%s1050 + $0xb0] sm:$0xf] %vm226, %v4562
      %v4679 = vld [vmem:[%s1050 + $0xb4] sm:$0xf]
      %v4680 = vsel %vm1052, %v4565, %v4679
      %4681 = vst [vmem:[%s1050 + $0xb4] sm:$0xf] %v4680
      %4682 = vst.msk [vmem:[%s1050 + $0xc0] sm:$0xf] %vm226, %v4571
      %v4683 = vld [vmem:[%s1050 + $0xc4] sm:$0xf]
      %v4684 = vsel %vm1052, %v4574, %v4683
      %4685 = vst [vmem:[%s1050 + $0xc4] sm:$0xf] %v4684
      %4686 = vst.msk [vmem:[%s1050 + $0xd0] sm:$0xf] %vm226, %v4580
      %v4687 = vld [vmem:[%s1050 + $0xd4] sm:$0xf]
      %v4688 = vsel %vm1052, %v4583, %v4687
      %4689 = vst [vmem:[%s1050 + $0xd4] sm:$0xf] %v4688
      %4690 = vst.msk [vmem:[%s1050 + $0xe0] sm:$0xf] %vm226, %v4589
      %v4691 = vld [vmem:[%s1050 + $0xe4] sm:$0xf]
      %v4692 = vsel %vm1052, %v4592, %v4691
      %4693 = vst [vmem:[%s1050 + $0xe4] sm:$0xf] %v4692
      %4694 = vst.msk [vmem:[%s1050 + $0xf0] sm:$0xf] %vm226, %v4598
      %v4695 = vld [vmem:[%s1050 + $0xf4] sm:$0xf]
      %v4696 = vsel %vm1052, %v4601, %v4695
      %4697 = vst [vmem:[%s1050 + $0xf4] sm:$0xf] %v4696
      %v4698 = vld [vmem:[#allocation2] sm:$0xf]
      %v4699 = vld [vmem:[#allocation2 + $0x4] sm:$0xf]
      %v4700 = vld [vmem:[#allocation2 + $0x8] sm:$0xf]
      %v4701 = vld [vmem:[#allocation2 + $0xc] sm:$0xf]
      %v4702 = vld [vmem:[#allocation2 + $0x10] sm:$0xf]
      %v4703 = vld [vmem:[#allocation2 + $0x14] sm:$0xf]
      %v4704 = vld [vmem:[#allocation2 + $0x18] sm:$0xf]
      %v4705 = vld [vmem:[#allocation2 + $0x1c] sm:$0xf]
      %v4706 = vld [vmem:[#allocation2 + $0x20] sm:$0xf]
      %v4707 = vld [vmem:[#allocation2 + $0x24] sm:$0xf]
      %v4708 = vld [vmem:[#allocation2 + $0x28] sm:$0xf]
      %v4709 = vld [vmem:[#allocation2 + $0x2c] sm:$0xf]
      %v4710 = vld [vmem:[#allocation2 + $0x30] sm:$0xf]
      %v4711 = vld [vmem:[#allocation2 + $0x34] sm:$0xf]
      %v4712 = vld [vmem:[#allocation2 + $0x38] sm:$0xf]
      %v4713 = vld [vmem:[#allocation2 + $0x3c] sm:$0xf]
      %v4714 = vld [vmem:[#allocation2 + $0x40] sm:$0xf]
      %v4715 = vld [vmem:[#allocation2 + $0x44] sm:$0xf]
      %v4716 = vld [vmem:[#allocation2 + $0x48] sm:$0xf]
      %v4717 = vld [vmem:[#allocation2 + $0x4c] sm:$0xf]
      %v4718 = vld [vmem:[#allocation2 + $0x50] sm:$0xf]
      %v4719 = vld [vmem:[#allocation2 + $0x54] sm:$0xf]
      %v4720 = vld [vmem:[#allocation2 + $0x58] sm:$0xf]
      %v4721 = vld [vmem:[#allocation2 + $0x5c] sm:$0xf]
      %v4722 = vld [vmem:[#allocation2 + $0x60] sm:$0xf]
      %v4723 = vld [vmem:[#allocation2 + $0x64] sm:$0xf]
      %v4724 = vld [vmem:[#allocation2 + $0x68] sm:$0xf]
      %v4725 = vld [vmem:[#allocation2 + $0x6c] sm:$0xf]
      %v4726 = vld [vmem:[#allocation2 + $0x70] sm:$0xf]
      %v4727 = vld [vmem:[#allocation2 + $0x74] sm:$0xf]
      %v4728 = vld [vmem:[#allocation2 + $0x78] sm:$0xf]
      %v4729 = vld [vmem:[#allocation2 + $0x7c] sm:$0xf]
      %v4730 = vld [vmem:[#allocation2 + $0x80] sm:$0xf]
      %v4731 = vld [vmem:[#allocation2 + $0x84] sm:$0xf]
      %v4732 = vld [vmem:[#allocation2 + $0x88] sm:$0xf]
      %v4733 = vld [vmem:[#allocation2 + $0x8c] sm:$0xf]
      %v4734 = vld [vmem:[#allocation2 + $0x90] sm:$0xf]
      %v4735 = vld [vmem:[#allocation2 + $0x94] sm:$0xf]
      %v4736 = vld [vmem:[#allocation2 + $0x98] sm:$0xf]
      %v4737 = vld [vmem:[#allocation2 + $0x9c] sm:$0xf]
      %v4738 = vld [vmem:[#allocation2 + $0xa0] sm:$0xf]
      %v4739 = vld [vmem:[#allocation2 + $0xa4] sm:$0xf]
      %v4740 = vld [vmem:[#allocation2 + $0xa8] sm:$0xf]
      %v4741 = vld [vmem:[#allocation2 + $0xac] sm:$0xf]
      %v4742 = vld [vmem:[#allocation2 + $0xb0] sm:$0xf]
      %v4743 = vld [vmem:[#allocation2 + $0xb4] sm:$0xf]
      %v4744 = vld [vmem:[#allocation2 + $0xb8] sm:$0xf]
      %v4745 = vld [vmem:[#allocation2 + $0xbc] sm:$0xf]
      %v4746 = vld [vmem:[#allocation2 + $0xc0] sm:$0xf]
      %v4747 = vld [vmem:[#allocation2 + $0xc4] sm:$0xf]
      %v4748 = vld [vmem:[#allocation2 + $0xc8] sm:$0xf]
      %v4749 = vld [vmem:[#allocation2 + $0xcc] sm:$0xf]
      %v4750 = vld [vmem:[#allocation2 + $0xd0] sm:$0xf]
      %v4751 = vld [vmem:[#allocation2 + $0xd4] sm:$0xf]
      %v4752 = vld [vmem:[#allocation2 + $0xd8] sm:$0xf]
      %v4753 = vld [vmem:[#allocation2 + $0xdc] sm:$0xf]
      %v4754 = vld [vmem:[#allocation2 + $0xe0] sm:$0xf]
      %v4755 = vld [vmem:[#allocation2 + $0xe4] sm:$0xf]
      %v4756 = vld [vmem:[#allocation2 + $0xe8] sm:$0xf]
      %v4757 = vld [vmem:[#allocation2 + $0xec] sm:$0xf]
      %v4758 = vld [vmem:[#allocation2 + $0xf0] sm:$0xf]
      %v4759 = vld [vmem:[#allocation2 + $0xf4] sm:$0xf]
      %v4760 = vld [vmem:[#allocation2 + $0xf8] sm:$0xf]
      %v4761 = vld [vmem:[#allocation2 + $0xfc] sm:$0xf]
      %v4762 = vld [vmem:[#allocation2 + $0x100] sm:$0xf]
      %v4763 = vld [vmem:[#allocation2 + $0x104] sm:$0xf]
      %v4764 = vld [vmem:[#allocation2 + $0x108] sm:$0xf]
      %v4765 = vld [vmem:[#allocation2 + $0x10c] sm:$0xf]
      %v4766 = vld [vmem:[#allocation2 + $0x110] sm:$0xf]
      %v4767 = vld [vmem:[#allocation2 + $0x114] sm:$0xf]
      %v4768 = vld [vmem:[#allocation2 + $0x118] sm:$0xf]
      %v4769 = vld [vmem:[#allocation2 + $0x11c] sm:$0xf]
      %v4770 = vld [vmem:[#allocation3] sm:$0xf]
      %v4771 = vld [vmem:[#allocation3 + $0x4] sm:$0xf]
      %v4772 = vld [vmem:[#allocation3 + $0x8] sm:$0xf]
      %v4773 = vld [vmem:[#allocation3 + $0xc] sm:$0xf]
      %v4774 = vld [vmem:[#allocation3 + $0x10] sm:$0xf]
      %v4775 = vld [vmem:[#allocation3 + $0x14] sm:$0xf]
      %v4776 = vld [vmem:[#allocation3 + $0x18] sm:$0xf]
      %v4777 = vld [vmem:[#allocation3 + $0x1c] sm:$0xf]
      %v4778 = vld [vmem:[#allocation3 + $0x20] sm:$0xf]
      %v4779 = vld [vmem:[#allocation3 + $0x24] sm:$0xf]
      %v4780 = vld [vmem:[#allocation3 + $0x28] sm:$0xf]
      %v4781 = vld [vmem:[#allocation3 + $0x2c] sm:$0xf]
      %v4782 = vld [vmem:[#allocation3 + $0x30] sm:$0xf]
      %v4783 = vld [vmem:[#allocation3 + $0x34] sm:$0xf]
      %v4784 = vld [vmem:[#allocation3 + $0x38] sm:$0xf]
      %v4785 = vld [vmem:[#allocation3 + $0x3c] sm:$0xf]
      %v4786 = vld [vmem:[#allocation3 + $0x40] sm:$0xf]
      %v4787 = vld [vmem:[#allocation3 + $0x44] sm:$0xf]
      %v4788 = vld [vmem:[#allocation3 + $0x48] sm:$0xf]
      %v4789 = vld [vmem:[#allocation3 + $0x4c] sm:$0xf]
      %v4790 = vld [vmem:[#allocation3 + $0x50] sm:$0xf]
      %v4791 = vld [vmem:[#allocation3 + $0x54] sm:$0xf]
      %v4792 = vld [vmem:[#allocation3 + $0x58] sm:$0xf]
      %v4793 = vld [vmem:[#allocation3 + $0x5c] sm:$0xf]
      %v4794 = vld [vmem:[#allocation3 + $0x60] sm:$0xf]
      %v4795 = vld [vmem:[#allocation3 + $0x64] sm:$0xf]
      %v4796 = vld [vmem:[#allocation3 + $0x68] sm:$0xf]
      %v4797 = vld [vmem:[#allocation3 + $0x6c] sm:$0xf]
      %v4798 = vld [vmem:[#allocation3 + $0x70] sm:$0xf]
      %v4799 = vld [vmem:[#allocation3 + $0x74] sm:$0xf]
      %v4800 = vld [vmem:[#allocation3 + $0x78] sm:$0xf]
      %v4801 = vld [vmem:[#allocation3 + $0x7c] sm:$0xf]
      %v4802 = vld [vmem:[#allocation3 + $0x80] sm:$0xf]
      %v4803 = vld [vmem:[#allocation3 + $0x84] sm:$0xf]
      %v4804 = vld [vmem:[#allocation3 + $0x88] sm:$0xf]
      %v4805 = vld [vmem:[#allocation3 + $0x8c] sm:$0xf]
      %v4806 = vld [vmem:[#allocation3 + $0x90] sm:$0xf]
      %v4807 = vld [vmem:[#allocation3 + $0x94] sm:$0xf]
      %v4808 = vld [vmem:[#allocation3 + $0x98] sm:$0xf]
      %v4809 = vld [vmem:[#allocation3 + $0x9c] sm:$0xf]
      %v4810 = vld [vmem:[#allocation3 + $0xa0] sm:$0xf]
      %v4811 = vld [vmem:[#allocation3 + $0xa4] sm:$0xf]
      %v4812 = vld [vmem:[#allocation3 + $0xa8] sm:$0xf]
      %v4813 = vld [vmem:[#allocation3 + $0xac] sm:$0xf]
      %v4814 = vld [vmem:[#allocation3 + $0xb0] sm:$0xf]
      %v4815 = vld [vmem:[#allocation3 + $0xb4] sm:$0xf]
      %v4816 = vld [vmem:[#allocation3 + $0xb8] sm:$0xf]
      %v4817 = vld [vmem:[#allocation3 + $0xbc] sm:$0xf]
      %v4818 = vld [vmem:[#allocation3 + $0xc0] sm:$0xf]
      %v4819 = vld [vmem:[#allocation3 + $0xc4] sm:$0xf]
      %v4820 = vld [vmem:[#allocation3 + $0xc8] sm:$0xf]
      %v4821 = vld [vmem:[#allocation3 + $0xcc] sm:$0xf]
      %v4822 = vld [vmem:[#allocation3 + $0xd0] sm:$0xf]
      %v4823 = vld [vmem:[#allocation3 + $0xd4] sm:$0xf]
      %v4824 = vld [vmem:[#allocation3 + $0xd8] sm:$0xf]
      %v4825 = vld [vmem:[#allocation3 + $0xdc] sm:$0xf]
      %v4826 = vld [vmem:[#allocation3 + $0xe0] sm:$0xf]
      %v4827 = vld [vmem:[#allocation3 + $0xe4] sm:$0xf]
      %v4828 = vld [vmem:[#allocation3 + $0xe8] sm:$0xf]
      %v4829 = vld [vmem:[#allocation3 + $0xec] sm:$0xf]
      %v4830 = vld [vmem:[#allocation3 + $0xf0] sm:$0xf]
      %v4831 = vld [vmem:[#allocation3 + $0xf4] sm:$0xf]
      %v4832 = vld [vmem:[#allocation3 + $0xf8] sm:$0xf]
      %v4833 = vld [vmem:[#allocation3 + $0xfc] sm:$0xf]
      %v4834 = vld [vmem:[#allocation3 + $0x100] sm:$0xf]
      %v4835 = vld [vmem:[#allocation3 + $0x104] sm:$0xf]
      %v4836 = vld [vmem:[#allocation3 + $0x108] sm:$0xf]
      %v4837 = vld [vmem:[#allocation3 + $0x10c] sm:$0xf]
      %v4838 = vld [vmem:[#allocation3 + $0x110] sm:$0xf]
      %v4839 = vld [vmem:[#allocation3 + $0x114] sm:$0xf]
      %v4840 = vld [vmem:[#allocation3 + $0x118] sm:$0xf]
      %v4841 = vld [vmem:[#allocation3 + $0x11c] sm:$0xf]
      %v4842 = vld [vmem:[#allocation4] sm:$0xf]
      %v4843 = vld [vmem:[#allocation4 + $0x4] sm:$0xf]
      %v4844 = vld [vmem:[#allocation4 + $0x8] sm:$0xf]
      %v4845 = vld [vmem:[#allocation4 + $0xc] sm:$0xf]
      %v4846 = vld [vmem:[#allocation4 + $0x10] sm:$0xf]
      %v4847 = vld [vmem:[#allocation4 + $0x14] sm:$0xf]
      %v4848 = vld [vmem:[#allocation4 + $0x18] sm:$0xf]
      %v4849 = vld [vmem:[#allocation4 + $0x1c] sm:$0xf]
      %v4850 = vld [vmem:[#allocation4 + $0x20] sm:$0xf]
      %v4851 = vld [vmem:[#allocation4 + $0x24] sm:$0xf]
      %v4852 = vld [vmem:[#allocation4 + $0x28] sm:$0xf]
      %v4853 = vld [vmem:[#allocation4 + $0x2c] sm:$0xf]
      %v4854 = vld [vmem:[#allocation4 + $0x30] sm:$0xf]
      %v4855 = vld [vmem:[#allocation4 + $0x34] sm:$0xf]
      %v4856 = vld [vmem:[#allocation4 + $0x38] sm:$0xf]
      %v4857 = vld [vmem:[#allocation4 + $0x3c] sm:$0xf]
      %v4858 = vld [vmem:[#allocation4 + $0x40] sm:$0xf]
      %v4859 = vld [vmem:[#allocation4 + $0x44] sm:$0xf]
      %v4860 = vld [vmem:[#allocation4 + $0x48] sm:$0xf]
      %v4861 = vld [vmem:[#allocation4 + $0x4c] sm:$0xf]
      %v4862 = vld [vmem:[#allocation4 + $0x50] sm:$0xf]
      %v4863 = vld [vmem:[#allocation4 + $0x54] sm:$0xf]
      %v4864 = vld [vmem:[#allocation4 + $0x58] sm:$0xf]
      %v4865 = vld [vmem:[#allocation4 + $0x5c] sm:$0xf]
      %v4866 = vld [vmem:[#allocation4 + $0x60] sm:$0xf]
      %v4867 = vld [vmem:[#allocation4 + $0x64] sm:$0xf]
      %v4868 = vld [vmem:[#allocation4 + $0x68] sm:$0xf]
      %v4869 = vld [vmem:[#allocation4 + $0x6c] sm:$0xf]
      %v4870 = vld [vmem:[#allocation4 + $0x70] sm:$0xf]
      %v4871 = vld [vmem:[#allocation4 + $0x74] sm:$0xf]
      %v4872 = vld [vmem:[#allocation4 + $0x78] sm:$0xf]
      %v4873 = vld [vmem:[#allocation4 + $0x7c] sm:$0xf]
      %v4874 = vld [vmem:[#allocation4 + $0x80] sm:$0xf]
      %v4875 = vld [vmem:[#allocation4 + $0x84] sm:$0xf]
      %v4876 = vld [vmem:[#allocation4 + $0x88] sm:$0xf]
      %v4877 = vld [vmem:[#allocation4 + $0x8c] sm:$0xf]
      %v4878 = vld [vmem:[#allocation4 + $0x90] sm:$0xf]
      %v4879 = vld [vmem:[#allocation4 + $0x94] sm:$0xf]
      %v4880 = vld [vmem:[#allocation4 + $0x98] sm:$0xf]
      %v4881 = vld [vmem:[#allocation4 + $0x9c] sm:$0xf]
      %v4882 = vld [vmem:[#allocation4 + $0xa0] sm:$0xf]
      %v4883 = vld [vmem:[#allocation4 + $0xa4] sm:$0xf]
      %v4884 = vld [vmem:[#allocation4 + $0xa8] sm:$0xf]
      %v4885 = vld [vmem:[#allocation4 + $0xac] sm:$0xf]
      %v4886 = vld [vmem:[#allocation4 + $0xb0] sm:$0xf]
      %v4887 = vld [vmem:[#allocation4 + $0xb4] sm:$0xf]
      %v4888 = vld [vmem:[#allocation4 + $0xb8] sm:$0xf]
      %v4889 = vld [vmem:[#allocation4 + $0xbc] sm:$0xf]
      %v4890 = vld [vmem:[#allocation4 + $0xc0] sm:$0xf]
      %v4891 = vld [vmem:[#allocation4 + $0xc4] sm:$0xf]
      %v4892 = vld [vmem:[#allocation4 + $0xc8] sm:$0xf]
      %v4893 = vld [vmem:[#allocation4 + $0xcc] sm:$0xf]
      %v4894 = vld [vmem:[#allocation4 + $0xd0] sm:$0xf]
      %v4895 = vld [vmem:[#allocation4 + $0xd4] sm:$0xf]
      %v4896 = vld [vmem:[#allocation4 + $0xd8] sm:$0xf]
      %v4897 = vld [vmem:[#allocation4 + $0xdc] sm:$0xf]
      %v4898 = vld [vmem:[#allocation4 + $0xe0] sm:$0xf]
      %v4899 = vld [vmem:[#allocation4 + $0xe4] sm:$0xf]
      %v4900 = vld [vmem:[#allocation4 + $0xe8] sm:$0xf]
      %v4901 = vld [vmem:[#allocation4 + $0xec] sm:$0xf]
      %v4902 = vld [vmem:[#allocation4 + $0xf0] sm:$0xf]
      %v4903 = vld [vmem:[#allocation4 + $0xf4] sm:$0xf]
      %v4904 = vld [vmem:[#allocation4 + $0xf8] sm:$0xf]
      %v4905 = vld [vmem:[#allocation4 + $0xfc] sm:$0xf]
      %v4906 = vld [vmem:[#allocation4 + $0x100] sm:$0xf]
      %v4907 = vld [vmem:[#allocation4 + $0x104] sm:$0xf]
      %v4908 = vld [vmem:[#allocation4 + $0x108] sm:$0xf]
      %v4909 = vld [vmem:[#allocation4 + $0x10c] sm:$0xf]
      %v4910 = vld [vmem:[#allocation4 + $0x110] sm:$0xf]
      %v4911 = vld [vmem:[#allocation4 + $0x114] sm:$0xf]
      %v4912 = vld [vmem:[#allocation4 + $0x118] sm:$0xf]
      %v4913 = vld [vmem:[#allocation4 + $0x11c] sm:$0xf]
      %v4914 = vld [vmem:[%s3] sm:$0xf]
      %v4915 = vld [vmem:[%s3 + $0x4] sm:$0xf]
      %s4916 = scalar_lea.vmem %s3, 8
      %v4917 = vld [vmem:[%s4916] sm:$0xf]
      %v4918 = vld [vmem:[%s4916 + $0x4] sm:$0xf]
      %v4983 = vunpack.c.l.b16 %v4770
      %v4984 = vunpack.c.l.b16 %v4771
      %v4985 = vunpack.c.l.b16 %v4772
      %v4986 = vunpack.c.l.b16 %v4773
      %v4987 = vunpack.c.l.b16 %v4774
      %v4988 = vunpack.c.l.b16 %v4775
      %v4989 = vunpack.c.l.b16 %v4776
      %v4990 = vunpack.c.l.b16 %v4777
      %v4991 = vunpack.c.l.b16 %v4778
      %v4992 = vunpack.c.l.b16 %v4779
      %v4993 = vunpack.c.l.b16 %v4780
      %v4994 = vunpack.c.l.b16 %v4781
      %v4995 = vunpack.c.l.b16 %v4782
      %v4996 = vunpack.c.l.b16 %v4783
      %v4997 = vunpack.c.l.b16 %v4784
      %v4998 = vunpack.c.l.b16 %v4785
      %v4999 = vunpack.c.l.b16 %v4786
      %v5000 = vunpack.c.l.b16 %v4787
      %v5001 = vunpack.c.l.b16 %v4788
      %v5002 = vunpack.c.l.b16 %v4789
      %v5003 = vunpack.c.l.b16 %v4790
      %v5004 = vunpack.c.l.b16 %v4791
      %v5005 = vunpack.c.l.b16 %v4792
      %v5006 = vunpack.c.l.b16 %v4793
      %v5007 = vunpack.c.l.b16 %v4794
      %v5008 = vunpack.c.l.b16 %v4795
      %v5009 = vunpack.c.l.b16 %v4796
      %v5010 = vunpack.c.l.b16 %v4797
      %v5011 = vunpack.c.l.b16 %v4798
      %v5012 = vunpack.c.l.b16 %v4799
      %v5013 = vunpack.c.l.b16 %v4800
      %v5014 = vunpack.c.l.b16 %v4801
      %v5015 = vunpack.c.l.b16 %v4802
      %v5016 = vunpack.c.l.b16 %v4803
      %v5017 = vunpack.c.l.b16 %v4804
      %v5018 = vunpack.c.l.b16 %v4805
      %v5019 = vunpack.c.l.b16 %v4806
      %v5020 = vunpack.c.l.b16 %v4807
      %v5021 = vunpack.c.l.b16 %v4808
      %v5022 = vunpack.c.l.b16 %v4809
      %v5023 = vunpack.c.l.b16 %v4810
      %v5024 = vunpack.c.l.b16 %v4811
      %v5025 = vunpack.c.l.b16 %v4812
      %v5026 = vunpack.c.l.b16 %v4813
      %v5027 = vunpack.c.l.b16 %v4814
      %v5028 = vunpack.c.l.b16 %v4815
      %v5029 = vunpack.c.l.b16 %v4816
      %v5030 = vunpack.c.l.b16 %v4817
      %v5031 = vunpack.c.l.b16 %v4818
      %v5032 = vunpack.c.l.b16 %v4819
      %v5033 = vunpack.c.l.b16 %v4820
      %v5034 = vunpack.c.l.b16 %v4821
      %v5035 = vunpack.c.l.b16 %v4822
      %v5036 = vunpack.c.l.b16 %v4823
      %v5037 = vunpack.c.l.b16 %v4824
      %v5038 = vunpack.c.l.b16 %v4825
      %v5039 = vunpack.c.l.b16 %v4826
      %v5040 = vunpack.c.l.b16 %v4827
      %v5041 = vunpack.c.l.b16 %v4828
      %v5042 = vunpack.c.l.b16 %v4829
      %v5043 = vunpack.c.l.b16 %v4830
      %v5044 = vunpack.c.l.b16 %v4831
      %v5045 = vunpack.c.l.b16 %v4832
      %v5046 = vunpack.c.l.b16 %v4833
      %v5047 = vpack.c.b16 %v4984, %v4983
      %v5048 = vpack.c.b16 %v4986, %v4985
      %v5049 = vpack.c.b16 %v4988, %v4987
      %v5050 = vpack.c.b16 %v4990, %v4989
      %v5051 = vpack.c.b16 %v4992, %v4991
      %v5052 = vpack.c.b16 %v4994, %v4993
      %v5053 = vpack.c.b16 %v4996, %v4995
      %v5054 = vpack.c.b16 %v4998, %v4997
      %v5055 = vpack.c.b16 %v5000, %v4999
      %v5056 = vpack.c.b16 %v5002, %v5001
      %v5057 = vpack.c.b16 %v5004, %v5003
      %v5058 = vpack.c.b16 %v5006, %v5005
      %v5059 = vpack.c.b16 %v5008, %v5007
      %v5060 = vpack.c.b16 %v5010, %v5009
      %v5061 = vpack.c.b16 %v5012, %v5011
      %v5062 = vpack.c.b16 %v5014, %v5013
      %v5063 = vpack.c.b16 %v5016, %v5015
      %v5064 = vpack.c.b16 %v5018, %v5017
      %v5065 = vpack.c.b16 %v5020, %v5019
      %v5066 = vpack.c.b16 %v5022, %v5021
      %v5067 = vpack.c.b16 %v5024, %v5023
      %v5068 = vpack.c.b16 %v5026, %v5025
      %v5069 = vpack.c.b16 %v5028, %v5027
      %v5070 = vpack.c.b16 %v5030, %v5029
      %v5071 = vpack.c.b16 %v5032, %v5031
      %v5072 = vpack.c.b16 %v5034, %v5033
      %v5073 = vpack.c.b16 %v5036, %v5035
      %v5074 = vpack.c.b16 %v5038, %v5037
      %v5075 = vpack.c.b16 %v5040, %v5039
      %v5076 = vpack.c.b16 %v5042, %v5041
      %v5077 = vpack.c.b16 %v5044, %v5043
      %v5078 = vpack.c.b16 %v5046, %v5045
      %v5081 = vunpack.c.l.b16 %v4917
      %v5082 = vunpack.c.l.b16 %v4918
      %v5083 = vpack.c.b16 %v5082, %v5081
      %v5086 = vsel %vm1503, %v5047, 0
      %v5089 = vsel %vm1503, %v5048, 0
      %v5092 = vsel %vm1503, %v5049, 0
      %v5095 = vsel %vm1503, %v5050, 0
      %v5098 = vsel %vm1503, %v5051, 0
      %v5101 = vsel %vm1503, %v5052, 0
      %v5104 = vsel %vm1503, %v5053, 0
      %v5107 = vsel %vm1503, %v5054, 0
      %v5110 = vsel %vm1503, %v5055, 0
      %v5113 = vsel %vm1503, %v5056, 0
      %v5116 = vsel %vm1503, %v5057, 0
      %v5119 = vsel %vm1503, %v5058, 0
      %v5122 = vsel %vm1503, %v5059, 0
      %v5125 = vsel %vm1503, %v5060, 0
      %v5128 = vsel %vm1503, %v5061, 0
      %v5131 = vsel %vm1503, %v5062, 0
      %v5134 = vsel %vm1503, %v5063, 0
      %v5137 = vsel %vm1503, %v5064, 0
      %v5140 = vsel %vm1503, %v5065, 0
      %v5143 = vsel %vm1503, %v5066, 0
      %v5146 = vsel %vm1503, %v5067, 0
      %v5149 = vsel %vm1503, %v5068, 0
      %v5152 = vsel %vm1503, %v5069, 0
      %v5155 = vsel %vm1503, %v5070, 0
      %v5158 = vsel %vm1503, %v5071, 0
      %v5161 = vsel %vm1503, %v5072, 0
      %v5164 = vsel %vm1503, %v5073, 0
      %v5167 = vsel %vm1503, %v5074, 0
      %v5170 = vsel %vm1503, %v5075, 0
      %v5173 = vsel %vm1503, %v5076, 0
      %v5176 = vsel %vm1503, %v5077, 0
      %v5179 = vsel %vm1503, %v5078, 0
      %5181 = vmatpush.bf16.msra.mxu0 0
      %5182 = vmatpush.bf16.msra.mxu0 0
      %5183 = vmatpush.bf16.msra.mxu0 0
      %5184 = vmatpush.bf16.msra.mxu0 0
      %5185 = vmatpush.bf16.msra.mxu0 0
      %5186 = vmatpush.bf16.msra.mxu0 0
      %5187 = vmatpush.bf16.msra.mxu0 0
      %5188 = vmatpush.bf16.msra.mxu0 %v5083
      %5189 = vmatmul.bf16.gmra.mxu0 %v5086
      %v5190 = vpop.f32.mrf.mxu0
      %v5191 = vadd.f32 0.0, %v5190
      %v5192 = vpop.f32.mrf.mxu0
      %v5193 = vadd.f32 0.0, %v5192
      %5194 = vmatmul.bf16.gmra.mxu0 %v5089
      %v5195 = vpop.f32.mrf.mxu0
      %v5196 = vpop.f32.mrf.mxu0
      %5197 = vmatmul.bf16.gmra.mxu0 %v5092
      %v5198 = vpop.f32.mrf.mxu0
      %v5199 = vadd.f32 0.0, %v5198
      %v5200 = vpop.f32.mrf.mxu0
      %v5201 = vadd.f32 0.0, %v5200
      %5202 = vmatmul.bf16.gmra.mxu0 %v5095
      %v5203 = vpop.f32.mrf.mxu0
      %v5204 = vpop.f32.mrf.mxu0
      %5205 = vmatmul.bf16.gmra.mxu0 %v5098
      %v5206 = vpop.f32.mrf.mxu0
      %v5207 = vadd.f32 0.0, %v5206
      %v5208 = vpop.f32.mrf.mxu0
      %v5209 = vadd.f32 0.0, %v5208
      %5210 = vmatmul.bf16.gmra.mxu0 %v5101
      %v5211 = vpop.f32.mrf.mxu0
      %v5212 = vpop.f32.mrf.mxu0
      %5213 = vmatmul.bf16.gmra.mxu0 %v5104
      %v5214 = vpop.f32.mrf.mxu0
      %v5215 = vadd.f32 0.0, %v5214
      %v5216 = vpop.f32.mrf.mxu0
      %v5217 = vadd.f32 0.0, %v5216
      %5218 = vmatmul.bf16.gmra.mxu0 %v5107
      %v5219 = vpop.f32.mrf.mxu0
      %v5220 = vpop.f32.mrf.mxu0
      %5221 = vmatmul.bf16.gmra.mxu0 %v5110
      %v5222 = vpop.f32.mrf.mxu0
      %v5223 = vadd.f32 0.0, %v5222
      %v5224 = vpop.f32.mrf.mxu0
      %v5225 = vadd.f32 0.0, %v5224
      %5226 = vmatmul.bf16.gmra.mxu0 %v5113
      %v5227 = vpop.f32.mrf.mxu0
      %v5228 = vpop.f32.mrf.mxu0
      %5229 = vmatmul.bf16.gmra.mxu0 %v5116
      %v5230 = vpop.f32.mrf.mxu0
      %v5231 = vadd.f32 0.0, %v5230
      %v5232 = vpop.f32.mrf.mxu0
      %v5233 = vadd.f32 0.0, %v5232
      %5234 = vmatmul.bf16.gmra.mxu0 %v5119
      %v5235 = vpop.f32.mrf.mxu0
      %v5236 = vpop.f32.mrf.mxu0
      %5237 = vmatmul.bf16.gmra.mxu0 %v5122
      %v5238 = vpop.f32.mrf.mxu0
      %v5239 = vadd.f32 0.0, %v5238
      %v5240 = vpop.f32.mrf.mxu0
      %v5241 = vadd.f32 0.0, %v5240
      %5242 = vmatmul.bf16.gmra.mxu0 %v5125
      %v5243 = vpop.f32.mrf.mxu0
      %v5244 = vpop.f32.mrf.mxu0
      %5245 = vmatmul.bf16.gmra.mxu0 %v5128
      %v5246 = vpop.f32.mrf.mxu0
      %v5247 = vadd.f32 0.0, %v5246
      %v5248 = vpop.f32.mrf.mxu0
      %v5249 = vadd.f32 0.0, %v5248
      %5250 = vmatmul.bf16.gmra.mxu0 %v5131
      %v5251 = vpop.f32.mrf.mxu0
      %v5252 = vpop.f32.mrf.mxu0
      %5253 = vmatmul.bf16.gmra.mxu0 %v5134
      %v5254 = vpop.f32.mrf.mxu0
      %v5255 = vadd.f32 0.0, %v5254
      %v5256 = vpop.f32.mrf.mxu0
      %v5257 = vadd.f32 0.0, %v5256
      %5258 = vmatmul.bf16.gmra.mxu0 %v5137
      %v5259 = vpop.f32.mrf.mxu0
      %v5260 = vpop.f32.mrf.mxu0
      %5261 = vmatmul.bf16.gmra.mxu0 %v5140
      %v5262 = vpop.f32.mrf.mxu0
      %v5263 = vadd.f32 0.0, %v5262
      %v5264 = vpop.f32.mrf.mxu0
      %v5265 = vadd.f32 0.0, %v5264
      %5266 = vmatmul.bf16.gmra.mxu0 %v5143
      %v5267 = vpop.f32.mrf.mxu0
      %v5268 = vpop.f32.mrf.mxu0
      %5269 = vmatmul.bf16.gmra.mxu0 %v5146
      %v5270 = vpop.f32.mrf.mxu0
      %v5271 = vadd.f32 0.0, %v5270
      %v5272 = vpop.f32.mrf.mxu0
      %v5273 = vadd.f32 0.0, %v5272
      %5274 = vmatmul.bf16.gmra.mxu0 %v5149
      %v5275 = vpop.f32.mrf.mxu0
      %v5276 = vpop.f32.mrf.mxu0
      %5277 = vmatmul.bf16.gmra.mxu0 %v5152
      %v5278 = vpop.f32.mrf.mxu0
      %v5279 = vadd.f32 0.0, %v5278
      %v5280 = vpop.f32.mrf.mxu0
      %v5281 = vadd.f32 0.0, %v5280
      %5282 = vmatmul.bf16.gmra.mxu0 %v5155
      %v5283 = vpop.f32.mrf.mxu0
      %v5284 = vpop.f32.mrf.mxu0
      %5285 = vmatmul.bf16.gmra.mxu0 %v5158
      %v5286 = vpop.f32.mrf.mxu0
      %v5287 = vadd.f32 0.0, %v5286
      %v5288 = vpop.f32.mrf.mxu0
      %v5289 = vadd.f32 0.0, %v5288
      %5290 = vmatmul.bf16.gmra.mxu0 %v5161
      %v5291 = vpop.f32.mrf.mxu0
      %v5292 = vpop.f32.mrf.mxu0
      %5293 = vmatmul.bf16.gmra.mxu0 %v5164
      %v5294 = vpop.f32.mrf.mxu0
      %v5295 = vadd.f32 0.0, %v5294
      %v5296 = vpop.f32.mrf.mxu0
      %v5297 = vadd.f32 0.0, %v5296
      %5298 = vmatmul.bf16.gmra.mxu0 %v5167
      %v5299 = vpop.f32.mrf.mxu0
      %v5300 = vpop.f32.mrf.mxu0
      %5301 = vmatmul.bf16.gmra.mxu0 %v5170
      %v5302 = vpop.f32.mrf.mxu0
      %v5303 = vadd.f32 0.0, %v5302
      %v5304 = vpop.f32.mrf.mxu0
      %v5305 = vadd.f32 0.0, %v5304
      %5306 = vmatmul.bf16.gmra.mxu0 %v5173
      %v5307 = vpop.f32.mrf.mxu0
      %v5308 = vpop.f32.mrf.mxu0
      %5309 = vmatmul.bf16.gmra.mxu0 %v5176
      %v5310 = vpop.f32.mrf.mxu0
      %v5311 = vadd.f32 0.0, %v5310
      %v5312 = vpop.f32.mrf.mxu0
      %v5313 = vadd.f32 0.0, %v5312
      %5314 = vmatmul.bf16.gmra.mxu0 %v5179
      %v5315 = vpop.f32.mrf.mxu0
      %v5316 = vpop.f32.mrf.mxu0
      %5317 = vdwg.mxu0
      %v5382 = vunpack.c.l.b16 %v4698
      %v5383 = vunpack.c.l.b16 %v4699
      %v5384 = vunpack.c.l.b16 %v4700
      %v5385 = vunpack.c.l.b16 %v4701
      %v5386 = vunpack.c.l.b16 %v4702
      %v5387 = vunpack.c.l.b16 %v4703
      %v5388 = vunpack.c.l.b16 %v4704
      %v5389 = vunpack.c.l.b16 %v4705
      %v5390 = vunpack.c.l.b16 %v4706
      %v5391 = vunpack.c.l.b16 %v4707
      %v5392 = vunpack.c.l.b16 %v4708
      %v5393 = vunpack.c.l.b16 %v4709
      %v5394 = vunpack.c.l.b16 %v4710
      %v5395 = vunpack.c.l.b16 %v4711
      %v5396 = vunpack.c.l.b16 %v4712
      %v5397 = vunpack.c.l.b16 %v4713
      %v5398 = vunpack.c.l.b16 %v4714
      %v5399 = vunpack.c.l.b16 %v4715
      %v5400 = vunpack.c.l.b16 %v4716
      %v5401 = vunpack.c.l.b16 %v4717
      %v5402 = vunpack.c.l.b16 %v4718
      %v5403 = vunpack.c.l.b16 %v4719
      %v5404 = vunpack.c.l.b16 %v4720
      %v5405 = vunpack.c.l.b16 %v4721
      %v5406 = vunpack.c.l.b16 %v4722
      %v5407 = vunpack.c.l.b16 %v4723
      %v5408 = vunpack.c.l.b16 %v4724
      %v5409 = vunpack.c.l.b16 %v4725
      %v5410 = vunpack.c.l.b16 %v4726
      %v5411 = vunpack.c.l.b16 %v4727
      %v5412 = vunpack.c.l.b16 %v4728
      %v5413 = vunpack.c.l.b16 %v4729
      %v5414 = vunpack.c.l.b16 %v4730
      %v5415 = vunpack.c.l.b16 %v4731
      %v5416 = vunpack.c.l.b16 %v4732
      %v5417 = vunpack.c.l.b16 %v4733
      %v5418 = vunpack.c.l.b16 %v4734
      %v5419 = vunpack.c.l.b16 %v4735
      %v5420 = vunpack.c.l.b16 %v4736
      %v5421 = vunpack.c.l.b16 %v4737
      %v5422 = vunpack.c.l.b16 %v4738
      %v5423 = vunpack.c.l.b16 %v4739
      %v5424 = vunpack.c.l.b16 %v4740
      %v5425 = vunpack.c.l.b16 %v4741
      %v5426 = vunpack.c.l.b16 %v4742
      %v5427 = vunpack.c.l.b16 %v4743
      %v5428 = vunpack.c.l.b16 %v4744
      %v5429 = vunpack.c.l.b16 %v4745
      %v5430 = vunpack.c.l.b16 %v4746
      %v5431 = vunpack.c.l.b16 %v4747
      %v5432 = vunpack.c.l.b16 %v4748
      %v5433 = vunpack.c.l.b16 %v4749
      %v5434 = vunpack.c.l.b16 %v4750
      %v5435 = vunpack.c.l.b16 %v4751
      %v5436 = vunpack.c.l.b16 %v4752
      %v5437 = vunpack.c.l.b16 %v4753
      %v5438 = vunpack.c.l.b16 %v4754
      %v5439 = vunpack.c.l.b16 %v4755
      %v5440 = vunpack.c.l.b16 %v4756
      %v5441 = vunpack.c.l.b16 %v4757
      %v5442 = vunpack.c.l.b16 %v4758
      %v5443 = vunpack.c.l.b16 %v4759
      %v5444 = vunpack.c.l.b16 %v4760
      %v5445 = vunpack.c.l.b16 %v4761
      %v5446 = vpack.c.b16 %v5383, %v5382
      %v5447 = vpack.c.b16 %v5385, %v5384
      %v5448 = vpack.c.b16 %v5387, %v5386
      %v5449 = vpack.c.b16 %v5389, %v5388
      %v5450 = vpack.c.b16 %v5391, %v5390
      %v5451 = vpack.c.b16 %v5393, %v5392
      %v5452 = vpack.c.b16 %v5395, %v5394
      %v5453 = vpack.c.b16 %v5397, %v5396
      %v5454 = vpack.c.b16 %v5399, %v5398
      %v5455 = vpack.c.b16 %v5401, %v5400
      %v5456 = vpack.c.b16 %v5403, %v5402
      %v5457 = vpack.c.b16 %v5405, %v5404
      %v5458 = vpack.c.b16 %v5407, %v5406
      %v5459 = vpack.c.b16 %v5409, %v5408
      %v5460 = vpack.c.b16 %v5411, %v5410
      %v5461 = vpack.c.b16 %v5413, %v5412
      %v5462 = vpack.c.b16 %v5415, %v5414
      %v5463 = vpack.c.b16 %v5417, %v5416
      %v5464 = vpack.c.b16 %v5419, %v5418
      %v5465 = vpack.c.b16 %v5421, %v5420
      %v5466 = vpack.c.b16 %v5423, %v5422
      %v5467 = vpack.c.b16 %v5425, %v5424
      %v5468 = vpack.c.b16 %v5427, %v5426
      %v5469 = vpack.c.b16 %v5429, %v5428
      %v5470 = vpack.c.b16 %v5431, %v5430
      %v5471 = vpack.c.b16 %v5433, %v5432
      %v5472 = vpack.c.b16 %v5435, %v5434
      %v5473 = vpack.c.b16 %v5437, %v5436
      %v5474 = vpack.c.b16 %v5439, %v5438
      %v5475 = vpack.c.b16 %v5441, %v5440
      %v5476 = vpack.c.b16 %v5443, %v5442
      %v5477 = vpack.c.b16 %v5445, %v5444
      %v5480 = vunpack.c.l.b16 %v4914
      %v5481 = vunpack.c.l.b16 %v4915
      %v5482 = vpack.c.b16 %v5481, %v5480
      %v5485 = vsel %vm1503, %v5446, 0
      %v5488 = vsel %vm1503, %v5447, 0
      %v5491 = vsel %vm1503, %v5448, 0
      %v5494 = vsel %vm1503, %v5449, 0
      %v5497 = vsel %vm1503, %v5450, 0
      %v5500 = vsel %vm1503, %v5451, 0
      %v5503 = vsel %vm1503, %v5452, 0
      %v5506 = vsel %vm1503, %v5453, 0
      %v5509 = vsel %vm1503, %v5454, 0
      %v5512 = vsel %vm1503, %v5455, 0
      %v5515 = vsel %vm1503, %v5456, 0
      %v5518 = vsel %vm1503, %v5457, 0
      %v5521 = vsel %vm1503, %v5458, 0
      %v5524 = vsel %vm1503, %v5459, 0
      %v5527 = vsel %vm1503, %v5460, 0
      %v5530 = vsel %vm1503, %v5461, 0
      %v5533 = vsel %vm1503, %v5462, 0
      %v5536 = vsel %vm1503, %v5463, 0
      %v5539 = vsel %vm1503, %v5464, 0
      %v5542 = vsel %vm1503, %v5465, 0
      %v5545 = vsel %vm1503, %v5466, 0
      %v5548 = vsel %vm1503, %v5467, 0
      %v5551 = vsel %vm1503, %v5468, 0
      %v5554 = vsel %vm1503, %v5469, 0
      %v5557 = vsel %vm1503, %v5470, 0
      %v5560 = vsel %vm1503, %v5471, 0
      %v5563 = vsel %vm1503, %v5472, 0
      %v5566 = vsel %vm1503, %v5473, 0
      %v5569 = vsel %vm1503, %v5474, 0
      %v5572 = vsel %vm1503, %v5475, 0
      %v5575 = vsel %vm1503, %v5476, 0
      %v5578 = vsel %vm1503, %v5477, 0
      %5580 = vmatpush.bf16.msra.mxu0 0
      %5581 = vmatpush.bf16.msra.mxu0 0
      %5582 = vmatpush.bf16.msra.mxu0 0
      %5583 = vmatpush.bf16.msra.mxu0 0
      %5584 = vmatpush.bf16.msra.mxu0 0
      %5585 = vmatpush.bf16.msra.mxu0 0
      %5586 = vmatpush.bf16.msra.mxu0 0
      %5587 = vmatpush.bf16.msra.mxu0 %v5482
      %5588 = vmatmul.bf16.gmra.mxu0 %v5485
      %v5589 = vpop.f32.mrf.mxu0
      %v5590 = vadd.f32 %v5191, %v5589
      %v5591 = vpop.f32.mrf.mxu0
      %v5592 = vadd.f32 %v5193, %v5591
      %5593 = vmatmul.bf16.gmra.mxu0 %v5488
      %v5594 = vpop.f32.mrf.mxu0
      %v5595 = vpop.f32.mrf.mxu0
      %5596 = vmatmul.bf16.gmra.mxu0 %v5491
      %v5597 = vpop.f32.mrf.mxu0
      %v5598 = vadd.f32 %v5199, %v5597
      %v5599 = vpop.f32.mrf.mxu0
      %v5600 = vadd.f32 %v5201, %v5599
      %5601 = vmatmul.bf16.gmra.mxu0 %v5494
      %v5602 = vpop.f32.mrf.mxu0
      %v5603 = vpop.f32.mrf.mxu0
      %5604 = vmatmul.bf16.gmra.mxu0 %v5497
      %v5605 = vpop.f32.mrf.mxu0
      %v5606 = vadd.f32 %v5207, %v5605
      %v5607 = vpop.f32.mrf.mxu0
      %v5608 = vadd.f32 %v5209, %v5607
      %5609 = vmatmul.bf16.gmra.mxu0 %v5500
      %v5610 = vpop.f32.mrf.mxu0
      %v5611 = vpop.f32.mrf.mxu0
      %5612 = vmatmul.bf16.gmra.mxu0 %v5503
      %v5613 = vpop.f32.mrf.mxu0
      %v5614 = vadd.f32 %v5215, %v5613
      %v5615 = vpop.f32.mrf.mxu0
      %v5616 = vadd.f32 %v5217, %v5615
      %5617 = vmatmul.bf16.gmra.mxu0 %v5506
      %v5618 = vpop.f32.mrf.mxu0
      %v5619 = vpop.f32.mrf.mxu0
      %5620 = vmatmul.bf16.gmra.mxu0 %v5509
      %v5621 = vpop.f32.mrf.mxu0
      %v5622 = vadd.f32 %v5223, %v5621
      %v5623 = vpop.f32.mrf.mxu0
      %v5624 = vadd.f32 %v5225, %v5623
      %5625 = vmatmul.bf16.gmra.mxu0 %v5512
      %v5626 = vpop.f32.mrf.mxu0
      %v5627 = vpop.f32.mrf.mxu0
      %5628 = vmatmul.bf16.gmra.mxu0 %v5515
      %v5629 = vpop.f32.mrf.mxu0
      %v5630 = vadd.f32 %v5231, %v5629
      %v5631 = vpop.f32.mrf.mxu0
      %v5632 = vadd.f32 %v5233, %v5631
      %5633 = vmatmul.bf16.gmra.mxu0 %v5518
      %v5634 = vpop.f32.mrf.mxu0
      %v5635 = vpop.f32.mrf.mxu0
      %5636 = vmatmul.bf16.gmra.mxu0 %v5521
      %v5637 = vpop.f32.mrf.mxu0
      %v5638 = vadd.f32 %v5239, %v5637
      %v5639 = vpop.f32.mrf.mxu0
      %v5640 = vadd.f32 %v5241, %v5639
      %5641 = vmatmul.bf16.gmra.mxu0 %v5524
      %v5642 = vpop.f32.mrf.mxu0
      %v5643 = vpop.f32.mrf.mxu0
      %5644 = vmatmul.bf16.gmra.mxu0 %v5527
      %v5645 = vpop.f32.mrf.mxu0
      %v5646 = vadd.f32 %v5247, %v5645
      %v5647 = vpop.f32.mrf.mxu0
      %v5648 = vadd.f32 %v5249, %v5647
      %5649 = vmatmul.bf16.gmra.mxu0 %v5530
      %v5650 = vpop.f32.mrf.mxu0
      %v5651 = vpop.f32.mrf.mxu0
      %5652 = vmatmul.bf16.gmra.mxu0 %v5533
      %v5653 = vpop.f32.mrf.mxu0
      %v5654 = vadd.f32 %v5255, %v5653
      %v5655 = vpop.f32.mrf.mxu0
      %v5656 = vadd.f32 %v5257, %v5655
      %5657 = vmatmul.bf16.gmra.mxu0 %v5536
      %v5658 = vpop.f32.mrf.mxu0
      %v5659 = vpop.f32.mrf.mxu0
      %5660 = vmatmul.bf16.gmra.mxu0 %v5539
      %v5661 = vpop.f32.mrf.mxu0
      %v5662 = vadd.f32 %v5263, %v5661
      %v5663 = vpop.f32.mrf.mxu0
      %v5664 = vadd.f32 %v5265, %v5663
      %5665 = vmatmul.bf16.gmra.mxu0 %v5542
      %v5666 = vpop.f32.mrf.mxu0
      %v5667 = vpop.f32.mrf.mxu0
      %5668 = vmatmul.bf16.gmra.mxu0 %v5545
      %v5669 = vpop.f32.mrf.mxu0
      %v5670 = vadd.f32 %v5271, %v5669
      %v5671 = vpop.f32.mrf.mxu0
      %v5672 = vadd.f32 %v5273, %v5671
      %5673 = vmatmul.bf16.gmra.mxu0 %v5548
      %v5674 = vpop.f32.mrf.mxu0
      %v5675 = vpop.f32.mrf.mxu0
      %5676 = vmatmul.bf16.gmra.mxu0 %v5551
      %v5677 = vpop.f32.mrf.mxu0
      %v5678 = vadd.f32 %v5279, %v5677
      %v5679 = vpop.f32.mrf.mxu0
      %v5680 = vadd.f32 %v5281, %v5679
      %5681 = vmatmul.bf16.gmra.mxu0 %v5554
      %v5682 = vpop.f32.mrf.mxu0
      %v5683 = vpop.f32.mrf.mxu0
      %5684 = vmatmul.bf16.gmra.mxu0 %v5557
      %v5685 = vpop.f32.mrf.mxu0
      %v5686 = vadd.f32 %v5287, %v5685
      %v5687 = vpop.f32.mrf.mxu0
      %v5688 = vadd.f32 %v5289, %v5687
      %5689 = vmatmul.bf16.gmra.mxu0 %v5560
      %v5690 = vpop.f32.mrf.mxu0
      %v5691 = vpop.f32.mrf.mxu0
      %5692 = vmatmul.bf16.gmra.mxu0 %v5563
      %v5693 = vpop.f32.mrf.mxu0
      %v5694 = vadd.f32 %v5295, %v5693
      %v5695 = vpop.f32.mrf.mxu0
      %v5696 = vadd.f32 %v5297, %v5695
      %5697 = vmatmul.bf16.gmra.mxu0 %v5566
      %v5698 = vpop.f32.mrf.mxu0
      %v5699 = vpop.f32.mrf.mxu0
      %5700 = vmatmul.bf16.gmra.mxu0 %v5569
      %v5701 = vpop.f32.mrf.mxu0
      %v5702 = vadd.f32 %v5303, %v5701
      %v5703 = vpop.f32.mrf.mxu0
      %v5704 = vadd.f32 %v5305, %v5703
      %5705 = vmatmul.bf16.gmra.mxu0 %v5572
      %v5706 = vpop.f32.mrf.mxu0
      %v5707 = vpop.f32.mrf.mxu0
      %5708 = vmatmul.bf16.gmra.mxu0 %v5575
      %v5709 = vpop.f32.mrf.mxu0
      %v5710 = vadd.f32 %v5311, %v5709
      %v5711 = vpop.f32.mrf.mxu0
      %v5712 = vadd.f32 %v5313, %v5711
      %5713 = vmatmul.bf16.gmra.mxu0 %v5578
      %v5714 = vpop.f32.mrf.mxu0
      %v5715 = vpop.f32.mrf.mxu0
      %5716 = vdwg.mxu0
      %s5717 = scalar_lea.vmem %s3, 16
      %v5718 = vld [vmem:[%s5717] sm:$0xf]
      %v5719 = vld [vmem:[%s5717 + $0x4] sm:$0xf]
      %v5784 = vunpack.c.l.b16 %v4842
      %v5785 = vunpack.c.l.b16 %v4843
      %v5786 = vunpack.c.l.b16 %v4844
      %v5787 = vunpack.c.l.b16 %v4845
      %v5788 = vunpack.c.l.b16 %v4846
      %v5789 = vunpack.c.l.b16 %v4847
      %v5790 = vunpack.c.l.b16 %v4848
      %v5791 = vunpack.c.l.b16 %v4849
      %v5792 = vunpack.c.l.b16 %v4850
      %v5793 = vunpack.c.l.b16 %v4851
      %v5794 = vunpack.c.l.b16 %v4852
      %v5795 = vunpack.c.l.b16 %v4853
      %v5796 = vunpack.c.l.b16 %v4854
      %v5797 = vunpack.c.l.b16 %v4855
      %v5798 = vunpack.c.l.b16 %v4856
      %v5799 = vunpack.c.l.b16 %v4857
      %v5800 = vunpack.c.l.b16 %v4858
      %v5801 = vunpack.c.l.b16 %v4859
      %v5802 = vunpack.c.l.b16 %v4860
      %v5803 = vunpack.c.l.b16 %v4861
      %v5804 = vunpack.c.l.b16 %v4862
      %v5805 = vunpack.c.l.b16 %v4863
      %v5806 = vunpack.c.l.b16 %v4864
      %v5807 = vunpack.c.l.b16 %v4865
      %v5808 = vunpack.c.l.b16 %v4866
      %v5809 = vunpack.c.l.b16 %v4867
      %v5810 = vunpack.c.l.b16 %v4868
      %v5811 = vunpack.c.l.b16 %v4869
      %v5812 = vunpack.c.l.b16 %v4870
      %v5813 = vunpack.c.l.b16 %v4871
      %v5814 = vunpack.c.l.b16 %v4872
      %v5815 = vunpack.c.l.b16 %v4873
      %v5816 = vunpack.c.l.b16 %v4874
      %v5817 = vunpack.c.l.b16 %v4875
      %v5818 = vunpack.c.l.b16 %v4876
      %v5819 = vunpack.c.l.b16 %v4877
      %v5820 = vunpack.c.l.b16 %v4878
      %v5821 = vunpack.c.l.b16 %v4879
      %v5822 = vunpack.c.l.b16 %v4880
      %v5823 = vunpack.c.l.b16 %v4881
      %v5824 = vunpack.c.l.b16 %v4882
      %v5825 = vunpack.c.l.b16 %v4883
      %v5826 = vunpack.c.l.b16 %v4884
      %v5827 = vunpack.c.l.b16 %v4885
      %v5828 = vunpack.c.l.b16 %v4886
      %v5829 = vunpack.c.l.b16 %v4887
      %v5830 = vunpack.c.l.b16 %v4888
      %v5831 = vunpack.c.l.b16 %v4889
      %v5832 = vunpack.c.l.b16 %v4890
      %v5833 = vunpack.c.l.b16 %v4891
      %v5834 = vunpack.c.l.b16 %v4892
      %v5835 = vunpack.c.l.b16 %v4893
      %v5836 = vunpack.c.l.b16 %v4894
      %v5837 = vunpack.c.l.b16 %v4895
      %v5838 = vunpack.c.l.b16 %v4896
      %v5839 = vunpack.c.l.b16 %v4897
      %v5840 = vunpack.c.l.b16 %v4898
      %v5841 = vunpack.c.l.b16 %v4899
      %v5842 = vunpack.c.l.b16 %v4900
      %v5843 = vunpack.c.l.b16 %v4901
      %v5844 = vunpack.c.l.b16 %v4902
      %v5845 = vunpack.c.l.b16 %v4903
      %v5846 = vunpack.c.l.b16 %v4904
      %v5847 = vunpack.c.l.b16 %v4905
      %v5848 = vpack.c.b16 %v5785, %v5784
      %v5849 = vpack.c.b16 %v5787, %v5786
      %v5850 = vpack.c.b16 %v5789, %v5788
      %v5851 = vpack.c.b16 %v5791, %v5790
      %v5852 = vpack.c.b16 %v5793, %v5792
      %v5853 = vpack.c.b16 %v5795, %v5794
      %v5854 = vpack.c.b16 %v5797, %v5796
      %v5855 = vpack.c.b16 %v5799, %v5798
      %v5856 = vpack.c.b16 %v5801, %v5800
      %v5857 = vpack.c.b16 %v5803, %v5802
      %v5858 = vpack.c.b16 %v5805, %v5804
      %v5859 = vpack.c.b16 %v5807, %v5806
      %v5860 = vpack.c.b16 %v5809, %v5808
      %v5861 = vpack.c.b16 %v5811, %v5810
      %v5862 = vpack.c.b16 %v5813, %v5812
      %v5863 = vpack.c.b16 %v5815, %v5814
      %v5864 = vpack.c.b16 %v5817, %v5816
      %v5865 = vpack.c.b16 %v5819, %v5818
      %v5866 = vpack.c.b16 %v5821, %v5820
      %v5867 = vpack.c.b16 %v5823, %v5822
      %v5868 = vpack.c.b16 %v5825, %v5824
      %v5869 = vpack.c.b16 %v5827, %v5826
      %v5870 = vpack.c.b16 %v5829, %v5828
      %v5871 = vpack.c.b16 %v5831, %v5830
      %v5872 = vpack.c.b16 %v5833, %v5832
      %v5873 = vpack.c.b16 %v5835, %v5834
      %v5874 = vpack.c.b16 %v5837, %v5836
      %v5875 = vpack.c.b16 %v5839, %v5838
      %v5876 = vpack.c.b16 %v5841, %v5840
      %v5877 = vpack.c.b16 %v5843, %v5842
      %v5878 = vpack.c.b16 %v5845, %v5844
      %v5879 = vpack.c.b16 %v5847, %v5846
      %v5882 = vunpack.c.l.b16 %v5718
      %v5883 = vunpack.c.l.b16 %v5719
      %v5884 = vpack.c.b16 %v5883, %v5882
      %v5887 = vsel %vm1503, %v5848, 0
      %v5890 = vsel %vm1503, %v5849, 0
      %v5893 = vsel %vm1503, %v5850, 0
      %v5896 = vsel %vm1503, %v5851, 0
      %v5899 = vsel %vm1503, %v5852, 0
      %v5902 = vsel %vm1503, %v5853, 0
      %v5905 = vsel %vm1503, %v5854, 0
      %v5908 = vsel %vm1503, %v5855, 0
      %v5911 = vsel %vm1503, %v5856, 0
      %v5914 = vsel %vm1503, %v5857, 0
      %v5917 = vsel %vm1503, %v5858, 0
      %v5920 = vsel %vm1503, %v5859, 0
      %v5923 = vsel %vm1503, %v5860, 0
      %v5926 = vsel %vm1503, %v5861, 0
      %v5929 = vsel %vm1503, %v5862, 0
      %v5932 = vsel %vm1503, %v5863, 0
      %v5935 = vsel %vm1503, %v5864, 0
      %v5938 = vsel %vm1503, %v5865, 0
      %v5941 = vsel %vm1503, %v5866, 0
      %v5944 = vsel %vm1503, %v5867, 0
      %v5947 = vsel %vm1503, %v5868, 0
      %v5950 = vsel %vm1503, %v5869, 0
      %v5953 = vsel %vm1503, %v5870, 0
      %v5956 = vsel %vm1503, %v5871, 0
      %v5959 = vsel %vm1503, %v5872, 0
      %v5962 = vsel %vm1503, %v5873, 0
      %v5965 = vsel %vm1503, %v5874, 0
      %v5968 = vsel %vm1503, %v5875, 0
      %v5971 = vsel %vm1503, %v5876, 0
      %v5974 = vsel %vm1503, %v5877, 0
      %v5977 = vsel %vm1503, %v5878, 0
      %v5980 = vsel %vm1503, %v5879, 0
      %5982 = vmatpush.bf16.msra.mxu0 0
      %5983 = vmatpush.bf16.msra.mxu0 0
      %5984 = vmatpush.bf16.msra.mxu0 0
      %5985 = vmatpush.bf16.msra.mxu0 0
      %5986 = vmatpush.bf16.msra.mxu0 0
      %5987 = vmatpush.bf16.msra.mxu0 0
      %5988 = vmatpush.bf16.msra.mxu0 0
      %5989 = vmatpush.bf16.msra.mxu0 %v5884
      %5990 = vmatmul.bf16.gmra.mxu0 %v5887
      %v5991 = vpop.f32.mrf.mxu0
      %v5992 = vadd.f32 0.0, %v5991
      %v5993 = vpop.f32.mrf.mxu0
      %v5994 = vadd.f32 0.0, %v5993
      %5995 = vmatmul.bf16.gmra.mxu0 %v5890
      %v5996 = vpop.f32.mrf.mxu0
      %v5997 = vpop.f32.mrf.mxu0
      %5998 = vmatmul.bf16.gmra.mxu0 %v5893
      %v5999 = vpop.f32.mrf.mxu0
      %v6000 = vadd.f32 0.0, %v5999
      %v6001 = vpop.f32.mrf.mxu0
      %v6002 = vadd.f32 0.0, %v6001
      %6003 = vmatmul.bf16.gmra.mxu0 %v5896
      %v6004 = vpop.f32.mrf.mxu0
      %v6005 = vpop.f32.mrf.mxu0
      %6006 = vmatmul.bf16.gmra.mxu0 %v5899
      %v6007 = vpop.f32.mrf.mxu0
      %v6008 = vadd.f32 0.0, %v6007
      %v6009 = vpop.f32.mrf.mxu0
      %v6010 = vadd.f32 0.0, %v6009
      %6011 = vmatmul.bf16.gmra.mxu0 %v5902
      %v6012 = vpop.f32.mrf.mxu0
      %v6013 = vpop.f32.mrf.mxu0
      %6014 = vmatmul.bf16.gmra.mxu0 %v5905
      %v6015 = vpop.f32.mrf.mxu0
      %v6016 = vadd.f32 0.0, %v6015
      %v6017 = vpop.f32.mrf.mxu0
      %v6018 = vadd.f32 0.0, %v6017
      %6019 = vmatmul.bf16.gmra.mxu0 %v5908
      %v6020 = vpop.f32.mrf.mxu0
      %v6021 = vpop.f32.mrf.mxu0
      %6022 = vmatmul.bf16.gmra.mxu0 %v5911
      %v6023 = vpop.f32.mrf.mxu0
      %v6024 = vadd.f32 0.0, %v6023
      %v6025 = vpop.f32.mrf.mxu0
      %v6026 = vadd.f32 0.0, %v6025
      %6027 = vmatmul.bf16.gmra.mxu0 %v5914
      %v6028 = vpop.f32.mrf.mxu0
      %v6029 = vpop.f32.mrf.mxu0
      %6030 = vmatmul.bf16.gmra.mxu0 %v5917
      %v6031 = vpop.f32.mrf.mxu0
      %v6032 = vadd.f32 0.0, %v6031
      %v6033 = vpop.f32.mrf.mxu0
      %v6034 = vadd.f32 0.0, %v6033
      %6035 = vmatmul.bf16.gmra.mxu0 %v5920
      %v6036 = vpop.f32.mrf.mxu0
      %v6037 = vpop.f32.mrf.mxu0
      %6038 = vmatmul.bf16.gmra.mxu0 %v5923
      %v6039 = vpop.f32.mrf.mxu0
      %v6040 = vadd.f32 0.0, %v6039
      %v6041 = vpop.f32.mrf.mxu0
      %v6042 = vadd.f32 0.0, %v6041
      %6043 = vmatmul.bf16.gmra.mxu0 %v5926
      %v6044 = vpop.f32.mrf.mxu0
      %v6045 = vpop.f32.mrf.mxu0
      %6046 = vmatmul.bf16.gmra.mxu0 %v5929
      %v6047 = vpop.f32.mrf.mxu0
      %v6048 = vadd.f32 0.0, %v6047
      %v6049 = vpop.f32.mrf.mxu0
      %v6050 = vadd.f32 0.0, %v6049
      %6051 = vmatmul.bf16.gmra.mxu0 %v5932
      %v6052 = vpop.f32.mrf.mxu0
      %v6053 = vpop.f32.mrf.mxu0
      %6054 = vmatmul.bf16.gmra.mxu0 %v5935
      %v6055 = vpop.f32.mrf.mxu0
      %v6056 = vadd.f32 0.0, %v6055
      %v6057 = vpop.f32.mrf.mxu0
      %v6058 = vadd.f32 0.0, %v6057
      %6059 = vmatmul.bf16.gmra.mxu0 %v5938
      %v6060 = vpop.f32.mrf.mxu0
      %v6061 = vpop.f32.mrf.mxu0
      %6062 = vmatmul.bf16.gmra.mxu0 %v5941
      %v6063 = vpop.f32.mrf.mxu0
      %v6064 = vadd.f32 0.0, %v6063
      %v6065 = vpop.f32.mrf.mxu0
      %v6066 = vadd.f32 0.0, %v6065
      %6067 = vmatmul.bf16.gmra.mxu0 %v5944
      %v6068 = vpop.f32.mrf.mxu0
      %v6069 = vpop.f32.mrf.mxu0
      %6070 = vmatmul.bf16.gmra.mxu0 %v5947
      %v6071 = vpop.f32.mrf.mxu0
      %v6072 = vadd.f32 0.0, %v6071
      %v6073 = vpop.f32.mrf.mxu0
      %v6074 = vadd.f32 0.0, %v6073
      %6075 = vmatmul.bf16.gmra.mxu0 %v5950
      %v6076 = vpop.f32.mrf.mxu0
      %v6077 = vpop.f32.mrf.mxu0
      %6078 = vmatmul.bf16.gmra.mxu0 %v5953
      %v6079 = vpop.f32.mrf.mxu0
      %v6080 = vadd.f32 0.0, %v6079
      %v6081 = vpop.f32.mrf.mxu0
      %v6082 = vadd.f32 0.0, %v6081
      %6083 = vmatmul.bf16.gmra.mxu0 %v5956
      %v6084 = vpop.f32.mrf.mxu0
      %v6085 = vpop.f32.mrf.mxu0
      %6086 = vmatmul.bf16.gmra.mxu0 %v5959
      %v6087 = vpop.f32.mrf.mxu0
      %v6088 = vadd.f32 0.0, %v6087
      %v6089 = vpop.f32.mrf.mxu0
      %v6090 = vadd.f32 0.0, %v6089
      %6091 = vmatmul.bf16.gmra.mxu0 %v5962
      %v6092 = vpop.f32.mrf.mxu0
      %v6093 = vpop.f32.mrf.mxu0
      %6094 = vmatmul.bf16.gmra.mxu0 %v5965
      %v6095 = vpop.f32.mrf.mxu0
      %v6096 = vadd.f32 0.0, %v6095
      %v6097 = vpop.f32.mrf.mxu0
      %v6098 = vadd.f32 0.0, %v6097
      %6099 = vmatmul.bf16.gmra.mxu0 %v5968
      %v6100 = vpop.f32.mrf.mxu0
      %v6101 = vpop.f32.mrf.mxu0
      %6102 = vmatmul.bf16.gmra.mxu0 %v5971
      %v6103 = vpop.f32.mrf.mxu0
      %v6104 = vadd.f32 0.0, %v6103
      %v6105 = vpop.f32.mrf.mxu0
      %v6106 = vadd.f32 0.0, %v6105
      %6107 = vmatmul.bf16.gmra.mxu0 %v5974
      %v6108 = vpop.f32.mrf.mxu0
      %v6109 = vpop.f32.mrf.mxu0
      %6110 = vmatmul.bf16.gmra.mxu0 %v5977
      %v6111 = vpop.f32.mrf.mxu0
      %v6112 = vadd.f32 0.0, %v6111
      %v6113 = vpop.f32.mrf.mxu0
      %v6114 = vadd.f32 0.0, %v6113
      %6115 = vmatmul.bf16.gmra.mxu0 %v5980
      %v6116 = vpop.f32.mrf.mxu0
      %v6117 = vpop.f32.mrf.mxu0
      %6118 = vdwg.mxu0
      %v6119 = vadd.f32 %v5590, %v5992
      %v6120 = vadd.f32 %v5592, %v5994
      %v6121 = vadd.f32 %v5598, %v6000
      %v6122 = vadd.f32 %v5600, %v6002
      %v6123 = vadd.f32 %v5606, %v6008
      %v6124 = vadd.f32 %v5608, %v6010
      %v6125 = vadd.f32 %v5614, %v6016
      %v6126 = vadd.f32 %v5616, %v6018
      %v6127 = vadd.f32 %v5622, %v6024
      %v6128 = vadd.f32 %v5624, %v6026
      %v6129 = vadd.f32 %v5630, %v6032
      %v6130 = vadd.f32 %v5632, %v6034
      %v6131 = vadd.f32 %v5638, %v6040
      %v6132 = vadd.f32 %v5640, %v6042
      %v6133 = vadd.f32 %v5646, %v6048
      %v6134 = vadd.f32 %v5648, %v6050
      %v6135 = vadd.f32 %v5654, %v6056
      %v6136 = vadd.f32 %v5656, %v6058
      %v6137 = vadd.f32 %v5662, %v6064
      %v6138 = vadd.f32 %v5664, %v6066
      %v6139 = vadd.f32 %v5670, %v6072
      %v6140 = vadd.f32 %v5672, %v6074
      %v6141 = vadd.f32 %v5678, %v6080
      %v6142 = vadd.f32 %v5680, %v6082
      %v6143 = vadd.f32 %v5686, %v6088
      %v6144 = vadd.f32 %v5688, %v6090
      %v6145 = vadd.f32 %v5694, %v6096
      %v6146 = vadd.f32 %v5696, %v6098
      %v6147 = vadd.f32 %v5702, %v6104
      %v6148 = vadd.f32 %v5704, %v6106
      %v6149 = vadd.f32 %v5710, %v6112
      %v6150 = vadd.f32 %v5712, %v6114
      %s6151 = scalar_lea.vmem %s3, 24
      %v6152 = vld [vmem:[%s6151] sm:$0xf]
      %v6153 = vld [vmem:[%s6151 + $0x4] sm:$0xf]
      %v6158 = vunpack.c.l.b16 %v4762
      %v6159 = vunpack.c.l.b16 %v4763
      %v6160 = vunpack.c.l.b16 %v4764
      %v6161 = vunpack.c.l.b16 %v4765
      %v6162 = vpack.c.b16 %v6159, %v6158
      %v6163 = vpack.c.b16 %v6161, %v6160
      %v6166 = vunpack.c.l.b16 %v6152
      %v6167 = vunpack.c.l.b16 %v6153
      %v6168 = vpack.c.b16 %v6167, %v6166
      %v6171 = vsel %vm1503, %v6162, 0
      %v6174 = vsel %vm1503, %v6163, 0
      %6176 = vmatpush.bf16.msra.mxu0 0
      %6177 = vmatpush.bf16.msra.mxu0 0
      %6178 = vmatpush.bf16.msra.mxu0 0
      %6179 = vmatpush.bf16.msra.mxu0 0
      %6180 = vmatpush.bf16.msra.mxu0 0
      %6181 = vmatpush.bf16.msra.mxu0 0
      %6182 = vmatpush.bf16.msra.mxu0 0
      %6183 = vmatpush.bf16.msra.mxu0 %v6168
      %6184 = vmatmul.bf16.gmra.mxu0 %v5491
      %v6185 = vpop.f32.mrf.mxu0
      %v6186 = vadd.f32 0.0, %v6185
      %v6187 = vpop.f32.mrf.mxu0
      %v6188 = vadd.f32 0.0, %v6187
      %6189 = vmatmul.bf16.gmra.mxu0 %v5494
      %v6190 = vpop.f32.mrf.mxu0
      %v6191 = vpop.f32.mrf.mxu0
      %6192 = vmatmul.bf16.gmra.mxu0 %v5497
      %v6193 = vpop.f32.mrf.mxu0
      %v6194 = vadd.f32 0.0, %v6193
      %v6195 = vpop.f32.mrf.mxu0
      %v6196 = vadd.f32 0.0, %v6195
      %6197 = vmatmul.bf16.gmra.mxu0 %v5500
      %v6198 = vpop.f32.mrf.mxu0
      %v6199 = vpop.f32.mrf.mxu0
      %6200 = vmatmul.bf16.gmra.mxu0 %v5503
      %v6201 = vpop.f32.mrf.mxu0
      %v6202 = vadd.f32 0.0, %v6201
      %v6203 = vpop.f32.mrf.mxu0
      %v6204 = vadd.f32 0.0, %v6203
      %6205 = vmatmul.bf16.gmra.mxu0 %v5506
      %v6206 = vpop.f32.mrf.mxu0
      %v6207 = vpop.f32.mrf.mxu0
      %6208 = vmatmul.bf16.gmra.mxu0 %v5509
      %v6209 = vpop.f32.mrf.mxu0
      %v6210 = vadd.f32 0.0, %v6209
      %v6211 = vpop.f32.mrf.mxu0
      %v6212 = vadd.f32 0.0, %v6211
      %6213 = vmatmul.bf16.gmra.mxu0 %v5512
      %v6214 = vpop.f32.mrf.mxu0
      %v6215 = vpop.f32.mrf.mxu0
      %6216 = vmatmul.bf16.gmra.mxu0 %v5515
      %v6217 = vpop.f32.mrf.mxu0
      %v6218 = vadd.f32 0.0, %v6217
      %v6219 = vpop.f32.mrf.mxu0
      %v6220 = vadd.f32 0.0, %v6219
      %6221 = vmatmul.bf16.gmra.mxu0 %v5518
      %v6222 = vpop.f32.mrf.mxu0
      %v6223 = vpop.f32.mrf.mxu0
      %6224 = vmatmul.bf16.gmra.mxu0 %v5521
      %v6225 = vpop.f32.mrf.mxu0
      %v6226 = vadd.f32 0.0, %v6225
      %v6227 = vpop.f32.mrf.mxu0
      %v6228 = vadd.f32 0.0, %v6227
      %6229 = vmatmul.bf16.gmra.mxu0 %v5524
      %v6230 = vpop.f32.mrf.mxu0
      %v6231 = vpop.f32.mrf.mxu0
      %6232 = vmatmul.bf16.gmra.mxu0 %v5527
      %v6233 = vpop.f32.mrf.mxu0
      %v6234 = vadd.f32 0.0, %v6233
      %v6235 = vpop.f32.mrf.mxu0
      %v6236 = vadd.f32 0.0, %v6235
      %6237 = vmatmul.bf16.gmra.mxu0 %v5530
      %v6238 = vpop.f32.mrf.mxu0
      %v6239 = vpop.f32.mrf.mxu0
      %6240 = vmatmul.bf16.gmra.mxu0 %v5533
      %v6241 = vpop.f32.mrf.mxu0
      %v6242 = vadd.f32 0.0, %v6241
      %v6243 = vpop.f32.mrf.mxu0
      %v6244 = vadd.f32 0.0, %v6243
      %6245 = vmatmul.bf16.gmra.mxu0 %v5536
      %v6246 = vpop.f32.mrf.mxu0
      %v6247 = vpop.f32.mrf.mxu0
      %6248 = vmatmul.bf16.gmra.mxu0 %v5539
      %v6249 = vpop.f32.mrf.mxu0
      %v6250 = vadd.f32 0.0, %v6249
      %v6251 = vpop.f32.mrf.mxu0
      %v6252 = vadd.f32 0.0, %v6251
      %6253 = vmatmul.bf16.gmra.mxu0 %v5542
      %v6254 = vpop.f32.mrf.mxu0
      %v6255 = vpop.f32.mrf.mxu0
      %6256 = vmatmul.bf16.gmra.mxu0 %v5545
      %v6257 = vpop.f32.mrf.mxu0
      %v6258 = vadd.f32 0.0, %v6257
      %v6259 = vpop.f32.mrf.mxu0
      %v6260 = vadd.f32 0.0, %v6259
      %6261 = vmatmul.bf16.gmra.mxu0 %v5548
      %v6262 = vpop.f32.mrf.mxu0
      %v6263 = vpop.f32.mrf.mxu0
      %6264 = vmatmul.bf16.gmra.mxu0 %v5551
      %v6265 = vpop.f32.mrf.mxu0
      %v6266 = vadd.f32 0.0, %v6265
      %v6267 = vpop.f32.mrf.mxu0
      %v6268 = vadd.f32 0.0, %v6267
      %6269 = vmatmul.bf16.gmra.mxu0 %v5554
      %v6270 = vpop.f32.mrf.mxu0
      %v6271 = vpop.f32.mrf.mxu0
      %6272 = vmatmul.bf16.gmra.mxu0 %v5557
      %v6273 = vpop.f32.mrf.mxu0
      %v6274 = vadd.f32 0.0, %v6273
      %v6275 = vpop.f32.mrf.mxu0
      %v6276 = vadd.f32 0.0, %v6275
      %6277 = vmatmul.bf16.gmra.mxu0 %v5560
      %v6278 = vpop.f32.mrf.mxu0
      %v6279 = vpop.f32.mrf.mxu0
      %6280 = vmatmul.bf16.gmra.mxu0 %v5563
      %v6281 = vpop.f32.mrf.mxu0
      %v6282 = vadd.f32 0.0, %v6281
      %v6283 = vpop.f32.mrf.mxu0
      %v6284 = vadd.f32 0.0, %v6283
      %6285 = vmatmul.bf16.gmra.mxu0 %v5566
      %v6286 = vpop.f32.mrf.mxu0
      %v6287 = vpop.f32.mrf.mxu0
      %6288 = vmatmul.bf16.gmra.mxu0 %v5569
      %v6289 = vpop.f32.mrf.mxu0
      %v6290 = vadd.f32 0.0, %v6289
      %v6291 = vpop.f32.mrf.mxu0
      %v6292 = vadd.f32 0.0, %v6291
      %6293 = vmatmul.bf16.gmra.mxu0 %v5572
      %v6294 = vpop.f32.mrf.mxu0
      %v6295 = vpop.f32.mrf.mxu0
      %6296 = vmatmul.bf16.gmra.mxu0 %v5575
      %v6297 = vpop.f32.mrf.mxu0
      %v6298 = vadd.f32 0.0, %v6297
      %v6299 = vpop.f32.mrf.mxu0
      %v6300 = vadd.f32 0.0, %v6299
      %6301 = vmatmul.bf16.gmra.mxu0 %v5578
      %v6302 = vpop.f32.mrf.mxu0
      %v6303 = vpop.f32.mrf.mxu0
      %6304 = vmatmul.bf16.gmra.mxu0 %v6171
      %v6305 = vpop.f32.mrf.mxu0
      %v6306 = vadd.f32 0.0, %v6305
      %v6307 = vpop.f32.mrf.mxu0
      %v6308 = vadd.f32 0.0, %v6307
      %6309 = vmatmul.bf16.gmra.mxu0 %v6174
      %v6310 = vpop.f32.mrf.mxu0
      %v6311 = vpop.f32.mrf.mxu0
      %6312 = vdwg.mxu0
      %v6313 = vadd.f32 %v6119, %v6186
      %v6314 = vadd.f32 %v6120, %v6188
      %v6315 = vadd.f32 %v6121, %v6194
      %v6316 = vadd.f32 %v6122, %v6196
      %v6317 = vadd.f32 %v6123, %v6202
      %v6318 = vadd.f32 %v6124, %v6204
      %v6319 = vadd.f32 %v6125, %v6210
      %v6320 = vadd.f32 %v6126, %v6212
      %v6321 = vadd.f32 %v6127, %v6218
      %v6322 = vadd.f32 %v6128, %v6220
      %v6323 = vadd.f32 %v6129, %v6226
      %v6324 = vadd.f32 %v6130, %v6228
      %v6325 = vadd.f32 %v6131, %v6234
      %v6326 = vadd.f32 %v6132, %v6236
      %v6327 = vadd.f32 %v6133, %v6242
      %v6328 = vadd.f32 %v6134, %v6244
      %v6329 = vadd.f32 %v6135, %v6250
      %v6330 = vadd.f32 %v6136, %v6252
      %v6331 = vadd.f32 %v6137, %v6258
      %v6332 = vadd.f32 %v6138, %v6260
      %v6333 = vadd.f32 %v6139, %v6266
      %v6334 = vadd.f32 %v6140, %v6268
      %v6335 = vadd.f32 %v6141, %v6274
      %v6336 = vadd.f32 %v6142, %v6276
      %v6337 = vadd.f32 %v6143, %v6282
      %v6338 = vadd.f32 %v6144, %v6284
      %v6339 = vadd.f32 %v6145, %v6290
      %v6340 = vadd.f32 %v6146, %v6292
      %v6341 = vadd.f32 %v6147, %v6298
      %v6342 = vadd.f32 %v6148, %v6300
      %v6343 = vadd.f32 %v6149, %v6306
      %v6344 = vadd.f32 %v6150, %v6308
      %s6345 = scalar_lea.vmem %s3, 32
      %v6346 = vld [vmem:[%s6345] sm:$0xf]
      %v6347 = vld [vmem:[%s6345 + $0x4] sm:$0xf]
      %v6352 = vunpack.c.l.b16 %v4834
      %v6353 = vunpack.c.l.b16 %v4835
      %v6354 = vunpack.c.l.b16 %v4836
      %v6355 = vunpack.c.l.b16 %v4837
      %v6356 = vpack.c.b16 %v6353, %v6352
      %v6357 = vpack.c.b16 %v6355, %v6354
      %v6360 = vunpack.c.l.b16 %v6346
      %v6361 = vunpack.c.l.b16 %v6347
      %v6362 = vpack.c.b16 %v6361, %v6360
      %v6365 = vsel %vm1503, %v6356, 0
      %v6368 = vsel %vm1503, %v6357, 0
      %6370 = vmatpush.bf16.msra.mxu0 0
      %6371 = vmatpush.bf16.msra.mxu0 0
      %6372 = vmatpush.bf16.msra.mxu0 0
      %6373 = vmatpush.bf16.msra.mxu0 0
      %6374 = vmatpush.bf16.msra.mxu0 0
      %6375 = vmatpush.bf16.msra.mxu0 0
      %6376 = vmatpush.bf16.msra.mxu0 0
      %6377 = vmatpush.bf16.msra.mxu0 %v6362
      %6378 = vmatmul.bf16.gmra.mxu0 %v5092
      %v6379 = vpop.f32.mrf.mxu0
      %v6380 = vadd.f32 0.0, %v6379
      %v6381 = vpop.f32.mrf.mxu0
      %v6382 = vadd.f32 0.0, %v6381
      %6383 = vmatmul.bf16.gmra.mxu0 %v5095
      %v6384 = vpop.f32.mrf.mxu0
      %v6385 = vpop.f32.mrf.mxu0
      %6386 = vmatmul.bf16.gmra.mxu0 %v5098
      %v6387 = vpop.f32.mrf.mxu0
      %v6388 = vadd.f32 0.0, %v6387
      %v6389 = vpop.f32.mrf.mxu0
      %v6390 = vadd.f32 0.0, %v6389
      %6391 = vmatmul.bf16.gmra.mxu0 %v5101
      %v6392 = vpop.f32.mrf.mxu0
      %v6393 = vpop.f32.mrf.mxu0
      %6394 = vmatmul.bf16.gmra.mxu0 %v5104
      %v6395 = vpop.f32.mrf.mxu0
      %v6396 = vadd.f32 0.0, %v6395
      %v6397 = vpop.f32.mrf.mxu0
      %v6398 = vadd.f32 0.0, %v6397
      %6399 = vmatmul.bf16.gmra.mxu0 %v5107
      %v6400 = vpop.f32.mrf.mxu0
      %v6401 = vpop.f32.mrf.mxu0
      %6402 = vmatmul.bf16.gmra.mxu0 %v5110
      %v6403 = vpop.f32.mrf.mxu0
      %v6404 = vadd.f32 0.0, %v6403
      %v6405 = vpop.f32.mrf.mxu0
      %v6406 = vadd.f32 0.0, %v6405
      %6407 = vmatmul.bf16.gmra.mxu0 %v5113
      %v6408 = vpop.f32.mrf.mxu0
      %v6409 = vpop.f32.mrf.mxu0
      %6410 = vmatmul.bf16.gmra.mxu0 %v5116
      %v6411 = vpop.f32.mrf.mxu0
      %v6412 = vadd.f32 0.0, %v6411
      %v6413 = vpop.f32.mrf.mxu0
      %v6414 = vadd.f32 0.0, %v6413
      %6415 = vmatmul.bf16.gmra.mxu0 %v5119
      %v6416 = vpop.f32.mrf.mxu0
      %v6417 = vpop.f32.mrf.mxu0
      %6418 = vmatmul.bf16.gmra.mxu0 %v5122
      %v6419 = vpop.f32.mrf.mxu0
      %v6420 = vadd.f32 0.0, %v6419
      %v6421 = vpop.f32.mrf.mxu0
      %v6422 = vadd.f32 0.0, %v6421
      %6423 = vmatmul.bf16.gmra.mxu0 %v5125
      %v6424 = vpop.f32.mrf.mxu0
      %v6425 = vpop.f32.mrf.mxu0
      %6426 = vmatmul.bf16.gmra.mxu0 %v5128
      %v6427 = vpop.f32.mrf.mxu0
      %v6428 = vadd.f32 0.0, %v6427
      %v6429 = vpop.f32.mrf.mxu0
      %v6430 = vadd.f32 0.0, %v6429
      %6431 = vmatmul.bf16.gmra.mxu0 %v5131
      %v6432 = vpop.f32.mrf.mxu0
      %v6433 = vpop.f32.mrf.mxu0
      %6434 = vmatmul.bf16.gmra.mxu0 %v5134
      %v6435 = vpop.f32.mrf.mxu0
      %v6436 = vadd.f32 0.0, %v6435
      %v6437 = vpop.f32.mrf.mxu0
      %v6438 = vadd.f32 0.0, %v6437
      %6439 = vmatmul.bf16.gmra.mxu0 %v5137
      %v6440 = vpop.f32.mrf.mxu0
      %v6441 = vpop.f32.mrf.mxu0
      %6442 = vmatmul.bf16.gmra.mxu0 %v5140
      %v6443 = vpop.f32.mrf.mxu0
      %v6444 = vadd.f32 0.0, %v6443
      %v6445 = vpop.f32.mrf.mxu0
      %v6446 = vadd.f32 0.0, %v6445
      %6447 = vmatmul.bf16.gmra.mxu0 %v5143
      %v6448 = vpop.f32.mrf.mxu0
      %v6449 = vpop.f32.mrf.mxu0
      %6450 = vmatmul.bf16.gmra.mxu0 %v5146
      %v6451 = vpop.f32.mrf.mxu0
      %v6452 = vadd.f32 0.0, %v6451
      %v6453 = vpop.f32.mrf.mxu0
      %v6454 = vadd.f32 0.0, %v6453
      %6455 = vmatmul.bf16.gmra.mxu0 %v5149
      %v6456 = vpop.f32.mrf.mxu0
      %v6457 = vpop.f32.mrf.mxu0
      %6458 = vmatmul.bf16.gmra.mxu0 %v5152
      %v6459 = vpop.f32.mrf.mxu0
      %v6460 = vadd.f32 0.0, %v6459
      %v6461 = vpop.f32.mrf.mxu0
      %v6462 = vadd.f32 0.0, %v6461
      %6463 = vmatmul.bf16.gmra.mxu0 %v5155
      %v6464 = vpop.f32.mrf.mxu0
      %v6465 = vpop.f32.mrf.mxu0
      %6466 = vmatmul.bf16.gmra.mxu0 %v5158
      %v6467 = vpop.f32.mrf.mxu0
      %v6468 = vadd.f32 0.0, %v6467
      %v6469 = vpop.f32.mrf.mxu0
      %v6470 = vadd.f32 0.0, %v6469
      %6471 = vmatmul.bf16.gmra.mxu0 %v5161
      %v6472 = vpop.f32.mrf.mxu0
      %v6473 = vpop.f32.mrf.mxu0
      %6474 = vmatmul.bf16.gmra.mxu0 %v5164
      %v6475 = vpop.f32.mrf.mxu0
      %v6476 = vadd.f32 0.0, %v6475
      %v6477 = vpop.f32.mrf.mxu0
      %v6478 = vadd.f32 0.0, %v6477
      %6479 = vmatmul.bf16.gmra.mxu0 %v5167
      %v6480 = vpop.f32.mrf.mxu0
      %v6481 = vpop.f32.mrf.mxu0
      %6482 = vmatmul.bf16.gmra.mxu0 %v5170
      %v6483 = vpop.f32.mrf.mxu0
      %v6484 = vadd.f32 0.0, %v6483
      %v6485 = vpop.f32.mrf.mxu0
      %v6486 = vadd.f32 0.0, %v6485
      %6487 = vmatmul.bf16.gmra.mxu0 %v5173
      %v6488 = vpop.f32.mrf.mxu0
      %v6489 = vpop.f32.mrf.mxu0
      %6490 = vmatmul.bf16.gmra.mxu0 %v5176
      %v6491 = vpop.f32.mrf.mxu0
      %v6492 = vadd.f32 0.0, %v6491
      %v6493 = vpop.f32.mrf.mxu0
      %v6494 = vadd.f32 0.0, %v6493
      %6495 = vmatmul.bf16.gmra.mxu0 %v5179
      %v6496 = vpop.f32.mrf.mxu0
      %v6497 = vpop.f32.mrf.mxu0
      %6498 = vmatmul.bf16.gmra.mxu0 %v6365
      %v6499 = vpop.f32.mrf.mxu0
      %v6500 = vadd.f32 0.0, %v6499
      %v6501 = vpop.f32.mrf.mxu0
      %v6502 = vadd.f32 0.0, %v6501
      %6503 = vmatmul.bf16.gmra.mxu0 %v6368
      %v6504 = vpop.f32.mrf.mxu0
      %v6505 = vpop.f32.mrf.mxu0
      %6506 = vdwg.mxu0
      %v6507 = vadd.f32 %v6313, %v6380
      %v6508 = vadd.f32 %v6314, %v6382
      %v6509 = vadd.f32 %v6315, %v6388
      %v6510 = vadd.f32 %v6316, %v6390
      %v6511 = vadd.f32 %v6317, %v6396
      %v6512 = vadd.f32 %v6318, %v6398
      %v6513 = vadd.f32 %v6319, %v6404
      %v6514 = vadd.f32 %v6320, %v6406
      %v6515 = vadd.f32 %v6321, %v6412
      %v6516 = vadd.f32 %v6322, %v6414
      %v6517 = vadd.f32 %v6323, %v6420
      %v6518 = vadd.f32 %v6324, %v6422
      %v6519 = vadd.f32 %v6325, %v6428
      %v6520 = vadd.f32 %v6326, %v6430
      %v6521 = vadd.f32 %v6327, %v6436
      %v6522 = vadd.f32 %v6328, %v6438
      %v6523 = vadd.f32 %v6329, %v6444
      %v6524 = vadd.f32 %v6330, %v6446
      %v6525 = vadd.f32 %v6331, %v6452
      %v6526 = vadd.f32 %v6332, %v6454
      %v6527 = vadd.f32 %v6333, %v6460
      %v6528 = vadd.f32 %v6334, %v6462
      %v6529 = vadd.f32 %v6335, %v6468
      %v6530 = vadd.f32 %v6336, %v6470
      %v6531 = vadd.f32 %v6337, %v6476
      %v6532 = vadd.f32 %v6338, %v6478
      %v6533 = vadd.f32 %v6339, %v6484
      %v6534 = vadd.f32 %v6340, %v6486
      %v6535 = vadd.f32 %v6341, %v6492
      %v6536 = vadd.f32 %v6342, %v6494
      %v6537 = vadd.f32 %v6343, %v6500
      %v6538 = vadd.f32 %v6344, %v6502
      %s6539 = scalar_lea.vmem %s3, 40
      %v6540 = vld [vmem:[%s6539] sm:$0xf]
      %v6541 = vld [vmem:[%s6539 + $0x4] sm:$0xf]
      %v6546 = vunpack.c.l.b16 %v4906
      %v6547 = vunpack.c.l.b16 %v4907
      %v6548 = vunpack.c.l.b16 %v4908
      %v6549 = vunpack.c.l.b16 %v4909
      %v6550 = vpack.c.b16 %v6547, %v6546
      %v6551 = vpack.c.b16 %v6549, %v6548
      %v6554 = vunpack.c.l.b16 %v6540
      %v6555 = vunpack.c.l.b16 %v6541
      %v6556 = vpack.c.b16 %v6555, %v6554
      %v6559 = vsel %vm1503, %v6550, 0
      %v6562 = vsel %vm1503, %v6551, 0
      %6564 = vmatpush.bf16.msra.mxu0 0
      %6565 = vmatpush.bf16.msra.mxu0 0
      %6566 = vmatpush.bf16.msra.mxu0 0
      %6567 = vmatpush.bf16.msra.mxu0 0
      %6568 = vmatpush.bf16.msra.mxu0 0
      %6569 = vmatpush.bf16.msra.mxu0 0
      %6570 = vmatpush.bf16.msra.mxu0 0
      %6571 = vmatpush.bf16.msra.mxu0 %v6556
      %6572 = vmatmul.bf16.gmra.mxu0 %v5893
      %v6573 = vpop.f32.mrf.mxu0
      %v6574 = vadd.f32 0.0, %v6573
      %v6575 = vpop.f32.mrf.mxu0
      %v6576 = vadd.f32 0.0, %v6575
      %6577 = vmatmul.bf16.gmra.mxu0 %v5896
      %v6578 = vpop.f32.mrf.mxu0
      %v6579 = vpop.f32.mrf.mxu0
      %6580 = vmatmul.bf16.gmra.mxu0 %v5899
      %v6581 = vpop.f32.mrf.mxu0
      %v6582 = vadd.f32 0.0, %v6581
      %v6583 = vpop.f32.mrf.mxu0
      %v6584 = vadd.f32 0.0, %v6583
      %6585 = vmatmul.bf16.gmra.mxu0 %v5902
      %v6586 = vpop.f32.mrf.mxu0
      %v6587 = vpop.f32.mrf.mxu0
      %6588 = vmatmul.bf16.gmra.mxu0 %v5905
      %v6589 = vpop.f32.mrf.mxu0
      %v6590 = vadd.f32 0.0, %v6589
      %v6591 = vpop.f32.mrf.mxu0
      %v6592 = vadd.f32 0.0, %v6591
      %6593 = vmatmul.bf16.gmra.mxu0 %v5908
      %v6594 = vpop.f32.mrf.mxu0
      %v6595 = vpop.f32.mrf.mxu0
      %6596 = vmatmul.bf16.gmra.mxu0 %v5911
      %v6597 = vpop.f32.mrf.mxu0
      %v6598 = vadd.f32 0.0, %v6597
      %v6599 = vpop.f32.mrf.mxu0
      %v6600 = vadd.f32 0.0, %v6599
      %6601 = vmatmul.bf16.gmra.mxu0 %v5914
      %v6602 = vpop.f32.mrf.mxu0
      %v6603 = vpop.f32.mrf.mxu0
      %6604 = vmatmul.bf16.gmra.mxu0 %v5917
      %v6605 = vpop.f32.mrf.mxu0
      %v6606 = vadd.f32 0.0, %v6605
      %v6607 = vpop.f32.mrf.mxu0
      %v6608 = vadd.f32 0.0, %v6607
      %6609 = vmatmul.bf16.gmra.mxu0 %v5920
      %v6610 = vpop.f32.mrf.mxu0
      %v6611 = vpop.f32.mrf.mxu0
      %6612 = vmatmul.bf16.gmra.mxu0 %v5923
      %v6613 = vpop.f32.mrf.mxu0
      %v6614 = vadd.f32 0.0, %v6613
      %v6615 = vpop.f32.mrf.mxu0
      %v6616 = vadd.f32 0.0, %v6615
      %6617 = vmatmul.bf16.gmra.mxu0 %v5926
      %v6618 = vpop.f32.mrf.mxu0
      %v6619 = vpop.f32.mrf.mxu0
      %6620 = vmatmul.bf16.gmra.mxu0 %v5929
      %v6621 = vpop.f32.mrf.mxu0
      %v6622 = vadd.f32 0.0, %v6621
      %v6623 = vpop.f32.mrf.mxu0
      %v6624 = vadd.f32 0.0, %v6623
      %6625 = vmatmul.bf16.gmra.mxu0 %v5932
      %v6626 = vpop.f32.mrf.mxu0
      %v6627 = vpop.f32.mrf.mxu0
      %6628 = vmatmul.bf16.gmra.mxu0 %v5935
      %v6629 = vpop.f32.mrf.mxu0
      %v6630 = vadd.f32 0.0, %v6629
      %v6631 = vpop.f32.mrf.mxu0
      %v6632 = vadd.f32 0.0, %v6631
      %6633 = vmatmul.bf16.gmra.mxu0 %v5938
      %v6634 = vpop.f32.mrf.mxu0
      %v6635 = vpop.f32.mrf.mxu0
      %6636 = vmatmul.bf16.gmra.mxu0 %v5941
      %v6637 = vpop.f32.mrf.mxu0
      %v6638 = vadd.f32 0.0, %v6637
      %v6639 = vpop.f32.mrf.mxu0
      %v6640 = vadd.f32 0.0, %v6639
      %6641 = vmatmul.bf16.gmra.mxu0 %v5944
      %v6642 = vpop.f32.mrf.mxu0
      %v6643 = vpop.f32.mrf.mxu0
      %6644 = vmatmul.bf16.gmra.mxu0 %v5947
      %v6645 = vpop.f32.mrf.mxu0
      %v6646 = vadd.f32 0.0, %v6645
      %v6647 = vpop.f32.mrf.mxu0
      %v6648 = vadd.f32 0.0, %v6647
      %6649 = vmatmul.bf16.gmra.mxu0 %v5950
      %v6650 = vpop.f32.mrf.mxu0
      %v6651 = vpop.f32.mrf.mxu0
      %6652 = vmatmul.bf16.gmra.mxu0 %v5953
      %v6653 = vpop.f32.mrf.mxu0
      %v6654 = vadd.f32 0.0, %v6653
      %v6655 = vpop.f32.mrf.mxu0
      %v6656 = vadd.f32 0.0, %v6655
      %6657 = vmatmul.bf16.gmra.mxu0 %v5956
      %v6658 = vpop.f32.mrf.mxu0
      %v6659 = vpop.f32.mrf.mxu0
      %6660 = vmatmul.bf16.gmra.mxu0 %v5959
      %v6661 = vpop.f32.mrf.mxu0
      %v6662 = vadd.f32 0.0, %v6661
      %v6663 = vpop.f32.mrf.mxu0
      %v6664 = vadd.f32 0.0, %v6663
      %6665 = vmatmul.bf16.gmra.mxu0 %v5962
      %v6666 = vpop.f32.mrf.mxu0
      %v6667 = vpop.f32.mrf.mxu0
      %6668 = vmatmul.bf16.gmra.mxu0 %v5965
      %v6669 = vpop.f32.mrf.mxu0
      %v6670 = vadd.f32 0.0, %v6669
      %v6671 = vpop.f32.mrf.mxu0
      %v6672 = vadd.f32 0.0, %v6671
      %6673 = vmatmul.bf16.gmra.mxu0 %v5968
      %v6674 = vpop.f32.mrf.mxu0
      %v6675 = vpop.f32.mrf.mxu0
      %6676 = vmatmul.bf16.gmra.mxu0 %v5971
      %v6677 = vpop.f32.mrf.mxu0
      %v6678 = vadd.f32 0.0, %v6677
      %v6679 = vpop.f32.mrf.mxu0
      %v6680 = vadd.f32 0.0, %v6679
      %6681 = vmatmul.bf16.gmra.mxu0 %v5974
      %v6682 = vpop.f32.mrf.mxu0
      %v6683 = vpop.f32.mrf.mxu0
      %6684 = vmatmul.bf16.gmra.mxu0 %v5977
      %v6685 = vpop.f32.mrf.mxu0
      %v6686 = vadd.f32 0.0, %v6685
      %v6687 = vpop.f32.mrf.mxu0
      %v6688 = vadd.f32 0.0, %v6687
      %6689 = vmatmul.bf16.gmra.mxu0 %v5980
      %v6690 = vpop.f32.mrf.mxu0
      %v6691 = vpop.f32.mrf.mxu0
      %6692 = vmatmul.bf16.gmra.mxu0 %v6559
      %v6693 = vpop.f32.mrf.mxu0
      %v6694 = vadd.f32 0.0, %v6693
      %v6695 = vpop.f32.mrf.mxu0
      %v6696 = vadd.f32 0.0, %v6695
      %6697 = vmatmul.bf16.gmra.mxu0 %v6562
      %v6698 = vpop.f32.mrf.mxu0
      %v6699 = vpop.f32.mrf.mxu0
      %6700 = vdwg.mxu0
      %v6701 = vadd.f32 %v6507, %v6574
      %v6702 = vadd.f32 %v6508, %v6576
      %v6703 = vadd.f32 %v6509, %v6582
      %v6704 = vadd.f32 %v6510, %v6584
      %v6705 = vadd.f32 %v6511, %v6590
      %v6706 = vadd.f32 %v6512, %v6592
      %v6707 = vadd.f32 %v6513, %v6598
      %v6708 = vadd.f32 %v6514, %v6600
      %v6709 = vadd.f32 %v6515, %v6606
      %v6710 = vadd.f32 %v6516, %v6608
      %v6711 = vadd.f32 %v6517, %v6614
      %v6712 = vadd.f32 %v6518, %v6616
      %v6713 = vadd.f32 %v6519, %v6622
      %v6714 = vadd.f32 %v6520, %v6624
      %v6715 = vadd.f32 %v6521, %v6630
      %v6716 = vadd.f32 %v6522, %v6632
      %v6717 = vadd.f32 %v6523, %v6638
      %v6718 = vadd.f32 %v6524, %v6640
      %v6719 = vadd.f32 %v6525, %v6646
      %v6720 = vadd.f32 %v6526, %v6648
      %v6721 = vadd.f32 %v6527, %v6654
      %v6722 = vadd.f32 %v6528, %v6656
      %v6723 = vadd.f32 %v6529, %v6662
      %v6724 = vadd.f32 %v6530, %v6664
      %v6725 = vadd.f32 %v6531, %v6670
      %v6726 = vadd.f32 %v6532, %v6672
      %v6727 = vadd.f32 %v6533, %v6678
      %v6728 = vadd.f32 %v6534, %v6680
      %v6729 = vadd.f32 %v6535, %v6686
      %v6730 = vadd.f32 %v6536, %v6688
      %v6731 = vadd.f32 %v6537, %v6694
      %v6732 = vadd.f32 %v6538, %v6696
      %s6733 = scalar_lea.vmem %s3, 48
      %v6734 = vld [vmem:[%s6733] sm:$0xf]
      %v6735 = vld [vmem:[%s6733 + $0x4] sm:$0xf]
      %v6740 = vunpack.c.l.b16 %v4766
      %v6741 = vunpack.c.l.b16 %v4767
      %v6742 = vunpack.c.l.b16 %v4768
      %v6743 = vunpack.c.l.b16 %v4769
      %v6744 = vpack.c.b16 %v6741, %v6740
      %v6745 = vpack.c.b16 %v6743, %v6742
      %v6748 = vunpack.c.l.b16 %v6734
      %v6749 = vunpack.c.l.b16 %v6735
      %v6750 = vpack.c.b16 %v6749, %v6748
      %v6753 = vsel %vm1503, %v6744, 0
      %v6756 = vsel %vm1503, %v6745, 0
      %6758 = vmatpush.bf16.msra.mxu0 0
      %6759 = vmatpush.bf16.msra.mxu0 0
      %6760 = vmatpush.bf16.msra.mxu0 0
      %6761 = vmatpush.bf16.msra.mxu0 0
      %6762 = vmatpush.bf16.msra.mxu0 0
      %6763 = vmatpush.bf16.msra.mxu0 0
      %6764 = vmatpush.bf16.msra.mxu0 0
      %6765 = vmatpush.bf16.msra.mxu0 %v6750
      %6766 = vmatmul.bf16.gmra.mxu0 %v5497
      %v6767 = vpop.f32.mrf.mxu0
      %v6768 = vadd.f32 0.0, %v6767
      %v6769 = vpop.f32.mrf.mxu0
      %v6770 = vadd.f32 0.0, %v6769
      %6771 = vmatmul.bf16.gmra.mxu0 %v5500
      %v6772 = vpop.f32.mrf.mxu0
      %v6773 = vpop.f32.mrf.mxu0
      %6774 = vmatmul.bf16.gmra.mxu0 %v5503
      %v6775 = vpop.f32.mrf.mxu0
      %v6776 = vadd.f32 0.0, %v6775
      %v6777 = vpop.f32.mrf.mxu0
      %v6778 = vadd.f32 0.0, %v6777
      %6779 = vmatmul.bf16.gmra.mxu0 %v5506
      %v6780 = vpop.f32.mrf.mxu0
      %v6781 = vpop.f32.mrf.mxu0
      %6782 = vmatmul.bf16.gmra.mxu0 %v5509
      %v6783 = vpop.f32.mrf.mxu0
      %v6784 = vadd.f32 0.0, %v6783
      %v6785 = vpop.f32.mrf.mxu0
      %v6786 = vadd.f32 0.0, %v6785
      %6787 = vmatmul.bf16.gmra.mxu0 %v5512
      %v6788 = vpop.f32.mrf.mxu0
      %v6789 = vpop.f32.mrf.mxu0
      %6790 = vmatmul.bf16.gmra.mxu0 %v5515
      %v6791 = vpop.f32.mrf.mxu0
      %v6792 = vadd.f32 0.0, %v6791
      %v6793 = vpop.f32.mrf.mxu0
      %v6794 = vadd.f32 0.0, %v6793
      %6795 = vmatmul.bf16.gmra.mxu0 %v5518
      %v6796 = vpop.f32.mrf.mxu0
      %v6797 = vpop.f32.mrf.mxu0
      %6798 = vmatmul.bf16.gmra.mxu0 %v5521
      %v6799 = vpop.f32.mrf.mxu0
      %v6800 = vadd.f32 0.0, %v6799
      %v6801 = vpop.f32.mrf.mxu0
      %v6802 = vadd.f32 0.0, %v6801
      %6803 = vmatmul.bf16.gmra.mxu0 %v5524
      %v6804 = vpop.f32.mrf.mxu0
      %v6805 = vpop.f32.mrf.mxu0
      %6806 = vmatmul.bf16.gmra.mxu0 %v5527
      %v6807 = vpop.f32.mrf.mxu0
      %v6808 = vadd.f32 0.0, %v6807
      %v6809 = vpop.f32.mrf.mxu0
      %v6810 = vadd.f32 0.0, %v6809
      %6811 = vmatmul.bf16.gmra.mxu0 %v5530
      %v6812 = vpop.f32.mrf.mxu0
      %v6813 = vpop.f32.mrf.mxu0
      %6814 = vmatmul.bf16.gmra.mxu0 %v5533
      %v6815 = vpop.f32.mrf.mxu0
      %v6816 = vadd.f32 0.0, %v6815
      %v6817 = vpop.f32.mrf.mxu0
      %v6818 = vadd.f32 0.0, %v6817
      %6819 = vmatmul.bf16.gmra.mxu0 %v5536
      %v6820 = vpop.f32.mrf.mxu0
      %v6821 = vpop.f32.mrf.mxu0
      %6822 = vmatmul.bf16.gmra.mxu0 %v5539
      %v6823 = vpop.f32.mrf.mxu0
      %v6824 = vadd.f32 0.0, %v6823
      %v6825 = vpop.f32.mrf.mxu0
      %v6826 = vadd.f32 0.0, %v6825
      %6827 = vmatmul.bf16.gmra.mxu0 %v5542
      %v6828 = vpop.f32.mrf.mxu0
      %v6829 = vpop.f32.mrf.mxu0
      %6830 = vmatmul.bf16.gmra.mxu0 %v5545
      %v6831 = vpop.f32.mrf.mxu0
      %v6832 = vadd.f32 0.0, %v6831
      %v6833 = vpop.f32.mrf.mxu0
      %v6834 = vadd.f32 0.0, %v6833
      %6835 = vmatmul.bf16.gmra.mxu0 %v5548
      %v6836 = vpop.f32.mrf.mxu0
      %v6837 = vpop.f32.mrf.mxu0
      %6838 = vmatmul.bf16.gmra.mxu0 %v5551
      %v6839 = vpop.f32.mrf.mxu0
      %v6840 = vadd.f32 0.0, %v6839
      %v6841 = vpop.f32.mrf.mxu0
      %v6842 = vadd.f32 0.0, %v6841
      %6843 = vmatmul.bf16.gmra.mxu0 %v5554
      %v6844 = vpop.f32.mrf.mxu0
      %v6845 = vpop.f32.mrf.mxu0
      %6846 = vmatmul.bf16.gmra.mxu0 %v5557
      %v6847 = vpop.f32.mrf.mxu0
      %v6848 = vadd.f32 0.0, %v6847
      %v6849 = vpop.f32.mrf.mxu0
      %v6850 = vadd.f32 0.0, %v6849
      %6851 = vmatmul.bf16.gmra.mxu0 %v5560
      %v6852 = vpop.f32.mrf.mxu0
      %v6853 = vpop.f32.mrf.mxu0
      %6854 = vmatmul.bf16.gmra.mxu0 %v5563
      %v6855 = vpop.f32.mrf.mxu0
      %v6856 = vadd.f32 0.0, %v6855
      %v6857 = vpop.f32.mrf.mxu0
      %v6858 = vadd.f32 0.0, %v6857
      %6859 = vmatmul.bf16.gmra.mxu0 %v5566
      %v6860 = vpop.f32.mrf.mxu0
      %v6861 = vpop.f32.mrf.mxu0
      %6862 = vmatmul.bf16.gmra.mxu0 %v5569
      %v6863 = vpop.f32.mrf.mxu0
      %v6864 = vadd.f32 0.0, %v6863
      %v6865 = vpop.f32.mrf.mxu0
      %v6866 = vadd.f32 0.0, %v6865
      %6867 = vmatmul.bf16.gmra.mxu0 %v5572
      %v6868 = vpop.f32.mrf.mxu0
      %v6869 = vpop.f32.mrf.mxu0
      %6870 = vmatmul.bf16.gmra.mxu0 %v5575
      %v6871 = vpop.f32.mrf.mxu0
      %v6872 = vadd.f32 0.0, %v6871
      %v6873 = vpop.f32.mrf.mxu0
      %v6874 = vadd.f32 0.0, %v6873
      %6875 = vmatmul.bf16.gmra.mxu0 %v5578
      %v6876 = vpop.f32.mrf.mxu0
      %v6877 = vpop.f32.mrf.mxu0
      %6878 = vmatmul.bf16.gmra.mxu0 %v6171
      %v6879 = vpop.f32.mrf.mxu0
      %v6880 = vadd.f32 0.0, %v6879
      %v6881 = vpop.f32.mrf.mxu0
      %v6882 = vadd.f32 0.0, %v6881
      %6883 = vmatmul.bf16.gmra.mxu0 %v6174
      %v6884 = vpop.f32.mrf.mxu0
      %v6885 = vpop.f32.mrf.mxu0
      %6886 = vmatmul.bf16.gmra.mxu0 %v6753
      %v6887 = vpop.f32.mrf.mxu0
      %v6888 = vadd.f32 0.0, %v6887
      %v6889 = vpop.f32.mrf.mxu0
      %v6890 = vadd.f32 0.0, %v6889
      %6891 = vmatmul.bf16.gmra.mxu0 %v6756
      %v6892 = vpop.f32.mrf.mxu0
      %v6893 = vpop.f32.mrf.mxu0
      %6894 = vdwg.mxu0
      %v6895 = vadd.f32 %v6701, %v6768
      %v6896 = vadd.f32 %v6702, %v6770
      %v6897 = vadd.f32 %v6703, %v6776
      %v6898 = vadd.f32 %v6704, %v6778
      %v6899 = vadd.f32 %v6705, %v6784
      %v6900 = vadd.f32 %v6706, %v6786
      %v6901 = vadd.f32 %v6707, %v6792
      %v6902 = vadd.f32 %v6708, %v6794
      %v6903 = vadd.f32 %v6709, %v6800
      %v6904 = vadd.f32 %v6710, %v6802
      %v6905 = vadd.f32 %v6711, %v6808
      %v6906 = vadd.f32 %v6712, %v6810
      %v6907 = vadd.f32 %v6713, %v6816
      %v6908 = vadd.f32 %v6714, %v6818
      %v6909 = vadd.f32 %v6715, %v6824
      %v6910 = vadd.f32 %v6716, %v6826
      %v6911 = vadd.f32 %v6717, %v6832
      %v6912 = vadd.f32 %v6718, %v6834
      %v6913 = vadd.f32 %v6719, %v6840
      %v6914 = vadd.f32 %v6720, %v6842
      %v6915 = vadd.f32 %v6721, %v6848
      %v6916 = vadd.f32 %v6722, %v6850
      %v6917 = vadd.f32 %v6723, %v6856
      %v6918 = vadd.f32 %v6724, %v6858
      %v6919 = vadd.f32 %v6725, %v6864
      %v6920 = vadd.f32 %v6726, %v6866
      %v6921 = vadd.f32 %v6727, %v6872
      %v6922 = vadd.f32 %v6728, %v6874
      %v6923 = vadd.f32 %v6729, %v6880
      %v6924 = vadd.f32 %v6730, %v6882
      %v6925 = vadd.f32 %v6731, %v6888
      %v6926 = vadd.f32 %v6732, %v6890
      %s6927 = scalar_lea.vmem %s3, 56
      %v6928 = vld [vmem:[%s6927] sm:$0xf]
      %v6929 = vld [vmem:[%s6927 + $0x4] sm:$0xf]
      %v6934 = vunpack.c.l.b16 %v4838
      %v6935 = vunpack.c.l.b16 %v4839
      %v6936 = vunpack.c.l.b16 %v4840
      %v6937 = vunpack.c.l.b16 %v4841
      %v6938 = vpack.c.b16 %v6935, %v6934
      %v6939 = vpack.c.b16 %v6937, %v6936
      %v6942 = vunpack.c.l.b16 %v6928
      %v6943 = vunpack.c.l.b16 %v6929
      %v6944 = vpack.c.b16 %v6943, %v6942
      %v6947 = vsel %vm1503, %v6938, 0
      %v6950 = vsel %vm1503, %v6939, 0
      %6952 = vmatpush.bf16.msra.mxu0 0
      %6953 = vmatpush.bf16.msra.mxu0 0
      %6954 = vmatpush.bf16.msra.mxu0 0
      %6955 = vmatpush.bf16.msra.mxu0 0
      %6956 = vmatpush.bf16.msra.mxu0 0
      %6957 = vmatpush.bf16.msra.mxu0 0
      %6958 = vmatpush.bf16.msra.mxu0 0
      %6959 = vmatpush.bf16.msra.mxu0 %v6944
      %6960 = vmatmul.bf16.gmra.mxu0 %v5098
      %v6961 = vpop.f32.mrf.mxu0
      %v6962 = vadd.f32 0.0, %v6961
      %v6963 = vpop.f32.mrf.mxu0
      %v6964 = vadd.f32 0.0, %v6963
      %6965 = vmatmul.bf16.gmra.mxu0 %v5101
      %v6966 = vpop.f32.mrf.mxu0
      %v6967 = vpop.f32.mrf.mxu0
      %6968 = vmatmul.bf16.gmra.mxu0 %v5104
      %v6969 = vpop.f32.mrf.mxu0
      %v6970 = vadd.f32 0.0, %v6969
      %v6971 = vpop.f32.mrf.mxu0
      %v6972 = vadd.f32 0.0, %v6971
      %6973 = vmatmul.bf16.gmra.mxu0 %v5107
      %v6974 = vpop.f32.mrf.mxu0
      %v6975 = vpop.f32.mrf.mxu0
      %6976 = vmatmul.bf16.gmra.mxu0 %v5110
      %v6977 = vpop.f32.mrf.mxu0
      %v6978 = vadd.f32 0.0, %v6977
      %v6979 = vpop.f32.mrf.mxu0
      %v6980 = vadd.f32 0.0, %v6979
      %6981 = vmatmul.bf16.gmra.mxu0 %v5113
      %v6982 = vpop.f32.mrf.mxu0
      %v6983 = vpop.f32.mrf.mxu0
      %6984 = vmatmul.bf16.gmra.mxu0 %v5116
      %v6985 = vpop.f32.mrf.mxu0
      %v6986 = vadd.f32 0.0, %v6985
      %v6987 = vpop.f32.mrf.mxu0
      %v6988 = vadd.f32 0.0, %v6987
      %6989 = vmatmul.bf16.gmra.mxu0 %v5119
      %v6990 = vpop.f32.mrf.mxu0
      %v6991 = vpop.f32.mrf.mxu0
      %6992 = vmatmul.bf16.gmra.mxu0 %v5122
      %v6993 = vpop.f32.mrf.mxu0
      %v6994 = vadd.f32 0.0, %v6993
      %v6995 = vpop.f32.mrf.mxu0
      %v6996 = vadd.f32 0.0, %v6995
      %6997 = vmatmul.bf16.gmra.mxu0 %v5125
      %v6998 = vpop.f32.mrf.mxu0
      %v6999 = vpop.f32.mrf.mxu0
      %7000 = vmatmul.bf16.gmra.mxu0 %v5128
      %v7001 = vpop.f32.mrf.mxu0
      %v7002 = vadd.f32 0.0, %v7001
      %v7003 = vpop.f32.mrf.mxu0
      %v7004 = vadd.f32 0.0, %v7003
      %7005 = vmatmul.bf16.gmra.mxu0 %v5131
      %v7006 = vpop.f32.mrf.mxu0
      %v7007 = vpop.f32.mrf.mxu0
      %7008 = vmatmul.bf16.gmra.mxu0 %v5134
      %v7009 = vpop.f32.mrf.mxu0
      %v7010 = vadd.f32 0.0, %v7009
      %v7011 = vpop.f32.mrf.mxu0
      %v7012 = vadd.f32 0.0, %v7011
      %7013 = vmatmul.bf16.gmra.mxu0 %v5137
      %v7014 = vpop.f32.mrf.mxu0
      %v7015 = vpop.f32.mrf.mxu0
      %7016 = vmatmul.bf16.gmra.mxu0 %v5140
      %v7017 = vpop.f32.mrf.mxu0
      %v7018 = vadd.f32 0.0, %v7017
      %v7019 = vpop.f32.mrf.mxu0
      %v7020 = vadd.f32 0.0, %v7019
      %7021 = vmatmul.bf16.gmra.mxu0 %v5143
      %v7022 = vpop.f32.mrf.mxu0
      %v7023 = vpop.f32.mrf.mxu0
      %7024 = vmatmul.bf16.gmra.mxu0 %v5146
      %v7025 = vpop.f32.mrf.mxu0
      %v7026 = vadd.f32 0.0, %v7025
      %v7027 = vpop.f32.mrf.mxu0
      %v7028 = vadd.f32 0.0, %v7027
      %7029 = vmatmul.bf16.gmra.mxu0 %v5149
      %v7030 = vpop.f32.mrf.mxu0
      %v7031 = vpop.f32.mrf.mxu0
      %7032 = vmatmul.bf16.gmra.mxu0 %v5152
      %v7033 = vpop.f32.mrf.mxu0
      %v7034 = vadd.f32 0.0, %v7033
      %v7035 = vpop.f32.mrf.mxu0
      %v7036 = vadd.f32 0.0, %v7035
      %7037 = vmatmul.bf16.gmra.mxu0 %v5155
      %v7038 = vpop.f32.mrf.mxu0
      %v7039 = vpop.f32.mrf.mxu0
      %7040 = vmatmul.bf16.gmra.mxu0 %v5158
      %v7041 = vpop.f32.mrf.mxu0
      %v7042 = vadd.f32 0.0, %v7041
      %v7043 = vpop.f32.mrf.mxu0
      %v7044 = vadd.f32 0.0, %v7043
      %7045 = vmatmul.bf16.gmra.mxu0 %v5161
      %v7046 = vpop.f32.mrf.mxu0
      %v7047 = vpop.f32.mrf.mxu0
      %7048 = vmatmul.bf16.gmra.mxu0 %v5164
      %v7049 = vpop.f32.mrf.mxu0
      %v7050 = vadd.f32 0.0, %v7049
      %v7051 = vpop.f32.mrf.mxu0
      %v7052 = vadd.f32 0.0, %v7051
      %7053 = vmatmul.bf16.gmra.mxu0 %v5167
      %v7054 = vpop.f32.mrf.mxu0
      %v7055 = vpop.f32.mrf.mxu0
      %7056 = vmatmul.bf16.gmra.mxu0 %v5170
      %v7057 = vpop.f32.mrf.mxu0
      %v7058 = vadd.f32 0.0, %v7057
      %v7059 = vpop.f32.mrf.mxu0
      %v7060 = vadd.f32 0.0, %v7059
      %7061 = vmatmul.bf16.gmra.mxu0 %v5173
      %v7062 = vpop.f32.mrf.mxu0
      %v7063 = vpop.f32.mrf.mxu0
      %7064 = vmatmul.bf16.gmra.mxu0 %v5176
      %v7065 = vpop.f32.mrf.mxu0
      %v7066 = vadd.f32 0.0, %v7065
      %v7067 = vpop.f32.mrf.mxu0
      %v7068 = vadd.f32 0.0, %v7067
      %7069 = vmatmul.bf16.gmra.mxu0 %v5179
      %v7070 = vpop.f32.mrf.mxu0
      %v7071 = vpop.f32.mrf.mxu0
      %7072 = vmatmul.bf16.gmra.mxu0 %v6365
      %v7073 = vpop.f32.mrf.mxu0
      %v7074 = vadd.f32 0.0, %v7073
      %v7075 = vpop.f32.mrf.mxu0
      %v7076 = vadd.f32 0.0, %v7075
      %7077 = vmatmul.bf16.gmra.mxu0 %v6368
      %v7078 = vpop.f32.mrf.mxu0
      %v7079 = vpop.f32.mrf.mxu0
      %7080 = vmatmul.bf16.gmra.mxu0 %v6947
      %v7081 = vpop.f32.mrf.mxu0
      %v7082 = vadd.f32 0.0, %v7081
      %v7083 = vpop.f32.mrf.mxu0
      %v7084 = vadd.f32 0.0, %v7083
      %7085 = vmatmul.bf16.gmra.mxu0 %v6950
      %v7086 = vpop.f32.mrf.mxu0
      %v7087 = vpop.f32.mrf.mxu0
      %7088 = vdwg.mxu0
      %v7089 = vadd.f32 %v6895, %v6962
      %v7090 = vadd.f32 %v6896, %v6964
      %v7091 = vadd.f32 %v6897, %v6970
      %v7092 = vadd.f32 %v6898, %v6972
      %v7093 = vadd.f32 %v6899, %v6978
      %v7094 = vadd.f32 %v6900, %v6980
      %v7095 = vadd.f32 %v6901, %v6986
      %v7096 = vadd.f32 %v6902, %v6988
      %v7097 = vadd.f32 %v6903, %v6994
      %v7098 = vadd.f32 %v6904, %v6996
      %v7099 = vadd.f32 %v6905, %v7002
      %v7100 = vadd.f32 %v6906, %v7004
      %v7101 = vadd.f32 %v6907, %v7010
      %v7102 = vadd.f32 %v6908, %v7012
      %v7103 = vadd.f32 %v6909, %v7018
      %v7104 = vadd.f32 %v6910, %v7020
      %v7105 = vadd.f32 %v6911, %v7026
      %v7106 = vadd.f32 %v6912, %v7028
      %v7107 = vadd.f32 %v6913, %v7034
      %v7108 = vadd.f32 %v6914, %v7036
      %v7109 = vadd.f32 %v6915, %v7042
      %v7110 = vadd.f32 %v6916, %v7044
      %v7111 = vadd.f32 %v6917, %v7050
      %v7112 = vadd.f32 %v6918, %v7052
      %v7113 = vadd.f32 %v6919, %v7058
      %v7114 = vadd.f32 %v6920, %v7060
      %v7115 = vadd.f32 %v6921, %v7066
      %v7116 = vadd.f32 %v6922, %v7068
      %v7117 = vadd.f32 %v6923, %v7074
      %v7118 = vadd.f32 %v6924, %v7076
      %v7119 = vadd.f32 %v6925, %v7082
      %v7120 = vadd.f32 %v6926, %v7084
      %s7121 = scalar_lea.vmem %s3, 64
      %v7122 = vld [vmem:[%s7121] sm:$0xf]
      %v7123 = vld [vmem:[%s7121 + $0x4] sm:$0xf]
      %v7128 = vunpack.c.l.b16 %v4910
      %v7129 = vunpack.c.l.b16 %v4911
      %v7130 = vunpack.c.l.b16 %v4912
      %v7131 = vunpack.c.l.b16 %v4913
      %v7132 = vpack.c.b16 %v7129, %v7128
      %v7133 = vpack.c.b16 %v7131, %v7130
      %v7136 = vunpack.c.l.b16 %v7122
      %v7137 = vunpack.c.l.b16 %v7123
      %v7138 = vpack.c.b16 %v7137, %v7136
      %v7141 = vsel %vm1503, %v7132, 0
      %v7144 = vsel %vm1503, %v7133, 0
      %7146 = vmatpush.bf16.msra.mxu0 0
      %7147 = vmatpush.bf16.msra.mxu0 0
      %7148 = vmatpush.bf16.msra.mxu0 0
      %7149 = vmatpush.bf16.msra.mxu0 0
      %7150 = vmatpush.bf16.msra.mxu0 0
      %7151 = vmatpush.bf16.msra.mxu0 0
      %7152 = vmatpush.bf16.msra.mxu0 0
      %7153 = vmatpush.bf16.msra.mxu0 %v7138
      %7154 = vmatmul.bf16.gmra.mxu0 %v5899
      %v7155 = vpop.f32.mrf.mxu0
      %v7156 = vadd.f32 0.0, %v7155
      %v7157 = vpop.f32.mrf.mxu0
      %v7158 = vadd.f32 0.0, %v7157
      %7159 = vmatmul.bf16.gmra.mxu0 %v5902
      %v7160 = vpop.f32.mrf.mxu0
      %v7161 = vpop.f32.mrf.mxu0
      %7162 = vmatmul.bf16.gmra.mxu0 %v5905
      %v7163 = vpop.f32.mrf.mxu0
      %v7164 = vadd.f32 0.0, %v7163
      %v7165 = vpop.f32.mrf.mxu0
      %v7166 = vadd.f32 0.0, %v7165
      %7167 = vmatmul.bf16.gmra.mxu0 %v5908
      %v7168 = vpop.f32.mrf.mxu0
      %v7169 = vpop.f32.mrf.mxu0
      %7170 = vmatmul.bf16.gmra.mxu0 %v5911
      %v7171 = vpop.f32.mrf.mxu0
      %v7172 = vadd.f32 0.0, %v7171
      %v7173 = vpop.f32.mrf.mxu0
      %v7174 = vadd.f32 0.0, %v7173
      %7175 = vmatmul.bf16.gmra.mxu0 %v5914
      %v7176 = vpop.f32.mrf.mxu0
      %v7177 = vpop.f32.mrf.mxu0
      %7178 = vmatmul.bf16.gmra.mxu0 %v5917
      %v7179 = vpop.f32.mrf.mxu0
      %v7180 = vadd.f32 0.0, %v7179
      %v7181 = vpop.f32.mrf.mxu0
      %v7182 = vadd.f32 0.0, %v7181
      %7183 = vmatmul.bf16.gmra.mxu0 %v5920
      %v7184 = vpop.f32.mrf.mxu0
      %v7185 = vpop.f32.mrf.mxu0
      %7186 = vmatmul.bf16.gmra.mxu0 %v5923
      %v7187 = vpop.f32.mrf.mxu0
      %v7188 = vadd.f32 0.0, %v7187
      %v7189 = vpop.f32.mrf.mxu0
      %v7190 = vadd.f32 0.0, %v7189
      %7191 = vmatmul.bf16.gmra.mxu0 %v5926
      %v7192 = vpop.f32.mrf.mxu0
      %v7193 = vpop.f32.mrf.mxu0
      %7194 = vmatmul.bf16.gmra.mxu0 %v5929
      %v7195 = vpop.f32.mrf.mxu0
      %v7196 = vadd.f32 0.0, %v7195
      %v7197 = vpop.f32.mrf.mxu0
      %v7198 = vadd.f32 0.0, %v7197
      %7199 = vmatmul.bf16.gmra.mxu0 %v5932
      %v7200 = vpop.f32.mrf.mxu0
      %v7201 = vpop.f32.mrf.mxu0
      %7202 = vmatmul.bf16.gmra.mxu0 %v5935
      %v7203 = vpop.f32.mrf.mxu0
      %v7204 = vadd.f32 0.0, %v7203
      %v7205 = vpop.f32.mrf.mxu0
      %v7206 = vadd.f32 0.0, %v7205
      %7207 = vmatmul.bf16.gmra.mxu0 %v5938
      %v7208 = vpop.f32.mrf.mxu0
      %v7209 = vpop.f32.mrf.mxu0
      %7210 = vmatmul.bf16.gmra.mxu0 %v5941
      %v7211 = vpop.f32.mrf.mxu0
      %v7212 = vadd.f32 0.0, %v7211
      %v7213 = vpop.f32.mrf.mxu0
      %v7214 = vadd.f32 0.0, %v7213
      %7215 = vmatmul.bf16.gmra.mxu0 %v5944
      %v7216 = vpop.f32.mrf.mxu0
      %v7217 = vpop.f32.mrf.mxu0
      %7218 = vmatmul.bf16.gmra.mxu0 %v5947
      %v7219 = vpop.f32.mrf.mxu0
      %v7220 = vadd.f32 0.0, %v7219
      %v7221 = vpop.f32.mrf.mxu0
      %v7222 = vadd.f32 0.0, %v7221
      %7223 = vmatmul.bf16.gmra.mxu0 %v5950
      %v7224 = vpop.f32.mrf.mxu0
      %v7225 = vpop.f32.mrf.mxu0
      %7226 = vmatmul.bf16.gmra.mxu0 %v5953
      %v7227 = vpop.f32.mrf.mxu0
      %v7228 = vadd.f32 0.0, %v7227
      %v7229 = vpop.f32.mrf.mxu0
      %v7230 = vadd.f32 0.0, %v7229
      %7231 = vmatmul.bf16.gmra.mxu0 %v5956
      %v7232 = vpop.f32.mrf.mxu0
      %v7233 = vpop.f32.mrf.mxu0
      %7234 = vmatmul.bf16.gmra.mxu0 %v5959
      %v7235 = vpop.f32.mrf.mxu0
      %v7236 = vadd.f32 0.0, %v7235
      %v7237 = vpop.f32.mrf.mxu0
      %v7238 = vadd.f32 0.0, %v7237
      %7239 = vmatmul.bf16.gmra.mxu0 %v5962
      %v7240 = vpop.f32.mrf.mxu0
      %v7241 = vpop.f32.mrf.mxu0
      %7242 = vmatmul.bf16.gmra.mxu0 %v5965
      %v7243 = vpop.f32.mrf.mxu0
      %v7244 = vadd.f32 0.0, %v7243
      %v7245 = vpop.f32.mrf.mxu0
      %v7246 = vadd.f32 0.0, %v7245
      %7247 = vmatmul.bf16.gmra.mxu0 %v5968
      %v7248 = vpop.f32.mrf.mxu0
      %v7249 = vpop.f32.mrf.mxu0
      %7250 = vmatmul.bf16.gmra.mxu0 %v5971
      %v7251 = vpop.f32.mrf.mxu0
      %v7252 = vadd.f32 0.0, %v7251
      %v7253 = vpop.f32.mrf.mxu0
      %v7254 = vadd.f32 0.0, %v7253
      %7255 = vmatmul.bf16.gmra.mxu0 %v5974
      %v7256 = vpop.f32.mrf.mxu0
      %v7257 = vpop.f32.mrf.mxu0
      %7258 = vmatmul.bf16.gmra.mxu0 %v5977
      %v7259 = vpop.f32.mrf.mxu0
      %v7260 = vadd.f32 0.0, %v7259
      %v7261 = vpop.f32.mrf.mxu0
      %v7262 = vadd.f32 0.0, %v7261
      %7263 = vmatmul.bf16.gmra.mxu0 %v5980
      %v7264 = vpop.f32.mrf.mxu0
      %v7265 = vpop.f32.mrf.mxu0
      %7266 = vmatmul.bf16.gmra.mxu0 %v6559
      %v7267 = vpop.f32.mrf.mxu0
      %v7268 = vadd.f32 0.0, %v7267
      %v7269 = vpop.f32.mrf.mxu0
      %v7270 = vadd.f32 0.0, %v7269
      %7271 = vmatmul.bf16.gmra.mxu0 %v6562
      %v7272 = vpop.f32.mrf.mxu0
      %v7273 = vpop.f32.mrf.mxu0
      %7274 = vmatmul.bf16.gmra.mxu0 %v7141
      %v7275 = vpop.f32.mrf.mxu0
      %v7276 = vadd.f32 0.0, %v7275
      %v7277 = vpop.f32.mrf.mxu0
      %v7278 = vadd.f32 0.0, %v7277
      %7279 = vmatmul.bf16.gmra.mxu0 %v7144
      %v7280 = vpop.f32.mrf.mxu0
      %v7281 = vpop.f32.mrf.mxu0
      %7282 = vdwg.mxu0
      %v7283 = vadd.f32 %v7089, %v7156
      %v7284 = vadd.f32 %v7090, %v7158
      %v7285 = vadd.f32 %v7091, %v7164
      %v7286 = vadd.f32 %v7092, %v7166
      %v7287 = vadd.f32 %v7093, %v7172
      %v7288 = vadd.f32 %v7094, %v7174
      %v7289 = vadd.f32 %v7095, %v7180
      %v7290 = vadd.f32 %v7096, %v7182
      %v7291 = vadd.f32 %v7097, %v7188
      %v7292 = vadd.f32 %v7098, %v7190
      %v7293 = vadd.f32 %v7099, %v7196
      %v7294 = vadd.f32 %v7100, %v7198
      %v7295 = vadd.f32 %v7101, %v7204
      %v7296 = vadd.f32 %v7102, %v7206
      %v7297 = vadd.f32 %v7103, %v7212
      %v7298 = vadd.f32 %v7104, %v7214
      %v7299 = vadd.f32 %v7105, %v7220
      %v7300 = vadd.f32 %v7106, %v7222
      %v7301 = vadd.f32 %v7107, %v7228
      %v7302 = vadd.f32 %v7108, %v7230
      %v7303 = vadd.f32 %v7109, %v7236
      %v7304 = vadd.f32 %v7110, %v7238
      %v7305 = vadd.f32 %v7111, %v7244
      %v7306 = vadd.f32 %v7112, %v7246
      %v7307 = vadd.f32 %v7113, %v7252
      %v7308 = vadd.f32 %v7114, %v7254
      %v7309 = vadd.f32 %v7115, %v7260
      %v7310 = vadd.f32 %v7116, %v7262
      %v7311 = vadd.f32 %v7117, %v7268
      %v7312 = vadd.f32 %v7118, %v7270
      %v7313 = vadd.f32 %v7119, %v7276
      %v7314 = vadd.f32 %v7120, %v7278
      %v7315 = vld [vmem:[%s4] sm:$0x1]
      %v7317 = vperm.slane %v7315, 0
      %v7319 = vadd.f32 %v7283, %v7317
      %v7320 = vadd.f32 %v7284, %v7317
      %v7321 = vadd.f32 %v7285, %v7317
      %v7322 = vadd.f32 %v7286, %v7317
      %v7323 = vadd.f32 %v7287, %v7317
      %v7324 = vadd.f32 %v7288, %v7317
      %v7325 = vadd.f32 %v7289, %v7317
      %v7326 = vadd.f32 %v7290, %v7317
      %v7327 = vadd.f32 %v7291, %v7317
      %v7328 = vadd.f32 %v7292, %v7317
      %v7329 = vadd.f32 %v7293, %v7317
      %v7330 = vadd.f32 %v7294, %v7317
      %v7331 = vadd.f32 %v7295, %v7317
      %v7332 = vadd.f32 %v7296, %v7317
      %v7333 = vadd.f32 %v7297, %v7317
      %v7334 = vadd.f32 %v7298, %v7317
      %v7335 = vadd.f32 %v7299, %v7317
      %v7336 = vadd.f32 %v7300, %v7317
      %v7337 = vadd.f32 %v7301, %v7317
      %v7338 = vadd.f32 %v7302, %v7317
      %v7339 = vadd.f32 %v7303, %v7317
      %v7340 = vadd.f32 %v7304, %v7317
      %v7341 = vadd.f32 %v7305, %v7317
      %v7342 = vadd.f32 %v7306, %v7317
      %v7343 = vadd.f32 %v7307, %v7317
      %v7344 = vadd.f32 %v7308, %v7317
      %v7345 = vadd.f32 %v7309, %v7317
      %v7346 = vadd.f32 %v7310, %v7317
      %v7347 = vadd.f32 %v7311, %v7317
      %v7348 = vadd.f32 %v7312, %v7317
      %v7349 = vadd.f32 %v7313, %v7317
      %v7350 = vadd.f32 %v7314, %v7317
      %v7351 = vsub.f32 0.0, %v7319
      %v7352 = vsub.f32 0.0, %v7320
      %v7353 = vsub.f32 0.0, %v7321
      %v7354 = vsub.f32 0.0, %v7322
      %v7355 = vsub.f32 0.0, %v7323
      %v7356 = vsub.f32 0.0, %v7324
      %v7357 = vsub.f32 0.0, %v7325
      %v7358 = vsub.f32 0.0, %v7326
      %v7359 = vsub.f32 0.0, %v7327
      %v7360 = vsub.f32 0.0, %v7328
      %v7361 = vsub.f32 0.0, %v7329
      %v7362 = vsub.f32 0.0, %v7330
      %v7363 = vsub.f32 0.0, %v7331
      %v7364 = vsub.f32 0.0, %v7332
      %v7365 = vsub.f32 0.0, %v7333
      %v7366 = vsub.f32 0.0, %v7334
      %v7367 = vsub.f32 0.0, %v7335
      %v7368 = vsub.f32 0.0, %v7336
      %v7369 = vsub.f32 0.0, %v7337
      %v7370 = vsub.f32 0.0, %v7338
      %v7371 = vsub.f32 0.0, %v7339
      %v7372 = vsub.f32 0.0, %v7340
      %v7373 = vsub.f32 0.0, %v7341
      %v7374 = vsub.f32 0.0, %v7342
      %v7375 = vsub.f32 0.0, %v7343
      %v7376 = vsub.f32 0.0, %v7344
      %v7377 = vsub.f32 0.0, %v7345
      %v7378 = vsub.f32 0.0, %v7346
      %v7379 = vsub.f32 0.0, %v7347
      %v7380 = vsub.f32 0.0, %v7348
      %v7381 = vsub.f32 0.0, %v7349
      %v7382 = vsub.f32 0.0, %v7350
      %v7383 = vmul.f32 %v7351, 1.442695
      %v7384 = vpow.pop %v7383
      %v7385 = vmul.f32 %v7352, 1.442695
      %v7386 = vpow.pop %v7385
      %v7387 = vmul.f32 %v7353, 1.442695
      %v7388 = vpow.pop %v7387
      %v7389 = vmul.f32 %v7354, 1.442695
      %v7390 = vpow.pop %v7389
      %v7391 = vmul.f32 %v7355, 1.442695
      %v7392 = vpow.pop %v7391
      %v7393 = vmul.f32 %v7356, 1.442695
      %v7394 = vpow.pop %v7393
      %v7395 = vmul.f32 %v7357, 1.442695
      %v7396 = vpow.pop %v7395
      %v7397 = vmul.f32 %v7358, 1.442695
      %v7398 = vpow.pop %v7397
      %v7399 = vmul.f32 %v7359, 1.442695
      %v7400 = vpow.pop %v7399
      %v7401 = vmul.f32 %v7360, 1.442695
      %v7402 = vpow.pop %v7401
      %v7403 = vmul.f32 %v7361, 1.442695
      %v7404 = vpow.pop %v7403
      %v7405 = vmul.f32 %v7362, 1.442695
      %v7406 = vpow.pop %v7405
      %v7407 = vmul.f32 %v7363, 1.442695
      %v7408 = vpow.pop %v7407
      %v7409 = vmul.f32 %v7364, 1.442695
      %v7410 = vpow.pop %v7409
      %v7411 = vmul.f32 %v7365, 1.442695
      %v7412 = vpow.pop %v7411
      %v7413 = vmul.f32 %v7366, 1.442695
      %v7414 = vpow.pop %v7413
      %v7415 = vmul.f32 %v7367, 1.442695
      %v7416 = vpow.pop %v7415
      %v7417 = vmul.f32 %v7368, 1.442695
      %v7418 = vpow.pop %v7417
      %v7419 = vmul.f32 %v7369, 1.442695
      %v7420 = vpow.pop %v7419
      %v7421 = vmul.f32 %v7370, 1.442695
      %v7422 = vpow.pop %v7421
      %v7423 = vmul.f32 %v7371, 1.442695
      %v7424 = vpow.pop %v7423
      %v7425 = vmul.f32 %v7372, 1.442695
      %v7426 = vpow.pop %v7425
      %v7427 = vmul.f32 %v7373, 1.442695
      %v7428 = vpow.pop %v7427
      %v7429 = vmul.f32 %v7374, 1.442695
      %v7430 = vpow.pop %v7429
      %v7431 = vmul.f32 %v7375, 1.442695
      %v7432 = vpow.pop %v7431
      %v7433 = vmul.f32 %v7376, 1.442695
      %v7434 = vpow.pop %v7433
      %v7435 = vmul.f32 %v7377, 1.442695
      %v7436 = vpow.pop %v7435
      %v7437 = vmul.f32 %v7378, 1.442695
      %v7438 = vpow.pop %v7437
      %v7439 = vmul.f32 %v7379, 1.442695
      %v7440 = vpow.pop %v7439
      %v7441 = vmul.f32 %v7380, 1.442695
      %v7442 = vpow.pop %v7441
      %v7443 = vmul.f32 %v7381, 1.442695
      %v7444 = vpow.pop %v7443
      %v7445 = vmul.f32 %v7382, 1.442695
      %v7446 = vpow.pop %v7445
      %v7447 = vadd.f32 %v7384, 1.0
      %v7448 = vadd.f32 %v7386, 1.0
      %v7449 = vadd.f32 %v7388, 1.0
      %v7450 = vadd.f32 %v7390, 1.0
      %v7451 = vadd.f32 %v7392, 1.0
      %v7452 = vadd.f32 %v7394, 1.0
      %v7453 = vadd.f32 %v7396, 1.0
      %v7454 = vadd.f32 %v7398, 1.0
      %v7455 = vadd.f32 %v7400, 1.0
      %v7456 = vadd.f32 %v7402, 1.0
      %v7457 = vadd.f32 %v7404, 1.0
      %v7458 = vadd.f32 %v7406, 1.0
      %v7459 = vadd.f32 %v7408, 1.0
      %v7460 = vadd.f32 %v7410, 1.0
      %v7461 = vadd.f32 %v7412, 1.0
      %v7462 = vadd.f32 %v7414, 1.0
      %v7463 = vadd.f32 %v7416, 1.0
      %v7464 = vadd.f32 %v7418, 1.0
      %v7465 = vadd.f32 %v7420, 1.0
      %v7466 = vadd.f32 %v7422, 1.0
      %v7467 = vadd.f32 %v7424, 1.0
      %v7468 = vadd.f32 %v7426, 1.0
      %v7469 = vadd.f32 %v7428, 1.0
      %v7470 = vadd.f32 %v7430, 1.0
      %v7471 = vadd.f32 %v7432, 1.0
      %v7472 = vadd.f32 %v7434, 1.0
      %v7473 = vadd.f32 %v7436, 1.0
      %v7474 = vadd.f32 %v7438, 1.0
      %v7475 = vadd.f32 %v7440, 1.0
      %v7476 = vadd.f32 %v7442, 1.0
      %v7477 = vadd.f32 %v7444, 1.0
      %v7478 = vadd.f32 %v7446, 1.0
      %v7479 = vrcp.pop %v7447
      %v7480 = vrcp.pop %v7448
      %v7481 = vrcp.pop %v7449
      %v7482 = vrcp.pop %v7450
      %v7483 = vrcp.pop %v7451
      %v7484 = vrcp.pop %v7452
      %v7485 = vrcp.pop %v7453
      %v7486 = vrcp.pop %v7454
      %v7487 = vrcp.pop %v7455
      %v7488 = vrcp.pop %v7456
      %v7489 = vrcp.pop %v7457
      %v7490 = vrcp.pop %v7458
      %v7491 = vrcp.pop %v7459
      %v7492 = vrcp.pop %v7460
      %v7493 = vrcp.pop %v7461
      %v7494 = vrcp.pop %v7462
      %v7495 = vrcp.pop %v7463
      %v7496 = vrcp.pop %v7464
      %v7497 = vrcp.pop %v7465
      %v7498 = vrcp.pop %v7466
      %v7499 = vrcp.pop %v7467
      %v7500 = vrcp.pop %v7468
      %v7501 = vrcp.pop %v7469
      %v7502 = vrcp.pop %v7470
      %v7503 = vrcp.pop %v7471
      %v7504 = vrcp.pop %v7472
      %v7505 = vrcp.pop %v7473
      %v7506 = vrcp.pop %v7474
      %v7507 = vrcp.pop %v7475
      %v7508 = vrcp.pop %v7476
      %v7509 = vrcp.pop %v7477
      %v7510 = vrcp.pop %v7478
      %v7511 = vmul.f32 %v7319, %v7479
      %v7512 = vmul.f32 %v7320, %v7480
      %v7513 = vmul.f32 %v7321, %v7481
      %v7514 = vmul.f32 %v7322, %v7482
      %v7515 = vmul.f32 %v7323, %v7483
      %v7516 = vmul.f32 %v7324, %v7484
      %v7517 = vmul.f32 %v7325, %v7485
      %v7518 = vmul.f32 %v7326, %v7486
      %v7519 = vmul.f32 %v7327, %v7487
      %v7520 = vmul.f32 %v7328, %v7488
      %v7521 = vmul.f32 %v7329, %v7489
      %v7522 = vmul.f32 %v7330, %v7490
      %v7523 = vmul.f32 %v7331, %v7491
      %v7524 = vmul.f32 %v7332, %v7492
      %v7525 = vmul.f32 %v7333, %v7493
      %v7526 = vmul.f32 %v7334, %v7494
      %v7527 = vmul.f32 %v7335, %v7495
      %v7528 = vmul.f32 %v7336, %v7496
      %v7529 = vmul.f32 %v7337, %v7497
      %v7530 = vmul.f32 %v7338, %v7498
      %v7531 = vmul.f32 %v7339, %v7499
      %v7532 = vmul.f32 %v7340, %v7500
      %v7533 = vmul.f32 %v7341, %v7501
      %v7534 = vmul.f32 %v7342, %v7502
      %v7535 = vmul.f32 %v7343, %v7503
      %v7536 = vmul.f32 %v7344, %v7504
      %v7537 = vmul.f32 %v7345, %v7505
      %v7538 = vmul.f32 %v7346, %v7506
      %v7539 = vmul.f32 %v7347, %v7507
      %v7540 = vmul.f32 %v7348, %v7508
      %v7541 = vmul.f32 %v7349, %v7509
      %v7542 = vmul.f32 %v7350, %v7510
      %v7543 = vunpack.c.l.bf16 %v368
      %v7544 = vunpack.c.l.bf16 %v369
      %v7545 = vunpack.c.l.bf16 %v370
      %v7546 = vunpack.c.l.bf16 %v371
      %v7547 = vunpack.c.l.bf16 %v372
      %v7548 = vunpack.c.l.bf16 %v373
      %v7549 = vunpack.c.l.bf16 %v374
      %v7550 = vunpack.c.l.bf16 %v375
      %v7551 = vunpack.c.l.bf16 %v376
      %v7552 = vunpack.c.l.bf16 %v377
      %v7553 = vunpack.c.l.bf16 %v378
      %v7554 = vunpack.c.l.bf16 %v379
      %v7555 = vunpack.c.l.bf16 %v380
      %v7556 = vunpack.c.l.bf16 %v381
      %v7557 = vunpack.c.l.bf16 %v382
      %v7558 = vunpack.c.l.bf16 %v383
      %v7559 = vunpack.c.l.bf16 %v384
      %v7560 = vunpack.c.l.bf16 %v385
      %v7561 = vunpack.c.l.bf16 %v386
      %v7562 = vunpack.c.l.bf16 %v387
      %v7563 = vunpack.c.l.bf16 %v388
      %v7564 = vunpack.c.l.bf16 %v389
      %v7565 = vunpack.c.l.bf16 %v390
      %v7566 = vunpack.c.l.bf16 %v391
      %v7567 = vunpack.c.l.bf16 %v392
      %v7568 = vunpack.c.l.bf16 %v393
      %v7569 = vunpack.c.l.bf16 %v394
      %v7570 = vunpack.c.l.bf16 %v395
      %v7571 = vunpack.c.l.bf16 %v396
      %v7572 = vunpack.c.l.bf16 %v397
      %v7573 = vunpack.c.l.bf16 %v398
      %v7574 = vunpack.c.l.bf16 %v399
      %v7575 = vadd.f32 %v7543, %v7511
      %v7576 = vadd.f32 %v7544, %v7512
      %v7577 = vadd.f32 %v7545, %v7513
      %v7578 = vadd.f32 %v7546, %v7514
      %v7579 = vadd.f32 %v7547, %v7515
      %v7580 = vadd.f32 %v7548, %v7516
      %v7581 = vadd.f32 %v7549, %v7517
      %v7582 = vadd.f32 %v7550, %v7518
      %v7583 = vadd.f32 %v7551, %v7519
      %v7584 = vadd.f32 %v7552, %v7520
      %v7585 = vadd.f32 %v7553, %v7521
      %v7586 = vadd.f32 %v7554, %v7522
      %v7587 = vadd.f32 %v7555, %v7523
      %v7588 = vadd.f32 %v7556, %v7524
      %v7589 = vadd.f32 %v7557, %v7525
      %v7590 = vadd.f32 %v7558, %v7526
      %v7591 = vadd.f32 %v7559, %v7527
      %v7592 = vadd.f32 %v7560, %v7528
      %v7593 = vadd.f32 %v7561, %v7529
      %v7594 = vadd.f32 %v7562, %v7530
      %v7595 = vadd.f32 %v7563, %v7531
      %v7596 = vadd.f32 %v7564, %v7532
      %v7597 = vadd.f32 %v7565, %v7533
      %v7598 = vadd.f32 %v7566, %v7534
      %v7599 = vadd.f32 %v7567, %v7535
      %v7600 = vadd.f32 %v7568, %v7536
      %v7601 = vadd.f32 %v7569, %v7537
      %v7602 = vadd.f32 %v7570, %v7538
      %v7603 = vadd.f32 %v7571, %v7539
      %v7604 = vadd.f32 %v7572, %v7540
      %v7605 = vadd.f32 %v7573, %v7541
      %v7606 = vadd.f32 %v7574, %v7542
      %v7607 = vpack.c.bf16 %v7575, %v7575
      %v7608 = vpack.c.bf16 %v7576, %v7576
      %v7609 = vpack.c.bf16 %v7577, %v7577
      %v7610 = vpack.c.bf16 %v7578, %v7578
      %v7611 = vpack.c.bf16 %v7579, %v7579
      %v7612 = vpack.c.bf16 %v7580, %v7580
      %v7613 = vpack.c.bf16 %v7581, %v7581
      %v7614 = vpack.c.bf16 %v7582, %v7582
      %v7615 = vpack.c.bf16 %v7583, %v7583
      %v7616 = vpack.c.bf16 %v7584, %v7584
      %v7617 = vpack.c.bf16 %v7585, %v7585
      %v7618 = vpack.c.bf16 %v7586, %v7586
      %v7619 = vpack.c.bf16 %v7587, %v7587
      %v7620 = vpack.c.bf16 %v7588, %v7588
      %v7621 = vpack.c.bf16 %v7589, %v7589
      %v7622 = vpack.c.bf16 %v7590, %v7590
      %v7623 = vpack.c.bf16 %v7591, %v7591
      %v7624 = vpack.c.bf16 %v7592, %v7592
      %v7625 = vpack.c.bf16 %v7593, %v7593
      %v7626 = vpack.c.bf16 %v7594, %v7594
      %v7627 = vpack.c.bf16 %v7595, %v7595
      %v7628 = vpack.c.bf16 %v7596, %v7596
      %v7629 = vpack.c.bf16 %v7597, %v7597
      %v7630 = vpack.c.bf16 %v7598, %v7598
      %v7631 = vpack.c.bf16 %v7599, %v7599
      %v7632 = vpack.c.bf16 %v7600, %v7600
      %v7633 = vpack.c.bf16 %v7601, %v7601
      %v7634 = vpack.c.bf16 %v7602, %v7602
      %v7635 = vpack.c.bf16 %v7603, %v7603
      %v7636 = vpack.c.bf16 %v7604, %v7604
      %v7637 = vpack.c.bf16 %v7605, %v7605
      %v7638 = vpack.c.bf16 %v7606, %v7606
      %7639 = vst.msk [vmem:[%s224] sm:$0xf] %vm226, %v7607
      %7640 = vst.msk [vmem:[%s224 + $0x4] sm:$0xf] %vm226, %v7608
      %7641 = vst.msk [vmem:[%s224 + $0x8] sm:$0xf] %vm226, %v7609
      %7642 = vst.msk [vmem:[%s224 + $0xc] sm:$0xf] %vm226, %v7610
      %7643 = vst.msk [vmem:[%s224 + $0x10] sm:$0xf] %vm226, %v7611
      %7644 = vst.msk [vmem:[%s224 + $0x14] sm:$0xf] %vm226, %v7612
      %7645 = vst.msk [vmem:[%s224 + $0x18] sm:$0xf] %vm226, %v7613
      %7646 = vst.msk [vmem:[%s224 + $0x1c] sm:$0xf] %vm226, %v7614
      %7647 = vst.msk [vmem:[%s224 + $0x20] sm:$0xf] %vm226, %v7615
      %7648 = vst.msk [vmem:[%s224 + $0x24] sm:$0xf] %vm226, %v7616
      %7649 = vst.msk [vmem:[%s224 + $0x28] sm:$0xf] %vm226, %v7617
      %7650 = vst.msk [vmem:[%s224 + $0x2c] sm:$0xf] %vm226, %v7618
      %7651 = vst.msk [vmem:[%s224 + $0x30] sm:$0xf] %vm226, %v7619
      %7652 = vst.msk [vmem:[%s224 + $0x34] sm:$0xf] %vm226, %v7620
      %7653 = vst.msk [vmem:[%s224 + $0x38] sm:$0xf] %vm226, %v7621
      %7654 = vst.msk [vmem:[%s224 + $0x3c] sm:$0xf] %vm226, %v7622
      %7655 = vst.msk [vmem:[%s224 + $0x40] sm:$0xf] %vm226, %v7623
      %7656 = vst.msk [vmem:[%s224 + $0x44] sm:$0xf] %vm226, %v7624
      %7657 = vst.msk [vmem:[%s224 + $0x48] sm:$0xf] %vm226, %v7625
      %7658 = vst.msk [vmem:[%s224 + $0x4c] sm:$0xf] %vm226, %v7626
      %7659 = vst.msk [vmem:[%s224 + $0x50] sm:$0xf] %vm226, %v7627
      %7660 = vst.msk [vmem:[%s224 + $0x54] sm:$0xf] %vm226, %v7628
      %7661 = vst.msk [vmem:[%s224 + $0x58] sm:$0xf] %vm226, %v7629
      %7662 = vst.msk [vmem:[%s224 + $0x5c] sm:$0xf] %vm226, %v7630
      %7663 = vst.msk [vmem:[%s224 + $0x60] sm:$0xf] %vm226, %v7631
      %7664 = vst.msk [vmem:[%s224 + $0x64] sm:$0xf] %vm226, %v7632
      %7665 = vst.msk [vmem:[%s224 + $0x68] sm:$0xf] %vm226, %v7633
      %7666 = vst.msk [vmem:[%s224 + $0x6c] sm:$0xf] %vm226, %v7634
      %7667 = vst.msk [vmem:[%s224 + $0x70] sm:$0xf] %vm226, %v7635
      %7668 = vst.msk [vmem:[%s224 + $0x74] sm:$0xf] %vm226, %v7636
      %7669 = vst.msk [vmem:[%s224 + $0x78] sm:$0xf] %vm226, %v7637
      %7670 = vst.msk [vmem:[%s224 + $0x7c] sm:$0xf] %vm226, %v7638
      %p7671 = scmp.lt.s32.totalorder %s16, 1
      %s7672 = scalar_select %p7671, %s16, 1
      %s7673 = smul.addr %s7672, 32
      %s7674 = smul.addr %s7673, 4
      %s7675 = scalar_lea.vmem %s5, %s7674
      // Predicated region
      $region41: #{repcsp_forward.5} parent=39 // pred_check
        %p7676 = pneg %p144
      $region42: #{repcsp_forward.5} parent=39 // pred_check_branch
        %7678 = sbr.rel (%p7676) target = $region44
      $region43: #{repcsp_forward.5} parent=39 // pred_region
        _
      $region44: #{repcsp_forward.5} parent=39 // pred_fallthru
        _
    $region40: #{repcsp_forward.5} parent=5 // pred_fallthru
      _
    %p7679 = scmp.le.s32.totalorder 2, %s11
    // Predicated region
    $region45: #{repcsp_forward.5} parent=5 // pred_check
      %p7680 = pneg %p7679
    $region46: #{repcsp_forward.5} parent=5 // pred_check_branch
      %7682 = sbr.rel (%p7680) target = $region48
    $region47: #{repcsp_forward.5} parent=5 // pred_region
      %s7683 = ssub.s32 %s11, 2
      // Predicated region
      $region49: #{repcsp_forward.5} parent=47 // pred_check
        %p7684 = pneg %p150
      $region50: #{repcsp_forward.5} parent=47 // pred_check_branch
        %7686 = sbr.rel (%p7684) target = $region52
      $region51: #{repcsp_forward.5} parent=47 // pred_region
        %p7687 = scmp.lt.s32.totalorder %s17, 1
        %s7688 = scalar_select %p7687, %s17, 1
        %s7689 = smul.addr %s7688, 32
        %s7690 = smul.addr %s7689, 4
        %s7691 = scalar_lea.vmem %s5, %s7690
      $region52: #{repcsp_forward.5} parent=47 // pred_fallthru
        _
    $region48: #{repcsp_forward.5} parent=5 // pred_fallthru
      _
  $region6: #{repcsp_forward.5} parent=0 // loop_footer
    %s15 = sadd.s32 1, %s11
  $region7: #{repcsp_forward.5} parent=0 // loop_footer_branch
    %10 = sbr.rel target = $region3
  $region8: #{repcsp_forward.5} parent=0 // loop_exit
    _

</llo_original>
